<compile_context>
chip_gen: v5e
topology: v5e:2x2
jax: 0.10.0
libtpu: 0.0.40
codegen_flags: <defaults>
</compile_context>

<pallas_src>
import functools

import jax
import jax.numpy as jnp
from jax.experimental import pallas as pl
from jax.experimental.pallas import tpu as pltpu

EMBED_SIZE = 12
OUT_LANES = 16                    # last conv output channels padded 12 -> 16 for the store
W_LANES = 64                      # packed weight slab width (max Cout over layers)
# (kernel_size, padding) per conv layer, in order.
LAYER_CFG = ((3, 1), (5, 2), (5, 0), (3, 0), (5, 0), (2, 0))
# conv channel plan: Cin of layer 1 depends on the input channel count.
_LAYER_CH = [(None, 32), (32, 32), (32, 32), (32, 64), (64, 64), (64, EMBED_SIZE)]


def _layer_meta(channels):
    """Static per-layer metadata: (K, pad, cin, cout_padded, w_row_offset, bias_row)."""
    metas, off = [], 0
    n = len(LAYER_CFG)
    for l, ((K, pad), (cin, cout)) in enumerate(zip(LAYER_CFG, _LAYER_CH)):
        cin = channels if cin is None else cin
        cout_p = OUT_LANES if l == n - 1 else cout
        metas.append((K, pad, cin, cout_p, off, l))
        off += -(-(K * cin) // 16) * 16           # 16-row aligned blocks (bf16 sublane tile)
    return tuple(metas), off


# ----------------------------------------------------------------------------- kernel ---
def _elu(v):
    # select discards the untaken exp branch, so no clamp is needed.
    return jnp.where(v > 0, v, jnp.exp(v) - 1.0)


def _embedding_kernel(metas, x_ref, w_ref, b_ref, o_ref):
    """One grid step: b_tile trajectory slots stacked along the row (sublane) axis.

    x_ref: (R, C+1) bf16 -- cols [0:C] input features (zero-padded slot tails / batch pad),
           col C is the per-row validity mask (1.0 on real time steps, 0.0 on slot tails).
    w_ref: (W_ROWS, 64) bf16 packed conv weights, rows tap-major per layer, BN folded.
    b_ref: (8, 64) f32 packed biases (row l = layer l).
    o_ref: (R, 16) f32 last-conv output, channels padded 12 -> 16.
    """
    R = o_ref.shape[0]
    C = metas[0][2]

    def conv(h, meta):
        # out[r] = b + sum_k h[(r + k - pad) mod R] @ W[k]; the roll wrap-around only ever
        # reads zeroed or garbage-tail rows (see wrapper invariants), so it is exact.
        K, pad, cin, cout, w_off, b_row = meta
        taps = []
        for k in range(K):
            shift = (pad - k) % R
            t = h if shift == 0 else pltpu.roll(h, shift=shift, axis=0)
            taps.append(t.astype(jnp.bfloat16))                  # bf16 before the concat
        slab = jnp.concatenate(taps, axis=-1)                    # (R, K*cin) bf16 im2col
        w = w_ref[w_off:w_off + K * cin, 0:cout]                 # (K*cin, cout) bf16
        acc = jnp.dot(slab, w, preferred_element_type=jnp.float32)
        return acc + b_ref[b_row:b_row + 1, 0:cout]              # (R, cout) f32

    x = x_ref[:, 0:C].astype(jnp.float32)                        # (R, C)
    valid = x_ref[:, C:C + 1].astype(jnp.float32)                # (R, 1)

    m1, m2, m3, m4, m5, m6 = metas
    h = _elu(conv(x, m1)) * valid    # re-zero slot tails: true zero padding for conv 2
    h = _elu(conv(h, m2))            # BN2 folded into layer-3 weights
    h = _elu(conv(h, m3))            # BN3 folded into layer-4 weights
    h = _elu(conv(h, m4))            # BN4 folded into layer-5 weights
    h = _elu(conv(h, m5))            # BN5 folded into layer-6 weights
    z = conv(h, m6)                                              # (R, 16)
    # Reference ends with ELU then ReLU; ReLU(ELU(z)) == ReLU(z).
    o_ref[...] = jnp.maximum(z, 0.0).astype(o_ref.dtype)


# ------------------------------------------------------------------------- parameters ---
def init_params(key, channels, eps=1e-5):
    """Deterministic synthetic parameters, packed kernel-ready.

    Returns (w_slab, b_slab): one (W_ROWS, 64) bf16 weight slab (per-layer blocks at
    16-aligned row offsets, rows tap-major: row = k*Cin + c_in) and one (8, 64) f32 bias
    slab.  The four eval-mode BatchNorm1d layers (after convs 2..5) are folded into the
    following conv: W' = W * s[c_in], b' = b + sum_{k,c_in} t[c_in] * W[k, c_in, :].
    The last conv's output axis is zero-padded 12 -> 16 for the compact store.
    """
    metas, w_rows = _layer_meta(channels)
    specs = [(K, channels if cin is None else cin, cout)
             for (K, _), (cin, cout) in zip(LAYER_CFG, _LAYER_CH)]
    keys = iter(jax.random.split(key, 64))

    def rnd(shape, scale=0.1):
        return scale * jax.random.normal(next(keys), shape, dtype=jnp.float32)

    raw_w = [rnd((K, cin, cout)) for (K, cin, cout) in specs]     # W[k, c_in, c_out]
    raw_b = [rnd((cout,)) for (_, _, cout) in specs]

    # eval-mode BatchNorm1d after convs 2,3,4,5 (0-based conv indices 1..4)
    bn_scale, bn_shift = {}, {}
    for idx in (1, 2, 3, 4):
        Cc = specs[idx][2]
        gamma = 1.0 + rnd((Cc,))
        beta = rnd((Cc,))
        mean = rnd((Cc,))
        var = jnp.abs(1.0 + rnd((Cc,)))
        s = gamma / jnp.sqrt(var + eps)
        bn_scale[idx], bn_shift[idx] = s, beta - mean * s

    w_slab = jnp.zeros((w_rows, W_LANES), jnp.float32)
    b_slab = jnp.zeros((8, W_LANES), jnp.float32)
    for l, ((K, cin, cout), meta) in enumerate(zip(specs, metas)):
        W, b = raw_w[l], raw_b[l]
        if (l - 1) in bn_scale:                    # fold preceding BN into this conv
            s, t = bn_scale[l - 1], bn_shift[l - 1]
            W = W * s[None, :, None]
            b = b + jnp.einsum("kio,i->o", raw_w[l], t)
        off = meta[4]
        w_slab = w_slab.at[off:off + K * cin, :cout].set(W.reshape(K * cin, cout))
        b_slab = b_slab.at[l, :cout].set(b)
    return w_slab.astype(jnp.bfloat16), b_slab


# ----------------------------------------------------------------------------- wrapper ---
def action_embedding_forward(x_ncl, params, *, b_tile=128,
                             vmem_limit_bytes=48 * 1024 * 1024):
    """x_ncl: (N, channels, T) PyTorch NCL layout.  Returns (N, 12, T-11) f32.

    b_tile trajectories per grid step (multiple of 8).  Default 128 targets v5e/v6e; on
    v7x's 64 MiB VMEM, 64-128 is appropriate and the in-function budget guard shrinks the
    tile if the per-slot length S is large.  At large N, G = ceil(N/b_tile) >= 2 so the
    "parallel" grid axis can use both v7x TensorCores.
    """
    w_slab, b_slab = params
    N, C, T = x_ncl.shape
    L_out = T - 11
    assert L_out >= 1, "temporal length must be >= 12 (receptive field of the embedding)"
    metas, w_rows = _layer_meta(C)
    assert w_slab.shape == (w_rows, W_LANES) and b_slab.shape == (8, W_LANES)

    S = -(-(T + 2) // 8) * 8                       # per-trajectory slot: >= T+2, mult. of 8
    bt = min(max(8, (b_tile // 8) * 8), -(-N // 8) * 8)
    per_row_bytes = 4096                           # conservative live-VMEM/row estimate
    while bt > 8 and bt * S * per_row_bytes > 36 * 1024 * 1024:
        bt -= 8                                    # keep the step well inside 48 MiB VMEM
    G = -(-N // bt)
    n_pad = G * bt
    R = bt * S                                     # rows per grid step
    assert S >= T + 2 and S % 8 == 0 and R % 8 == 0   # roll-wraparound invariants

    # NCL -> NLC, bf16 (halves input DMA); zero-pad slot tails + batch; append the per-row
    # validity mask as an extra channel so the kernel needs no separate lane-1 mask input.
    x_nlc = jnp.transpose(x_ncl, (0, 2, 1)).astype(jnp.bfloat16)
    x_slot = jnp.pad(x_nlc, ((0, n_pad - N), (0, S - T), (0, 0)))
    valid = jnp.broadcast_to((jnp.arange(S) < T).astype(jnp.bfloat16)[None, :, None],
                             (n_pad, S, 1))
    x2d = jnp.concatenate([x_slot, valid], axis=-1).reshape(n_pad * S, C + 1)

    kernel = functools.partial(_embedding_kernel, metas)

    out2d = pl.pallas_call(
        kernel,
        out_shape=jax.ShapeDtypeStruct((n_pad * S, OUT_LANES), jnp.float32),
        grid_spec=pltpu.PrefetchScalarGridSpec(
            num_scalar_prefetch=0,
            grid=(G,),
            in_specs=[
                pl.BlockSpec((R, C + 1), lambda g: (g, 0)),     # batched activation slab
                pl.BlockSpec(w_slab.shape, lambda g: (0, 0)),   # packed weights (const)
                pl.BlockSpec(b_slab.shape, lambda g: (0, 0)),   # packed biases  (const)
            ],
            out_specs=pl.BlockSpec((R, OUT_LANES), lambda g: (g, 0)),
        ),
        compiler_params=pltpu.CompilerParams(
            dimension_semantics=("parallel",),
            vmem_limit_bytes=vmem_limit_bytes),
    )(x2d, w_slab, b_slab)

    out = out2d.reshape(n_pad, S, OUT_LANES)[:N, :L_out, :EMBED_SIZE]
    return jnp.transpose(out, (0, 2, 1))           # NLC -> NCL  (N, 12, T-11)


# -------------------------------------------------------------------------------- main ---
if __name__ == "__main__":
    # Small synthetic configuration (channels=5 is the module default; T >= 12 required).
    N = 16
    channels = 5
    T = 24
    L_out = T - 11                                 # 13

    key = jax.random.PRNGKey(0)
    kx, kp = jax.random.split(key)
    x = jax.random.normal(kx, (N, channels, T), dtype=jnp.float32)
    params = init_params(kp, channels)

    y = action_embedding_forward(x, params)
    y = jax.block_until_ready(y)

    assert y.shape == (N, EMBED_SIZE, L_out), y.shape
    assert bool(jnp.all(jnp.isfinite(y)))
    assert bool(jnp.all(y >= 0.0))                 # final ELU -> ReLU output is non-negative
    print("KERNEL_OK")
</pallas_src>

<mosaic_0001>
module attributes {stable_mosaic.version = 11 : i64} {
  func.func @_embedding_kernel(%arg0: i32, %arg1: memref<512x6xbf16, #tpu.memory_space<vmem>>, %arg2: memref<880x64xbf16, #tpu.memory_space<vmem>>, %arg3: memref<8x64xf32, #tpu.memory_space<vmem>>, %arg4: memref<512x16xf32, #tpu.memory_space<vmem>>) attributes {dimension_semantics = [#tpu.dimension_semantics<parallel>], iteration_bounds = array<i64: 1>, scalar_prefetch = 0 : i64, scratch_operands = 0 : i64, tpu.core_type = #tpu.core_type<tc>, window_params = [{transform_indices = @transform_0, window_bounds = array<i64: 512, 6>}, {pipeline_mode = #tpu.pipeline_mode<synchronous>, transform_indices = @transform_1, window_bounds = array<i64: 880, 64>}, {pipeline_mode = #tpu.pipeline_mode<synchronous>, transform_indices = @transform_2, window_bounds = array<i64: 8, 64>}, {transform_indices = @transform_3, window_bounds = array<i64: 512, 16>}]} {
    %c0 = arith.constant 0 : index
    %c0_0 = arith.constant 0 : index
    %0 = vector.load %arg1[%c0, %c0_0] : memref<512x6xbf16, #tpu.memory_space<vmem>>, vector<512x5xbf16>
    %1 = arith.extf %0 : vector<512x5xbf16> to vector<512x5xf32>
    %c0_1 = arith.constant 0 : index
    %c5 = arith.constant 5 : index
    %2 = vector.load %arg1[%c0_1, %c5] : memref<512x6xbf16, #tpu.memory_space<vmem>>, vector<512x1xbf16>
    %3 = arith.extf %2 : vector<512x1xbf16> to vector<512x1xf32>
    %c1_i32 = arith.constant 1 : i32
    %4 = tpu.dynamic_rotate %1 by %c1_i32 dim 0 : vector<512x5xf32>, i32 -> vector<512x5xf32>
    %5 = arith.truncf %4 : vector<512x5xf32> to vector<512x5xbf16>
    %6 = arith.truncf %1 : vector<512x5xf32> to vector<512x5xbf16>
    %c511_i32 = arith.constant 511 : i32
    %7 = tpu.dynamic_rotate %1 by %c511_i32 dim 0 : vector<512x5xf32>, i32 -> vector<512x5xf32>
    %8 = arith.truncf %7 : vector<512x5xf32> to vector<512x5xbf16>
    %9 = tpu.concatenate %5, %6, %8 in 1 : vector<512x5xbf16>, vector<512x5xbf16>, vector<512x5xbf16> -> vector<512x15xbf16>
    %c0_2 = arith.constant 0 : index
    %c0_3 = arith.constant 0 : index
    %10 = vector.load %arg2[%c0_2, %c0_3] : memref<880x64xbf16, #tpu.memory_space<vmem>>, vector<15x32xbf16>
    %cst = arith.constant dense<0.000000e+00> : vector<512x32xf32>
    %11 = tpu.matmul %9, %10, %cst {dimension_numbers = #tpu.dot_dimension_numbers<[1], [0], [0], [1], [0, 0, 1, 1], [], []>} : vector<512x15xbf16>, vector<15x32xbf16>, vector<512x32xf32> -> vector<512x32xf32>
    %c0_4 = arith.constant 0 : index
    %c0_5 = arith.constant 0 : index
    %12 = vector.load %arg3[%c0_4, %c0_5] : memref<8x64xf32, #tpu.memory_space<vmem>>, vector<1x32xf32>
    %13 = vector.broadcast %12 : vector<1x32xf32> to vector<512x32xf32>
    %14 = arith.addf %11, %13 : vector<512x32xf32>
    %cst_6 = arith.constant 0.000000e+00 : f32
    %15 = vector.broadcast %cst_6 : f32 to vector<512x32xf32>
    %16 = arith.cmpf ogt, %14, %15 : vector<512x32xf32>
    %17 = math.exp %14 : vector<512x32xf32>
    %cst_7 = arith.constant 1.000000e+00 : f32
    %18 = vector.broadcast %cst_7 : f32 to vector<512x32xf32>
    %19 = arith.subf %17, %18 : vector<512x32xf32>
    %20 = arith.select %16, %14, %19 : vector<512x32xi1>, vector<512x32xf32>
    %21 = vector.broadcast %3 : vector<512x1xf32> to vector<512x32xf32>
    %22 = arith.mulf %20, %21 : vector<512x32xf32>
    %c2_i32 = arith.constant 2 : i32
    %23 = tpu.dynamic_rotate %22 by %c2_i32 dim 0 : vector<512x32xf32>, i32 -> vector<512x32xf32>
    %24 = arith.truncf %23 : vector<512x32xf32> to vector<512x32xbf16>
    %c1_i32_8 = arith.constant 1 : i32
    %25 = tpu.dynamic_rotate %22 by %c1_i32_8 dim 0 : vector<512x32xf32>, i32 -> vector<512x32xf32>
    %26 = arith.truncf %25 : vector<512x32xf32> to vector<512x32xbf16>
    %27 = arith.truncf %22 : vector<512x32xf32> to vector<512x32xbf16>
    %c511_i32_9 = arith.constant 511 : i32
    %28 = tpu.dynamic_rotate %22 by %c511_i32_9 dim 0 : vector<512x32xf32>, i32 -> vector<512x32xf32>
    %29 = arith.truncf %28 : vector<512x32xf32> to vector<512x32xbf16>
    %c510_i32 = arith.constant 510 : i32
    %30 = tpu.dynamic_rotate %22 by %c510_i32 dim 0 : vector<512x32xf32>, i32 -> vector<512x32xf32>
    %31 = arith.truncf %30 : vector<512x32xf32> to vector<512x32xbf16>
    %32 = tpu.concatenate %24, %26, %27, %29, %31 in 1 : vector<512x32xbf16>, vector<512x32xbf16>, vector<512x32xbf16>, vector<512x32xbf16>, vector<512x32xbf16> -> vector<512x160xbf16>
    %c16 = arith.constant 16 : index
    %c0_10 = arith.constant 0 : index
    %33 = vector.load %arg2[%c16, %c0_10] : memref<880x64xbf16, #tpu.memory_space<vmem>>, vector<160x32xbf16>
    %cst_11 = arith.constant dense<0.000000e+00> : vector<512x32xf32>
    %34 = tpu.matmul %32, %33, %cst_11 {dimension_numbers = #tpu.dot_dimension_numbers<[1], [0], [0], [1], [0, 0, 1, 1], [], []>} : vector<512x160xbf16>, vector<160x32xbf16>, vector<512x32xf32> -> vector<512x32xf32>
    %c1 = arith.constant 1 : index
    %c0_12 = arith.constant 0 : index
    %35 = vector.load %arg3[%c1, %c0_12] : memref<8x64xf32, #tpu.memory_space<vmem>>, vector<1x32xf32>
    %36 = vector.broadcast %35 : vector<1x32xf32> to vector<512x32xf32>
    %37 = arith.addf %34, %36 : vector<512x32xf32>
    %cst_13 = arith.constant 0.000000e+00 : f32
    %38 = vector.broadcast %cst_13 : f32 to vector<512x32xf32>
    %39 = arith.cmpf ogt, %37, %38 : vector<512x32xf32>
    %40 = math.exp %37 : vector<512x32xf32>
    %cst_14 = arith.constant 1.000000e+00 : f32
    %41 = vector.broadcast %cst_14 : f32 to vector<512x32xf32>
    %42 = arith.subf %40, %41 : vector<512x32xf32>
    %43 = arith.select %39, %37, %42 : vector<512x32xi1>, vector<512x32xf32>
    %44 = arith.truncf %43 : vector<512x32xf32> to vector<512x32xbf16>
    %c511_i32_15 = arith.constant 511 : i32
    %45 = tpu.dynamic_rotate %43 by %c511_i32_15 dim 0 : vector<512x32xf32>, i32 -> vector<512x32xf32>
    %46 = arith.truncf %45 : vector<512x32xf32> to vector<512x32xbf16>
    %c510_i32_16 = arith.constant 510 : i32
    %47 = tpu.dynamic_rotate %43 by %c510_i32_16 dim 0 : vector<512x32xf32>, i32 -> vector<512x32xf32>
    %48 = arith.truncf %47 : vector<512x32xf32> to vector<512x32xbf16>
    %c509_i32 = arith.constant 509 : i32
    %49 = tpu.dynamic_rotate %43 by %c509_i32 dim 0 : vector<512x32xf32>, i32 -> vector<512x32xf32>
    %50 = arith.truncf %49 : vector<512x32xf32> to vector<512x32xbf16>
    %c508_i32 = arith.constant 508 : i32
    %51 = tpu.dynamic_rotate %43 by %c508_i32 dim 0 : vector<512x32xf32>, i32 -> vector<512x32xf32>
    %52 = arith.truncf %51 : vector<512x32xf32> to vector<512x32xbf16>
    %53 = tpu.concatenate %44, %46, %48, %50, %52 in 1 : vector<512x32xbf16>, vector<512x32xbf16>, vector<512x32xbf16>, vector<512x32xbf16>, vector<512x32xbf16> -> vector<512x160xbf16>
    %c176 = arith.constant 176 : index
    %c0_17 = arith.constant 0 : index
    %54 = vector.load %arg2[%c176, %c0_17] : memref<880x64xbf16, #tpu.memory_space<vmem>>, vector<160x32xbf16>
    %cst_18 = arith.constant dense<0.000000e+00> : vector<512x32xf32>
    %55 = tpu.matmul %53, %54, %cst_18 {dimension_numbers = #tpu.dot_dimension_numbers<[1], [0], [0], [1], [0, 0, 1, 1], [], []>} : vector<512x160xbf16>, vector<160x32xbf16>, vector<512x32xf32> -> vector<512x32xf32>
    %c2 = arith.constant 2 : index
    %c0_19 = arith.constant 0 : index
    %56 = vector.load %arg3[%c2, %c0_19] : memref<8x64xf32, #tpu.memory_space<vmem>>, vector<1x32xf32>
    %57 = vector.broadcast %56 : vector<1x32xf32> to vector<512x32xf32>
    %58 = arith.addf %55, %57 : vector<512x32xf32>
    %cst_20 = arith.constant 0.000000e+00 : f32
    %59 = vector.broadcast %cst_20 : f32 to vector<512x32xf32>
    %60 = arith.cmpf ogt, %58, %59 : vector<512x32xf32>
    %61 = math.exp %58 : vector<512x32xf32>
    %cst_21 = arith.constant 1.000000e+00 : f32
    %62 = vector.broadcast %cst_21 : f32 to vector<512x32xf32>
    %63 = arith.subf %61, %62 : vector<512x32xf32>
    %64 = arith.select %60, %58, %63 : vector<512x32xi1>, vector<512x32xf32>
    %65 = arith.truncf %64 : vector<512x32xf32> to vector<512x32xbf16>
    %c511_i32_22 = arith.constant 511 : i32
    %66 = tpu.dynamic_rotate %64 by %c511_i32_22 dim 0 : vector<512x32xf32>, i32 -> vector<512x32xf32>
    %67 = arith.truncf %66 : vector<512x32xf32> to vector<512x32xbf16>
    %c510_i32_23 = arith.constant 510 : i32
    %68 = tpu.dynamic_rotate %64 by %c510_i32_23 dim 0 : vector<512x32xf32>, i32 -> vector<512x32xf32>
    %69 = arith.truncf %68 : vector<512x32xf32> to vector<512x32xbf16>
    %70 = tpu.concatenate %65, %67, %69 in 1 : vector<512x32xbf16>, vector<512x32xbf16>, vector<512x32xbf16> -> vector<512x96xbf16>
    %c336 = arith.constant 336 : index
    %c0_24 = arith.constant 0 : index
    %71 = vector.load %arg2[%c336, %c0_24] : memref<880x64xbf16, #tpu.memory_space<vmem>>, vector<96x64xbf16>
    %cst_25 = arith.constant dense<0.000000e+00> : vector<512x64xf32>
    %72 = tpu.matmul %70, %71, %cst_25 {dimension_numbers = #tpu.dot_dimension_numbers<[1], [0], [0], [1], [0, 0, 1, 1], [], []>} : vector<512x96xbf16>, vector<96x64xbf16>, vector<512x64xf32> -> vector<512x64xf32>
    %c3 = arith.constant 3 : index
    %c0_26 = arith.constant 0 : index
    %73 = vector.load %arg3[%c3, %c0_26] : memref<8x64xf32, #tpu.memory_space<vmem>>, vector<1x64xf32>
    %74 = vector.broadcast %73 : vector<1x64xf32> to vector<512x64xf32>
    %75 = arith.addf %72, %74 : vector<512x64xf32>
    %cst_27 = arith.constant 0.000000e+00 : f32
    %76 = vector.broadcast %cst_27 : f32 to vector<512x64xf32>
    %77 = arith.cmpf ogt, %75, %76 : vector<512x64xf32>
    %78 = math.exp %75 : vector<512x64xf32>
    %cst_28 = arith.constant 1.000000e+00 : f32
    %79 = vector.broadcast %cst_28 : f32 to vector<512x64xf32>
    %80 = arith.subf %78, %79 : vector<512x64xf32>
    %81 = arith.select %77, %75, %80 : vector<512x64xi1>, vector<512x64xf32>
    %82 = arith.truncf %81 : vector<512x64xf32> to vector<512x64xbf16>
    %c511_i32_29 = arith.constant 511 : i32
    %83 = tpu.dynamic_rotate %81 by %c511_i32_29 dim 0 : vector<512x64xf32>, i32 -> vector<512x64xf32>
    %84 = arith.truncf %83 : vector<512x64xf32> to vector<512x64xbf16>
    %c510_i32_30 = arith.constant 510 : i32
    %85 = tpu.dynamic_rotate %81 by %c510_i32_30 dim 0 : vector<512x64xf32>, i32 -> vector<512x64xf32>
    %86 = arith.truncf %85 : vector<512x64xf32> to vector<512x64xbf16>
    %c509_i32_31 = arith.constant 509 : i32
    %87 = tpu.dynamic_rotate %81 by %c509_i32_31 dim 0 : vector<512x64xf32>, i32 -> vector<512x64xf32>
    %88 = arith.truncf %87 : vector<512x64xf32> to vector<512x64xbf16>
    %c508_i32_32 = arith.constant 508 : i32
    %89 = tpu.dynamic_rotate %81 by %c508_i32_32 dim 0 : vector<512x64xf32>, i32 -> vector<512x64xf32>
    %90 = arith.truncf %89 : vector<512x64xf32> to vector<512x64xbf16>
    %91 = tpu.concatenate %82, %84, %86, %88, %90 in 1 : vector<512x64xbf16>, vector<512x64xbf16>, vector<512x64xbf16>, vector<512x64xbf16>, vector<512x64xbf16> -> vector<512x320xbf16>
    %c432 = arith.constant 432 : index
    %c0_33 = arith.constant 0 : index
    %92 = vector.load %arg2[%c432, %c0_33] : memref<880x64xbf16, #tpu.memory_space<vmem>>, vector<320x64xbf16>
    %cst_34 = arith.constant dense<0.000000e+00> : vector<512x64xf32>
    %93 = tpu.matmul %91, %92, %cst_34 {dimension_numbers = #tpu.dot_dimension_numbers<[1], [0], [0], [1], [0, 0, 1, 1], [], []>} : vector<512x320xbf16>, vector<320x64xbf16>, vector<512x64xf32> -> vector<512x64xf32>
    %c4 = arith.constant 4 : index
    %c0_35 = arith.constant 0 : index
    %94 = vector.load %arg3[%c4, %c0_35] : memref<8x64xf32, #tpu.memory_space<vmem>>, vector<1x64xf32>
    %95 = vector.broadcast %94 : vector<1x64xf32> to vector<512x64xf32>
    %96 = arith.addf %93, %95 : vector<512x64xf32>
    %cst_36 = arith.constant 0.000000e+00 : f32
    %97 = vector.broadcast %cst_36 : f32 to vector<512x64xf32>
    %98 = arith.cmpf ogt, %96, %97 : vector<512x64xf32>
    %99 = math.exp %96 : vector<512x64xf32>
    %cst_37 = arith.constant 1.000000e+00 : f32
    %100 = vector.broadcast %cst_37 : f32 to vector<512x64xf32>
    %101 = arith.subf %99, %100 : vector<512x64xf32>
    %102 = arith.select %98, %96, %101 : vector<512x64xi1>, vector<512x64xf32>
    %103 = arith.truncf %102 : vector<512x64xf32> to vector<512x64xbf16>
    %c511_i32_38 = arith.constant 511 : i32
    %104 = tpu.dynamic_rotate %102 by %c511_i32_38 dim 0 : vector<512x64xf32>, i32 -> vector<512x64xf32>
    %105 = arith.truncf %104 : vector<512x64xf32> to vector<512x64xbf16>
    %106 = tpu.concatenate %103, %105 in 1 : vector<512x64xbf16>, vector<512x64xbf16> -> vector<512x128xbf16>
    %c752 = arith.constant 752 : index
    %c0_39 = arith.constant 0 : index
    %107 = vector.load %arg2[%c752, %c0_39] : memref<880x64xbf16, #tpu.memory_space<vmem>>, vector<128x16xbf16>
    %cst_40 = arith.constant dense<0.000000e+00> : vector<512x16xf32>
    %108 = tpu.matmul %106, %107, %cst_40 {dimension_numbers = #tpu.dot_dimension_numbers<[1], [0], [0], [1], [0, 0, 1, 1], [], []>} : vector<512x128xbf16>, vector<128x16xbf16>, vector<512x16xf32> -> vector<512x16xf32>
    %c5_41 = arith.constant 5 : index
    %c0_42 = arith.constant 0 : index
    %109 = vector.load %arg3[%c5_41, %c0_42] : memref<8x64xf32, #tpu.memory_space<vmem>>, vector<1x16xf32>
    %110 = vector.broadcast %109 : vector<1x16xf32> to vector<512x16xf32>
    %111 = arith.addf %108, %110 : vector<512x16xf32>
    %cst_43 = arith.constant 0.000000e+00 : f32
    %112 = vector.broadcast %cst_43 : f32 to vector<512x16xf32>
    %113 = arith.maximumf %111, %112 : vector<512x16xf32>
    %c0_44 = arith.constant 0 : index
    %c0_45 = arith.constant 0 : index
    %114 = vector.load %arg4[%c0_44, %c0_45] : memref<512x16xf32, #tpu.memory_space<vmem>>, vector<512x16xf32>
    tpu.vector_store %arg4[%c0_44, %c0_45], %113 {strides = array<i32>} : memref<512x16xf32, #tpu.memory_space<vmem>>, vector<512x16xf32>,
    return
  }
  func.func @transform_0(%arg0: i32) -> (i32, i32) {
    %c0_i32 = arith.constant 0 : i32
    %c0_i32_0 = arith.constant 0 : i32
    return %arg0, %c0_i32 : i32, i32
  }
  func.func @transform_1(%arg0: i32) -> (i32, i32) {
    %c0_i32 = arith.constant 0 : i32
    %c0_i32_0 = arith.constant 0 : i32
    %c0_i32_1 = arith.constant 0 : i32
    return %c0_i32, %c0_i32_0 : i32, i32
  }
  func.func @transform_2(%arg0: i32) -> (i32, i32) {
    %c0_i32 = arith.constant 0 : i32
    %c0_i32_0 = arith.constant 0 : i32
    %c0_i32_1 = arith.constant 0 : i32
    return %c0_i32, %c0_i32_0 : i32, i32
  }
  func.func @transform_3(%arg0: i32) -> (i32, i32) {
    %c0_i32 = arith.constant 0 : i32
    %c0_i32_0 = arith.constant 0 : i32
    return %arg0, %c0_i32 : i32, i32
  }
}

</mosaic_0001>

<llo_original>
// kernel: tpu_custom_call.1
$region0: #{tpu_custom_call.1}
  #allocation0 [shape = 'u32[]', space=smem, size = 0x4, offset = 0x4, fixed_abs, tag = 'smem constant byte address 0x4 - core index']
  #allocation1 [shape = 'u32[72,128]{1,0:T(1,128)}', space=vmem, size = 0x9000, scoped, tag = 'internal scratch']
  %s0 = inlined_call_operand.vmem [shape: bf16[512,6], index: 0, kind: input, shape index: {}]
  %s1 = inlined_call_operand.vmem [shape: bf16[880,64], index: 1, kind: input, shape index: {}]
  %s2 = inlined_call_operand.vmem [shape: f32[8,64], index: 2, kind: input, shape index: {}]
  %s3 = inlined_call_operand.vmem [shape: f32[512,16], index: 3, kind: output, shape index: {}]
  %s4 = sld [smem:[#allocation0]]
  $region22: #{tpu_custom_call.1} parent=0
    _
  %s6 = ssub.s32 1, %s4
  %s7 = scalar_select 0, %s6, %s4
  // Predicated region
  $region2: #{tpu_custom_call.1} parent=0 // pred_check
    _
  $region3: #{tpu_custom_call.1} parent=0 // pred_check_branch
    %9 = sbr.rel (0) target = $region5
  $region4: #{tpu_custom_call.1} parent=0 // pred_region
    _
  $region5: #{tpu_custom_call.1} parent=0 // pred_fallthru
    _
  // Predicated region
  $region6: #{tpu_custom_call.1} parent=0 // pred_check
    _
  $region7: #{tpu_custom_call.1} parent=0 // pred_check_branch
    %11 = sbr.rel (0) target = $region9
  $region8: #{tpu_custom_call.1} parent=0 // pred_region
    _
  $region9: #{tpu_custom_call.1} parent=0 // pred_fallthru
    _
  // Predicated region
  $region10: #{tpu_custom_call.1} parent=0 // pred_check
    _
  $region11: #{tpu_custom_call.1} parent=0 // pred_check_branch
    %13 = sbr.rel (0) target = $region13
  $region12: #{tpu_custom_call.1} parent=0 // pred_region
    _
  $region13: #{tpu_custom_call.1} parent=0 // pred_fallthru
    _
  %v15 = vld [vmem:[%s0] sm:$0xf]
  %v16 = vld [vmem:[%s0 + $0x4] sm:$0xf]
  %v17 = vld [vmem:[%s0 + $0x8] sm:$0xf]
  %v18 = vld [vmem:[%s0 + $0xc] sm:$0xf]
  %v19 = vld [vmem:[%s0 + $0x10] sm:$0xf]
  %v20 = vld [vmem:[%s0 + $0x14] sm:$0xf]
  %v21 = vld [vmem:[%s0 + $0x18] sm:$0xf]
  %v22 = vld [vmem:[%s0 + $0x1c] sm:$0xf]
  %v23 = vld [vmem:[%s0 + $0x20] sm:$0xf]
  %v24 = vld [vmem:[%s0 + $0x24] sm:$0xf]
  %v25 = vld [vmem:[%s0 + $0x28] sm:$0xf]
  %v26 = vld [vmem:[%s0 + $0x2c] sm:$0xf]
  %v27 = vld [vmem:[%s0 + $0x30] sm:$0xf]
  %v28 = vld [vmem:[%s0 + $0x34] sm:$0xf]
  %v29 = vld [vmem:[%s0 + $0x38] sm:$0xf]
  %v30 = vld [vmem:[%s0 + $0x3c] sm:$0xf]
  %v31 = vld [vmem:[%s0 + $0x40] sm:$0xf]
  %v32 = vld [vmem:[%s0 + $0x44] sm:$0xf]
  %v33 = vld [vmem:[%s0 + $0x48] sm:$0xf]
  %v34 = vld [vmem:[%s0 + $0x4c] sm:$0xf]
  %v35 = vld [vmem:[%s0 + $0x50] sm:$0xf]
  %v36 = vld [vmem:[%s0 + $0x54] sm:$0xf]
  %v37 = vld [vmem:[%s0 + $0x58] sm:$0xf]
  %v38 = vld [vmem:[%s0 + $0x5c] sm:$0xf]
  %v39 = vld [vmem:[%s0 + $0x60] sm:$0xf]
  %v40 = vld [vmem:[%s0 + $0x64] sm:$0xf]
  %v41 = vld [vmem:[%s0 + $0x68] sm:$0xf]
  %v42 = vld [vmem:[%s0 + $0x6c] sm:$0xf]
  %v43 = vld [vmem:[%s0 + $0x70] sm:$0xf]
  %v44 = vld [vmem:[%s0 + $0x74] sm:$0xf]
  %v45 = vld [vmem:[%s0 + $0x78] sm:$0xf]
  %v46 = vld [vmem:[%s0 + $0x7c] sm:$0xf]
  %v47 = vld [vmem:[%s0 + $0x80] sm:$0xf]
  %v48 = vld [vmem:[%s0 + $0x84] sm:$0xf]
  %v49 = vld [vmem:[%s0 + $0x88] sm:$0xf]
  %v50 = vld [vmem:[%s0 + $0x8c] sm:$0xf]
  %v51 = vld [vmem:[%s0 + $0x90] sm:$0xf]
  %v52 = vld [vmem:[%s0 + $0x94] sm:$0xf]
  %v53 = vld [vmem:[%s0 + $0x98] sm:$0xf]
  %v54 = vld [vmem:[%s0 + $0x9c] sm:$0xf]
  %v55 = vld [vmem:[%s0 + $0xa0] sm:$0xf]
  %v56 = vld [vmem:[%s0 + $0xa4] sm:$0xf]
  %v57 = vld [vmem:[%s0 + $0xa8] sm:$0xf]
  %v58 = vld [vmem:[%s0 + $0xac] sm:$0xf]
  %v59 = vld [vmem:[%s0 + $0xb0] sm:$0xf]
  %v60 = vld [vmem:[%s0 + $0xb4] sm:$0xf]
  %v61 = vld [vmem:[%s0 + $0xb8] sm:$0xf]
  %v62 = vld [vmem:[%s0 + $0xbc] sm:$0xf]
  %v63 = vld [vmem:[%s0 + $0xc0] sm:$0xf]
  %v64 = vld [vmem:[%s0 + $0xc4] sm:$0xf]
  %v65 = vld [vmem:[%s0 + $0xc8] sm:$0xf]
  %v66 = vld [vmem:[%s0 + $0xcc] sm:$0xf]
  %v67 = vld [vmem:[%s0 + $0xd0] sm:$0xf]
  %v68 = vld [vmem:[%s0 + $0xd4] sm:$0xf]
  %v69 = vld [vmem:[%s0 + $0xd8] sm:$0xf]
  %v70 = vld [vmem:[%s0 + $0xdc] sm:$0xf]
  %v71 = vld [vmem:[%s0 + $0xe0] sm:$0xf]
  %v72 = vld [vmem:[%s0 + $0xe4] sm:$0xf]
  %v73 = vld [vmem:[%s0 + $0xe8] sm:$0xf]
  %v74 = vld [vmem:[%s0 + $0xec] sm:$0xf]
  %v75 = vld [vmem:[%s0 + $0xf0] sm:$0xf]
  %v76 = vld [vmem:[%s0 + $0xf4] sm:$0xf]
  %v77 = vld [vmem:[%s0 + $0xf8] sm:$0xf]
  %v78 = vld [vmem:[%s0 + $0xfc] sm:$0xf]
  %v79 = vunpack.c.l.bf16 %v15
  %v80 = vunpack.c.l.bf16 %v16
  %v81 = vunpack.c.l.bf16 %v17
  %v82 = vunpack.c.l.bf16 %v18
  %v83 = vunpack.c.l.bf16 %v19
  %v84 = vunpack.c.l.bf16 %v20
  %v85 = vunpack.c.l.bf16 %v21
  %v86 = vunpack.c.l.bf16 %v22
  %v87 = vunpack.c.l.bf16 %v23
  %v88 = vunpack.c.l.bf16 %v24
  %v89 = vunpack.c.l.bf16 %v25
  %v90 = vunpack.c.l.bf16 %v26
  %v91 = vunpack.c.l.bf16 %v27
  %v92 = vunpack.c.l.bf16 %v28
  %v93 = vunpack.c.l.bf16 %v29
  %v94 = vunpack.c.l.bf16 %v30
  %v95 = vunpack.c.l.bf16 %v31
  %v96 = vunpack.c.l.bf16 %v32
  %v97 = vunpack.c.l.bf16 %v33
  %v98 = vunpack.c.l.bf16 %v34
  %v99 = vunpack.c.l.bf16 %v35
  %v100 = vunpack.c.l.bf16 %v36
  %v101 = vunpack.c.l.bf16 %v37
  %v102 = vunpack.c.l.bf16 %v38
  %v103 = vunpack.c.l.bf16 %v39
  %v104 = vunpack.c.l.bf16 %v40
  %v105 = vunpack.c.l.bf16 %v41
  %v106 = vunpack.c.l.bf16 %v42
  %v107 = vunpack.c.l.bf16 %v43
  %v108 = vunpack.c.l.bf16 %v44
  %v109 = vunpack.c.l.bf16 %v45
  %v110 = vunpack.c.l.bf16 %v46
  %v111 = vunpack.c.l.bf16 %v47
  %v112 = vunpack.c.l.bf16 %v48
  %v113 = vunpack.c.l.bf16 %v49
  %v114 = vunpack.c.l.bf16 %v50
  %v115 = vunpack.c.l.bf16 %v51
  %v116 = vunpack.c.l.bf16 %v52
  %v117 = vunpack.c.l.bf16 %v53
  %v118 = vunpack.c.l.bf16 %v54
  %v119 = vunpack.c.l.bf16 %v55
  %v120 = vunpack.c.l.bf16 %v56
  %v121 = vunpack.c.l.bf16 %v57
  %v122 = vunpack.c.l.bf16 %v58
  %v123 = vunpack.c.l.bf16 %v59
  %v124 = vunpack.c.l.bf16 %v60
  %v125 = vunpack.c.l.bf16 %v61
  %v126 = vunpack.c.l.bf16 %v62
  %v127 = vunpack.c.l.bf16 %v63
  %v128 = vunpack.c.l.bf16 %v64
  %v129 = vunpack.c.l.bf16 %v65
  %v130 = vunpack.c.l.bf16 %v66
  %v131 = vunpack.c.l.bf16 %v67
  %v132 = vunpack.c.l.bf16 %v68
  %v133 = vunpack.c.l.bf16 %v69
  %v134 = vunpack.c.l.bf16 %v70
  %v135 = vunpack.c.l.bf16 %v71
  %v136 = vunpack.c.l.bf16 %v72
  %v137 = vunpack.c.l.bf16 %v73
  %v138 = vunpack.c.l.bf16 %v74
  %v139 = vunpack.c.l.bf16 %v75
  %v140 = vunpack.c.l.bf16 %v76
  %v141 = vunpack.c.l.bf16 %v77
  %v142 = vunpack.c.l.bf16 %v78
  %v143 = vrot.slane %v79, 7
  %v144 = vrot.slane %v80, 7
  %v145 = vrot.slane %v81, 7
  %v146 = vrot.slane %v82, 7
  %v147 = vrot.slane %v83, 7
  %v148 = vrot.slane %v84, 7
  %v149 = vrot.slane %v85, 7
  %v150 = vrot.slane %v86, 7
  %v151 = vrot.slane %v87, 7
  %v152 = vrot.slane %v88, 7
  %v153 = vrot.slane %v89, 7
  %v154 = vrot.slane %v90, 7
  %v155 = vrot.slane %v91, 7
  %v156 = vrot.slane %v92, 7
  %v157 = vrot.slane %v93, 7
  %v158 = vrot.slane %v94, 7
  %v159 = vrot.slane %v95, 7
  %v160 = vrot.slane %v96, 7
  %v161 = vrot.slane %v97, 7
  %v162 = vrot.slane %v98, 7
  %v163 = vrot.slane %v99, 7
  %v164 = vrot.slane %v100, 7
  %v165 = vrot.slane %v101, 7
  %v166 = vrot.slane %v102, 7
  %v167 = vrot.slane %v103, 7
  %v168 = vrot.slane %v104, 7
  %v169 = vrot.slane %v105, 7
  %v170 = vrot.slane %v106, 7
  %v171 = vrot.slane %v107, 7
  %v172 = vrot.slane %v108, 7
  %v173 = vrot.slane %v109, 7
  %v174 = vrot.slane %v110, 7
  %v175 = vrot.slane %v111, 7
  %v176 = vrot.slane %v112, 7
  %v177 = vrot.slane %v113, 7
  %v178 = vrot.slane %v114, 7
  %v179 = vrot.slane %v115, 7
  %v180 = vrot.slane %v116, 7
  %v181 = vrot.slane %v117, 7
  %v182 = vrot.slane %v118, 7
  %v183 = vrot.slane %v119, 7
  %v184 = vrot.slane %v120, 7
  %v185 = vrot.slane %v121, 7
  %v186 = vrot.slane %v122, 7
  %v187 = vrot.slane %v123, 7
  %v188 = vrot.slane %v124, 7
  %v189 = vrot.slane %v125, 7
  %v190 = vrot.slane %v126, 7
  %v191 = vrot.slane %v127, 7
  %v192 = vrot.slane %v128, 7
  %v193 = vrot.slane %v129, 7
  %v194 = vrot.slane %v130, 7
  %v195 = vrot.slane %v131, 7
  %v196 = vrot.slane %v132, 7
  %v197 = vrot.slane %v133, 7
  %v198 = vrot.slane %v134, 7
  %v199 = vrot.slane %v135, 7
  %v200 = vrot.slane %v136, 7
  %v201 = vrot.slane %v137, 7
  %v202 = vrot.slane %v138, 7
  %v203 = vrot.slane %v139, 7
  %v204 = vrot.slane %v140, 7
  %v205 = vrot.slane %v141, 7
  %v206 = vrot.slane %v142, 7
  %v207 = vlaneseq
  %v208 = vshrl.u32 %v207, 7
  %vm209 = vcmp.lt.s32.totalorder %v208, 1
  %v210 = vsel %vm209, %v205, %v206
  %v211 = vsel %vm209, %v204, %v205
  %v212 = vsel %vm209, %v203, %v204
  %v213 = vsel %vm209, %v202, %v203
  %v214 = vsel %vm209, %v201, %v202
  %v215 = vsel %vm209, %v200, %v201
  %v216 = vsel %vm209, %v199, %v200
  %v217 = vsel %vm209, %v198, %v199
  %v218 = vsel %vm209, %v197, %v198
  %v219 = vsel %vm209, %v196, %v197
  %v220 = vsel %vm209, %v195, %v196
  %v221 = vsel %vm209, %v194, %v195
  %v222 = vsel %vm209, %v193, %v194
  %v223 = vsel %vm209, %v192, %v193
  %v224 = vsel %vm209, %v191, %v192
  %v225 = vsel %vm209, %v190, %v191
  %v226 = vsel %vm209, %v189, %v190
  %v227 = vsel %vm209, %v188, %v189
  %v228 = vsel %vm209, %v187, %v188
  %v229 = vsel %vm209, %v186, %v187
  %v230 = vsel %vm209, %v185, %v186
  %v231 = vsel %vm209, %v184, %v185
  %v232 = vsel %vm209, %v183, %v184
  %v233 = vsel %vm209, %v182, %v183
  %v234 = vsel %vm209, %v181, %v182
  %v235 = vsel %vm209, %v180, %v181
  %v236 = vsel %vm209, %v179, %v180
  %v237 = vsel %vm209, %v178, %v179
  %v238 = vsel %vm209, %v177, %v178
  %v239 = vsel %vm209, %v176, %v177
  %v240 = vsel %vm209, %v175, %v176
  %v241 = vsel %vm209, %v174, %v175
  %v242 = vsel %vm209, %v173, %v174
  %v243 = vsel %vm209, %v172, %v173
  %v244 = vsel %vm209, %v171, %v172
  %v245 = vsel %vm209, %v170, %v171
  %v246 = vsel %vm209, %v169, %v170
  %v247 = vsel %vm209, %v168, %v169
  %v248 = vsel %vm209, %v167, %v168
  %v249 = vsel %vm209, %v166, %v167
  %v250 = vsel %vm209, %v165, %v166
  %v251 = vsel %vm209, %v164, %v165
  %v252 = vsel %vm209, %v163, %v164
  %v253 = vsel %vm209, %v162, %v163
  %v254 = vsel %vm209, %v161, %v162
  %v255 = vsel %vm209, %v160, %v161
  %v256 = vsel %vm209, %v159, %v160
  %v257 = vsel %vm209, %v158, %v159
  %v258 = vsel %vm209, %v157, %v158
  %v259 = vsel %vm209, %v156, %v157
  %v260 = vsel %vm209, %v155, %v156
  %v261 = vsel %vm209, %v154, %v155
  %v262 = vsel %vm209, %v153, %v154
  %v263 = vsel %vm209, %v152, %v153
  %v264 = vsel %vm209, %v151, %v152
  %v265 = vsel %vm209, %v150, %v151
  %v266 = vsel %vm209, %v149, %v150
  %v267 = vsel %vm209, %v148, %v149
  %v268 = vsel %vm209, %v147, %v148
  %v269 = vsel %vm209, %v146, %v147
  %v270 = vsel %vm209, %v145, %v146
  %v271 = vsel %vm209, %v144, %v145
  %v272 = vsel %vm209, %v143, %v144
  %v273 = vsel %vm209, %v206, %v143
  %v274 = vpack.c.bf16 %v273, %v273
  %v275 = vpack.c.bf16 %v272, %v272
  %v276 = vpack.c.bf16 %v271, %v271
  %v277 = vpack.c.bf16 %v270, %v270
  %v278 = vpack.c.bf16 %v269, %v269
  %v279 = vpack.c.bf16 %v268, %v268
  %v280 = vpack.c.bf16 %v267, %v267
  %v281 = vpack.c.bf16 %v266, %v266
  %v282 = vpack.c.bf16 %v265, %v265
  %v283 = vpack.c.bf16 %v264, %v264
  %v284 = vpack.c.bf16 %v263, %v263
  %v285 = vpack.c.bf16 %v262, %v262
  %v286 = vpack.c.bf16 %v261, %v261
  %v287 = vpack.c.bf16 %v260, %v260
  %v288 = vpack.c.bf16 %v259, %v259
  %v289 = vpack.c.bf16 %v258, %v258
  %v290 = vpack.c.bf16 %v257, %v257
  %v291 = vpack.c.bf16 %v256, %v256
  %v292 = vpack.c.bf16 %v255, %v255
  %v293 = vpack.c.bf16 %v254, %v254
  %v294 = vpack.c.bf16 %v253, %v253
  %v295 = vpack.c.bf16 %v252, %v252
  %v296 = vpack.c.bf16 %v251, %v251
  %v297 = vpack.c.bf16 %v250, %v250
  %v298 = vpack.c.bf16 %v249, %v249
  %v299 = vpack.c.bf16 %v248, %v248
  %v300 = vpack.c.bf16 %v247, %v247
  %v301 = vpack.c.bf16 %v246, %v246
  %v302 = vpack.c.bf16 %v245, %v245
  %v303 = vpack.c.bf16 %v244, %v244
  %v304 = vpack.c.bf16 %v243, %v243
  %v305 = vpack.c.bf16 %v242, %v242
  %v306 = vpack.c.bf16 %v241, %v241
  %v307 = vpack.c.bf16 %v240, %v240
  %v308 = vpack.c.bf16 %v239, %v239
  %v309 = vpack.c.bf16 %v238, %v238
  %v310 = vpack.c.bf16 %v237, %v237
  %v311 = vpack.c.bf16 %v236, %v236
  %v312 = vpack.c.bf16 %v235, %v235
  %v313 = vpack.c.bf16 %v234, %v234
  %v314 = vpack.c.bf16 %v233, %v233
  %v315 = vpack.c.bf16 %v232, %v232
  %v316 = vpack.c.bf16 %v231, %v231
  %v317 = vpack.c.bf16 %v230, %v230
  %v318 = vpack.c.bf16 %v229, %v229
  %v319 = vpack.c.bf16 %v228, %v228
  %v320 = vpack.c.bf16 %v227, %v227
  %v321 = vpack.c.bf16 %v226, %v226
  %v322 = vpack.c.bf16 %v225, %v225
  %v323 = vpack.c.bf16 %v224, %v224
  %v324 = vpack.c.bf16 %v223, %v223
  %v325 = vpack.c.bf16 %v222, %v222
  %v326 = vpack.c.bf16 %v221, %v221
  %v327 = vpack.c.bf16 %v220, %v220
  %v328 = vpack.c.bf16 %v219, %v219
  %v329 = vpack.c.bf16 %v218, %v218
  %v330 = vpack.c.bf16 %v217, %v217
  %v331 = vpack.c.bf16 %v216, %v216
  %v332 = vpack.c.bf16 %v215, %v215
  %v333 = vpack.c.bf16 %v214, %v214
  %v334 = vpack.c.bf16 %v213, %v213
  %v335 = vpack.c.bf16 %v212, %v212
  %v336 = vpack.c.bf16 %v211, %v211
  %v337 = vpack.c.bf16 %v210, %v210
  %v338 = vrot.slane %v79, 1
  %v339 = vrot.slane %v80, 1
  %v340 = vrot.slane %v81, 1
  %v341 = vrot.slane %v82, 1
  %v342 = vrot.slane %v83, 1
  %v343 = vrot.slane %v84, 1
  %v344 = vrot.slane %v85, 1
  %v345 = vrot.slane %v86, 1
  %v346 = vrot.slane %v87, 1
  %v347 = vrot.slane %v88, 1
  %v348 = vrot.slane %v89, 1
  %v349 = vrot.slane %v90, 1
  %v350 = vrot.slane %v91, 1
  %v351 = vrot.slane %v92, 1
  %v352 = vrot.slane %v93, 1
  %v353 = vrot.slane %v94, 1
  %v354 = vrot.slane %v95, 1
  %v355 = vrot.slane %v96, 1
  %v356 = vrot.slane %v97, 1
  %v357 = vrot.slane %v98, 1
  %v358 = vrot.slane %v99, 1
  %v359 = vrot.slane %v100, 1
  %v360 = vrot.slane %v101, 1
  %v361 = vrot.slane %v102, 1
  %v362 = vrot.slane %v103, 1
  %v363 = vrot.slane %v104, 1
  %v364 = vrot.slane %v105, 1
  %v365 = vrot.slane %v106, 1
  %v366 = vrot.slane %v107, 1
  %v367 = vrot.slane %v108, 1
  %v368 = vrot.slane %v109, 1
  %v369 = vrot.slane %v110, 1
  %v370 = vrot.slane %v111, 1
  %v371 = vrot.slane %v112, 1
  %v372 = vrot.slane %v113, 1
  %v373 = vrot.slane %v114, 1
  %v374 = vrot.slane %v115, 1
  %v375 = vrot.slane %v116, 1
  %v376 = vrot.slane %v117, 1
  %v377 = vrot.slane %v118, 1
  %v378 = vrot.slane %v119, 1
  %v379 = vrot.slane %v120, 1
  %v380 = vrot.slane %v121, 1
  %v381 = vrot.slane %v122, 1
  %v382 = vrot.slane %v123, 1
  %v383 = vrot.slane %v124, 1
  %v384 = vrot.slane %v125, 1
  %v385 = vrot.slane %v126, 1
  %v386 = vrot.slane %v127, 1
  %v387 = vrot.slane %v128, 1
  %v388 = vrot.slane %v129, 1
  %v389 = vrot.slane %v130, 1
  %v390 = vrot.slane %v131, 1
  %v391 = vrot.slane %v132, 1
  %v392 = vrot.slane %v133, 1
  %v393 = vrot.slane %v134, 1
  %v394 = vrot.slane %v135, 1
  %v395 = vrot.slane %v136, 1
  %v396 = vrot.slane %v137, 1
  %v397 = vrot.slane %v138, 1
  %v398 = vrot.slane %v139, 1
  %v399 = vrot.slane %v140, 1
  %v400 = vrot.slane %v141, 1
  %v401 = vrot.slane %v142, 1
  %vm402 = vcmp.lt.s32.totalorder %v208, 7
  %v403 = vsel %vm402, %v400, %v401
  %v404 = vsel %vm402, %v399, %v400
  %v405 = vsel %vm402, %v398, %v399
  %v406 = vsel %vm402, %v397, %v398
  %v407 = vsel %vm402, %v396, %v397
  %v408 = vsel %vm402, %v395, %v396
  %v409 = vsel %vm402, %v394, %v395
  %v410 = vsel %vm402, %v393, %v394
  %v411 = vsel %vm402, %v392, %v393
  %v412 = vsel %vm402, %v391, %v392
  %v413 = vsel %vm402, %v390, %v391
  %v414 = vsel %vm402, %v389, %v390
  %v415 = vsel %vm402, %v388, %v389
  %v416 = vsel %vm402, %v387, %v388
  %v417 = vsel %vm402, %v386, %v387
  %v418 = vsel %vm402, %v385, %v386
  %v419 = vsel %vm402, %v384, %v385
  %v420 = vsel %vm402, %v383, %v384
  %v421 = vsel %vm402, %v382, %v383
  %v422 = vsel %vm402, %v381, %v382
  %v423 = vsel %vm402, %v380, %v381
  %v424 = vsel %vm402, %v379, %v380
  %v425 = vsel %vm402, %v378, %v379
  %v426 = vsel %vm402, %v377, %v378
  %v427 = vsel %vm402, %v376, %v377
  %v428 = vsel %vm402, %v375, %v376
  %v429 = vsel %vm402, %v374, %v375
  %v430 = vsel %vm402, %v373, %v374
  %v431 = vsel %vm402, %v372, %v373
  %v432 = vsel %vm402, %v371, %v372
  %v433 = vsel %vm402, %v370, %v371
  %v434 = vsel %vm402, %v369, %v370
  %v435 = vsel %vm402, %v368, %v369
  %v436 = vsel %vm402, %v367, %v368
  %v437 = vsel %vm402, %v366, %v367
  %v438 = vsel %vm402, %v365, %v366
  %v439 = vsel %vm402, %v364, %v365
  %v440 = vsel %vm402, %v363, %v364
  %v441 = vsel %vm402, %v362, %v363
  %v442 = vsel %vm402, %v361, %v362
  %v443 = vsel %vm402, %v360, %v361
  %v444 = vsel %vm402, %v359, %v360
  %v445 = vsel %vm402, %v358, %v359
  %v446 = vsel %vm402, %v357, %v358
  %v447 = vsel %vm402, %v356, %v357
  %v448 = vsel %vm402, %v355, %v356
  %v449 = vsel %vm402, %v354, %v355
  %v450 = vsel %vm402, %v353, %v354
  %v451 = vsel %vm402, %v352, %v353
  %v452 = vsel %vm402, %v351, %v352
  %v453 = vsel %vm402, %v350, %v351
  %v454 = vsel %vm402, %v349, %v350
  %v455 = vsel %vm402, %v348, %v349
  %v456 = vsel %vm402, %v347, %v348
  %v457 = vsel %vm402, %v346, %v347
  %v458 = vsel %vm402, %v345, %v346
  %v459 = vsel %vm402, %v344, %v345
  %v460 = vsel %vm402, %v343, %v344
  %v461 = vsel %vm402, %v342, %v343
  %v462 = vsel %vm402, %v341, %v342
  %v463 = vsel %vm402, %v340, %v341
  %v464 = vsel %vm402, %v339, %v340
  %v465 = vsel %vm402, %v338, %v339
  %v466 = vsel %vm402, %v401, %v338
  %v467 = vpack.c.bf16 %v465, %v465
  %v468 = vpack.c.bf16 %v464, %v464
  %v469 = vpack.c.bf16 %v463, %v463
  %v470 = vpack.c.bf16 %v462, %v462
  %v471 = vpack.c.bf16 %v461, %v461
  %v472 = vpack.c.bf16 %v460, %v460
  %v473 = vpack.c.bf16 %v459, %v459
  %v474 = vpack.c.bf16 %v458, %v458
  %v475 = vpack.c.bf16 %v457, %v457
  %v476 = vpack.c.bf16 %v456, %v456
  %v477 = vpack.c.bf16 %v455, %v455
  %v478 = vpack.c.bf16 %v454, %v454
  %v479 = vpack.c.bf16 %v453, %v453
  %v480 = vpack.c.bf16 %v452, %v452
  %v481 = vpack.c.bf16 %v451, %v451
  %v482 = vpack.c.bf16 %v450, %v450
  %v483 = vpack.c.bf16 %v449, %v449
  %v484 = vpack.c.bf16 %v448, %v448
  %v485 = vpack.c.bf16 %v447, %v447
  %v486 = vpack.c.bf16 %v446, %v446
  %v487 = vpack.c.bf16 %v445, %v445
  %v488 = vpack.c.bf16 %v444, %v444
  %v489 = vpack.c.bf16 %v443, %v443
  %v490 = vpack.c.bf16 %v442, %v442
  %v491 = vpack.c.bf16 %v441, %v441
  %v492 = vpack.c.bf16 %v440, %v440
  %v493 = vpack.c.bf16 %v439, %v439
  %v494 = vpack.c.bf16 %v438, %v438
  %v495 = vpack.c.bf16 %v437, %v437
  %v496 = vpack.c.bf16 %v436, %v436
  %v497 = vpack.c.bf16 %v435, %v435
  %v498 = vpack.c.bf16 %v434, %v434
  %v499 = vpack.c.bf16 %v433, %v433
  %v500 = vpack.c.bf16 %v432, %v432
  %v501 = vpack.c.bf16 %v431, %v431
  %v502 = vpack.c.bf16 %v430, %v430
  %v503 = vpack.c.bf16 %v429, %v429
  %v504 = vpack.c.bf16 %v428, %v428
  %v505 = vpack.c.bf16 %v427, %v427
  %v506 = vpack.c.bf16 %v426, %v426
  %v507 = vpack.c.bf16 %v425, %v425
  %v508 = vpack.c.bf16 %v424, %v424
  %v509 = vpack.c.bf16 %v423, %v423
  %v510 = vpack.c.bf16 %v422, %v422
  %v511 = vpack.c.bf16 %v421, %v421
  %v512 = vpack.c.bf16 %v420, %v420
  %v513 = vpack.c.bf16 %v419, %v419
  %v514 = vpack.c.bf16 %v418, %v418
  %v515 = vpack.c.bf16 %v417, %v417
  %v516 = vpack.c.bf16 %v416, %v416
  %v517 = vpack.c.bf16 %v415, %v415
  %v518 = vpack.c.bf16 %v414, %v414
  %v519 = vpack.c.bf16 %v413, %v413
  %v520 = vpack.c.bf16 %v412, %v412
  %v521 = vpack.c.bf16 %v411, %v411
  %v522 = vpack.c.bf16 %v410, %v410
  %v523 = vpack.c.bf16 %v409, %v409
  %v524 = vpack.c.bf16 %v408, %v408
  %v525 = vpack.c.bf16 %v407, %v407
  %v526 = vpack.c.bf16 %v406, %v406
  %v527 = vpack.c.bf16 %v405, %v405
  %v528 = vpack.c.bf16 %v404, %v404
  %v529 = vpack.c.bf16 %v403, %v403
  %v530 = vpack.c.bf16 %v466, %v466
  %v595 = vunpack.c.l.b16 %v274
  %v596 = vunpack.c.l.b16 %v275
  %v597 = vunpack.c.l.b16 %v276
  %v598 = vunpack.c.l.b16 %v277
  %v599 = vunpack.c.l.b16 %v278
  %v600 = vunpack.c.l.b16 %v279
  %v601 = vunpack.c.l.b16 %v280
  %v602 = vunpack.c.l.b16 %v281
  %v603 = vunpack.c.l.b16 %v282
  %v604 = vunpack.c.l.b16 %v283
  %v605 = vunpack.c.l.b16 %v284
  %v606 = vunpack.c.l.b16 %v285
  %v607 = vunpack.c.l.b16 %v286
  %v608 = vunpack.c.l.b16 %v287
  %v609 = vunpack.c.l.b16 %v288
  %v610 = vunpack.c.l.b16 %v289
  %v611 = vunpack.c.l.b16 %v290
  %v612 = vunpack.c.l.b16 %v291
  %v613 = vunpack.c.l.b16 %v292
  %v614 = vunpack.c.l.b16 %v293
  %v615 = vunpack.c.l.b16 %v294
  %v616 = vunpack.c.l.b16 %v295
  %v617 = vunpack.c.l.b16 %v296
  %v618 = vunpack.c.l.b16 %v297
  %v619 = vunpack.c.l.b16 %v298
  %v620 = vunpack.c.l.b16 %v299
  %v621 = vunpack.c.l.b16 %v300
  %v622 = vunpack.c.l.b16 %v301
  %v623 = vunpack.c.l.b16 %v302
  %v624 = vunpack.c.l.b16 %v303
  %v625 = vunpack.c.l.b16 %v304
  %v626 = vunpack.c.l.b16 %v305
  %v627 = vunpack.c.l.b16 %v306
  %v628 = vunpack.c.l.b16 %v307
  %v629 = vunpack.c.l.b16 %v308
  %v630 = vunpack.c.l.b16 %v309
  %v631 = vunpack.c.l.b16 %v310
  %v632 = vunpack.c.l.b16 %v311
  %v633 = vunpack.c.l.b16 %v312
  %v634 = vunpack.c.l.b16 %v313
  %v635 = vunpack.c.l.b16 %v314
  %v636 = vunpack.c.l.b16 %v315
  %v637 = vunpack.c.l.b16 %v316
  %v638 = vunpack.c.l.b16 %v317
  %v639 = vunpack.c.l.b16 %v318
  %v640 = vunpack.c.l.b16 %v319
  %v641 = vunpack.c.l.b16 %v320
  %v642 = vunpack.c.l.b16 %v321
  %v643 = vunpack.c.l.b16 %v322
  %v644 = vunpack.c.l.b16 %v323
  %v645 = vunpack.c.l.b16 %v324
  %v646 = vunpack.c.l.b16 %v325
  %v647 = vunpack.c.l.b16 %v326
  %v648 = vunpack.c.l.b16 %v327
  %v649 = vunpack.c.l.b16 %v328
  %v650 = vunpack.c.l.b16 %v329
  %v651 = vunpack.c.l.b16 %v330
  %v652 = vunpack.c.l.b16 %v331
  %v653 = vunpack.c.l.b16 %v332
  %v654 = vunpack.c.l.b16 %v333
  %v655 = vunpack.c.l.b16 %v334
  %v656 = vunpack.c.l.b16 %v335
  %v657 = vunpack.c.l.b16 %v336
  %v658 = vunpack.c.l.b16 %v337
  %v659 = vpack.c.b16 %v596, %v595
  %v660 = vpack.c.b16 %v598, %v597
  %v661 = vpack.c.b16 %v600, %v599
  %v662 = vpack.c.b16 %v602, %v601
  %v663 = vpack.c.b16 %v604, %v603
  %v664 = vpack.c.b16 %v606, %v605
  %v665 = vpack.c.b16 %v608, %v607
  %v666 = vpack.c.b16 %v610, %v609
  %v667 = vpack.c.b16 %v612, %v611
  %v668 = vpack.c.b16 %v614, %v613
  %v669 = vpack.c.b16 %v616, %v615
  %v670 = vpack.c.b16 %v618, %v617
  %v671 = vpack.c.b16 %v620, %v619
  %v672 = vpack.c.b16 %v622, %v621
  %v673 = vpack.c.b16 %v624, %v623
  %v674 = vpack.c.b16 %v626, %v625
  %v675 = vpack.c.b16 %v628, %v627
  %v676 = vpack.c.b16 %v630, %v629
  %v677 = vpack.c.b16 %v632, %v631
  %v678 = vpack.c.b16 %v634, %v633
  %v679 = vpack.c.b16 %v636, %v635
  %v680 = vpack.c.b16 %v638, %v637
  %v681 = vpack.c.b16 %v640, %v639
  %v682 = vpack.c.b16 %v642, %v641
  %v683 = vpack.c.b16 %v644, %v643
  %v684 = vpack.c.b16 %v646, %v645
  %v685 = vpack.c.b16 %v648, %v647
  %v686 = vpack.c.b16 %v650, %v649
  %v687 = vpack.c.b16 %v652, %v651
  %v688 = vpack.c.b16 %v654, %v653
  %v689 = vpack.c.b16 %v656, %v655
  %v690 = vpack.c.b16 %v658, %v657
  %v755 = vunpack.c.l.b16 %v15
  %v756 = vunpack.c.l.b16 %v16
  %v757 = vunpack.c.l.b16 %v17
  %v758 = vunpack.c.l.b16 %v18
  %v759 = vunpack.c.l.b16 %v19
  %v760 = vunpack.c.l.b16 %v20
  %v761 = vunpack.c.l.b16 %v21
  %v762 = vunpack.c.l.b16 %v22
  %v763 = vunpack.c.l.b16 %v23
  %v764 = vunpack.c.l.b16 %v24
  %v765 = vunpack.c.l.b16 %v25
  %v766 = vunpack.c.l.b16 %v26
  %v767 = vunpack.c.l.b16 %v27
  %v768 = vunpack.c.l.b16 %v28
  %v769 = vunpack.c.l.b16 %v29
  %v770 = vunpack.c.l.b16 %v30
  %v771 = vunpack.c.l.b16 %v31
  %v772 = vunpack.c.l.b16 %v32
  %v773 = vunpack.c.l.b16 %v33
  %v774 = vunpack.c.l.b16 %v34
  %v775 = vunpack.c.l.b16 %v35
  %v776 = vunpack.c.l.b16 %v36
  %v777 = vunpack.c.l.b16 %v37
  %v778 = vunpack.c.l.b16 %v38
  %v779 = vunpack.c.l.b16 %v39
  %v780 = vunpack.c.l.b16 %v40
  %v781 = vunpack.c.l.b16 %v41
  %v782 = vunpack.c.l.b16 %v42
  %v783 = vunpack.c.l.b16 %v43
  %v784 = vunpack.c.l.b16 %v44
  %v785 = vunpack.c.l.b16 %v45
  %v786 = vunpack.c.l.b16 %v46
  %v787 = vunpack.c.l.b16 %v47
  %v788 = vunpack.c.l.b16 %v48
  %v789 = vunpack.c.l.b16 %v49
  %v790 = vunpack.c.l.b16 %v50
  %v791 = vunpack.c.l.b16 %v51
  %v792 = vunpack.c.l.b16 %v52
  %v793 = vunpack.c.l.b16 %v53
  %v794 = vunpack.c.l.b16 %v54
  %v795 = vunpack.c.l.b16 %v55
  %v796 = vunpack.c.l.b16 %v56
  %v797 = vunpack.c.l.b16 %v57
  %v798 = vunpack.c.l.b16 %v58
  %v799 = vunpack.c.l.b16 %v59
  %v800 = vunpack.c.l.b16 %v60
  %v801 = vunpack.c.l.b16 %v61
  %v802 = vunpack.c.l.b16 %v62
  %v803 = vunpack.c.l.b16 %v63
  %v804 = vunpack.c.l.b16 %v64
  %v805 = vunpack.c.l.b16 %v65
  %v806 = vunpack.c.l.b16 %v66
  %v807 = vunpack.c.l.b16 %v67
  %v808 = vunpack.c.l.b16 %v68
  %v809 = vunpack.c.l.b16 %v69
  %v810 = vunpack.c.l.b16 %v70
  %v811 = vunpack.c.l.b16 %v71
  %v812 = vunpack.c.l.b16 %v72
  %v813 = vunpack.c.l.b16 %v73
  %v814 = vunpack.c.l.b16 %v74
  %v815 = vunpack.c.l.b16 %v75
  %v816 = vunpack.c.l.b16 %v76
  %v817 = vunpack.c.l.b16 %v77
  %v818 = vunpack.c.l.b16 %v78
  %v819 = vpack.c.b16 %v756, %v755
  %v820 = vpack.c.b16 %v758, %v757
  %v821 = vpack.c.b16 %v760, %v759
  %v822 = vpack.c.b16 %v762, %v761
  %v823 = vpack.c.b16 %v764, %v763
  %v824 = vpack.c.b16 %v766, %v765
  %v825 = vpack.c.b16 %v768, %v767
  %v826 = vpack.c.b16 %v770, %v769
  %v827 = vpack.c.b16 %v772, %v771
  %v828 = vpack.c.b16 %v774, %v773
  %v829 = vpack.c.b16 %v776, %v775
  %v830 = vpack.c.b16 %v778, %v777
  %v831 = vpack.c.b16 %v780, %v779
  %v832 = vpack.c.b16 %v782, %v781
  %v833 = vpack.c.b16 %v784, %v783
  %v834 = vpack.c.b16 %v786, %v785
  %v835 = vpack.c.b16 %v788, %v787
  %v836 = vpack.c.b16 %v790, %v789
  %v837 = vpack.c.b16 %v792, %v791
  %v838 = vpack.c.b16 %v794, %v793
  %v839 = vpack.c.b16 %v796, %v795
  %v840 = vpack.c.b16 %v798, %v797
  %v841 = vpack.c.b16 %v800, %v799
  %v842 = vpack.c.b16 %v802, %v801
  %v843 = vpack.c.b16 %v804, %v803
  %v844 = vpack.c.b16 %v806, %v805
  %v845 = vpack.c.b16 %v808, %v807
  %v846 = vpack.c.b16 %v810, %v809
  %v847 = vpack.c.b16 %v812, %v811
  %v848 = vpack.c.b16 %v814, %v813
  %v849 = vpack.c.b16 %v816, %v815
  %v850 = vpack.c.b16 %v818, %v817
  %851 = vrot.lane.b32.xlu0 %v819, 5
  %v852 = vpop.permute.xlu0 %851
  %853 = vrot.lane.b32.xlu0 %v820, 5
  %v854 = vpop.permute.xlu0 %853
  %855 = vrot.lane.b32.xlu0 %v821, 5
  %v856 = vpop.permute.xlu0 %855
  %857 = vrot.lane.b32.xlu0 %v822, 5
  %v858 = vpop.permute.xlu0 %857
  %859 = vrot.lane.b32.xlu0 %v823, 5
  %v860 = vpop.permute.xlu0 %859
  %861 = vrot.lane.b32.xlu0 %v824, 5
  %v862 = vpop.permute.xlu0 %861
  %863 = vrot.lane.b32.xlu0 %v825, 5
  %v864 = vpop.permute.xlu0 %863
  %865 = vrot.lane.b32.xlu0 %v826, 5
  %v866 = vpop.permute.xlu0 %865
  %867 = vrot.lane.b32.xlu0 %v827, 5
  %v868 = vpop.permute.xlu0 %867
  %869 = vrot.lane.b32.xlu0 %v828, 5
  %v870 = vpop.permute.xlu0 %869
  %871 = vrot.lane.b32.xlu0 %v829, 5
  %v872 = vpop.permute.xlu0 %871
  %873 = vrot.lane.b32.xlu0 %v830, 5
  %v874 = vpop.permute.xlu0 %873
  %875 = vrot.lane.b32.xlu0 %v831, 5
  %v876 = vpop.permute.xlu0 %875
  %877 = vrot.lane.b32.xlu0 %v832, 5
  %v878 = vpop.permute.xlu0 %877
  %879 = vrot.lane.b32.xlu0 %v833, 5
  %v880 = vpop.permute.xlu0 %879
  %881 = vrot.lane.b32.xlu0 %v834, 5
  %v882 = vpop.permute.xlu0 %881
  %883 = vrot.lane.b32.xlu0 %v835, 5
  %v884 = vpop.permute.xlu0 %883
  %885 = vrot.lane.b32.xlu0 %v836, 5
  %v886 = vpop.permute.xlu0 %885
  %887 = vrot.lane.b32.xlu0 %v837, 5
  %v888 = vpop.permute.xlu0 %887
  %889 = vrot.lane.b32.xlu0 %v838, 5
  %v890 = vpop.permute.xlu0 %889
  %891 = vrot.lane.b32.xlu0 %v839, 5
  %v892 = vpop.permute.xlu0 %891
  %893 = vrot.lane.b32.xlu0 %v840, 5
  %v894 = vpop.permute.xlu0 %893
  %895 = vrot.lane.b32.xlu0 %v841, 5
  %v896 = vpop.permute.xlu0 %895
  %897 = vrot.lane.b32.xlu0 %v842, 5
  %v898 = vpop.permute.xlu0 %897
  %899 = vrot.lane.b32.xlu0 %v843, 5
  %v900 = vpop.permute.xlu0 %899
  %901 = vrot.lane.b32.xlu0 %v844, 5
  %v902 = vpop.permute.xlu0 %901
  %903 = vrot.lane.b32.xlu0 %v845, 5
  %v904 = vpop.permute.xlu0 %903
  %905 = vrot.lane.b32.xlu0 %v846, 5
  %v906 = vpop.permute.xlu0 %905
  %907 = vrot.lane.b32.xlu0 %v847, 5
  %v908 = vpop.permute.xlu0 %907
  %909 = vrot.lane.b32.xlu0 %v848, 5
  %v910 = vpop.permute.xlu0 %909
  %911 = vrot.lane.b32.xlu0 %v849, 5
  %v912 = vpop.permute.xlu0 %911
  %913 = vrot.lane.b32.xlu0 %v850, 5
  %v914 = vpop.permute.xlu0 %913
  %v979 = vunpack.c.l.b16 %v467
  %v980 = vunpack.c.l.b16 %v468
  %v981 = vunpack.c.l.b16 %v469
  %v982 = vunpack.c.l.b16 %v470
  %v983 = vunpack.c.l.b16 %v471
  %v984 = vunpack.c.l.b16 %v472
  %v985 = vunpack.c.l.b16 %v473
  %v986 = vunpack.c.l.b16 %v474
  %v987 = vunpack.c.l.b16 %v475
  %v988 = vunpack.c.l.b16 %v476
  %v989 = vunpack.c.l.b16 %v477
  %v990 = vunpack.c.l.b16 %v478
  %v991 = vunpack.c.l.b16 %v479
  %v992 = vunpack.c.l.b16 %v480
  %v993 = vunpack.c.l.b16 %v481
  %v994 = vunpack.c.l.b16 %v482
  %v995 = vunpack.c.l.b16 %v483
  %v996 = vunpack.c.l.b16 %v484
  %v997 = vunpack.c.l.b16 %v485
  %v998 = vunpack.c.l.b16 %v486
  %v999 = vunpack.c.l.b16 %v487
  %v1000 = vunpack.c.l.b16 %v488
  %v1001 = vunpack.c.l.b16 %v489
  %v1002 = vunpack.c.l.b16 %v490
  %v1003 = vunpack.c.l.b16 %v491
  %v1004 = vunpack.c.l.b16 %v492
  %v1005 = vunpack.c.l.b16 %v493
  %v1006 = vunpack.c.l.b16 %v494
  %v1007 = vunpack.c.l.b16 %v495
  %v1008 = vunpack.c.l.b16 %v496
  %v1009 = vunpack.c.l.b16 %v497
  %v1010 = vunpack.c.l.b16 %v498
  %v1011 = vunpack.c.l.b16 %v499
  %v1012 = vunpack.c.l.b16 %v500
  %v1013 = vunpack.c.l.b16 %v501
  %v1014 = vunpack.c.l.b16 %v502
  %v1015 = vunpack.c.l.b16 %v503
  %v1016 = vunpack.c.l.b16 %v504
  %v1017 = vunpack.c.l.b16 %v505
  %v1018 = vunpack.c.l.b16 %v506
  %v1019 = vunpack.c.l.b16 %v507
  %v1020 = vunpack.c.l.b16 %v508
  %v1021 = vunpack.c.l.b16 %v509
  %v1022 = vunpack.c.l.b16 %v510
  %v1023 = vunpack.c.l.b16 %v511
  %v1024 = vunpack.c.l.b16 %v512
  %v1025 = vunpack.c.l.b16 %v513
  %v1026 = vunpack.c.l.b16 %v514
  %v1027 = vunpack.c.l.b16 %v515
  %v1028 = vunpack.c.l.b16 %v516
  %v1029 = vunpack.c.l.b16 %v517
  %v1030 = vunpack.c.l.b16 %v518
  %v1031 = vunpack.c.l.b16 %v519
  %v1032 = vunpack.c.l.b16 %v520
  %v1033 = vunpack.c.l.b16 %v521
  %v1034 = vunpack.c.l.b16 %v522
  %v1035 = vunpack.c.l.b16 %v523
  %v1036 = vunpack.c.l.b16 %v524
  %v1037 = vunpack.c.l.b16 %v525
  %v1038 = vunpack.c.l.b16 %v526
  %v1039 = vunpack.c.l.b16 %v527
  %v1040 = vunpack.c.l.b16 %v528
  %v1041 = vunpack.c.l.b16 %v529
  %v1042 = vunpack.c.l.b16 %v530
  %v1043 = vpack.c.b16 %v980, %v979
  %v1044 = vpack.c.b16 %v982, %v981
  %v1045 = vpack.c.b16 %v984, %v983
  %v1046 = vpack.c.b16 %v986, %v985
  %v1047 = vpack.c.b16 %v988, %v987
  %v1048 = vpack.c.b16 %v990, %v989
  %v1049 = vpack.c.b16 %v992, %v991
  %v1050 = vpack.c.b16 %v994, %v993
  %v1051 = vpack.c.b16 %v996, %v995
  %v1052 = vpack.c.b16 %v998, %v997
  %v1053 = vpack.c.b16 %v1000, %v999
  %v1054 = vpack.c.b16 %v1002, %v1001
  %v1055 = vpack.c.b16 %v1004, %v1003
  %v1056 = vpack.c.b16 %v1006, %v1005
  %v1057 = vpack.c.b16 %v1008, %v1007
  %v1058 = vpack.c.b16 %v1010, %v1009
  %v1059 = vpack.c.b16 %v1012, %v1011
  %v1060 = vpack.c.b16 %v1014, %v1013
  %v1061 = vpack.c.b16 %v1016, %v1015
  %v1062 = vpack.c.b16 %v1018, %v1017
  %v1063 = vpack.c.b16 %v1020, %v1019
  %v1064 = vpack.c.b16 %v1022, %v1021
  %v1065 = vpack.c.b16 %v1024, %v1023
  %v1066 = vpack.c.b16 %v1026, %v1025
  %v1067 = vpack.c.b16 %v1028, %v1027
  %v1068 = vpack.c.b16 %v1030, %v1029
  %v1069 = vpack.c.b16 %v1032, %v1031
  %v1070 = vpack.c.b16 %v1034, %v1033
  %v1071 = vpack.c.b16 %v1036, %v1035
  %v1072 = vpack.c.b16 %v1038, %v1037
  %v1073 = vpack.c.b16 %v1040, %v1039
  %v1074 = vpack.c.b16 %v1042, %v1041
  %1075 = vrot.lane.b32.xlu0 %v1043, 10
  %v1076 = vpop.permute.xlu0 %1075
  %1077 = vrot.lane.b32.xlu0 %v1044, 10
  %v1078 = vpop.permute.xlu0 %1077
  %1079 = vrot.lane.b32.xlu0 %v1045, 10
  %v1080 = vpop.permute.xlu0 %1079
  %1081 = vrot.lane.b32.xlu0 %v1046, 10
  %v1082 = vpop.permute.xlu0 %1081
  %1083 = vrot.lane.b32.xlu0 %v1047, 10
  %v1084 = vpop.permute.xlu0 %1083
  %1085 = vrot.lane.b32.xlu0 %v1048, 10
  %v1086 = vpop.permute.xlu0 %1085
  %1087 = vrot.lane.b32.xlu0 %v1049, 10
  %v1088 = vpop.permute.xlu0 %1087
  %1089 = vrot.lane.b32.xlu0 %v1050, 10
  %v1090 = vpop.permute.xlu0 %1089
  %1091 = vrot.lane.b32.xlu0 %v1051, 10
  %v1092 = vpop.permute.xlu0 %1091
  %1093 = vrot.lane.b32.xlu0 %v1052, 10
  %v1094 = vpop.permute.xlu0 %1093
  %1095 = vrot.lane.b32.xlu0 %v1053, 10
  %v1096 = vpop.permute.xlu0 %1095
  %1097 = vrot.lane.b32.xlu0 %v1054, 10
  %v1098 = vpop.permute.xlu0 %1097
  %1099 = vrot.lane.b32.xlu0 %v1055, 10
  %v1100 = vpop.permute.xlu0 %1099
  %1101 = vrot.lane.b32.xlu0 %v1056, 10
  %v1102 = vpop.permute.xlu0 %1101
  %1103 = vrot.lane.b32.xlu0 %v1057, 10
  %v1104 = vpop.permute.xlu0 %1103
  %1105 = vrot.lane.b32.xlu0 %v1058, 10
  %v1106 = vpop.permute.xlu0 %1105
  %1107 = vrot.lane.b32.xlu0 %v1059, 10
  %v1108 = vpop.permute.xlu0 %1107
  %1109 = vrot.lane.b32.xlu0 %v1060, 10
  %v1110 = vpop.permute.xlu0 %1109
  %1111 = vrot.lane.b32.xlu0 %v1061, 10
  %v1112 = vpop.permute.xlu0 %1111
  %1113 = vrot.lane.b32.xlu0 %v1062, 10
  %v1114 = vpop.permute.xlu0 %1113
  %1115 = vrot.lane.b32.xlu0 %v1063, 10
  %v1116 = vpop.permute.xlu0 %1115
  %1117 = vrot.lane.b32.xlu0 %v1064, 10
  %v1118 = vpop.permute.xlu0 %1117
  %1119 = vrot.lane.b32.xlu0 %v1065, 10
  %v1120 = vpop.permute.xlu0 %1119
  %1121 = vrot.lane.b32.xlu0 %v1066, 10
  %v1122 = vpop.permute.xlu0 %1121
  %1123 = vrot.lane.b32.xlu0 %v1067, 10
  %v1124 = vpop.permute.xlu0 %1123
  %1125 = vrot.lane.b32.xlu0 %v1068, 10
  %v1126 = vpop.permute.xlu0 %1125
  %1127 = vrot.lane.b32.xlu0 %v1069, 10
  %v1128 = vpop.permute.xlu0 %1127
  %1129 = vrot.lane.b32.xlu0 %v1070, 10
  %v1130 = vpop.permute.xlu0 %1129
  %1131 = vrot.lane.b32.xlu0 %v1071, 10
  %v1132 = vpop.permute.xlu0 %1131
  %1133 = vrot.lane.b32.xlu0 %v1072, 10
  %v1134 = vpop.permute.xlu0 %1133
  %1135 = vrot.lane.b32.xlu0 %v1073, 10
  %v1136 = vpop.permute.xlu0 %1135
  %1137 = vrot.lane.b32.xlu0 %v1074, 10
  %v1138 = vpop.permute.xlu0 %1137
  %vm1139 = vcmask 39936
  %v1142 = vsel %vm1139, %v659, %v852
  %v1145 = vsel %vm1139, %v660, %v854
  %v1148 = vsel %vm1139, %v661, %v856
  %v1151 = vsel %vm1139, %v662, %v858
  %v1154 = vsel %vm1139, %v663, %v860
  %v1157 = vsel %vm1139, %v664, %v862
  %v1160 = vsel %vm1139, %v665, %v864
  %v1163 = vsel %vm1139, %v666, %v866
  %v1166 = vsel %vm1139, %v667, %v868
  %v1169 = vsel %vm1139, %v668, %v870
  %v1172 = vsel %vm1139, %v669, %v872
  %v1175 = vsel %vm1139, %v670, %v874
  %v1178 = vsel %vm1139, %v671, %v876
  %v1181 = vsel %vm1139, %v672, %v878
  %v1184 = vsel %vm1139, %v673, %v880
  %v1187 = vsel %vm1139, %v674, %v882
  %v1190 = vsel %vm1139, %v675, %v884
  %v1193 = vsel %vm1139, %v676, %v886
  %v1196 = vsel %vm1139, %v677, %v888
  %v1199 = vsel %vm1139, %v678, %v890
  %v1202 = vsel %vm1139, %v679, %v892
  %v1205 = vsel %vm1139, %v680, %v894
  %v1208 = vsel %vm1139, %v681, %v896
  %v1211 = vsel %vm1139, %v682, %v898
  %v1214 = vsel %vm1139, %v683, %v900
  %v1217 = vsel %vm1139, %v684, %v902
  %v1220 = vsel %vm1139, %v685, %v904
  %v1223 = vsel %vm1139, %v686, %v906
  %v1226 = vsel %vm1139, %v687, %v908
  %v1229 = vsel %vm1139, %v688, %v910
  %v1232 = vsel %vm1139, %v689, %v912
  %v1235 = vsel %vm1139, %v690, %v914
  %vm1236 = vcmask 80896
  %v1238 = vsel %vm1236, %v1142, %v1076
  %v1240 = vsel %vm1236, %v1145, %v1078
  %v1242 = vsel %vm1236, %v1148, %v1080
  %v1244 = vsel %vm1236, %v1151, %v1082
  %v1246 = vsel %vm1236, %v1154, %v1084
  %v1248 = vsel %vm1236, %v1157, %v1086
  %v1250 = vsel %vm1236, %v1160, %v1088
  %v1252 = vsel %vm1236, %v1163, %v1090
  %v1254 = vsel %vm1236, %v1166, %v1092
  %v1256 = vsel %vm1236, %v1169, %v1094
  %v1258 = vsel %vm1236, %v1172, %v1096
  %v1260 = vsel %vm1236, %v1175, %v1098
  %v1262 = vsel %vm1236, %v1178, %v1100
  %v1264 = vsel %vm1236, %v1181, %v1102
  %v1266 = vsel %vm1236, %v1184, %v1104
  %v1268 = vsel %vm1236, %v1187, %v1106
  %v1270 = vsel %vm1236, %v1190, %v1108
  %v1272 = vsel %vm1236, %v1193, %v1110
  %v1274 = vsel %vm1236, %v1196, %v1112
  %v1276 = vsel %vm1236, %v1199, %v1114
  %v1278 = vsel %vm1236, %v1202, %v1116
  %v1280 = vsel %vm1236, %v1205, %v1118
  %v1282 = vsel %vm1236, %v1208, %v1120
  %v1284 = vsel %vm1236, %v1211, %v1122
  %v1286 = vsel %vm1236, %v1214, %v1124
  %v1288 = vsel %vm1236, %v1217, %v1126
  %v1290 = vsel %vm1236, %v1220, %v1128
  %v1292 = vsel %vm1236, %v1223, %v1130
  %v1294 = vsel %vm1236, %v1226, %v1132
  %v1296 = vsel %vm1236, %v1229, %v1134
  %v1298 = vsel %vm1236, %v1232, %v1136
  %v1300 = vsel %vm1236, %v1235, %v1138
  %v1301 = vld [vmem:[%s1] sm:$0xf]
  %v1302 = vld [vmem:[%s1 + $0x4] sm:$0xf]
  %v1303 = vld [vmem:[%s2] sm:$0x1]
  %v1304 = vperm.slane %v1303, 0
  %v1307 = vunpack.c.l.b16 %v1301
  %v1308 = vunpack.c.l.b16 %v1302
  %v1309 = vpack.c.b16 %v1308, %v1307
  %vm1310 = vcmask 121856
  %v1311 = vsel %vm1310, %v1238, 0
  %v1313 = vsel %vm1310, %v1240, 0
  %v1315 = vsel %vm1310, %v1242, 0
  %v1317 = vsel %vm1310, %v1244, 0
  %v1319 = vsel %vm1310, %v1246, 0
  %v1321 = vsel %vm1310, %v1248, 0
  %v1323 = vsel %vm1310, %v1250, 0
  %v1325 = vsel %vm1310, %v1252, 0
  %v1327 = vsel %vm1310, %v1254, 0
  %v1329 = vsel %vm1310, %v1256, 0
  %v1331 = vsel %vm1310, %v1258, 0
  %v1333 = vsel %vm1310, %v1260, 0
  %v1335 = vsel %vm1310, %v1262, 0
  %v1337 = vsel %vm1310, %v1264, 0
  %v1339 = vsel %vm1310, %v1266, 0
  %v1341 = vsel %vm1310, %v1268, 0
  %v1343 = vsel %vm1310, %v1270, 0
  %v1345 = vsel %vm1310, %v1272, 0
  %v1347 = vsel %vm1310, %v1274, 0
  %v1349 = vsel %vm1310, %v1276, 0
  %v1351 = vsel %vm1310, %v1278, 0
  %v1353 = vsel %vm1310, %v1280, 0
  %v1355 = vsel %vm1310, %v1282, 0
  %v1357 = vsel %vm1310, %v1284, 0
  %v1359 = vsel %vm1310, %v1286, 0
  %v1361 = vsel %vm1310, %v1288, 0
  %v1363 = vsel %vm1310, %v1290, 0
  %v1365 = vsel %vm1310, %v1292, 0
  %v1367 = vsel %vm1310, %v1294, 0
  %v1369 = vsel %vm1310, %v1296, 0
  %v1371 = vsel %vm1310, %v1298, 0
  %v1373 = vsel %vm1310, %v1300, 0
  %vm1375 = vcmask 1046528
  %vm1376 = vcmask 1047552
  %v1377 = vsel %vm1375, 4294967295, 65535
  %v1378 = vsel %vm1376, %v1377, 0
  %v1380 = vand.u32 %v1309, %v1378
  %1382 = vmatpush.bf16.msra.mxu0 0
  %1383 = vmatpush.bf16.msra.mxu0 0
  %1384 = vmatpush.bf16.msra.mxu0 0
  %1385 = vmatpush.bf16.msra.mxu0 0
  %1386 = vmatpush.bf16.msra.mxu0 0
  %1387 = vmatpush.bf16.msra.mxu0 0
  %1388 = vmatpush.bf16.msra.mxu0 0
  %1389 = vmatpush.bf16.msra.mxu0 %v1380
  %1390 = vmatmul.bf16.gmra.mxu0 %v1311
  %v1391 = vpop.f32.mrf.mxu0
  %v1392 = vadd.f32 %v1304, %v1391
  %v1393 = vpop.f32.mrf.mxu0
  %v1394 = vadd.f32 %v1304, %v1393
  %1395 = vmatmul.bf16.gmra.mxu0 %v1313
  %v1396 = vpop.f32.mrf.mxu0
  %v1397 = vadd.f32 %v1304, %v1396
  %v1398 = vpop.f32.mrf.mxu0
  %v1399 = vadd.f32 %v1304, %v1398
  %1400 = vmatmul.bf16.gmra.mxu0 %v1315
  %v1401 = vpop.f32.mrf.mxu0
  %v1402 = vadd.f32 %v1304, %v1401
  %v1403 = vpop.f32.mrf.mxu0
  %v1404 = vadd.f32 %v1304, %v1403
  %1405 = vmatmul.bf16.gmra.mxu0 %v1317
  %v1406 = vpop.f32.mrf.mxu0
  %v1407 = vadd.f32 %v1304, %v1406
  %v1408 = vpop.f32.mrf.mxu0
  %v1409 = vadd.f32 %v1304, %v1408
  %1410 = vmatmul.bf16.gmra.mxu0 %v1319
  %v1411 = vpop.f32.mrf.mxu0
  %v1412 = vadd.f32 %v1304, %v1411
  %v1413 = vpop.f32.mrf.mxu0
  %v1414 = vadd.f32 %v1304, %v1413
  %1415 = vmatmul.bf16.gmra.mxu0 %v1321
  %v1416 = vpop.f32.mrf.mxu0
  %v1417 = vadd.f32 %v1304, %v1416
  %v1418 = vpop.f32.mrf.mxu0
  %v1419 = vadd.f32 %v1304, %v1418
  %1420 = vmatmul.bf16.gmra.mxu0 %v1323
  %v1421 = vpop.f32.mrf.mxu0
  %v1422 = vadd.f32 %v1304, %v1421
  %v1423 = vpop.f32.mrf.mxu0
  %v1424 = vadd.f32 %v1304, %v1423
  %1425 = vmatmul.bf16.gmra.mxu0 %v1325
  %v1426 = vpop.f32.mrf.mxu0
  %v1427 = vadd.f32 %v1304, %v1426
  %v1428 = vpop.f32.mrf.mxu0
  %v1429 = vadd.f32 %v1304, %v1428
  %1430 = vmatmul.bf16.gmra.mxu0 %v1327
  %v1431 = vpop.f32.mrf.mxu0
  %v1432 = vadd.f32 %v1304, %v1431
  %v1433 = vpop.f32.mrf.mxu0
  %v1434 = vadd.f32 %v1304, %v1433
  %1435 = vmatmul.bf16.gmra.mxu0 %v1329
  %v1436 = vpop.f32.mrf.mxu0
  %v1437 = vadd.f32 %v1304, %v1436
  %v1438 = vpop.f32.mrf.mxu0
  %v1439 = vadd.f32 %v1304, %v1438
  %1440 = vmatmul.bf16.gmra.mxu0 %v1331
  %v1441 = vpop.f32.mrf.mxu0
  %v1442 = vadd.f32 %v1304, %v1441
  %v1443 = vpop.f32.mrf.mxu0
  %v1444 = vadd.f32 %v1304, %v1443
  %1445 = vmatmul.bf16.gmra.mxu0 %v1333
  %v1446 = vpop.f32.mrf.mxu0
  %v1447 = vadd.f32 %v1304, %v1446
  %v1448 = vpop.f32.mrf.mxu0
  %v1449 = vadd.f32 %v1304, %v1448
  %1450 = vmatmul.bf16.gmra.mxu0 %v1335
  %v1451 = vpop.f32.mrf.mxu0
  %v1452 = vadd.f32 %v1304, %v1451
  %v1453 = vpop.f32.mrf.mxu0
  %v1454 = vadd.f32 %v1304, %v1453
  %1455 = vmatmul.bf16.gmra.mxu0 %v1337
  %v1456 = vpop.f32.mrf.mxu0
  %v1457 = vadd.f32 %v1304, %v1456
  %v1458 = vpop.f32.mrf.mxu0
  %v1459 = vadd.f32 %v1304, %v1458
  %1460 = vmatmul.bf16.gmra.mxu0 %v1339
  %v1461 = vpop.f32.mrf.mxu0
  %v1462 = vadd.f32 %v1304, %v1461
  %v1463 = vpop.f32.mrf.mxu0
  %v1464 = vadd.f32 %v1304, %v1463
  %1465 = vmatmul.bf16.gmra.mxu0 %v1341
  %v1466 = vpop.f32.mrf.mxu0
  %v1467 = vadd.f32 %v1304, %v1466
  %v1468 = vpop.f32.mrf.mxu0
  %v1469 = vadd.f32 %v1304, %v1468
  %1470 = vmatmul.bf16.gmra.mxu0 %v1343
  %v1471 = vpop.f32.mrf.mxu0
  %v1472 = vadd.f32 %v1304, %v1471
  %v1473 = vpop.f32.mrf.mxu0
  %v1474 = vadd.f32 %v1304, %v1473
  %1475 = vmatmul.bf16.gmra.mxu0 %v1345
  %v1476 = vpop.f32.mrf.mxu0
  %v1477 = vadd.f32 %v1304, %v1476
  %v1478 = vpop.f32.mrf.mxu0
  %v1479 = vadd.f32 %v1304, %v1478
  %1480 = vmatmul.bf16.gmra.mxu0 %v1347
  %v1481 = vpop.f32.mrf.mxu0
  %v1482 = vadd.f32 %v1304, %v1481
  %v1483 = vpop.f32.mrf.mxu0
  %v1484 = vadd.f32 %v1304, %v1483
  %1485 = vmatmul.bf16.gmra.mxu0 %v1349
  %v1486 = vpop.f32.mrf.mxu0
  %v1487 = vadd.f32 %v1304, %v1486
  %v1488 = vpop.f32.mrf.mxu0
  %v1489 = vadd.f32 %v1304, %v1488
  %1490 = vmatmul.bf16.gmra.mxu0 %v1351
  %v1491 = vpop.f32.mrf.mxu0
  %v1492 = vadd.f32 %v1304, %v1491
  %v1493 = vpop.f32.mrf.mxu0
  %v1494 = vadd.f32 %v1304, %v1493
  %1495 = vmatmul.bf16.gmra.mxu0 %v1353
  %v1496 = vpop.f32.mrf.mxu0
  %v1497 = vadd.f32 %v1304, %v1496
  %v1498 = vpop.f32.mrf.mxu0
  %v1499 = vadd.f32 %v1304, %v1498
  %1500 = vmatmul.bf16.gmra.mxu0 %v1355
  %v1501 = vpop.f32.mrf.mxu0
  %v1502 = vadd.f32 %v1304, %v1501
  %v1503 = vpop.f32.mrf.mxu0
  %v1504 = vadd.f32 %v1304, %v1503
  %1505 = vmatmul.bf16.gmra.mxu0 %v1357
  %v1506 = vpop.f32.mrf.mxu0
  %v1507 = vadd.f32 %v1304, %v1506
  %v1508 = vpop.f32.mrf.mxu0
  %v1509 = vadd.f32 %v1304, %v1508
  %1510 = vmatmul.bf16.gmra.mxu0 %v1359
  %v1511 = vpop.f32.mrf.mxu0
  %v1512 = vadd.f32 %v1304, %v1511
  %v1513 = vpop.f32.mrf.mxu0
  %v1514 = vadd.f32 %v1304, %v1513
  %1515 = vmatmul.bf16.gmra.mxu0 %v1361
  %v1516 = vpop.f32.mrf.mxu0
  %v1517 = vadd.f32 %v1304, %v1516
  %v1518 = vpop.f32.mrf.mxu0
  %v1519 = vadd.f32 %v1304, %v1518
  %1520 = vmatmul.bf16.gmra.mxu0 %v1363
  %v1521 = vpop.f32.mrf.mxu0
  %v1522 = vadd.f32 %v1304, %v1521
  %v1523 = vpop.f32.mrf.mxu0
  %v1524 = vadd.f32 %v1304, %v1523
  %1525 = vmatmul.bf16.gmra.mxu0 %v1365
  %v1526 = vpop.f32.mrf.mxu0
  %v1527 = vadd.f32 %v1304, %v1526
  %v1528 = vpop.f32.mrf.mxu0
  %v1529 = vadd.f32 %v1304, %v1528
  %1530 = vmatmul.bf16.gmra.mxu0 %v1367
  %v1531 = vpop.f32.mrf.mxu0
  %v1532 = vadd.f32 %v1304, %v1531
  %v1533 = vpop.f32.mrf.mxu0
  %v1534 = vadd.f32 %v1304, %v1533
  %1535 = vmatmul.bf16.gmra.mxu0 %v1369
  %v1536 = vpop.f32.mrf.mxu0
  %v1537 = vadd.f32 %v1304, %v1536
  %v1538 = vpop.f32.mrf.mxu0
  %v1539 = vadd.f32 %v1304, %v1538
  %1540 = vmatmul.bf16.gmra.mxu0 %v1371
  %v1541 = vpop.f32.mrf.mxu0
  %v1542 = vadd.f32 %v1304, %v1541
  %v1543 = vpop.f32.mrf.mxu0
  %v1544 = vadd.f32 %v1304, %v1543
  %1545 = vmatmul.bf16.gmra.mxu0 %v1373
  %v1546 = vpop.f32.mrf.mxu0
  %v1547 = vadd.f32 %v1304, %v1546
  %v1548 = vpop.f32.mrf.mxu0
  %v1549 = vadd.f32 %v1304, %v1548
  %1550 = vdwg.mxu0
  %vm1551 = vcmp.gt.f32.partialorder %v1392, 0.0
  %vm1552 = vcmp.gt.f32.partialorder %v1394, 0.0
  %vm1553 = vcmp.gt.f32.partialorder %v1397, 0.0
  %vm1554 = vcmp.gt.f32.partialorder %v1399, 0.0
  %vm1555 = vcmp.gt.f32.partialorder %v1402, 0.0
  %vm1556 = vcmp.gt.f32.partialorder %v1404, 0.0
  %vm1557 = vcmp.gt.f32.partialorder %v1407, 0.0
  %vm1558 = vcmp.gt.f32.partialorder %v1409, 0.0
  %vm1559 = vcmp.gt.f32.partialorder %v1412, 0.0
  %vm1560 = vcmp.gt.f32.partialorder %v1414, 0.0
  %vm1561 = vcmp.gt.f32.partialorder %v1417, 0.0
  %vm1562 = vcmp.gt.f32.partialorder %v1419, 0.0
  %vm1563 = vcmp.gt.f32.partialorder %v1422, 0.0
  %vm1564 = vcmp.gt.f32.partialorder %v1424, 0.0
  %vm1565 = vcmp.gt.f32.partialorder %v1427, 0.0
  %vm1566 = vcmp.gt.f32.partialorder %v1429, 0.0
  %vm1567 = vcmp.gt.f32.partialorder %v1432, 0.0
  %vm1568 = vcmp.gt.f32.partialorder %v1434, 0.0
  %vm1569 = vcmp.gt.f32.partialorder %v1437, 0.0
  %vm1570 = vcmp.gt.f32.partialorder %v1439, 0.0
  %vm1571 = vcmp.gt.f32.partialorder %v1442, 0.0
  %vm1572 = vcmp.gt.f32.partialorder %v1444, 0.0
  %vm1573 = vcmp.gt.f32.partialorder %v1447, 0.0
  %vm1574 = vcmp.gt.f32.partialorder %v1449, 0.0
  %vm1575 = vcmp.gt.f32.partialorder %v1452, 0.0
  %vm1576 = vcmp.gt.f32.partialorder %v1454, 0.0
  %vm1577 = vcmp.gt.f32.partialorder %v1457, 0.0
  %vm1578 = vcmp.gt.f32.partialorder %v1459, 0.0
  %vm1579 = vcmp.gt.f32.partialorder %v1462, 0.0
  %vm1580 = vcmp.gt.f32.partialorder %v1464, 0.0
  %vm1581 = vcmp.gt.f32.partialorder %v1467, 0.0
  %vm1582 = vcmp.gt.f32.partialorder %v1469, 0.0
  %vm1583 = vcmp.gt.f32.partialorder %v1472, 0.0
  %vm1584 = vcmp.gt.f32.partialorder %v1474, 0.0
  %vm1585 = vcmp.gt.f32.partialorder %v1477, 0.0
  %vm1586 = vcmp.gt.f32.partialorder %v1479, 0.0
  %vm1587 = vcmp.gt.f32.partialorder %v1482, 0.0
  %vm1588 = vcmp.gt.f32.partialorder %v1484, 0.0
  %vm1589 = vcmp.gt.f32.partialorder %v1487, 0.0
  %vm1590 = vcmp.gt.f32.partialorder %v1489, 0.0
  %vm1591 = vcmp.gt.f32.partialorder %v1492, 0.0
  %vm1592 = vcmp.gt.f32.partialorder %v1494, 0.0
  %vm1593 = vcmp.gt.f32.partialorder %v1497, 0.0
  %vm1594 = vcmp.gt.f32.partialorder %v1499, 0.0
  %vm1595 = vcmp.gt.f32.partialorder %v1502, 0.0
  %vm1596 = vcmp.gt.f32.partialorder %v1504, 0.0
  %vm1597 = vcmp.gt.f32.partialorder %v1507, 0.0
  %vm1598 = vcmp.gt.f32.partialorder %v1509, 0.0
  %vm1599 = vcmp.gt.f32.partialorder %v1512, 0.0
  %vm1600 = vcmp.gt.f32.partialorder %v1514, 0.0
  %vm1601 = vcmp.gt.f32.partialorder %v1517, 0.0
  %vm1602 = vcmp.gt.f32.partialorder %v1519, 0.0
  %vm1603 = vcmp.gt.f32.partialorder %v1522, 0.0
  %vm1604 = vcmp.gt.f32.partialorder %v1524, 0.0
  %vm1605 = vcmp.gt.f32.partialorder %v1527, 0.0
  %vm1606 = vcmp.gt.f32.partialorder %v1529, 0.0
  %vm1607 = vcmp.gt.f32.partialorder %v1532, 0.0
  %vm1608 = vcmp.gt.f32.partialorder %v1534, 0.0
  %vm1609 = vcmp.gt.f32.partialorder %v1537, 0.0
  %vm1610 = vcmp.gt.f32.partialorder %v1539, 0.0
  %vm1611 = vcmp.gt.f32.partialorder %v1542, 0.0
  %vm1612 = vcmp.gt.f32.partialorder %v1544, 0.0
  %vm1613 = vcmp.gt.f32.partialorder %v1547, 0.0
  %vm1614 = vcmp.gt.f32.partialorder %v1549, 0.0
  %v1615 = vmul.f32 %v1392, 1.442695
  %v1616 = vpow.pop %v1615
  %v1617 = vmul.f32 %v1394, 1.442695
  %v1618 = vpow.pop %v1617
  %v1619 = vmul.f32 %v1397, 1.442695
  %v1620 = vpow.pop %v1619
  %v1621 = vmul.f32 %v1399, 1.442695
  %v1622 = vpow.pop %v1621
  %v1623 = vmul.f32 %v1402, 1.442695
  %v1624 = vpow.pop %v1623
  %v1625 = vmul.f32 %v1404, 1.442695
  %v1626 = vpow.pop %v1625
  %v1627 = vmul.f32 %v1407, 1.442695
  %v1628 = vpow.pop %v1627
  %v1629 = vmul.f32 %v1409, 1.442695
  %v1630 = vpow.pop %v1629
  %v1631 = vmul.f32 %v1412, 1.442695
  %v1632 = vpow.pop %v1631
  %v1633 = vmul.f32 %v1414, 1.442695
  %v1634 = vpow.pop %v1633
  %v1635 = vmul.f32 %v1417, 1.442695
  %v1636 = vpow.pop %v1635
  %v1637 = vmul.f32 %v1419, 1.442695
  %v1638 = vpow.pop %v1637
  %v1639 = vmul.f32 %v1422, 1.442695
  %v1640 = vpow.pop %v1639
  %v1641 = vmul.f32 %v1424, 1.442695
  %v1642 = vpow.pop %v1641
  %v1643 = vmul.f32 %v1427, 1.442695
  %v1644 = vpow.pop %v1643
  %v1645 = vmul.f32 %v1429, 1.442695
  %v1646 = vpow.pop %v1645
  %v1647 = vmul.f32 %v1432, 1.442695
  %v1648 = vpow.pop %v1647
  %v1649 = vmul.f32 %v1434, 1.442695
  %v1650 = vpow.pop %v1649
  %v1651 = vmul.f32 %v1437, 1.442695
  %v1652 = vpow.pop %v1651
  %v1653 = vmul.f32 %v1439, 1.442695
  %v1654 = vpow.pop %v1653
  %v1655 = vmul.f32 %v1442, 1.442695
  %v1656 = vpow.pop %v1655
  %v1657 = vmul.f32 %v1444, 1.442695
  %v1658 = vpow.pop %v1657
  %v1659 = vmul.f32 %v1447, 1.442695
  %v1660 = vpow.pop %v1659
  %v1661 = vmul.f32 %v1449, 1.442695
  %v1662 = vpow.pop %v1661
  %v1663 = vmul.f32 %v1452, 1.442695
  %v1664 = vpow.pop %v1663
  %v1665 = vmul.f32 %v1454, 1.442695
  %v1666 = vpow.pop %v1665
  %v1667 = vmul.f32 %v1457, 1.442695
  %v1668 = vpow.pop %v1667
  %v1669 = vmul.f32 %v1459, 1.442695
  %v1670 = vpow.pop %v1669
  %v1671 = vmul.f32 %v1462, 1.442695
  %v1672 = vpow.pop %v1671
  %v1673 = vmul.f32 %v1464, 1.442695
  %v1674 = vpow.pop %v1673
  %v1675 = vmul.f32 %v1467, 1.442695
  %v1676 = vpow.pop %v1675
  %v1677 = vmul.f32 %v1469, 1.442695
  %v1678 = vpow.pop %v1677
  %v1679 = vmul.f32 %v1472, 1.442695
  %v1680 = vpow.pop %v1679
  %v1681 = vmul.f32 %v1474, 1.442695
  %v1682 = vpow.pop %v1681
  %v1683 = vmul.f32 %v1477, 1.442695
  %v1684 = vpow.pop %v1683
  %v1685 = vmul.f32 %v1479, 1.442695
  %v1686 = vpow.pop %v1685
  %v1687 = vmul.f32 %v1482, 1.442695
  %v1688 = vpow.pop %v1687
  %v1689 = vmul.f32 %v1484, 1.442695
  %v1690 = vpow.pop %v1689
  %v1691 = vmul.f32 %v1487, 1.442695
  %v1692 = vpow.pop %v1691
  %v1693 = vmul.f32 %v1489, 1.442695
  %v1694 = vpow.pop %v1693
  %v1695 = vmul.f32 %v1492, 1.442695
  %v1696 = vpow.pop %v1695
  %v1697 = vmul.f32 %v1494, 1.442695
  %v1698 = vpow.pop %v1697
  %v1699 = vmul.f32 %v1497, 1.442695
  %v1700 = vpow.pop %v1699
  %v1701 = vmul.f32 %v1499, 1.442695
  %v1702 = vpow.pop %v1701
  %v1703 = vmul.f32 %v1502, 1.442695
  %v1704 = vpow.pop %v1703
  %v1705 = vmul.f32 %v1504, 1.442695
  %v1706 = vpow.pop %v1705
  %v1707 = vmul.f32 %v1507, 1.442695
  %v1708 = vpow.pop %v1707
  %v1709 = vmul.f32 %v1509, 1.442695
  %v1710 = vpow.pop %v1709
  %v1711 = vmul.f32 %v1512, 1.442695
  %v1712 = vpow.pop %v1711
  %v1713 = vmul.f32 %v1514, 1.442695
  %v1714 = vpow.pop %v1713
  %v1715 = vmul.f32 %v1517, 1.442695
  %v1716 = vpow.pop %v1715
  %v1717 = vmul.f32 %v1519, 1.442695
  %v1718 = vpow.pop %v1717
  %v1719 = vmul.f32 %v1522, 1.442695
  %v1720 = vpow.pop %v1719
  %v1721 = vmul.f32 %v1524, 1.442695
  %v1722 = vpow.pop %v1721
  %v1723 = vmul.f32 %v1527, 1.442695
  %v1724 = vpow.pop %v1723
  %v1725 = vmul.f32 %v1529, 1.442695
  %v1726 = vpow.pop %v1725
  %v1727 = vmul.f32 %v1532, 1.442695
  %v1728 = vpow.pop %v1727
  %v1729 = vmul.f32 %v1534, 1.442695
  %v1730 = vpow.pop %v1729
  %v1731 = vmul.f32 %v1537, 1.442695
  %v1732 = vpow.pop %v1731
  %v1733 = vmul.f32 %v1539, 1.442695
  %v1734 = vpow.pop %v1733
  %v1735 = vmul.f32 %v1542, 1.442695
  %v1736 = vpow.pop %v1735
  %v1737 = vmul.f32 %v1544, 1.442695
  %v1738 = vpow.pop %v1737
  %v1739 = vmul.f32 %v1547, 1.442695
  %v1740 = vpow.pop %v1739
  %v1741 = vmul.f32 %v1549, 1.442695
  %v1742 = vpow.pop %v1741
  %v1743 = vsub.f32 %v1616, 1.0
  %v1744 = vsub.f32 %v1618, 1.0
  %v1745 = vsub.f32 %v1620, 1.0
  %v1746 = vsub.f32 %v1622, 1.0
  %v1747 = vsub.f32 %v1624, 1.0
  %v1748 = vsub.f32 %v1626, 1.0
  %v1749 = vsub.f32 %v1628, 1.0
  %v1750 = vsub.f32 %v1630, 1.0
  %v1751 = vsub.f32 %v1632, 1.0
  %v1752 = vsub.f32 %v1634, 1.0
  %v1753 = vsub.f32 %v1636, 1.0
  %v1754 = vsub.f32 %v1638, 1.0
  %v1755 = vsub.f32 %v1640, 1.0
  %v1756 = vsub.f32 %v1642, 1.0
  %v1757 = vsub.f32 %v1644, 1.0
  %v1758 = vsub.f32 %v1646, 1.0
  %v1759 = vsub.f32 %v1648, 1.0
  %v1760 = vsub.f32 %v1650, 1.0
  %v1761 = vsub.f32 %v1652, 1.0
  %v1762 = vsub.f32 %v1654, 1.0
  %v1763 = vsub.f32 %v1656, 1.0
  %v1764 = vsub.f32 %v1658, 1.0
  %v1765 = vsub.f32 %v1660, 1.0
  %v1766 = vsub.f32 %v1662, 1.0
  %v1767 = vsub.f32 %v1664, 1.0
  %v1768 = vsub.f32 %v1666, 1.0
  %v1769 = vsub.f32 %v1668, 1.0
  %v1770 = vsub.f32 %v1670, 1.0
  %v1771 = vsub.f32 %v1672, 1.0
  %v1772 = vsub.f32 %v1674, 1.0
  %v1773 = vsub.f32 %v1676, 1.0
  %v1774 = vsub.f32 %v1678, 1.0
  %v1775 = vsub.f32 %v1680, 1.0
  %v1776 = vsub.f32 %v1682, 1.0
  %v1777 = vsub.f32 %v1684, 1.0
  %v1778 = vsub.f32 %v1686, 1.0
  %v1779 = vsub.f32 %v1688, 1.0
  %v1780 = vsub.f32 %v1690, 1.0
  %v1781 = vsub.f32 %v1692, 1.0
  %v1782 = vsub.f32 %v1694, 1.0
  %v1783 = vsub.f32 %v1696, 1.0
  %v1784 = vsub.f32 %v1698, 1.0
  %v1785 = vsub.f32 %v1700, 1.0
  %v1786 = vsub.f32 %v1702, 1.0
  %v1787 = vsub.f32 %v1704, 1.0
  %v1788 = vsub.f32 %v1706, 1.0
  %v1789 = vsub.f32 %v1708, 1.0
  %v1790 = vsub.f32 %v1710, 1.0
  %v1791 = vsub.f32 %v1712, 1.0
  %v1792 = vsub.f32 %v1714, 1.0
  %v1793 = vsub.f32 %v1716, 1.0
  %v1794 = vsub.f32 %v1718, 1.0
  %v1795 = vsub.f32 %v1720, 1.0
  %v1796 = vsub.f32 %v1722, 1.0
  %v1797 = vsub.f32 %v1724, 1.0
  %v1798 = vsub.f32 %v1726, 1.0
  %v1799 = vsub.f32 %v1728, 1.0
  %v1800 = vsub.f32 %v1730, 1.0
  %v1801 = vsub.f32 %v1732, 1.0
  %v1802 = vsub.f32 %v1734, 1.0
  %v1803 = vsub.f32 %v1736, 1.0
  %v1804 = vsub.f32 %v1738, 1.0
  %v1805 = vsub.f32 %v1740, 1.0
  %v1806 = vsub.f32 %v1742, 1.0
  %v1807 = vsel %vm1551, %v1392, %v1743
  %v1808 = vsel %vm1552, %v1394, %v1744
  %v1809 = vsel %vm1553, %v1397, %v1745
  %v1810 = vsel %vm1554, %v1399, %v1746
  %v1811 = vsel %vm1555, %v1402, %v1747
  %v1812 = vsel %vm1556, %v1404, %v1748
  %v1813 = vsel %vm1557, %v1407, %v1749
  %v1814 = vsel %vm1558, %v1409, %v1750
  %v1815 = vsel %vm1559, %v1412, %v1751
  %v1816 = vsel %vm1560, %v1414, %v1752
  %v1817 = vsel %vm1561, %v1417, %v1753
  %v1818 = vsel %vm1562, %v1419, %v1754
  %v1819 = vsel %vm1563, %v1422, %v1755
  %v1820 = vsel %vm1564, %v1424, %v1756
  %v1821 = vsel %vm1565, %v1427, %v1757
  %v1822 = vsel %vm1566, %v1429, %v1758
  %v1823 = vsel %vm1567, %v1432, %v1759
  %v1824 = vsel %vm1568, %v1434, %v1760
  %v1825 = vsel %vm1569, %v1437, %v1761
  %v1826 = vsel %vm1570, %v1439, %v1762
  %v1827 = vsel %vm1571, %v1442, %v1763
  %v1828 = vsel %vm1572, %v1444, %v1764
  %v1829 = vsel %vm1573, %v1447, %v1765
  %v1830 = vsel %vm1574, %v1449, %v1766
  %v1831 = vsel %vm1575, %v1452, %v1767
  %v1832 = vsel %vm1576, %v1454, %v1768
  %v1833 = vsel %vm1577, %v1457, %v1769
  %v1834 = vsel %vm1578, %v1459, %v1770
  %v1835 = vsel %vm1579, %v1462, %v1771
  %v1836 = vsel %vm1580, %v1464, %v1772
  %v1837 = vsel %vm1581, %v1467, %v1773
  %v1838 = vsel %vm1582, %v1469, %v1774
  %v1839 = vsel %vm1583, %v1472, %v1775
  %v1840 = vsel %vm1584, %v1474, %v1776
  %v1841 = vsel %vm1585, %v1477, %v1777
  %v1842 = vsel %vm1586, %v1479, %v1778
  %v1843 = vsel %vm1587, %v1482, %v1779
  %v1844 = vsel %vm1588, %v1484, %v1780
  %v1845 = vsel %vm1589, %v1487, %v1781
  %v1846 = vsel %vm1590, %v1489, %v1782
  %v1847 = vsel %vm1591, %v1492, %v1783
  %v1848 = vsel %vm1592, %v1494, %v1784
  %v1849 = vsel %vm1593, %v1497, %v1785
  %v1850 = vsel %vm1594, %v1499, %v1786
  %v1851 = vsel %vm1595, %v1502, %v1787
  %v1852 = vsel %vm1596, %v1504, %v1788
  %v1853 = vsel %vm1597, %v1507, %v1789
  %v1854 = vsel %vm1598, %v1509, %v1790
  %v1855 = vsel %vm1599, %v1512, %v1791
  %v1856 = vsel %vm1600, %v1514, %v1792
  %v1857 = vsel %vm1601, %v1517, %v1793
  %v1858 = vsel %vm1602, %v1519, %v1794
  %v1859 = vsel %vm1603, %v1522, %v1795
  %v1860 = vsel %vm1604, %v1524, %v1796
  %v1861 = vsel %vm1605, %v1527, %v1797
  %v1862 = vsel %vm1606, %v1529, %v1798
  %v1863 = vsel %vm1607, %v1532, %v1799
  %v1864 = vsel %vm1608, %v1534, %v1800
  %v1865 = vsel %vm1609, %v1537, %v1801
  %v1866 = vsel %vm1610, %v1539, %v1802
  %v1867 = vsel %vm1611, %v1542, %v1803
  %v1868 = vsel %vm1612, %v1544, %v1804
  %v1869 = vsel %vm1613, %v1547, %v1805
  %v1870 = vsel %vm1614, %v1549, %v1806
  %1872 = vset.pattern.permute.xlu0 5
  %1873 = vperm.xlu0 %1872, %v79
  %v1874 = vpop.permute.xlu0 %1873
  %1877 = vset.pattern.permute.xlu0 5
  %1878 = vperm.xlu0 %1877, %v80
  %v1879 = vpop.permute.xlu0 %1878
  %1882 = vset.pattern.permute.xlu0 5
  %1883 = vperm.xlu0 %1882, %v81
  %v1884 = vpop.permute.xlu0 %1883
  %1887 = vset.pattern.permute.xlu0 5
  %1888 = vperm.xlu0 %1887, %v82
  %v1889 = vpop.permute.xlu0 %1888
  %1892 = vset.pattern.permute.xlu0 5
  %1893 = vperm.xlu0 %1892, %v83
  %v1894 = vpop.permute.xlu0 %1893
  %1897 = vset.pattern.permute.xlu0 5
  %1898 = vperm.xlu0 %1897, %v84
  %v1899 = vpop.permute.xlu0 %1898
  %1902 = vset.pattern.permute.xlu0 5
  %1903 = vperm.xlu0 %1902, %v85
  %v1904 = vpop.permute.xlu0 %1903
  %1907 = vset.pattern.permute.xlu0 5
  %1908 = vperm.xlu0 %1907, %v86
  %v1909 = vpop.permute.xlu0 %1908
  %1912 = vset.pattern.permute.xlu0 5
  %1913 = vperm.xlu0 %1912, %v87
  %v1914 = vpop.permute.xlu0 %1913
  %1917 = vset.pattern.permute.xlu0 5
  %1918 = vperm.xlu0 %1917, %v88
  %v1919 = vpop.permute.xlu0 %1918
  %1922 = vset.pattern.permute.xlu0 5
  %1923 = vperm.xlu0 %1922, %v89
  %v1924 = vpop.permute.xlu0 %1923
  %1927 = vset.pattern.permute.xlu0 5
  %1928 = vperm.xlu0 %1927, %v90
  %v1929 = vpop.permute.xlu0 %1928
  %1932 = vset.pattern.permute.xlu0 5
  %1933 = vperm.xlu0 %1932, %v91
  %v1934 = vpop.permute.xlu0 %1933
  %1937 = vset.pattern.permute.xlu0 5
  %1938 = vperm.xlu0 %1937, %v92
  %v1939 = vpop.permute.xlu0 %1938
  %1942 = vset.pattern.permute.xlu0 5
  %1943 = vperm.xlu0 %1942, %v93
  %v1944 = vpop.permute.xlu0 %1943
  %1947 = vset.pattern.permute.xlu0 5
  %1948 = vperm.xlu0 %1947, %v94
  %v1949 = vpop.permute.xlu0 %1948
  %1952 = vset.pattern.permute.xlu0 5
  %1953 = vperm.xlu0 %1952, %v95
  %v1954 = vpop.permute.xlu0 %1953
  %1957 = vset.pattern.permute.xlu0 5
  %1958 = vperm.xlu0 %1957, %v96
  %v1959 = vpop.permute.xlu0 %1958
  %1962 = vset.pattern.permute.xlu0 5
  %1963 = vperm.xlu0 %1962, %v97
  %v1964 = vpop.permute.xlu0 %1963
  %1967 = vset.pattern.permute.xlu0 5
  %1968 = vperm.xlu0 %1967, %v98
  %v1969 = vpop.permute.xlu0 %1968
  %1972 = vset.pattern.permute.xlu0 5
  %1973 = vperm.xlu0 %1972, %v99
  %v1974 = vpop.permute.xlu0 %1973
  %1977 = vset.pattern.permute.xlu0 5
  %1978 = vperm.xlu0 %1977, %v100
  %v1979 = vpop.permute.xlu0 %1978
  %1982 = vset.pattern.permute.xlu0 5
  %1983 = vperm.xlu0 %1982, %v101
  %v1984 = vpop.permute.xlu0 %1983
  %1987 = vset.pattern.permute.xlu0 5
  %1988 = vperm.xlu0 %1987, %v102
  %v1989 = vpop.permute.xlu0 %1988
  %1992 = vset.pattern.permute.xlu0 5
  %1993 = vperm.xlu0 %1992, %v103
  %v1994 = vpop.permute.xlu0 %1993
  %1997 = vset.pattern.permute.xlu0 5
  %1998 = vperm.xlu0 %1997, %v104
  %v1999 = vpop.permute.xlu0 %1998
  %2002 = vset.pattern.permute.xlu0 5
  %2003 = vperm.xlu0 %2002, %v105
  %v2004 = vpop.permute.xlu0 %2003
  %2007 = vset.pattern.permute.xlu0 5
  %2008 = vperm.xlu0 %2007, %v106
  %v2009 = vpop.permute.xlu0 %2008
  %2012 = vset.pattern.permute.xlu0 5
  %2013 = vperm.xlu0 %2012, %v107
  %v2014 = vpop.permute.xlu0 %2013
  %2017 = vset.pattern.permute.xlu0 5
  %2018 = vperm.xlu0 %2017, %v108
  %v2019 = vpop.permute.xlu0 %2018
  %2022 = vset.pattern.permute.xlu0 5
  %2023 = vperm.xlu0 %2022, %v109
  %v2024 = vpop.permute.xlu0 %2023
  %2027 = vset.pattern.permute.xlu0 5
  %2028 = vperm.xlu0 %2027, %v110
  %v2029 = vpop.permute.xlu0 %2028
  %2032 = vset.pattern.permute.xlu0 5
  %2033 = vperm.xlu0 %2032, %v111
  %v2034 = vpop.permute.xlu0 %2033
  %2037 = vset.pattern.permute.xlu0 5
  %2038 = vperm.xlu0 %2037, %v112
  %v2039 = vpop.permute.xlu0 %2038
  %2042 = vset.pattern.permute.xlu0 5
  %2043 = vperm.xlu0 %2042, %v113
  %v2044 = vpop.permute.xlu0 %2043
  %2047 = vset.pattern.permute.xlu0 5
  %2048 = vperm.xlu0 %2047, %v114
  %v2049 = vpop.permute.xlu0 %2048
  %2052 = vset.pattern.permute.xlu0 5
  %2053 = vperm.xlu0 %2052, %v115
  %v2054 = vpop.permute.xlu0 %2053
  %2057 = vset.pattern.permute.xlu0 5
  %2058 = vperm.xlu0 %2057, %v116
  %v2059 = vpop.permute.xlu0 %2058
  %2062 = vset.pattern.permute.xlu0 5
  %2063 = vperm.xlu0 %2062, %v117
  %v2064 = vpop.permute.xlu0 %2063
  %2067 = vset.pattern.permute.xlu0 5
  %2068 = vperm.xlu0 %2067, %v118
  %v2069 = vpop.permute.xlu0 %2068
  %2072 = vset.pattern.permute.xlu0 5
  %2073 = vperm.xlu0 %2072, %v119
  %v2074 = vpop.permute.xlu0 %2073
  %2077 = vset.pattern.permute.xlu0 5
  %2078 = vperm.xlu0 %2077, %v120
  %v2079 = vpop.permute.xlu0 %2078
  %2082 = vset.pattern.permute.xlu0 5
  %2083 = vperm.xlu0 %2082, %v121
  %v2084 = vpop.permute.xlu0 %2083
  %2087 = vset.pattern.permute.xlu0 5
  %2088 = vperm.xlu0 %2087, %v122
  %v2089 = vpop.permute.xlu0 %2088
  %2092 = vset.pattern.permute.xlu0 5
  %2093 = vperm.xlu0 %2092, %v123
  %v2094 = vpop.permute.xlu0 %2093
  %2097 = vset.pattern.permute.xlu0 5
  %2098 = vperm.xlu0 %2097, %v124
  %v2099 = vpop.permute.xlu0 %2098
  %2102 = vset.pattern.permute.xlu0 5
  %2103 = vperm.xlu0 %2102, %v125
  %v2104 = vpop.permute.xlu0 %2103
  %2107 = vset.pattern.permute.xlu0 5
  %2108 = vperm.xlu0 %2107, %v126
  %v2109 = vpop.permute.xlu0 %2108
  %2112 = vset.pattern.permute.xlu0 5
  %2113 = vperm.xlu0 %2112, %v127
  %v2114 = vpop.permute.xlu0 %2113
  %2117 = vset.pattern.permute.xlu0 5
  %2118 = vperm.xlu0 %2117, %v128
  %v2119 = vpop.permute.xlu0 %2118
  %2122 = vset.pattern.permute.xlu0 5
  %2123 = vperm.xlu0 %2122, %v129
  %v2124 = vpop.permute.xlu0 %2123
  %2127 = vset.pattern.permute.xlu0 5
  %2128 = vperm.xlu0 %2127, %v130
  %v2129 = vpop.permute.xlu0 %2128
  %2132 = vset.pattern.permute.xlu0 5
  %2133 = vperm.xlu0 %2132, %v131
  %v2134 = vpop.permute.xlu0 %2133
  %2137 = vset.pattern.permute.xlu0 5
  %2138 = vperm.xlu0 %2137, %v132
  %v2139 = vpop.permute.xlu0 %2138
  %2142 = vset.pattern.permute.xlu0 5
  %2143 = vperm.xlu0 %2142, %v133
  %v2144 = vpop.permute.xlu0 %2143
  %2147 = vset.pattern.permute.xlu0 5
  %2148 = vperm.xlu0 %2147, %v134
  %v2149 = vpop.permute.xlu0 %2148
  %2152 = vset.pattern.permute.xlu0 5
  %2153 = vperm.xlu0 %2152, %v135
  %v2154 = vpop.permute.xlu0 %2153
  %2157 = vset.pattern.permute.xlu0 5
  %2158 = vperm.xlu0 %2157, %v136
  %v2159 = vpop.permute.xlu0 %2158
  %2162 = vset.pattern.permute.xlu0 5
  %2163 = vperm.xlu0 %2162, %v137
  %v2164 = vpop.permute.xlu0 %2163
  %2167 = vset.pattern.permute.xlu0 5
  %2168 = vperm.xlu0 %2167, %v138
  %v2169 = vpop.permute.xlu0 %2168
  %2172 = vset.pattern.permute.xlu0 5
  %2173 = vperm.xlu0 %2172, %v139
  %v2174 = vpop.permute.xlu0 %2173
  %2177 = vset.pattern.permute.xlu0 5
  %2178 = vperm.xlu0 %2177, %v140
  %v2179 = vpop.permute.xlu0 %2178
  %2182 = vset.pattern.permute.xlu0 5
  %2183 = vperm.xlu0 %2182, %v141
  %v2184 = vpop.permute.xlu0 %2183
  %2187 = vset.pattern.permute.xlu0 5
  %2188 = vperm.xlu0 %2187, %v142
  %v2189 = vpop.permute.xlu0 %2188
  %v2191 = vmul.f32 %v1807, %v1874
  %v2192 = vmul.f32 %v1808, %v1879
  %v2193 = vmul.f32 %v1809, %v1884
  %v2194 = vmul.f32 %v1810, %v1889
  %v2195 = vmul.f32 %v1811, %v1894
  %v2196 = vmul.f32 %v1812, %v1899
  %v2197 = vmul.f32 %v1813, %v1904
  %v2198 = vmul.f32 %v1814, %v1909
  %v2199 = vmul.f32 %v1815, %v1914
  %v2200 = vmul.f32 %v1816, %v1919
  %v2201 = vmul.f32 %v1817, %v1924
  %v2202 = vmul.f32 %v1818, %v1929
  %v2203 = vmul.f32 %v1819, %v1934
  %v2204 = vmul.f32 %v1820, %v1939
  %v2205 = vmul.f32 %v1821, %v1944
  %v2206 = vmul.f32 %v1822, %v1949
  %v2207 = vmul.f32 %v1823, %v1954
  %v2208 = vmul.f32 %v1824, %v1959
  %v2209 = vmul.f32 %v1825, %v1964
  %v2210 = vmul.f32 %v1826, %v1969
  %v2211 = vmul.f32 %v1827, %v1974
  %v2212 = vmul.f32 %v1828, %v1979
  %v2213 = vmul.f32 %v1829, %v1984
  %v2214 = vmul.f32 %v1830, %v1989
  %v2215 = vmul.f32 %v1831, %v1994
  %v2216 = vmul.f32 %v1832, %v1999
  %v2217 = vmul.f32 %v1833, %v2004
  %v2218 = vmul.f32 %v1834, %v2009
  %v2219 = vmul.f32 %v1835, %v2014
  %v2220 = vmul.f32 %v1836, %v2019
  %v2221 = vmul.f32 %v1837, %v2024
  %v2222 = vmul.f32 %v1838, %v2029
  %v2223 = vmul.f32 %v1839, %v2034
  %v2224 = vmul.f32 %v1840, %v2039
  %v2225 = vmul.f32 %v1841, %v2044
  %v2226 = vmul.f32 %v1842, %v2049
  %v2227 = vmul.f32 %v1843, %v2054
  %v2228 = vmul.f32 %v1844, %v2059
  %v2229 = vmul.f32 %v1845, %v2064
  %v2230 = vmul.f32 %v1846, %v2069
  %v2231 = vmul.f32 %v1847, %v2074
  %v2232 = vmul.f32 %v1848, %v2079
  %v2233 = vmul.f32 %v1849, %v2084
  %v2234 = vmul.f32 %v1850, %v2089
  %v2235 = vmul.f32 %v1851, %v2094
  %v2236 = vmul.f32 %v1852, %v2099
  %v2237 = vmul.f32 %v1853, %v2104
  %v2238 = vmul.f32 %v1854, %v2109
  %v2239 = vmul.f32 %v1855, %v2114
  %v2240 = vmul.f32 %v1856, %v2119
  %v2241 = vmul.f32 %v1857, %v2124
  %v2242 = vmul.f32 %v1858, %v2129
  %v2243 = vmul.f32 %v1859, %v2134
  %v2244 = vmul.f32 %v1860, %v2139
  %v2245 = vmul.f32 %v1861, %v2144
  %v2246 = vmul.f32 %v1862, %v2149
  %v2247 = vmul.f32 %v1863, %v2154
  %v2248 = vmul.f32 %v1864, %v2159
  %v2249 = vmul.f32 %v1865, %v2164
  %v2250 = vmul.f32 %v1866, %v2169
  %v2251 = vmul.f32 %v1867, %v2174
  %v2252 = vmul.f32 %v1868, %v2179
  %v2253 = vmul.f32 %v1869, %v2184
  %v2254 = vmul.f32 %v1870, %v2189
  %v2255 = vrot.slane %v2191, 6
  %v2256 = vrot.slane %v2192, 6
  %v2257 = vrot.slane %v2193, 6
  %v2258 = vrot.slane %v2194, 6
  %v2259 = vrot.slane %v2195, 6
  %v2260 = vrot.slane %v2196, 6
  %v2261 = vrot.slane %v2197, 6
  %v2262 = vrot.slane %v2198, 6
  %v2263 = vrot.slane %v2199, 6
  %v2264 = vrot.slane %v2200, 6
  %v2265 = vrot.slane %v2201, 6
  %v2266 = vrot.slane %v2202, 6
  %v2267 = vrot.slane %v2203, 6
  %v2268 = vrot.slane %v2204, 6
  %v2269 = vrot.slane %v2205, 6
  %v2270 = vrot.slane %v2206, 6
  %v2271 = vrot.slane %v2207, 6
  %v2272 = vrot.slane %v2208, 6
  %v2273 = vrot.slane %v2209, 6
  %v2274 = vrot.slane %v2210, 6
  %v2275 = vrot.slane %v2211, 6
  %v2276 = vrot.slane %v2212, 6
  %v2277 = vrot.slane %v2213, 6
  %v2278 = vrot.slane %v2214, 6
  %v2279 = vrot.slane %v2215, 6
  %v2280 = vrot.slane %v2216, 6
  %v2281 = vrot.slane %v2217, 6
  %v2282 = vrot.slane %v2218, 6
  %v2283 = vrot.slane %v2219, 6
  %v2284 = vrot.slane %v2220, 6
  %v2285 = vrot.slane %v2221, 6
  %v2286 = vrot.slane %v2222, 6
  %v2287 = vrot.slane %v2223, 6
  %v2288 = vrot.slane %v2224, 6
  %v2289 = vrot.slane %v2225, 6
  %v2290 = vrot.slane %v2226, 6
  %v2291 = vrot.slane %v2227, 6
  %v2292 = vrot.slane %v2228, 6
  %v2293 = vrot.slane %v2229, 6
  %v2294 = vrot.slane %v2230, 6
  %v2295 = vrot.slane %v2231, 6
  %v2296 = vrot.slane %v2232, 6
  %v2297 = vrot.slane %v2233, 6
  %v2298 = vrot.slane %v2234, 6
  %v2299 = vrot.slane %v2235, 6
  %v2300 = vrot.slane %v2236, 6
  %v2301 = vrot.slane %v2237, 6
  %v2302 = vrot.slane %v2238, 6
  %v2303 = vrot.slane %v2239, 6
  %v2304 = vrot.slane %v2240, 6
  %v2305 = vrot.slane %v2241, 6
  %v2306 = vrot.slane %v2242, 6
  %v2307 = vrot.slane %v2243, 6
  %v2308 = vrot.slane %v2244, 6
  %v2309 = vrot.slane %v2245, 6
  %v2310 = vrot.slane %v2246, 6
  %v2311 = vrot.slane %v2247, 6
  %v2312 = vrot.slane %v2248, 6
  %v2313 = vrot.slane %v2249, 6
  %v2314 = vrot.slane %v2250, 6
  %v2315 = vrot.slane %v2251, 6
  %v2316 = vrot.slane %v2252, 6
  %v2317 = vrot.slane %v2253, 6
  %v2318 = vrot.slane %v2254, 6
  %vm2319 = vcmp.lt.s32.totalorder %v208, 2
  %v2320 = vsel %vm2319, %v2317, %v2318
  %v2321 = vsel %vm2319, %v2316, %v2317
  %v2322 = vsel %vm2319, %v2315, %v2316
  %v2323 = vsel %vm2319, %v2314, %v2315
  %v2324 = vsel %vm2319, %v2313, %v2314
  %v2325 = vsel %vm2319, %v2312, %v2313
  %v2326 = vsel %vm2319, %v2311, %v2312
  %v2327 = vsel %vm2319, %v2310, %v2311
  %v2328 = vsel %vm2319, %v2309, %v2310
  %v2329 = vsel %vm2319, %v2308, %v2309
  %v2330 = vsel %vm2319, %v2307, %v2308
  %v2331 = vsel %vm2319, %v2306, %v2307
  %v2332 = vsel %vm2319, %v2305, %v2306
  %v2333 = vsel %vm2319, %v2304, %v2305
  %v2334 = vsel %vm2319, %v2303, %v2304
  %v2335 = vsel %vm2319, %v2302, %v2303
  %v2336 = vsel %vm2319, %v2301, %v2302
  %v2337 = vsel %vm2319, %v2300, %v2301
  %v2338 = vsel %vm2319, %v2299, %v2300
  %v2339 = vsel %vm2319, %v2298, %v2299
  %v2340 = vsel %vm2319, %v2297, %v2298
  %v2341 = vsel %vm2319, %v2296, %v2297
  %v2342 = vsel %vm2319, %v2295, %v2296
  %v2343 = vsel %vm2319, %v2294, %v2295
  %v2344 = vsel %vm2319, %v2293, %v2294
  %v2345 = vsel %vm2319, %v2292, %v2293
  %v2346 = vsel %vm2319, %v2291, %v2292
  %v2347 = vsel %vm2319, %v2290, %v2291
  %v2348 = vsel %vm2319, %v2289, %v2290
  %v2349 = vsel %vm2319, %v2288, %v2289
  %v2350 = vsel %vm2319, %v2287, %v2288
  %v2351 = vsel %vm2319, %v2286, %v2287
  %v2352 = vsel %vm2319, %v2285, %v2286
  %v2353 = vsel %vm2319, %v2284, %v2285
  %v2354 = vsel %vm2319, %v2283, %v2284
  %v2355 = vsel %vm2319, %v2282, %v2283
  %v2356 = vsel %vm2319, %v2281, %v2282
  %v2357 = vsel %vm2319, %v2280, %v2281
  %v2358 = vsel %vm2319, %v2279, %v2280
  %v2359 = vsel %vm2319, %v2278, %v2279
  %v2360 = vsel %vm2319, %v2277, %v2278
  %v2361 = vsel %vm2319, %v2276, %v2277
  %v2362 = vsel %vm2319, %v2275, %v2276
  %v2363 = vsel %vm2319, %v2274, %v2275
  %v2364 = vsel %vm2319, %v2273, %v2274
  %v2365 = vsel %vm2319, %v2272, %v2273
  %v2366 = vsel %vm2319, %v2271, %v2272
  %v2367 = vsel %vm2319, %v2270, %v2271
  %v2368 = vsel %vm2319, %v2269, %v2270
  %v2369 = vsel %vm2319, %v2268, %v2269
  %v2370 = vsel %vm2319, %v2267, %v2268
  %v2371 = vsel %vm2319, %v2266, %v2267
  %v2372 = vsel %vm2319, %v2265, %v2266
  %v2373 = vsel %vm2319, %v2264, %v2265
  %v2374 = vsel %vm2319, %v2263, %v2264
  %v2375 = vsel %vm2319, %v2262, %v2263
  %v2376 = vsel %vm2319, %v2261, %v2262
  %v2377 = vsel %vm2319, %v2260, %v2261
  %v2378 = vsel %vm2319, %v2259, %v2260
  %v2379 = vsel %vm2319, %v2258, %v2259
  %v2380 = vsel %vm2319, %v2257, %v2258
  %v2381 = vsel %vm2319, %v2256, %v2257
  %v2382 = vsel %vm2319, %v2255, %v2256
  %v2383 = vsel %vm2319, %v2318, %v2255
  %v2384 = vpack.c.bf16 %v2383, %v2383
  %v2385 = vpack.c.bf16 %v2382, %v2382
  %v2386 = vpack.c.bf16 %v2381, %v2381
  %v2387 = vpack.c.bf16 %v2380, %v2380
  %v2388 = vpack.c.bf16 %v2379, %v2379
  %v2389 = vpack.c.bf16 %v2378, %v2378
  %v2390 = vpack.c.bf16 %v2377, %v2377
  %v2391 = vpack.c.bf16 %v2376, %v2376
  %v2392 = vpack.c.bf16 %v2375, %v2375
  %v2393 = vpack.c.bf16 %v2374, %v2374
  %v2394 = vpack.c.bf16 %v2373, %v2373
  %v2395 = vpack.c.bf16 %v2372, %v2372
  %v2396 = vpack.c.bf16 %v2371, %v2371
  %v2397 = vpack.c.bf16 %v2370, %v2370
  %v2398 = vpack.c.bf16 %v2369, %v2369
  %v2399 = vpack.c.bf16 %v2368, %v2368
  %v2400 = vpack.c.bf16 %v2367, %v2367
  %v2401 = vpack.c.bf16 %v2366, %v2366
  %v2402 = vpack.c.bf16 %v2365, %v2365
  %v2403 = vpack.c.bf16 %v2364, %v2364
  %v2404 = vpack.c.bf16 %v2363, %v2363
  %v2405 = vpack.c.bf16 %v2362, %v2362
  %v2406 = vpack.c.bf16 %v2361, %v2361
  %v2407 = vpack.c.bf16 %v2360, %v2360
  %v2408 = vpack.c.bf16 %v2359, %v2359
  %v2409 = vpack.c.bf16 %v2358, %v2358
  %v2410 = vpack.c.bf16 %v2357, %v2357
  %v2411 = vpack.c.bf16 %v2356, %v2356
  %v2412 = vpack.c.bf16 %v2355, %v2355
  %v2413 = vpack.c.bf16 %v2354, %v2354
  %v2414 = vpack.c.bf16 %v2353, %v2353
  %v2415 = vpack.c.bf16 %v2352, %v2352
  %v2416 = vpack.c.bf16 %v2351, %v2351
  %v2417 = vpack.c.bf16 %v2350, %v2350
  %v2418 = vpack.c.bf16 %v2349, %v2349
  %v2419 = vpack.c.bf16 %v2348, %v2348
  %v2420 = vpack.c.bf16 %v2347, %v2347
  %v2421 = vpack.c.bf16 %v2346, %v2346
  %v2422 = vpack.c.bf16 %v2345, %v2345
  %v2423 = vpack.c.bf16 %v2344, %v2344
  %v2424 = vpack.c.bf16 %v2343, %v2343
  %v2425 = vpack.c.bf16 %v2342, %v2342
  %v2426 = vpack.c.bf16 %v2341, %v2341
  %v2427 = vpack.c.bf16 %v2340, %v2340
  %v2428 = vpack.c.bf16 %v2339, %v2339
  %v2429 = vpack.c.bf16 %v2338, %v2338
  %v2430 = vpack.c.bf16 %v2337, %v2337
  %v2431 = vpack.c.bf16 %v2336, %v2336
  %v2432 = vpack.c.bf16 %v2335, %v2335
  %v2433 = vpack.c.bf16 %v2334, %v2334
  %v2434 = vpack.c.bf16 %v2333, %v2333
  %v2435 = vpack.c.bf16 %v2332, %v2332
  %v2436 = vpack.c.bf16 %v2331, %v2331
  %v2437 = vpack.c.bf16 %v2330, %v2330
  %v2438 = vpack.c.bf16 %v2329, %v2329
  %v2439 = vpack.c.bf16 %v2328, %v2328
  %v2440 = vpack.c.bf16 %v2327, %v2327
  %v2441 = vpack.c.bf16 %v2326, %v2326
  %v2442 = vpack.c.bf16 %v2325, %v2325
  %v2443 = vpack.c.bf16 %v2324, %v2324
  %v2444 = vpack.c.bf16 %v2323, %v2323
  %v2445 = vpack.c.bf16 %v2322, %v2322
  %v2446 = vpack.c.bf16 %v2321, %v2321
  %v2447 = vpack.c.bf16 %v2320, %v2320
  %v2448 = vrot.slane %v2191, 7
  %v2449 = vrot.slane %v2192, 7
  %v2450 = vrot.slane %v2193, 7
  %v2451 = vrot.slane %v2194, 7
  %v2452 = vrot.slane %v2195, 7
  %v2453 = vrot.slane %v2196, 7
  %v2454 = vrot.slane %v2197, 7
  %v2455 = vrot.slane %v2198, 7
  %v2456 = vrot.slane %v2199, 7
  %v2457 = vrot.slane %v2200, 7
  %v2458 = vrot.slane %v2201, 7
  %v2459 = vrot.slane %v2202, 7
  %v2460 = vrot.slane %v2203, 7
  %v2461 = vrot.slane %v2204, 7
  %v2462 = vrot.slane %v2205, 7
  %v2463 = vrot.slane %v2206, 7
  %v2464 = vrot.slane %v2207, 7
  %v2465 = vrot.slane %v2208, 7
  %v2466 = vrot.slane %v2209, 7
  %v2467 = vrot.slane %v2210, 7
  %v2468 = vrot.slane %v2211, 7
  %v2469 = vrot.slane %v2212, 7
  %v2470 = vrot.slane %v2213, 7
  %v2471 = vrot.slane %v2214, 7
  %v2472 = vrot.slane %v2215, 7
  %v2473 = vrot.slane %v2216, 7
  %v2474 = vrot.slane %v2217, 7
  %v2475 = vrot.slane %v2218, 7
  %v2476 = vrot.slane %v2219, 7
  %v2477 = vrot.slane %v2220, 7
  %v2478 = vrot.slane %v2221, 7
  %v2479 = vrot.slane %v2222, 7
  %v2480 = vrot.slane %v2223, 7
  %v2481 = vrot.slane %v2224, 7
  %v2482 = vrot.slane %v2225, 7
  %v2483 = vrot.slane %v2226, 7
  %v2484 = vrot.slane %v2227, 7
  %v2485 = vrot.slane %v2228, 7
  %v2486 = vrot.slane %v2229, 7
  %v2487 = vrot.slane %v2230, 7
  %v2488 = vrot.slane %v2231, 7
  %v2489 = vrot.slane %v2232, 7
  %v2490 = vrot.slane %v2233, 7
  %v2491 = vrot.slane %v2234, 7
  %v2492 = vrot.slane %v2235, 7
  %v2493 = vrot.slane %v2236, 7
  %v2494 = vrot.slane %v2237, 7
  %v2495 = vrot.slane %v2238, 7
  %v2496 = vrot.slane %v2239, 7
  %v2497 = vrot.slane %v2240, 7
  %v2498 = vrot.slane %v2241, 7
  %v2499 = vrot.slane %v2242, 7
  %v2500 = vrot.slane %v2243, 7
  %v2501 = vrot.slane %v2244, 7
  %v2502 = vrot.slane %v2245, 7
  %v2503 = vrot.slane %v2246, 7
  %v2504 = vrot.slane %v2247, 7
  %v2505 = vrot.slane %v2248, 7
  %v2506 = vrot.slane %v2249, 7
  %v2507 = vrot.slane %v2250, 7
  %v2508 = vrot.slane %v2251, 7
  %v2509 = vrot.slane %v2252, 7
  %v2510 = vrot.slane %v2253, 7
  %v2511 = vrot.slane %v2254, 7
  %v2512 = vsel %vm209, %v2510, %v2511
  %v2513 = vsel %vm209, %v2509, %v2510
  %v2514 = vsel %vm209, %v2508, %v2509
  %v2515 = vsel %vm209, %v2507, %v2508
  %v2516 = vsel %vm209, %v2506, %v2507
  %v2517 = vsel %vm209, %v2505, %v2506
  %v2518 = vsel %vm209, %v2504, %v2505
  %v2519 = vsel %vm209, %v2503, %v2504
  %v2520 = vsel %vm209, %v2502, %v2503
  %v2521 = vsel %vm209, %v2501, %v2502
  %v2522 = vsel %vm209, %v2500, %v2501
  %v2523 = vsel %vm209, %v2499, %v2500
  %v2524 = vsel %vm209, %v2498, %v2499
  %v2525 = vsel %vm209, %v2497, %v2498
  %v2526 = vsel %vm209, %v2496, %v2497
  %v2527 = vsel %vm209, %v2495, %v2496
  %v2528 = vsel %vm209, %v2494, %v2495
  %v2529 = vsel %vm209, %v2493, %v2494
  %v2530 = vsel %vm209, %v2492, %v2493
  %v2531 = vsel %vm209, %v2491, %v2492
  %v2532 = vsel %vm209, %v2490, %v2491
  %v2533 = vsel %vm209, %v2489, %v2490
  %v2534 = vsel %vm209, %v2488, %v2489
  %v2535 = vsel %vm209, %v2487, %v2488
  %v2536 = vsel %vm209, %v2486, %v2487
  %v2537 = vsel %vm209, %v2485, %v2486
  %v2538 = vsel %vm209, %v2484, %v2485
  %v2539 = vsel %vm209, %v2483, %v2484
  %v2540 = vsel %vm209, %v2482, %v2483
  %v2541 = vsel %vm209, %v2481, %v2482
  %v2542 = vsel %vm209, %v2480, %v2481
  %v2543 = vsel %vm209, %v2479, %v2480
  %v2544 = vsel %vm209, %v2478, %v2479
  %v2545 = vsel %vm209, %v2477, %v2478
  %v2546 = vsel %vm209, %v2476, %v2477
  %v2547 = vsel %vm209, %v2475, %v2476
  %v2548 = vsel %vm209, %v2474, %v2475
  %v2549 = vsel %vm209, %v2473, %v2474
  %v2550 = vsel %vm209, %v2472, %v2473
  %v2551 = vsel %vm209, %v2471, %v2472
  %v2552 = vsel %vm209, %v2470, %v2471
  %v2553 = vsel %vm209, %v2469, %v2470
  %v2554 = vsel %vm209, %v2468, %v2469
  %v2555 = vsel %vm209, %v2467, %v2468
  %v2556 = vsel %vm209, %v2466, %v2467
  %v2557 = vsel %vm209, %v2465, %v2466
  %v2558 = vsel %vm209, %v2464, %v2465
  %v2559 = vsel %vm209, %v2463, %v2464
  %v2560 = vsel %vm209, %v2462, %v2463
  %v2561 = vsel %vm209, %v2461, %v2462
  %v2562 = vsel %vm209, %v2460, %v2461
  %v2563 = vsel %vm209, %v2459, %v2460
  %v2564 = vsel %vm209, %v2458, %v2459
  %v2565 = vsel %vm209, %v2457, %v2458
  %v2566 = vsel %vm209, %v2456, %v2457
  %v2567 = vsel %vm209, %v2455, %v2456
  %v2568 = vsel %vm209, %v2454, %v2455
  %v2569 = vsel %vm209, %v2453, %v2454
  %v2570 = vsel %vm209, %v2452, %v2453
  %v2571 = vsel %vm209, %v2451, %v2452
  %v2572 = vsel %vm209, %v2450, %v2451
  %v2573 = vsel %vm209, %v2449, %v2450
  %v2574 = vsel %vm209, %v2448, %v2449
  %v2575 = vsel %vm209, %v2511, %v2448
  %v2576 = vpack.c.bf16 %v2575, %v2575
  %v2577 = vpack.c.bf16 %v2574, %v2574
  %v2578 = vpack.c.bf16 %v2573, %v2573
  %v2579 = vpack.c.bf16 %v2572, %v2572
  %v2580 = vpack.c.bf16 %v2571, %v2571
  %v2581 = vpack.c.bf16 %v2570, %v2570
  %v2582 = vpack.c.bf16 %v2569, %v2569
  %v2583 = vpack.c.bf16 %v2568, %v2568
  %v2584 = vpack.c.bf16 %v2567, %v2567
  %v2585 = vpack.c.bf16 %v2566, %v2566
  %v2586 = vpack.c.bf16 %v2565, %v2565
  %v2587 = vpack.c.bf16 %v2564, %v2564
  %v2588 = vpack.c.bf16 %v2563, %v2563
  %v2589 = vpack.c.bf16 %v2562, %v2562
  %v2590 = vpack.c.bf16 %v2561, %v2561
  %v2591 = vpack.c.bf16 %v2560, %v2560
  %v2592 = vpack.c.bf16 %v2559, %v2559
  %v2593 = vpack.c.bf16 %v2558, %v2558
  %v2594 = vpack.c.bf16 %v2557, %v2557
  %v2595 = vpack.c.bf16 %v2556, %v2556
  %v2596 = vpack.c.bf16 %v2555, %v2555
  %v2597 = vpack.c.bf16 %v2554, %v2554
  %v2598 = vpack.c.bf16 %v2553, %v2553
  %v2599 = vpack.c.bf16 %v2552, %v2552
  %v2600 = vpack.c.bf16 %v2551, %v2551
  %v2601 = vpack.c.bf16 %v2550, %v2550
  %v2602 = vpack.c.bf16 %v2549, %v2549
  %v2603 = vpack.c.bf16 %v2548, %v2548
  %v2604 = vpack.c.bf16 %v2547, %v2547
  %v2605 = vpack.c.bf16 %v2546, %v2546
  %v2606 = vpack.c.bf16 %v2545, %v2545
  %v2607 = vpack.c.bf16 %v2544, %v2544
  %v2608 = vpack.c.bf16 %v2543, %v2543
  %v2609 = vpack.c.bf16 %v2542, %v2542
  %v2610 = vpack.c.bf16 %v2541, %v2541
  %v2611 = vpack.c.bf16 %v2540, %v2540
  %v2612 = vpack.c.bf16 %v2539, %v2539
  %v2613 = vpack.c.bf16 %v2538, %v2538
  %v2614 = vpack.c.bf16 %v2537, %v2537
  %v2615 = vpack.c.bf16 %v2536, %v2536
  %v2616 = vpack.c.bf16 %v2535, %v2535
  %v2617 = vpack.c.bf16 %v2534, %v2534
  %v2618 = vpack.c.bf16 %v2533, %v2533
  %v2619 = vpack.c.bf16 %v2532, %v2532
  %v2620 = vpack.c.bf16 %v2531, %v2531
  %v2621 = vpack.c.bf16 %v2530, %v2530
  %v2622 = vpack.c.bf16 %v2529, %v2529
  %v2623 = vpack.c.bf16 %v2528, %v2528
  %v2624 = vpack.c.bf16 %v2527, %v2527
  %v2625 = vpack.c.bf16 %v2526, %v2526
  %v2626 = vpack.c.bf16 %v2525, %v2525
  %v2627 = vpack.c.bf16 %v2524, %v2524
  %v2628 = vpack.c.bf16 %v2523, %v2523
  %v2629 = vpack.c.bf16 %v2522, %v2522
  %v2630 = vpack.c.bf16 %v2521, %v2521
  %v2631 = vpack.c.bf16 %v2520, %v2520
  %v2632 = vpack.c.bf16 %v2519, %v2519
  %v2633 = vpack.c.bf16 %v2518, %v2518
  %v2634 = vpack.c.bf16 %v2517, %v2517
  %v2635 = vpack.c.bf16 %v2516, %v2516
  %v2636 = vpack.c.bf16 %v2515, %v2515
  %v2637 = vpack.c.bf16 %v2514, %v2514
  %v2638 = vpack.c.bf16 %v2513, %v2513
  %v2639 = vpack.c.bf16 %v2512, %v2512
  %v2640 = vpack.c.bf16 %v2191, %v2191
  %v2641 = vpack.c.bf16 %v2192, %v2192
  %v2642 = vpack.c.bf16 %v2193, %v2193
  %v2643 = vpack.c.bf16 %v2194, %v2194
  %v2644 = vpack.c.bf16 %v2195, %v2195
  %v2645 = vpack.c.bf16 %v2196, %v2196
  %v2646 = vpack.c.bf16 %v2197, %v2197
  %v2647 = vpack.c.bf16 %v2198, %v2198
  %v2648 = vpack.c.bf16 %v2199, %v2199
  %v2649 = vpack.c.bf16 %v2200, %v2200
  %v2650 = vpack.c.bf16 %v2201, %v2201
  %v2651 = vpack.c.bf16 %v2202, %v2202
  %v2652 = vpack.c.bf16 %v2203, %v2203
  %v2653 = vpack.c.bf16 %v2204, %v2204
  %v2654 = vpack.c.bf16 %v2205, %v2205
  %v2655 = vpack.c.bf16 %v2206, %v2206
  %v2656 = vpack.c.bf16 %v2207, %v2207
  %v2657 = vpack.c.bf16 %v2208, %v2208
  %v2658 = vpack.c.bf16 %v2209, %v2209
  %v2659 = vpack.c.bf16 %v2210, %v2210
  %v2660 = vpack.c.bf16 %v2211, %v2211
  %v2661 = vpack.c.bf16 %v2212, %v2212
  %v2662 = vpack.c.bf16 %v2213, %v2213
  %v2663 = vpack.c.bf16 %v2214, %v2214
  %v2664 = vpack.c.bf16 %v2215, %v2215
  %v2665 = vpack.c.bf16 %v2216, %v2216
  %v2666 = vpack.c.bf16 %v2217, %v2217
  %v2667 = vpack.c.bf16 %v2218, %v2218
  %v2668 = vpack.c.bf16 %v2219, %v2219
  %v2669 = vpack.c.bf16 %v2220, %v2220
  %v2670 = vpack.c.bf16 %v2221, %v2221
  %v2671 = vpack.c.bf16 %v2222, %v2222
  %v2672 = vpack.c.bf16 %v2223, %v2223
  %v2673 = vpack.c.bf16 %v2224, %v2224
  %v2674 = vpack.c.bf16 %v2225, %v2225
  %v2675 = vpack.c.bf16 %v2226, %v2226
  %v2676 = vpack.c.bf16 %v2227, %v2227
  %v2677 = vpack.c.bf16 %v2228, %v2228
  %v2678 = vpack.c.bf16 %v2229, %v2229
  %v2679 = vpack.c.bf16 %v2230, %v2230
  %v2680 = vpack.c.bf16 %v2231, %v2231
  %v2681 = vpack.c.bf16 %v2232, %v2232
  %v2682 = vpack.c.bf16 %v2233, %v2233
  %v2683 = vpack.c.bf16 %v2234, %v2234
  %v2684 = vpack.c.bf16 %v2235, %v2235
  %v2685 = vpack.c.bf16 %v2236, %v2236
  %v2686 = vpack.c.bf16 %v2237, %v2237
  %v2687 = vpack.c.bf16 %v2238, %v2238
  %v2688 = vpack.c.bf16 %v2239, %v2239
  %v2689 = vpack.c.bf16 %v2240, %v2240
  %v2690 = vpack.c.bf16 %v2241, %v2241
  %v2691 = vpack.c.bf16 %v2242, %v2242
  %v2692 = vpack.c.bf16 %v2243, %v2243
  %v2693 = vpack.c.bf16 %v2244, %v2244
  %v2694 = vpack.c.bf16 %v2245, %v2245
  %v2695 = vpack.c.bf16 %v2246, %v2246
  %v2696 = vpack.c.bf16 %v2247, %v2247
  %v2697 = vpack.c.bf16 %v2248, %v2248
  %v2698 = vpack.c.bf16 %v2249, %v2249
  %v2699 = vpack.c.bf16 %v2250, %v2250
  %v2700 = vpack.c.bf16 %v2251, %v2251
  %v2701 = vpack.c.bf16 %v2252, %v2252
  %v2702 = vpack.c.bf16 %v2253, %v2253
  %v2703 = vpack.c.bf16 %v2254, %v2254
  %v2704 = vrot.slane %v2191, 1
  %v2705 = vrot.slane %v2192, 1
  %v2706 = vrot.slane %v2193, 1
  %v2707 = vrot.slane %v2194, 1
  %v2708 = vrot.slane %v2195, 1
  %v2709 = vrot.slane %v2196, 1
  %v2710 = vrot.slane %v2197, 1
  %v2711 = vrot.slane %v2198, 1
  %v2712 = vrot.slane %v2199, 1
  %v2713 = vrot.slane %v2200, 1
  %v2714 = vrot.slane %v2201, 1
  %v2715 = vrot.slane %v2202, 1
  %v2716 = vrot.slane %v2203, 1
  %v2717 = vrot.slane %v2204, 1
  %v2718 = vrot.slane %v2205, 1
  %v2719 = vrot.slane %v2206, 1
  %v2720 = vrot.slane %v2207, 1
  %v2721 = vrot.slane %v2208, 1
  %v2722 = vrot.slane %v2209, 1
  %v2723 = vrot.slane %v2210, 1
  %v2724 = vrot.slane %v2211, 1
  %v2725 = vrot.slane %v2212, 1
  %v2726 = vrot.slane %v2213, 1
  %v2727 = vrot.slane %v2214, 1
  %v2728 = vrot.slane %v2215, 1
  %v2729 = vrot.slane %v2216, 1
  %v2730 = vrot.slane %v2217, 1
  %v2731 = vrot.slane %v2218, 1
  %v2732 = vrot.slane %v2219, 1
  %v2733 = vrot.slane %v2220, 1
  %v2734 = vrot.slane %v2221, 1
  %v2735 = vrot.slane %v2222, 1
  %v2736 = vrot.slane %v2223, 1
  %v2737 = vrot.slane %v2224, 1
  %v2738 = vrot.slane %v2225, 1
  %v2739 = vrot.slane %v2226, 1
  %v2740 = vrot.slane %v2227, 1
  %v2741 = vrot.slane %v2228, 1
  %v2742 = vrot.slane %v2229, 1
  %v2743 = vrot.slane %v2230, 1
  %v2744 = vrot.slane %v2231, 1
  %v2745 = vrot.slane %v2232, 1
  %v2746 = vrot.slane %v2233, 1
  %v2747 = vrot.slane %v2234, 1
  %v2748 = vrot.slane %v2235, 1
  %v2749 = vrot.slane %v2236, 1
  %v2750 = vrot.slane %v2237, 1
  %v2751 = vrot.slane %v2238, 1
  %v2752 = vrot.slane %v2239, 1
  %v2753 = vrot.slane %v2240, 1
  %v2754 = vrot.slane %v2241, 1
  %v2755 = vrot.slane %v2242, 1
  %v2756 = vrot.slane %v2243, 1
  %v2757 = vrot.slane %v2244, 1
  %v2758 = vrot.slane %v2245, 1
  %v2759 = vrot.slane %v2246, 1
  %v2760 = vrot.slane %v2247, 1
  %v2761 = vrot.slane %v2248, 1
  %v2762 = vrot.slane %v2249, 1
  %v2763 = vrot.slane %v2250, 1
  %v2764 = vrot.slane %v2251, 1
  %v2765 = vrot.slane %v2252, 1
  %v2766 = vrot.slane %v2253, 1
  %v2767 = vrot.slane %v2254, 1
  %v2768 = vsel %vm402, %v2766, %v2767
  %v2769 = vsel %vm402, %v2765, %v2766
  %v2770 = vsel %vm402, %v2764, %v2765
  %v2771 = vsel %vm402, %v2763, %v2764
  %v2772 = vsel %vm402, %v2762, %v2763
  %v2773 = vsel %vm402, %v2761, %v2762
  %v2774 = vsel %vm402, %v2760, %v2761
  %v2775 = vsel %vm402, %v2759, %v2760
  %v2776 = vsel %vm402, %v2758, %v2759
  %v2777 = vsel %vm402, %v2757, %v2758
  %v2778 = vsel %vm402, %v2756, %v2757
  %v2779 = vsel %vm402, %v2755, %v2756
  %v2780 = vsel %vm402, %v2754, %v2755
  %v2781 = vsel %vm402, %v2753, %v2754
  %v2782 = vsel %vm402, %v2752, %v2753
  %v2783 = vsel %vm402, %v2751, %v2752
  %v2784 = vsel %vm402, %v2750, %v2751
  %v2785 = vsel %vm402, %v2749, %v2750
  %v2786 = vsel %vm402, %v2748, %v2749
  %v2787 = vsel %vm402, %v2747, %v2748
  %v2788 = vsel %vm402, %v2746, %v2747
  %v2789 = vsel %vm402, %v2745, %v2746
  %v2790 = vsel %vm402, %v2744, %v2745
  %v2791 = vsel %vm402, %v2743, %v2744
  %v2792 = vsel %vm402, %v2742, %v2743
  %v2793 = vsel %vm402, %v2741, %v2742
  %v2794 = vsel %vm402, %v2740, %v2741
  %v2795 = vsel %vm402, %v2739, %v2740
  %v2796 = vsel %vm402, %v2738, %v2739
  %v2797 = vsel %vm402, %v2737, %v2738
  %v2798 = vsel %vm402, %v2736, %v2737
  %v2799 = vsel %vm402, %v2735, %v2736
  %v2800 = vsel %vm402, %v2734, %v2735
  %v2801 = vsel %vm402, %v2733, %v2734
  %v2802 = vsel %vm402, %v2732, %v2733
  %v2803 = vsel %vm402, %v2731, %v2732
  %v2804 = vsel %vm402, %v2730, %v2731
  %v2805 = vsel %vm402, %v2729, %v2730
  %v2806 = vsel %vm402, %v2728, %v2729
  %v2807 = vsel %vm402, %v2727, %v2728
  %v2808 = vsel %vm402, %v2726, %v2727
  %v2809 = vsel %vm402, %v2725, %v2726
  %v2810 = vsel %vm402, %v2724, %v2725
  %v2811 = vsel %vm402, %v2723, %v2724
  %v2812 = vsel %vm402, %v2722, %v2723
  %v2813 = vsel %vm402, %v2721, %v2722
  %v2814 = vsel %vm402, %v2720, %v2721
  %v2815 = vsel %vm402, %v2719, %v2720
  %v2816 = vsel %vm402, %v2718, %v2719
  %v2817 = vsel %vm402, %v2717, %v2718
  %v2818 = vsel %vm402, %v2716, %v2717
  %v2819 = vsel %vm402, %v2715, %v2716
  %v2820 = vsel %vm402, %v2714, %v2715
  %v2821 = vsel %vm402, %v2713, %v2714
  %v2822 = vsel %vm402, %v2712, %v2713
  %v2823 = vsel %vm402, %v2711, %v2712
  %v2824 = vsel %vm402, %v2710, %v2711
  %v2825 = vsel %vm402, %v2709, %v2710
  %v2826 = vsel %vm402, %v2708, %v2709
  %v2827 = vsel %vm402, %v2707, %v2708
  %v2828 = vsel %vm402, %v2706, %v2707
  %v2829 = vsel %vm402, %v2705, %v2706
  %v2830 = vsel %vm402, %v2704, %v2705
  %v2831 = vsel %vm402, %v2767, %v2704
  %v2832 = vpack.c.bf16 %v2830, %v2830
  %v2833 = vpack.c.bf16 %v2829, %v2829
  %v2834 = vpack.c.bf16 %v2828, %v2828
  %v2835 = vpack.c.bf16 %v2827, %v2827
  %v2836 = vpack.c.bf16 %v2826, %v2826
  %v2837 = vpack.c.bf16 %v2825, %v2825
  %v2838 = vpack.c.bf16 %v2824, %v2824
  %v2839 = vpack.c.bf16 %v2823, %v2823
  %v2840 = vpack.c.bf16 %v2822, %v2822
  %v2841 = vpack.c.bf16 %v2821, %v2821
  %v2842 = vpack.c.bf16 %v2820, %v2820
  %v2843 = vpack.c.bf16 %v2819, %v2819
  %v2844 = vpack.c.bf16 %v2818, %v2818
  %v2845 = vpack.c.bf16 %v2817, %v2817
  %v2846 = vpack.c.bf16 %v2816, %v2816
  %v2847 = vpack.c.bf16 %v2815, %v2815
  %v2848 = vpack.c.bf16 %v2814, %v2814
  %v2849 = vpack.c.bf16 %v2813, %v2813
  %v2850 = vpack.c.bf16 %v2812, %v2812
  %v2851 = vpack.c.bf16 %v2811, %v2811
  %v2852 = vpack.c.bf16 %v2810, %v2810
  %v2853 = vpack.c.bf16 %v2809, %v2809
  %v2854 = vpack.c.bf16 %v2808, %v2808
  %v2855 = vpack.c.bf16 %v2807, %v2807
  %v2856 = vpack.c.bf16 %v2806, %v2806
  %v2857 = vpack.c.bf16 %v2805, %v2805
  %v2858 = vpack.c.bf16 %v2804, %v2804
  %v2859 = vpack.c.bf16 %v2803, %v2803
  %v2860 = vpack.c.bf16 %v2802, %v2802
  %v2861 = vpack.c.bf16 %v2801, %v2801
  %v2862 = vpack.c.bf16 %v2800, %v2800
  %v2863 = vpack.c.bf16 %v2799, %v2799
  %v2864 = vpack.c.bf16 %v2798, %v2798
  %v2865 = vpack.c.bf16 %v2797, %v2797
  %v2866 = vpack.c.bf16 %v2796, %v2796
  %v2867 = vpack.c.bf16 %v2795, %v2795
  %v2868 = vpack.c.bf16 %v2794, %v2794
  %v2869 = vpack.c.bf16 %v2793, %v2793
  %v2870 = vpack.c.bf16 %v2792, %v2792
  %v2871 = vpack.c.bf16 %v2791, %v2791
  %v2872 = vpack.c.bf16 %v2790, %v2790
  %v2873 = vpack.c.bf16 %v2789, %v2789
  %v2874 = vpack.c.bf16 %v2788, %v2788
  %v2875 = vpack.c.bf16 %v2787, %v2787
  %v2876 = vpack.c.bf16 %v2786, %v2786
  %v2877 = vpack.c.bf16 %v2785, %v2785
  %v2878 = vpack.c.bf16 %v2784, %v2784
  %v2879 = vpack.c.bf16 %v2783, %v2783
  %v2880 = vpack.c.bf16 %v2782, %v2782
  %v2881 = vpack.c.bf16 %v2781, %v2781
  %v2882 = vpack.c.bf16 %v2780, %v2780
  %v2883 = vpack.c.bf16 %v2779, %v2779
  %v2884 = vpack.c.bf16 %v2778, %v2778
  %v2885 = vpack.c.bf16 %v2777, %v2777
  %v2886 = vpack.c.bf16 %v2776, %v2776
  %v2887 = vpack.c.bf16 %v2775, %v2775
  %v2888 = vpack.c.bf16 %v2774, %v2774
  %v2889 = vpack.c.bf16 %v2773, %v2773
  %v2890 = vpack.c.bf16 %v2772, %v2772
  %v2891 = vpack.c.bf16 %v2771, %v2771
  %v2892 = vpack.c.bf16 %v2770, %v2770
  %v2893 = vpack.c.bf16 %v2769, %v2769
  %v2894 = vpack.c.bf16 %v2768, %v2768
  %v2895 = vpack.c.bf16 %v2831, %v2831
  %v2896 = vrot.slane %v2191, 2
  %v2897 = vrot.slane %v2192, 2
  %v2898 = vrot.slane %v2193, 2
  %v2899 = vrot.slane %v2194, 2
  %v2900 = vrot.slane %v2195, 2
  %v2901 = vrot.slane %v2196, 2
  %v2902 = vrot.slane %v2197, 2
  %v2903 = vrot.slane %v2198, 2
  %v2904 = vrot.slane %v2199, 2
  %v2905 = vrot.slane %v2200, 2
  %v2906 = vrot.slane %v2201, 2
  %v2907 = vrot.slane %v2202, 2
  %v2908 = vrot.slane %v2203, 2
  %v2909 = vrot.slane %v2204, 2
  %v2910 = vrot.slane %v2205, 2
  %v2911 = vrot.slane %v2206, 2
  %v2912 = vrot.slane %v2207, 2
  %v2913 = vrot.slane %v2208, 2
  %v2914 = vrot.slane %v2209, 2
  %v2915 = vrot.slane %v2210, 2
  %v2916 = vrot.slane %v2211, 2
  %v2917 = vrot.slane %v2212, 2
  %v2918 = vrot.slane %v2213, 2
  %v2919 = vrot.slane %v2214, 2
  %v2920 = vrot.slane %v2215, 2
  %v2921 = vrot.slane %v2216, 2
  %v2922 = vrot.slane %v2217, 2
  %v2923 = vrot.slane %v2218, 2
  %v2924 = vrot.slane %v2219, 2
  %v2925 = vrot.slane %v2220, 2
  %v2926 = vrot.slane %v2221, 2
  %v2927 = vrot.slane %v2222, 2
  %v2928 = vrot.slane %v2223, 2
  %v2929 = vrot.slane %v2224, 2
  %v2930 = vrot.slane %v2225, 2
  %v2931 = vrot.slane %v2226, 2
  %v2932 = vrot.slane %v2227, 2
  %v2933 = vrot.slane %v2228, 2
  %v2934 = vrot.slane %v2229, 2
  %v2935 = vrot.slane %v2230, 2
  %v2936 = vrot.slane %v2231, 2
  %v2937 = vrot.slane %v2232, 2
  %v2938 = vrot.slane %v2233, 2
  %v2939 = vrot.slane %v2234, 2
  %v2940 = vrot.slane %v2235, 2
  %v2941 = vrot.slane %v2236, 2
  %v2942 = vrot.slane %v2237, 2
  %v2943 = vrot.slane %v2238, 2
  %v2944 = vrot.slane %v2239, 2
  %v2945 = vrot.slane %v2240, 2
  %v2946 = vrot.slane %v2241, 2
  %v2947 = vrot.slane %v2242, 2
  %v2948 = vrot.slane %v2243, 2
  %v2949 = vrot.slane %v2244, 2
  %v2950 = vrot.slane %v2245, 2
  %v2951 = vrot.slane %v2246, 2
  %v2952 = vrot.slane %v2247, 2
  %v2953 = vrot.slane %v2248, 2
  %v2954 = vrot.slane %v2249, 2
  %v2955 = vrot.slane %v2250, 2
  %v2956 = vrot.slane %v2251, 2
  %v2957 = vrot.slane %v2252, 2
  %v2958 = vrot.slane %v2253, 2
  %v2959 = vrot.slane %v2254, 2
  %vm2960 = vcmp.lt.s32.totalorder %v208, 6
  %v2961 = vsel %vm2960, %v2958, %v2959
  %v2962 = vsel %vm2960, %v2957, %v2958
  %v2963 = vsel %vm2960, %v2956, %v2957
  %v2964 = vsel %vm2960, %v2955, %v2956
  %v2965 = vsel %vm2960, %v2954, %v2955
  %v2966 = vsel %vm2960, %v2953, %v2954
  %v2967 = vsel %vm2960, %v2952, %v2953
  %v2968 = vsel %vm2960, %v2951, %v2952
  %v2969 = vsel %vm2960, %v2950, %v2951
  %v2970 = vsel %vm2960, %v2949, %v2950
  %v2971 = vsel %vm2960, %v2948, %v2949
  %v2972 = vsel %vm2960, %v2947, %v2948
  %v2973 = vsel %vm2960, %v2946, %v2947
  %v2974 = vsel %vm2960, %v2945, %v2946
  %v2975 = vsel %vm2960, %v2944, %v2945
  %v2976 = vsel %vm2960, %v2943, %v2944
  %v2977 = vsel %vm2960, %v2942, %v2943
  %v2978 = vsel %vm2960, %v2941, %v2942
  %v2979 = vsel %vm2960, %v2940, %v2941
  %v2980 = vsel %vm2960, %v2939, %v2940
  %v2981 = vsel %vm2960, %v2938, %v2939
  %v2982 = vsel %vm2960, %v2937, %v2938
  %v2983 = vsel %vm2960, %v2936, %v2937
  %v2984 = vsel %vm2960, %v2935, %v2936
  %v2985 = vsel %vm2960, %v2934, %v2935
  %v2986 = vsel %vm2960, %v2933, %v2934
  %v2987 = vsel %vm2960, %v2932, %v2933
  %v2988 = vsel %vm2960, %v2931, %v2932
  %v2989 = vsel %vm2960, %v2930, %v2931
  %v2990 = vsel %vm2960, %v2929, %v2930
  %v2991 = vsel %vm2960, %v2928, %v2929
  %v2992 = vsel %vm2960, %v2927, %v2928
  %v2993 = vsel %vm2960, %v2926, %v2927
  %v2994 = vsel %vm2960, %v2925, %v2926
  %v2995 = vsel %vm2960, %v2924, %v2925
  %v2996 = vsel %vm2960, %v2923, %v2924
  %v2997 = vsel %vm2960, %v2922, %v2923
  %v2998 = vsel %vm2960, %v2921, %v2922
  %v2999 = vsel %vm2960, %v2920, %v2921
  %v3000 = vsel %vm2960, %v2919, %v2920
  %v3001 = vsel %vm2960, %v2918, %v2919
  %v3002 = vsel %vm2960, %v2917, %v2918
  %v3003 = vsel %vm2960, %v2916, %v2917
  %v3004 = vsel %vm2960, %v2915, %v2916
  %v3005 = vsel %vm2960, %v2914, %v2915
  %v3006 = vsel %vm2960, %v2913, %v2914
  %v3007 = vsel %vm2960, %v2912, %v2913
  %v3008 = vsel %vm2960, %v2911, %v2912
  %v3009 = vsel %vm2960, %v2910, %v2911
  %v3010 = vsel %vm2960, %v2909, %v2910
  %v3011 = vsel %vm2960, %v2908, %v2909
  %v3012 = vsel %vm2960, %v2907, %v2908
  %v3013 = vsel %vm2960, %v2906, %v2907
  %v3014 = vsel %vm2960, %v2905, %v2906
  %v3015 = vsel %vm2960, %v2904, %v2905
  %v3016 = vsel %vm2960, %v2903, %v2904
  %v3017 = vsel %vm2960, %v2902, %v2903
  %v3018 = vsel %vm2960, %v2901, %v2902
  %v3019 = vsel %vm2960, %v2900, %v2901
  %v3020 = vsel %vm2960, %v2899, %v2900
  %v3021 = vsel %vm2960, %v2898, %v2899
  %v3022 = vsel %vm2960, %v2897, %v2898
  %v3023 = vsel %vm2960, %v2896, %v2897
  %v3024 = vsel %vm2960, %v2959, %v2896
  %v3025 = vpack.c.bf16 %v3023, %v3023
  %v3026 = vpack.c.bf16 %v3022, %v3022
  %v3027 = vpack.c.bf16 %v3021, %v3021
  %v3028 = vpack.c.bf16 %v3020, %v3020
  %v3029 = vpack.c.bf16 %v3019, %v3019
  %v3030 = vpack.c.bf16 %v3018, %v3018
  %v3031 = vpack.c.bf16 %v3017, %v3017
  %v3032 = vpack.c.bf16 %v3016, %v3016
  %v3033 = vpack.c.bf16 %v3015, %v3015
  %v3034 = vpack.c.bf16 %v3014, %v3014
  %v3035 = vpack.c.bf16 %v3013, %v3013
  %v3036 = vpack.c.bf16 %v3012, %v3012
  %v3037 = vpack.c.bf16 %v3011, %v3011
  %v3038 = vpack.c.bf16 %v3010, %v3010
  %v3039 = vpack.c.bf16 %v3009, %v3009
  %v3040 = vpack.c.bf16 %v3008, %v3008
  %v3041 = vpack.c.bf16 %v3007, %v3007
  %v3042 = vpack.c.bf16 %v3006, %v3006
  %v3043 = vpack.c.bf16 %v3005, %v3005
  %v3044 = vpack.c.bf16 %v3004, %v3004
  %v3045 = vpack.c.bf16 %v3003, %v3003
  %v3046 = vpack.c.bf16 %v3002, %v3002
  %v3047 = vpack.c.bf16 %v3001, %v3001
  %v3048 = vpack.c.bf16 %v3000, %v3000
  %v3049 = vpack.c.bf16 %v2999, %v2999
  %v3050 = vpack.c.bf16 %v2998, %v2998
  %v3051 = vpack.c.bf16 %v2997, %v2997
  %v3052 = vpack.c.bf16 %v2996, %v2996
  %v3053 = vpack.c.bf16 %v2995, %v2995
  %v3054 = vpack.c.bf16 %v2994, %v2994
  %v3055 = vpack.c.bf16 %v2993, %v2993
  %v3056 = vpack.c.bf16 %v2992, %v2992
  %v3057 = vpack.c.bf16 %v2991, %v2991
  %v3058 = vpack.c.bf16 %v2990, %v2990
  %v3059 = vpack.c.bf16 %v2989, %v2989
  %v3060 = vpack.c.bf16 %v2988, %v2988
  %v3061 = vpack.c.bf16 %v2987, %v2987
  %v3062 = vpack.c.bf16 %v2986, %v2986
  %v3063 = vpack.c.bf16 %v2985, %v2985
  %v3064 = vpack.c.bf16 %v2984, %v2984
  %v3065 = vpack.c.bf16 %v2983, %v2983
  %v3066 = vpack.c.bf16 %v2982, %v2982
  %v3067 = vpack.c.bf16 %v2981, %v2981
  %v3068 = vpack.c.bf16 %v2980, %v2980
  %v3069 = vpack.c.bf16 %v2979, %v2979
  %v3070 = vpack.c.bf16 %v2978, %v2978
  %v3071 = vpack.c.bf16 %v2977, %v2977
  %v3072 = vpack.c.bf16 %v2976, %v2976
  %v3073 = vpack.c.bf16 %v2975, %v2975
  %v3074 = vpack.c.bf16 %v2974, %v2974
  %v3075 = vpack.c.bf16 %v2973, %v2973
  %v3076 = vpack.c.bf16 %v2972, %v2972
  %v3077 = vpack.c.bf16 %v2971, %v2971
  %v3078 = vpack.c.bf16 %v2970, %v2970
  %v3079 = vpack.c.bf16 %v2969, %v2969
  %v3080 = vpack.c.bf16 %v2968, %v2968
  %v3081 = vpack.c.bf16 %v2967, %v2967
  %v3082 = vpack.c.bf16 %v2966, %v2966
  %v3083 = vpack.c.bf16 %v2965, %v2965
  %v3084 = vpack.c.bf16 %v2964, %v2964
  %v3085 = vpack.c.bf16 %v2963, %v2963
  %v3086 = vpack.c.bf16 %v2962, %v2962
  %v3087 = vpack.c.bf16 %v2961, %v2961
  %v3088 = vpack.c.bf16 %v3024, %v3024
  %v3153 = vunpack.c.l.b16 %v2384
  %v3154 = vunpack.c.l.b16 %v2385
  %v3155 = vunpack.c.l.b16 %v2386
  %v3156 = vunpack.c.l.b16 %v2387
  %v3157 = vunpack.c.l.b16 %v2388
  %v3158 = vunpack.c.l.b16 %v2389
  %v3159 = vunpack.c.l.b16 %v2390
  %v3160 = vunpack.c.l.b16 %v2391
  %v3161 = vunpack.c.l.b16 %v2392
  %v3162 = vunpack.c.l.b16 %v2393
  %v3163 = vunpack.c.l.b16 %v2394
  %v3164 = vunpack.c.l.b16 %v2395
  %v3165 = vunpack.c.l.b16 %v2396
  %v3166 = vunpack.c.l.b16 %v2397
  %v3167 = vunpack.c.l.b16 %v2398
  %v3168 = vunpack.c.l.b16 %v2399
  %v3169 = vunpack.c.l.b16 %v2400
  %v3170 = vunpack.c.l.b16 %v2401
  %v3171 = vunpack.c.l.b16 %v2402
  %v3172 = vunpack.c.l.b16 %v2403
  %v3173 = vunpack.c.l.b16 %v2404
  %v3174 = vunpack.c.l.b16 %v2405
  %v3175 = vunpack.c.l.b16 %v2406
  %v3176 = vunpack.c.l.b16 %v2407
  %v3177 = vunpack.c.l.b16 %v2408
  %v3178 = vunpack.c.l.b16 %v2409
  %v3179 = vunpack.c.l.b16 %v2410
  %v3180 = vunpack.c.l.b16 %v2411
  %v3181 = vunpack.c.l.b16 %v2412
  %v3182 = vunpack.c.l.b16 %v2413
  %v3183 = vunpack.c.l.b16 %v2414
  %v3184 = vunpack.c.l.b16 %v2415
  %v3185 = vunpack.c.l.b16 %v2416
  %v3186 = vunpack.c.l.b16 %v2417
  %v3187 = vunpack.c.l.b16 %v2418
  %v3188 = vunpack.c.l.b16 %v2419
  %v3189 = vunpack.c.l.b16 %v2420
  %v3190 = vunpack.c.l.b16 %v2421
  %v3191 = vunpack.c.l.b16 %v2422
  %v3192 = vunpack.c.l.b16 %v2423
  %v3193 = vunpack.c.l.b16 %v2424
  %v3194 = vunpack.c.l.b16 %v2425
  %v3195 = vunpack.c.l.b16 %v2426
  %v3196 = vunpack.c.l.b16 %v2427
  %v3197 = vunpack.c.l.b16 %v2428
  %v3198 = vunpack.c.l.b16 %v2429
  %v3199 = vunpack.c.l.b16 %v2430
  %v3200 = vunpack.c.l.b16 %v2431
  %v3201 = vunpack.c.l.b16 %v2432
  %v3202 = vunpack.c.l.b16 %v2433
  %v3203 = vunpack.c.l.b16 %v2434
  %v3204 = vunpack.c.l.b16 %v2435
  %v3205 = vunpack.c.l.b16 %v2436
  %v3206 = vunpack.c.l.b16 %v2437
  %v3207 = vunpack.c.l.b16 %v2438
  %v3208 = vunpack.c.l.b16 %v2439
  %v3209 = vunpack.c.l.b16 %v2440
  %v3210 = vunpack.c.l.b16 %v2441
  %v3211 = vunpack.c.l.b16 %v2442
  %v3212 = vunpack.c.l.b16 %v2443
  %v3213 = vunpack.c.l.b16 %v2444
  %v3214 = vunpack.c.l.b16 %v2445
  %v3215 = vunpack.c.l.b16 %v2446
  %v3216 = vunpack.c.l.b16 %v2447
  %v3217 = vpack.c.b16 %v3154, %v3153
  %v3218 = vpack.c.b16 %v3156, %v3155
  %v3219 = vpack.c.b16 %v3158, %v3157
  %v3220 = vpack.c.b16 %v3160, %v3159
  %v3221 = vpack.c.b16 %v3162, %v3161
  %v3222 = vpack.c.b16 %v3164, %v3163
  %v3223 = vpack.c.b16 %v3166, %v3165
  %v3224 = vpack.c.b16 %v3168, %v3167
  %v3225 = vpack.c.b16 %v3170, %v3169
  %v3226 = vpack.c.b16 %v3172, %v3171
  %v3227 = vpack.c.b16 %v3174, %v3173
  %v3228 = vpack.c.b16 %v3176, %v3175
  %v3229 = vpack.c.b16 %v3178, %v3177
  %v3230 = vpack.c.b16 %v3180, %v3179
  %v3231 = vpack.c.b16 %v3182, %v3181
  %v3232 = vpack.c.b16 %v3184, %v3183
  %v3233 = vpack.c.b16 %v3186, %v3185
  %v3234 = vpack.c.b16 %v3188, %v3187
  %v3235 = vpack.c.b16 %v3190, %v3189
  %v3236 = vpack.c.b16 %v3192, %v3191
  %v3237 = vpack.c.b16 %v3194, %v3193
  %v3238 = vpack.c.b16 %v3196, %v3195
  %v3239 = vpack.c.b16 %v3198, %v3197
  %v3240 = vpack.c.b16 %v3200, %v3199
  %v3241 = vpack.c.b16 %v3202, %v3201
  %v3242 = vpack.c.b16 %v3204, %v3203
  %v3243 = vpack.c.b16 %v3206, %v3205
  %v3244 = vpack.c.b16 %v3208, %v3207
  %v3245 = vpack.c.b16 %v3210, %v3209
  %v3246 = vpack.c.b16 %v3212, %v3211
  %v3247 = vpack.c.b16 %v3214, %v3213
  %v3248 = vpack.c.b16 %v3216, %v3215
  %v3313 = vunpack.c.l.b16 %v2576
  %v3314 = vunpack.c.l.b16 %v2577
  %v3315 = vunpack.c.l.b16 %v2578
  %v3316 = vunpack.c.l.b16 %v2579
  %v3317 = vunpack.c.l.b16 %v2580
  %v3318 = vunpack.c.l.b16 %v2581
  %v3319 = vunpack.c.l.b16 %v2582
  %v3320 = vunpack.c.l.b16 %v2583
  %v3321 = vunpack.c.l.b16 %v2584
  %v3322 = vunpack.c.l.b16 %v2585
  %v3323 = vunpack.c.l.b16 %v2586
  %v3324 = vunpack.c.l.b16 %v2587
  %v3325 = vunpack.c.l.b16 %v2588
  %v3326 = vunpack.c.l.b16 %v2589
  %v3327 = vunpack.c.l.b16 %v2590
  %v3328 = vunpack.c.l.b16 %v2591
  %v3329 = vunpack.c.l.b16 %v2592
  %v3330 = vunpack.c.l.b16 %v2593
  %v3331 = vunpack.c.l.b16 %v2594
  %v3332 = vunpack.c.l.b16 %v2595
  %v3333 = vunpack.c.l.b16 %v2596
  %v3334 = vunpack.c.l.b16 %v2597
  %v3335 = vunpack.c.l.b16 %v2598
  %v3336 = vunpack.c.l.b16 %v2599
  %v3337 = vunpack.c.l.b16 %v2600
  %v3338 = vunpack.c.l.b16 %v2601
  %v3339 = vunpack.c.l.b16 %v2602
  %v3340 = vunpack.c.l.b16 %v2603
  %v3341 = vunpack.c.l.b16 %v2604
  %v3342 = vunpack.c.l.b16 %v2605
  %v3343 = vunpack.c.l.b16 %v2606
  %v3344 = vunpack.c.l.b16 %v2607
  %v3345 = vunpack.c.l.b16 %v2608
  %v3346 = vunpack.c.l.b16 %v2609
  %v3347 = vunpack.c.l.b16 %v2610
  %v3348 = vunpack.c.l.b16 %v2611
  %v3349 = vunpack.c.l.b16 %v2612
  %v3350 = vunpack.c.l.b16 %v2613
  %v3351 = vunpack.c.l.b16 %v2614
  %v3352 = vunpack.c.l.b16 %v2615
  %v3353 = vunpack.c.l.b16 %v2616
  %v3354 = vunpack.c.l.b16 %v2617
  %v3355 = vunpack.c.l.b16 %v2618
  %v3356 = vunpack.c.l.b16 %v2619
  %v3357 = vunpack.c.l.b16 %v2620
  %v3358 = vunpack.c.l.b16 %v2621
  %v3359 = vunpack.c.l.b16 %v2622
  %v3360 = vunpack.c.l.b16 %v2623
  %v3361 = vunpack.c.l.b16 %v2624
  %v3362 = vunpack.c.l.b16 %v2625
  %v3363 = vunpack.c.l.b16 %v2626
  %v3364 = vunpack.c.l.b16 %v2627
  %v3365 = vunpack.c.l.b16 %v2628
  %v3366 = vunpack.c.l.b16 %v2629
  %v3367 = vunpack.c.l.b16 %v2630
  %v3368 = vunpack.c.l.b16 %v2631
  %v3369 = vunpack.c.l.b16 %v2632
  %v3370 = vunpack.c.l.b16 %v2633
  %v3371 = vunpack.c.l.b16 %v2634
  %v3372 = vunpack.c.l.b16 %v2635
  %v3373 = vunpack.c.l.b16 %v2636
  %v3374 = vunpack.c.l.b16 %v2637
  %v3375 = vunpack.c.l.b16 %v2638
  %v3376 = vunpack.c.l.b16 %v2639
  %v3377 = vpack.c.b16 %v3314, %v3313
  %v3378 = vpack.c.b16 %v3316, %v3315
  %v3379 = vpack.c.b16 %v3318, %v3317
  %v3380 = vpack.c.b16 %v3320, %v3319
  %v3381 = vpack.c.b16 %v3322, %v3321
  %v3382 = vpack.c.b16 %v3324, %v3323
  %v3383 = vpack.c.b16 %v3326, %v3325
  %v3384 = vpack.c.b16 %v3328, %v3327
  %v3385 = vpack.c.b16 %v3330, %v3329
  %v3386 = vpack.c.b16 %v3332, %v3331
  %v3387 = vpack.c.b16 %v3334, %v3333
  %v3388 = vpack.c.b16 %v3336, %v3335
  %v3389 = vpack.c.b16 %v3338, %v3337
  %v3390 = vpack.c.b16 %v3340, %v3339
  %v3391 = vpack.c.b16 %v3342, %v3341
  %v3392 = vpack.c.b16 %v3344, %v3343
  %v3393 = vpack.c.b16 %v3346, %v3345
  %v3394 = vpack.c.b16 %v3348, %v3347
  %v3395 = vpack.c.b16 %v3350, %v3349
  %v3396 = vpack.c.b16 %v3352, %v3351
  %v3397 = vpack.c.b16 %v3354, %v3353
  %v3398 = vpack.c.b16 %v3356, %v3355
  %v3399 = vpack.c.b16 %v3358, %v3357
  %v3400 = vpack.c.b16 %v3360, %v3359
  %v3401 = vpack.c.b16 %v3362, %v3361
  %v3402 = vpack.c.b16 %v3364, %v3363
  %v3403 = vpack.c.b16 %v3366, %v3365
  %v3404 = vpack.c.b16 %v3368, %v3367
  %v3405 = vpack.c.b16 %v3370, %v3369
  %v3406 = vpack.c.b16 %v3372, %v3371
  %v3407 = vpack.c.b16 %v3374, %v3373
  %v3408 = vpack.c.b16 %v3376, %v3375
  %3409 = vrot.lane.b32.xlu0 %v3377, 32
  %v3410 = vpop.permute.xlu0 %3409
  %3411 = vrot.lane.b32.xlu0 %v3378, 32
  %v3412 = vpop.permute.xlu0 %3411
  %3413 = vrot.lane.b32.xlu0 %v3379, 32
  %v3414 = vpop.permute.xlu0 %3413
  %3415 = vrot.lane.b32.xlu0 %v3380, 32
  %v3416 = vpop.permute.xlu0 %3415
  %3417 = vrot.lane.b32.xlu0 %v3381, 32
  %v3418 = vpop.permute.xlu0 %3417
  %3419 = vrot.lane.b32.xlu0 %v3382, 32
  %v3420 = vpop.permute.xlu0 %3419
  %3421 = vrot.lane.b32.xlu0 %v3383, 32
  %v3422 = vpop.permute.xlu0 %3421
  %3423 = vrot.lane.b32.xlu0 %v3384, 32
  %v3424 = vpop.permute.xlu0 %3423
  %3425 = vrot.lane.b32.xlu0 %v3385, 32
  %v3426 = vpop.permute.xlu0 %3425
  %3427 = vrot.lane.b32.xlu0 %v3386, 32
  %v3428 = vpop.permute.xlu0 %3427
  %3429 = vrot.lane.b32.xlu0 %v3387, 32
  %v3430 = vpop.permute.xlu0 %3429
  %3431 = vrot.lane.b32.xlu0 %v3388, 32
  %v3432 = vpop.permute.xlu0 %3431
  %3433 = vrot.lane.b32.xlu0 %v3389, 32
  %v3434 = vpop.permute.xlu0 %3433
  %3435 = vrot.lane.b32.xlu0 %v3390, 32
  %v3436 = vpop.permute.xlu0 %3435
  %3437 = vrot.lane.b32.xlu0 %v3391, 32
  %v3438 = vpop.permute.xlu0 %3437
  %3439 = vrot.lane.b32.xlu0 %v3392, 32
  %v3440 = vpop.permute.xlu0 %3439
  %3441 = vrot.lane.b32.xlu0 %v3393, 32
  %v3442 = vpop.permute.xlu0 %3441
  %3443 = vrot.lane.b32.xlu0 %v3394, 32
  %v3444 = vpop.permute.xlu0 %3443
  %3445 = vrot.lane.b32.xlu0 %v3395, 32
  %v3446 = vpop.permute.xlu0 %3445
  %3447 = vrot.lane.b32.xlu0 %v3396, 32
  %v3448 = vpop.permute.xlu0 %3447
  %3449 = vrot.lane.b32.xlu0 %v3397, 32
  %v3450 = vpop.permute.xlu0 %3449
  %3451 = vrot.lane.b32.xlu0 %v3398, 32
  %v3452 = vpop.permute.xlu0 %3451
  %3453 = vrot.lane.b32.xlu0 %v3399, 32
  %v3454 = vpop.permute.xlu0 %3453
  %3455 = vrot.lane.b32.xlu0 %v3400, 32
  %v3456 = vpop.permute.xlu0 %3455
  %3457 = vrot.lane.b32.xlu0 %v3401, 32
  %v3458 = vpop.permute.xlu0 %3457
  %3459 = vrot.lane.b32.xlu0 %v3402, 32
  %v3460 = vpop.permute.xlu0 %3459
  %3461 = vrot.lane.b32.xlu0 %v3403, 32
  %v3462 = vpop.permute.xlu0 %3461
  %3463 = vrot.lane.b32.xlu0 %v3404, 32
  %v3464 = vpop.permute.xlu0 %3463
  %3465 = vrot.lane.b32.xlu0 %v3405, 32
  %v3466 = vpop.permute.xlu0 %3465
  %3467 = vrot.lane.b32.xlu0 %v3406, 32
  %v3468 = vpop.permute.xlu0 %3467
  %3469 = vrot.lane.b32.xlu0 %v3407, 32
  %v3470 = vpop.permute.xlu0 %3469
  %3471 = vrot.lane.b32.xlu0 %v3408, 32
  %v3472 = vpop.permute.xlu0 %3471
  %v3537 = vunpack.c.l.b16 %v2640
  %v3538 = vunpack.c.l.b16 %v2641
  %v3539 = vunpack.c.l.b16 %v2642
  %v3540 = vunpack.c.l.b16 %v2643
  %v3541 = vunpack.c.l.b16 %v2644
  %v3542 = vunpack.c.l.b16 %v2645
  %v3543 = vunpack.c.l.b16 %v2646
  %v3544 = vunpack.c.l.b16 %v2647
  %v3545 = vunpack.c.l.b16 %v2648
  %v3546 = vunpack.c.l.b16 %v2649
  %v3547 = vunpack.c.l.b16 %v2650
  %v3548 = vunpack.c.l.b16 %v2651
  %v3549 = vunpack.c.l.b16 %v2652
  %v3550 = vunpack.c.l.b16 %v2653
  %v3551 = vunpack.c.l.b16 %v2654
  %v3552 = vunpack.c.l.b16 %v2655
  %v3553 = vunpack.c.l.b16 %v2656
  %v3554 = vunpack.c.l.b16 %v2657
  %v3555 = vunpack.c.l.b16 %v2658
  %v3556 = vunpack.c.l.b16 %v2659
  %v3557 = vunpack.c.l.b16 %v2660
  %v3558 = vunpack.c.l.b16 %v2661
  %v3559 = vunpack.c.l.b16 %v2662
  %v3560 = vunpack.c.l.b16 %v2663
  %v3561 = vunpack.c.l.b16 %v2664
  %v3562 = vunpack.c.l.b16 %v2665
  %v3563 = vunpack.c.l.b16 %v2666
  %v3564 = vunpack.c.l.b16 %v2667
  %v3565 = vunpack.c.l.b16 %v2668
  %v3566 = vunpack.c.l.b16 %v2669
  %v3567 = vunpack.c.l.b16 %v2670
  %v3568 = vunpack.c.l.b16 %v2671
  %v3569 = vunpack.c.l.b16 %v2672
  %v3570 = vunpack.c.l.b16 %v2673
  %v3571 = vunpack.c.l.b16 %v2674
  %v3572 = vunpack.c.l.b16 %v2675
  %v3573 = vunpack.c.l.b16 %v2676
  %v3574 = vunpack.c.l.b16 %v2677
  %v3575 = vunpack.c.l.b16 %v2678
  %v3576 = vunpack.c.l.b16 %v2679
  %v3577 = vunpack.c.l.b16 %v2680
  %v3578 = vunpack.c.l.b16 %v2681
  %v3579 = vunpack.c.l.b16 %v2682
  %v3580 = vunpack.c.l.b16 %v2683
  %v3581 = vunpack.c.l.b16 %v2684
  %v3582 = vunpack.c.l.b16 %v2685
  %v3583 = vunpack.c.l.b16 %v2686
  %v3584 = vunpack.c.l.b16 %v2687
  %v3585 = vunpack.c.l.b16 %v2688
  %v3586 = vunpack.c.l.b16 %v2689
  %v3587 = vunpack.c.l.b16 %v2690
  %v3588 = vunpack.c.l.b16 %v2691
  %v3589 = vunpack.c.l.b16 %v2692
  %v3590 = vunpack.c.l.b16 %v2693
  %v3591 = vunpack.c.l.b16 %v2694
  %v3592 = vunpack.c.l.b16 %v2695
  %v3593 = vunpack.c.l.b16 %v2696
  %v3594 = vunpack.c.l.b16 %v2697
  %v3595 = vunpack.c.l.b16 %v2698
  %v3596 = vunpack.c.l.b16 %v2699
  %v3597 = vunpack.c.l.b16 %v2700
  %v3598 = vunpack.c.l.b16 %v2701
  %v3599 = vunpack.c.l.b16 %v2702
  %v3600 = vunpack.c.l.b16 %v2703
  %v3601 = vpack.c.b16 %v3538, %v3537
  %v3602 = vpack.c.b16 %v3540, %v3539
  %v3603 = vpack.c.b16 %v3542, %v3541
  %v3604 = vpack.c.b16 %v3544, %v3543
  %v3605 = vpack.c.b16 %v3546, %v3545
  %v3606 = vpack.c.b16 %v3548, %v3547
  %v3607 = vpack.c.b16 %v3550, %v3549
  %v3608 = vpack.c.b16 %v3552, %v3551
  %v3609 = vpack.c.b16 %v3554, %v3553
  %v3610 = vpack.c.b16 %v3556, %v3555
  %v3611 = vpack.c.b16 %v3558, %v3557
  %v3612 = vpack.c.b16 %v3560, %v3559
  %v3613 = vpack.c.b16 %v3562, %v3561
  %v3614 = vpack.c.b16 %v3564, %v3563
  %v3615 = vpack.c.b16 %v3566, %v3565
  %v3616 = vpack.c.b16 %v3568, %v3567
  %v3617 = vpack.c.b16 %v3570, %v3569
  %v3618 = vpack.c.b16 %v3572, %v3571
  %v3619 = vpack.c.b16 %v3574, %v3573
  %v3620 = vpack.c.b16 %v3576, %v3575
  %v3621 = vpack.c.b16 %v3578, %v3577
  %v3622 = vpack.c.b16 %v3580, %v3579
  %v3623 = vpack.c.b16 %v3582, %v3581
  %v3624 = vpack.c.b16 %v3584, %v3583
  %v3625 = vpack.c.b16 %v3586, %v3585
  %v3626 = vpack.c.b16 %v3588, %v3587
  %v3627 = vpack.c.b16 %v3590, %v3589
  %v3628 = vpack.c.b16 %v3592, %v3591
  %v3629 = vpack.c.b16 %v3594, %v3593
  %v3630 = vpack.c.b16 %v3596, %v3595
  %v3631 = vpack.c.b16 %v3598, %v3597
  %v3632 = vpack.c.b16 %v3600, %v3599
  %3633 = vrot.lane.b32.xlu0 %v3601, 64
  %v3634 = vpop.permute.xlu0 %3633
  %3635 = vrot.lane.b32.xlu0 %v3602, 64
  %v3636 = vpop.permute.xlu0 %3635
  %3637 = vrot.lane.b32.xlu0 %v3603, 64
  %v3638 = vpop.permute.xlu0 %3637
  %3639 = vrot.lane.b32.xlu0 %v3604, 64
  %v3640 = vpop.permute.xlu0 %3639
  %3641 = vrot.lane.b32.xlu0 %v3605, 64
  %v3642 = vpop.permute.xlu0 %3641
  %3643 = vrot.lane.b32.xlu0 %v3606, 64
  %v3644 = vpop.permute.xlu0 %3643
  %3645 = vrot.lane.b32.xlu0 %v3607, 64
  %v3646 = vpop.permute.xlu0 %3645
  %3647 = vrot.lane.b32.xlu0 %v3608, 64
  %v3648 = vpop.permute.xlu0 %3647
  %3649 = vrot.lane.b32.xlu0 %v3609, 64
  %v3650 = vpop.permute.xlu0 %3649
  %3651 = vrot.lane.b32.xlu0 %v3610, 64
  %v3652 = vpop.permute.xlu0 %3651
  %3653 = vrot.lane.b32.xlu0 %v3611, 64
  %v3654 = vpop.permute.xlu0 %3653
  %3655 = vrot.lane.b32.xlu0 %v3612, 64
  %v3656 = vpop.permute.xlu0 %3655
  %3657 = vrot.lane.b32.xlu0 %v3613, 64
  %v3658 = vpop.permute.xlu0 %3657
  %3659 = vrot.lane.b32.xlu0 %v3614, 64
  %v3660 = vpop.permute.xlu0 %3659
  %3661 = vrot.lane.b32.xlu0 %v3615, 64
  %v3662 = vpop.permute.xlu0 %3661
  %3663 = vrot.lane.b32.xlu0 %v3616, 64
  %v3664 = vpop.permute.xlu0 %3663
  %3665 = vrot.lane.b32.xlu0 %v3617, 64
  %v3666 = vpop.permute.xlu0 %3665
  %3667 = vrot.lane.b32.xlu0 %v3618, 64
  %v3668 = vpop.permute.xlu0 %3667
  %3669 = vrot.lane.b32.xlu0 %v3619, 64
  %v3670 = vpop.permute.xlu0 %3669
  %3671 = vrot.lane.b32.xlu0 %v3620, 64
  %v3672 = vpop.permute.xlu0 %3671
  %3673 = vrot.lane.b32.xlu0 %v3621, 64
  %v3674 = vpop.permute.xlu0 %3673
  %3675 = vrot.lane.b32.xlu0 %v3622, 64
  %v3676 = vpop.permute.xlu0 %3675
  %3677 = vrot.lane.b32.xlu0 %v3623, 64
  %v3678 = vpop.permute.xlu0 %3677
  %3679 = vrot.lane.b32.xlu0 %v3624, 64
  %v3680 = vpop.permute.xlu0 %3679
  %3681 = vrot.lane.b32.xlu0 %v3625, 64
  %v3682 = vpop.permute.xlu0 %3681
  %3683 = vrot.lane.b32.xlu0 %v3626, 64
  %v3684 = vpop.permute.xlu0 %3683
  %3685 = vrot.lane.b32.xlu0 %v3627, 64
  %v3686 = vpop.permute.xlu0 %3685
  %3687 = vrot.lane.b32.xlu0 %v3628, 64
  %v3688 = vpop.permute.xlu0 %3687
  %3689 = vrot.lane.b32.xlu0 %v3629, 64
  %v3690 = vpop.permute.xlu0 %3689
  %3691 = vrot.lane.b32.xlu0 %v3630, 64
  %v3692 = vpop.permute.xlu0 %3691
  %3693 = vrot.lane.b32.xlu0 %v3631, 64
  %v3694 = vpop.permute.xlu0 %3693
  %3695 = vrot.lane.b32.xlu0 %v3632, 64
  %v3696 = vpop.permute.xlu0 %3695
  %v3761 = vunpack.c.l.b16 %v2832
  %v3762 = vunpack.c.l.b16 %v2833
  %v3763 = vunpack.c.l.b16 %v2834
  %v3764 = vunpack.c.l.b16 %v2835
  %v3765 = vunpack.c.l.b16 %v2836
  %v3766 = vunpack.c.l.b16 %v2837
  %v3767 = vunpack.c.l.b16 %v2838
  %v3768 = vunpack.c.l.b16 %v2839
  %v3769 = vunpack.c.l.b16 %v2840
  %v3770 = vunpack.c.l.b16 %v2841
  %v3771 = vunpack.c.l.b16 %v2842
  %v3772 = vunpack.c.l.b16 %v2843
  %v3773 = vunpack.c.l.b16 %v2844
  %v3774 = vunpack.c.l.b16 %v2845
  %v3775 = vunpack.c.l.b16 %v2846
  %v3776 = vunpack.c.l.b16 %v2847
  %v3777 = vunpack.c.l.b16 %v2848
  %v3778 = vunpack.c.l.b16 %v2849
  %v3779 = vunpack.c.l.b16 %v2850
  %v3780 = vunpack.c.l.b16 %v2851
  %v3781 = vunpack.c.l.b16 %v2852
  %v3782 = vunpack.c.l.b16 %v2853
  %v3783 = vunpack.c.l.b16 %v2854
  %v3784 = vunpack.c.l.b16 %v2855
  %v3785 = vunpack.c.l.b16 %v2856
  %v3786 = vunpack.c.l.b16 %v2857
  %v3787 = vunpack.c.l.b16 %v2858
  %v3788 = vunpack.c.l.b16 %v2859
  %v3789 = vunpack.c.l.b16 %v2860
  %v3790 = vunpack.c.l.b16 %v2861
  %v3791 = vunpack.c.l.b16 %v2862
  %v3792 = vunpack.c.l.b16 %v2863
  %v3793 = vunpack.c.l.b16 %v2864
  %v3794 = vunpack.c.l.b16 %v2865
  %v3795 = vunpack.c.l.b16 %v2866
  %v3796 = vunpack.c.l.b16 %v2867
  %v3797 = vunpack.c.l.b16 %v2868
  %v3798 = vunpack.c.l.b16 %v2869
  %v3799 = vunpack.c.l.b16 %v2870
  %v3800 = vunpack.c.l.b16 %v2871
  %v3801 = vunpack.c.l.b16 %v2872
  %v3802 = vunpack.c.l.b16 %v2873
  %v3803 = vunpack.c.l.b16 %v2874
  %v3804 = vunpack.c.l.b16 %v2875
  %v3805 = vunpack.c.l.b16 %v2876
  %v3806 = vunpack.c.l.b16 %v2877
  %v3807 = vunpack.c.l.b16 %v2878
  %v3808 = vunpack.c.l.b16 %v2879
  %v3809 = vunpack.c.l.b16 %v2880
  %v3810 = vunpack.c.l.b16 %v2881
  %v3811 = vunpack.c.l.b16 %v2882
  %v3812 = vunpack.c.l.b16 %v2883
  %v3813 = vunpack.c.l.b16 %v2884
  %v3814 = vunpack.c.l.b16 %v2885
  %v3815 = vunpack.c.l.b16 %v2886
  %v3816 = vunpack.c.l.b16 %v2887
  %v3817 = vunpack.c.l.b16 %v2888
  %v3818 = vunpack.c.l.b16 %v2889
  %v3819 = vunpack.c.l.b16 %v2890
  %v3820 = vunpack.c.l.b16 %v2891
  %v3821 = vunpack.c.l.b16 %v2892
  %v3822 = vunpack.c.l.b16 %v2893
  %v3823 = vunpack.c.l.b16 %v2894
  %v3824 = vunpack.c.l.b16 %v2895
  %v3825 = vpack.c.b16 %v3762, %v3761
  %v3826 = vpack.c.b16 %v3764, %v3763
  %v3827 = vpack.c.b16 %v3766, %v3765
  %v3828 = vpack.c.b16 %v3768, %v3767
  %v3829 = vpack.c.b16 %v3770, %v3769
  %v3830 = vpack.c.b16 %v3772, %v3771
  %v3831 = vpack.c.b16 %v3774, %v3773
  %v3832 = vpack.c.b16 %v3776, %v3775
  %v3833 = vpack.c.b16 %v3778, %v3777
  %v3834 = vpack.c.b16 %v3780, %v3779
  %v3835 = vpack.c.b16 %v3782, %v3781
  %v3836 = vpack.c.b16 %v3784, %v3783
  %v3837 = vpack.c.b16 %v3786, %v3785
  %v3838 = vpack.c.b16 %v3788, %v3787
  %v3839 = vpack.c.b16 %v3790, %v3789
  %v3840 = vpack.c.b16 %v3792, %v3791
  %v3841 = vpack.c.b16 %v3794, %v3793
  %v3842 = vpack.c.b16 %v3796, %v3795
  %v3843 = vpack.c.b16 %v3798, %v3797
  %v3844 = vpack.c.b16 %v3800, %v3799
  %v3845 = vpack.c.b16 %v3802, %v3801
  %v3846 = vpack.c.b16 %v3804, %v3803
  %v3847 = vpack.c.b16 %v3806, %v3805
  %v3848 = vpack.c.b16 %v3808, %v3807
  %v3849 = vpack.c.b16 %v3810, %v3809
  %v3850 = vpack.c.b16 %v3812, %v3811
  %v3851 = vpack.c.b16 %v3814, %v3813
  %v3852 = vpack.c.b16 %v3816, %v3815
  %v3853 = vpack.c.b16 %v3818, %v3817
  %v3854 = vpack.c.b16 %v3820, %v3819
  %v3855 = vpack.c.b16 %v3822, %v3821
  %v3856 = vpack.c.b16 %v3824, %v3823
  %3857 = vrot.lane.b32.xlu0 %v3825, 96
  %v3858 = vpop.permute.xlu0 %3857
  %3859 = vrot.lane.b32.xlu0 %v3826, 96
  %v3860 = vpop.permute.xlu0 %3859
  %3861 = vrot.lane.b32.xlu0 %v3827, 96
  %v3862 = vpop.permute.xlu0 %3861
  %3863 = vrot.lane.b32.xlu0 %v3828, 96
  %v3864 = vpop.permute.xlu0 %3863
  %3865 = vrot.lane.b32.xlu0 %v3829, 96
  %v3866 = vpop.permute.xlu0 %3865
  %3867 = vrot.lane.b32.xlu0 %v3830, 96
  %v3868 = vpop.permute.xlu0 %3867
  %3869 = vrot.lane.b32.xlu0 %v3831, 96
  %v3870 = vpop.permute.xlu0 %3869
  %3871 = vrot.lane.b32.xlu0 %v3832, 96
  %v3872 = vpop.permute.xlu0 %3871
  %3873 = vrot.lane.b32.xlu0 %v3833, 96
  %v3874 = vpop.permute.xlu0 %3873
  %3875 = vrot.lane.b32.xlu0 %v3834, 96
  %v3876 = vpop.permute.xlu0 %3875
  %3877 = vrot.lane.b32.xlu0 %v3835, 96
  %v3878 = vpop.permute.xlu0 %3877
  %3879 = vrot.lane.b32.xlu0 %v3836, 96
  %v3880 = vpop.permute.xlu0 %3879
  %3881 = vrot.lane.b32.xlu0 %v3837, 96
  %v3882 = vpop.permute.xlu0 %3881
  %3883 = vrot.lane.b32.xlu0 %v3838, 96
  %v3884 = vpop.permute.xlu0 %3883
  %3885 = vrot.lane.b32.xlu0 %v3839, 96
  %v3886 = vpop.permute.xlu0 %3885
  %3887 = vrot.lane.b32.xlu0 %v3840, 96
  %v3888 = vpop.permute.xlu0 %3887
  %3889 = vrot.lane.b32.xlu0 %v3841, 96
  %v3890 = vpop.permute.xlu0 %3889
  %3891 = vrot.lane.b32.xlu0 %v3842, 96
  %v3892 = vpop.permute.xlu0 %3891
  %3893 = vrot.lane.b32.xlu0 %v3843, 96
  %v3894 = vpop.permute.xlu0 %3893
  %3895 = vrot.lane.b32.xlu0 %v3844, 96
  %v3896 = vpop.permute.xlu0 %3895
  %3897 = vrot.lane.b32.xlu0 %v3845, 96
  %v3898 = vpop.permute.xlu0 %3897
  %3899 = vrot.lane.b32.xlu0 %v3846, 96
  %v3900 = vpop.permute.xlu0 %3899
  %3901 = vrot.lane.b32.xlu0 %v3847, 96
  %v3902 = vpop.permute.xlu0 %3901
  %3903 = vrot.lane.b32.xlu0 %v3848, 96
  %v3904 = vpop.permute.xlu0 %3903
  %3905 = vrot.lane.b32.xlu0 %v3849, 96
  %v3906 = vpop.permute.xlu0 %3905
  %3907 = vrot.lane.b32.xlu0 %v3850, 96
  %v3908 = vpop.permute.xlu0 %3907
  %3909 = vrot.lane.b32.xlu0 %v3851, 96
  %v3910 = vpop.permute.xlu0 %3909
  %3911 = vrot.lane.b32.xlu0 %v3852, 96
  %v3912 = vpop.permute.xlu0 %3911
  %3913 = vrot.lane.b32.xlu0 %v3853, 96
  %v3914 = vpop.permute.xlu0 %3913
  %3915 = vrot.lane.b32.xlu0 %v3854, 96
  %v3916 = vpop.permute.xlu0 %3915
  %3917 = vrot.lane.b32.xlu0 %v3855, 96
  %v3918 = vpop.permute.xlu0 %3917
  %3919 = vrot.lane.b32.xlu0 %v3856, 96
  %v3920 = vpop.permute.xlu0 %3919
  %v3985 = vunpack.c.l.b16 %v3025
  %v3986 = vunpack.c.l.b16 %v3026
  %v3987 = vunpack.c.l.b16 %v3027
  %v3988 = vunpack.c.l.b16 %v3028
  %v3989 = vunpack.c.l.b16 %v3029
  %v3990 = vunpack.c.l.b16 %v3030
  %v3991 = vunpack.c.l.b16 %v3031
  %v3992 = vunpack.c.l.b16 %v3032
  %v3993 = vunpack.c.l.b16 %v3033
  %v3994 = vunpack.c.l.b16 %v3034
  %v3995 = vunpack.c.l.b16 %v3035
  %v3996 = vunpack.c.l.b16 %v3036
  %v3997 = vunpack.c.l.b16 %v3037
  %v3998 = vunpack.c.l.b16 %v3038
  %v3999 = vunpack.c.l.b16 %v3039
  %v4000 = vunpack.c.l.b16 %v3040
  %v4001 = vunpack.c.l.b16 %v3041
  %v4002 = vunpack.c.l.b16 %v3042
  %v4003 = vunpack.c.l.b16 %v3043
  %v4004 = vunpack.c.l.b16 %v3044
  %v4005 = vunpack.c.l.b16 %v3045
  %v4006 = vunpack.c.l.b16 %v3046
  %v4007 = vunpack.c.l.b16 %v3047
  %v4008 = vunpack.c.l.b16 %v3048
  %v4009 = vunpack.c.l.b16 %v3049
  %v4010 = vunpack.c.l.b16 %v3050
  %v4011 = vunpack.c.l.b16 %v3051
  %v4012 = vunpack.c.l.b16 %v3052
  %v4013 = vunpack.c.l.b16 %v3053
  %v4014 = vunpack.c.l.b16 %v3054
  %v4015 = vunpack.c.l.b16 %v3055
  %v4016 = vunpack.c.l.b16 %v3056
  %v4017 = vunpack.c.l.b16 %v3057
  %v4018 = vunpack.c.l.b16 %v3058
  %v4019 = vunpack.c.l.b16 %v3059
  %v4020 = vunpack.c.l.b16 %v3060
  %v4021 = vunpack.c.l.b16 %v3061
  %v4022 = vunpack.c.l.b16 %v3062
  %v4023 = vunpack.c.l.b16 %v3063
  %v4024 = vunpack.c.l.b16 %v3064
  %v4025 = vunpack.c.l.b16 %v3065
  %v4026 = vunpack.c.l.b16 %v3066
  %v4027 = vunpack.c.l.b16 %v3067
  %v4028 = vunpack.c.l.b16 %v3068
  %v4029 = vunpack.c.l.b16 %v3069
  %v4030 = vunpack.c.l.b16 %v3070
  %v4031 = vunpack.c.l.b16 %v3071
  %v4032 = vunpack.c.l.b16 %v3072
  %v4033 = vunpack.c.l.b16 %v3073
  %v4034 = vunpack.c.l.b16 %v3074
  %v4035 = vunpack.c.l.b16 %v3075
  %v4036 = vunpack.c.l.b16 %v3076
  %v4037 = vunpack.c.l.b16 %v3077
  %v4038 = vunpack.c.l.b16 %v3078
  %v4039 = vunpack.c.l.b16 %v3079
  %v4040 = vunpack.c.l.b16 %v3080
  %v4041 = vunpack.c.l.b16 %v3081
  %v4042 = vunpack.c.l.b16 %v3082
  %v4043 = vunpack.c.l.b16 %v3083
  %v4044 = vunpack.c.l.b16 %v3084
  %v4045 = vunpack.c.l.b16 %v3085
  %v4046 = vunpack.c.l.b16 %v3086
  %v4047 = vunpack.c.l.b16 %v3087
  %v4048 = vunpack.c.l.b16 %v3088
  %v4049 = vpack.c.b16 %v3986, %v3985
  %v4050 = vpack.c.b16 %v3988, %v3987
  %v4051 = vpack.c.b16 %v3990, %v3989
  %v4052 = vpack.c.b16 %v3992, %v3991
  %v4053 = vpack.c.b16 %v3994, %v3993
  %v4054 = vpack.c.b16 %v3996, %v3995
  %v4055 = vpack.c.b16 %v3998, %v3997
  %v4056 = vpack.c.b16 %v4000, %v3999
  %v4057 = vpack.c.b16 %v4002, %v4001
  %v4058 = vpack.c.b16 %v4004, %v4003
  %v4059 = vpack.c.b16 %v4006, %v4005
  %v4060 = vpack.c.b16 %v4008, %v4007
  %v4061 = vpack.c.b16 %v4010, %v4009
  %v4062 = vpack.c.b16 %v4012, %v4011
  %v4063 = vpack.c.b16 %v4014, %v4013
  %v4064 = vpack.c.b16 %v4016, %v4015
  %v4065 = vpack.c.b16 %v4018, %v4017
  %v4066 = vpack.c.b16 %v4020, %v4019
  %v4067 = vpack.c.b16 %v4022, %v4021
  %v4068 = vpack.c.b16 %v4024, %v4023
  %v4069 = vpack.c.b16 %v4026, %v4025
  %v4070 = vpack.c.b16 %v4028, %v4027
  %v4071 = vpack.c.b16 %v4030, %v4029
  %v4072 = vpack.c.b16 %v4032, %v4031
  %v4073 = vpack.c.b16 %v4034, %v4033
  %v4074 = vpack.c.b16 %v4036, %v4035
  %v4075 = vpack.c.b16 %v4038, %v4037
  %v4076 = vpack.c.b16 %v4040, %v4039
  %v4077 = vpack.c.b16 %v4042, %v4041
  %v4078 = vpack.c.b16 %v4044, %v4043
  %v4079 = vpack.c.b16 %v4046, %v4045
  %v4080 = vpack.c.b16 %v4048, %v4047
  %vm4081 = vcmask 261120
  %v4084 = vsel %vm4081, %v3217, %v3410
  %v4087 = vsel %vm4081, %v3218, %v3412
  %v4090 = vsel %vm4081, %v3219, %v3414
  %v4093 = vsel %vm4081, %v3220, %v3416
  %v4096 = vsel %vm4081, %v3221, %v3418
  %v4099 = vsel %vm4081, %v3222, %v3420
  %v4102 = vsel %vm4081, %v3223, %v3422
  %v4105 = vsel %vm4081, %v3224, %v3424
  %v4108 = vsel %vm4081, %v3225, %v3426
  %v4111 = vsel %vm4081, %v3226, %v3428
  %v4114 = vsel %vm4081, %v3227, %v3430
  %v4117 = vsel %vm4081, %v3228, %v3432
  %v4120 = vsel %vm4081, %v3229, %v3434
  %v4123 = vsel %vm4081, %v3230, %v3436
  %v4126 = vsel %vm4081, %v3231, %v3438
  %v4129 = vsel %vm4081, %v3232, %v3440
  %v4132 = vsel %vm4081, %v3233, %v3442
  %v4135 = vsel %vm4081, %v3234, %v3444
  %v4138 = vsel %vm4081, %v3235, %v3446
  %v4141 = vsel %vm4081, %v3236, %v3448
  %v4144 = vsel %vm4081, %v3237, %v3450
  %v4147 = vsel %vm4081, %v3238, %v3452
  %v4150 = vsel %vm4081, %v3239, %v3454
  %v4153 = vsel %vm4081, %v3240, %v3456
  %v4156 = vsel %vm4081, %v3241, %v3458
  %v4159 = vsel %vm4081, %v3242, %v3460
  %v4162 = vsel %vm4081, %v3243, %v3462
  %v4165 = vsel %vm4081, %v3244, %v3464
  %v4168 = vsel %vm4081, %v3245, %v3466
  %v4171 = vsel %vm4081, %v3246, %v3468
  %v4174 = vsel %vm4081, %v3247, %v3470
  %v4177 = vsel %vm4081, %v3248, %v3472
  %vm4178 = vcmask 523264
  %v4180 = vsel %vm4178, %v4084, %v3634
  %v4182 = vsel %vm4178, %v4087, %v3636
  %v4184 = vsel %vm4178, %v4090, %v3638
  %v4186 = vsel %vm4178, %v4093, %v3640
  %v4188 = vsel %vm4178, %v4096, %v3642
  %v4190 = vsel %vm4178, %v4099, %v3644
  %v4192 = vsel %vm4178, %v4102, %v3646
  %v4194 = vsel %vm4178, %v4105, %v3648
  %v4196 = vsel %vm4178, %v4108, %v3650
  %v4198 = vsel %vm4178, %v4111, %v3652
  %v4200 = vsel %vm4178, %v4114, %v3654
  %v4202 = vsel %vm4178, %v4117, %v3656
  %v4204 = vsel %vm4178, %v4120, %v3658
  %v4206 = vsel %vm4178, %v4123, %v3660
  %v4208 = vsel %vm4178, %v4126, %v3662
  %v4210 = vsel %vm4178, %v4129, %v3664
  %v4212 = vsel %vm4178, %v4132, %v3666
  %v4214 = vsel %vm4178, %v4135, %v3668
  %v4216 = vsel %vm4178, %v4138, %v3670
  %v4218 = vsel %vm4178, %v4141, %v3672
  %v4220 = vsel %vm4178, %v4144, %v3674
  %v4222 = vsel %vm4178, %v4147, %v3676
  %v4224 = vsel %vm4178, %v4150, %v3678
  %v4226 = vsel %vm4178, %v4153, %v3680
  %v4228 = vsel %vm4178, %v4156, %v3682
  %v4230 = vsel %vm4178, %v4159, %v3684
  %v4232 = vsel %vm4178, %v4162, %v3686
  %v4234 = vsel %vm4178, %v4165, %v3688
  %v4236 = vsel %vm4178, %v4168, %v3690
  %v4238 = vsel %vm4178, %v4171, %v3692
  %v4240 = vsel %vm4178, %v4174, %v3694
  %v4242 = vsel %vm4178, %v4177, %v3696
  %vm4243 = vcmask 785408
  %v4245 = vsel %vm4243, %v4180, %v3858
  %v4248 = vsel %vm4243, %v4182, %v3860
  %v4251 = vsel %vm4243, %v4184, %v3862
  %v4254 = vsel %vm4243, %v4186, %v3864
  %v4257 = vsel %vm4243, %v4188, %v3866
  %v4260 = vsel %vm4243, %v4190, %v3868
  %v4263 = vsel %vm4243, %v4192, %v3870
  %v4266 = vsel %vm4243, %v4194, %v3872
  %v4269 = vsel %vm4243, %v4196, %v3874
  %v4272 = vsel %vm4243, %v4198, %v3876
  %v4275 = vsel %vm4243, %v4200, %v3878
  %v4278 = vsel %vm4243, %v4202, %v3880
  %v4281 = vsel %vm4243, %v4204, %v3882
  %v4284 = vsel %vm4243, %v4206, %v3884
  %v4287 = vsel %vm4243, %v4208, %v3886
  %v4290 = vsel %vm4243, %v4210, %v3888
  %v4293 = vsel %vm4243, %v4212, %v3890
  %v4296 = vsel %vm4243, %v4214, %v3892
  %v4299 = vsel %vm4243, %v4216, %v3894
  %v4302 = vsel %vm4243, %v4218, %v3896
  %v4305 = vsel %vm4243, %v4220, %v3898
  %v4308 = vsel %vm4243, %v4222, %v3900
  %v4311 = vsel %vm4243, %v4224, %v3902
  %v4314 = vsel %vm4243, %v4226, %v3904
  %v4317 = vsel %vm4243, %v4228, %v3906
  %v4320 = vsel %vm4243, %v4230, %v3908
  %v4323 = vsel %vm4243, %v4232, %v3910
  %v4326 = vsel %vm4243, %v4234, %v3912
  %v4329 = vsel %vm4243, %v4236, %v3914
  %v4332 = vsel %vm4243, %v4238, %v3916
  %v4335 = vsel %vm4243, %v4240, %v3918
  %v4338 = vsel %vm4243, %v4242, %v3920
  %v4340 = vld [vmem:[%s1 + $0x8] sm:$0xf]
  %v4341 = vld [vmem:[%s1 + $0xc] sm:$0xf]
  %v4342 = vld [vmem:[%s1 + $0x10] sm:$0xf]
  %v4343 = vld [vmem:[%s1 + $0x14] sm:$0xf]
  %v4344 = vld [vmem:[%s1 + $0x18] sm:$0xf]
  %v4345 = vld [vmem:[%s1 + $0x1c] sm:$0xf]
  %v4346 = vld [vmem:[%s1 + $0x20] sm:$0xf]
  %v4347 = vld [vmem:[%s1 + $0x24] sm:$0xf]
  %v4348 = vld [vmem:[%s1 + $0x28] sm:$0xf]
  %v4349 = vld [vmem:[%s1 + $0x2c] sm:$0xf]
  %v4350 = vld [vmem:[%s1 + $0x30] sm:$0xf]
  %v4351 = vld [vmem:[%s1 + $0x34] sm:$0xf]
  %v4352 = vld [vmem:[%s1 + $0x38] sm:$0xf]
  %v4353 = vld [vmem:[%s1 + $0x3c] sm:$0xf]
  %v4354 = vld [vmem:[%s1 + $0x40] sm:$0xf]
  %v4355 = vld [vmem:[%s1 + $0x44] sm:$0xf]
  %v4356 = vld [vmem:[%s1 + $0x48] sm:$0xf]
  %v4357 = vld [vmem:[%s1 + $0x4c] sm:$0xf]
  %v4358 = vld [vmem:[%s1 + $0x50] sm:$0xf]
  %v4359 = vld [vmem:[%s1 + $0x54] sm:$0xf]
  %v4360 = vld [vmem:[%s2 + $0x1] sm:$0x1]
  %v4361 = vperm.slane %v4360, 0
  %v4382 = vunpack.c.l.b16 %v4340
  %v4383 = vunpack.c.l.b16 %v4341
  %v4384 = vunpack.c.l.b16 %v4342
  %v4385 = vunpack.c.l.b16 %v4343
  %v4386 = vunpack.c.l.b16 %v4344
  %v4387 = vunpack.c.l.b16 %v4345
  %v4388 = vunpack.c.l.b16 %v4346
  %v4389 = vunpack.c.l.b16 %v4347
  %v4390 = vunpack.c.l.b16 %v4348
  %v4391 = vunpack.c.l.b16 %v4349
  %v4392 = vunpack.c.l.b16 %v4350
  %v4393 = vunpack.c.l.b16 %v4351
  %v4394 = vunpack.c.l.b16 %v4352
  %v4395 = vunpack.c.l.b16 %v4353
  %v4396 = vunpack.c.l.b16 %v4354
  %v4397 = vunpack.c.l.b16 %v4355
  %v4398 = vunpack.c.l.b16 %v4356
  %v4399 = vunpack.c.l.b16 %v4357
  %v4400 = vunpack.c.l.b16 %v4358
  %v4401 = vunpack.c.l.b16 %v4359
  %v4402 = vpack.c.b16 %v4383, %v4382
  %v4403 = vpack.c.b16 %v4385, %v4384
  %v4404 = vpack.c.b16 %v4387, %v4386
  %v4405 = vpack.c.b16 %v4389, %v4388
  %v4406 = vpack.c.b16 %v4391, %v4390
  %v4407 = vpack.c.b16 %v4393, %v4392
  %v4408 = vpack.c.b16 %v4395, %v4394
  %v4409 = vpack.c.b16 %v4397, %v4396
  %v4410 = vpack.c.b16 %v4399, %v4398
  %v4411 = vpack.c.b16 %v4401, %v4400
  %v4423 = vsel %vm4081, %v4049, 0
  %v4426 = vsel %vm4081, %v4050, 0
  %v4429 = vsel %vm4081, %v4051, 0
  %v4432 = vsel %vm4081, %v4052, 0
  %v4435 = vsel %vm4081, %v4053, 0
  %v4438 = vsel %vm4081, %v4054, 0
  %v4441 = vsel %vm4081, %v4055, 0
  %v4444 = vsel %vm4081, %v4056, 0
  %v4447 = vsel %vm4081, %v4057, 0
  %v4450 = vsel %vm4081, %v4058, 0
  %v4453 = vsel %vm4081, %v4059, 0
  %v4456 = vsel %vm4081, %v4060, 0
  %v4459 = vsel %vm4081, %v4061, 0
  %v4462 = vsel %vm4081, %v4062, 0
  %v4465 = vsel %vm4081, %v4063, 0
  %v4468 = vsel %vm4081, %v4064, 0
  %v4471 = vsel %vm4081, %v4065, 0
  %v4474 = vsel %vm4081, %v4066, 0
  %v4477 = vsel %vm4081, %v4067, 0
  %v4480 = vsel %vm4081, %v4068, 0
  %v4483 = vsel %vm4081, %v4069, 0
  %v4486 = vsel %vm4081, %v4070, 0
  %v4489 = vsel %vm4081, %v4071, 0
  %v4492 = vsel %vm4081, %v4072, 0
  %v4495 = vsel %vm4081, %v4073, 0
  %v4498 = vsel %vm4081, %v4074, 0
  %v4501 = vsel %vm4081, %v4075, 0
  %v4504 = vsel %vm4081, %v4076, 0
  %v4507 = vsel %vm4081, %v4077, 0
  %v4510 = vsel %vm4081, %v4078, 0
  %v4513 = vsel %vm4081, %v4079, 0
  %v4516 = vsel %vm4081, %v4080, 0
  %4518 = vmatpush.bf16.msra.mxu0 %v4409
  %4519 = vmatpush.bf16.msra.mxu0 %v4408
  %4520 = vmatpush.bf16.msra.mxu0 %v4407
  %4521 = vmatpush.bf16.msra.mxu0 %v4406
  %4522 = vmatpush.bf16.msra.mxu0 %v4405
  %4523 = vmatpush.bf16.msra.mxu0 %v4404
  %4524 = vmatpush.bf16.msra.mxu0 %v4403
  %4525 = vmatpush.bf16.msra.mxu0 %v4402
  %4526 = vmatmul.bf16.gmra.mxu0 %v4245
  %v4527 = vpop.f32.mrf.mxu0
  %v4528 = vadd.f32 %v4361, %v4527
  %v4529 = vpop.f32.mrf.mxu0
  %v4530 = vadd.f32 %v4361, %v4529
  %4531 = vmatmul.bf16.gmra.mxu0 %v4248
  %v4532 = vpop.f32.mrf.mxu0
  %v4533 = vadd.f32 %v4361, %v4532
  %v4534 = vpop.f32.mrf.mxu0
  %v4535 = vadd.f32 %v4361, %v4534
  %4536 = vmatmul.bf16.gmra.mxu0 %v4251
  %v4537 = vpop.f32.mrf.mxu0
  %v4538 = vadd.f32 %v4361, %v4537
  %v4539 = vpop.f32.mrf.mxu0
  %v4540 = vadd.f32 %v4361, %v4539
  %4541 = vmatmul.bf16.gmra.mxu0 %v4254
  %v4542 = vpop.f32.mrf.mxu0
  %v4543 = vadd.f32 %v4361, %v4542
  %v4544 = vpop.f32.mrf.mxu0
  %v4545 = vadd.f32 %v4361, %v4544
  %4546 = vmatmul.bf16.gmra.mxu0 %v4257
  %v4547 = vpop.f32.mrf.mxu0
  %v4548 = vadd.f32 %v4361, %v4547
  %v4549 = vpop.f32.mrf.mxu0
  %v4550 = vadd.f32 %v4361, %v4549
  %4551 = vmatmul.bf16.gmra.mxu0 %v4260
  %v4552 = vpop.f32.mrf.mxu0
  %v4553 = vadd.f32 %v4361, %v4552
  %v4554 = vpop.f32.mrf.mxu0
  %v4555 = vadd.f32 %v4361, %v4554
  %4556 = vmatmul.bf16.gmra.mxu0 %v4263
  %v4557 = vpop.f32.mrf.mxu0
  %v4558 = vadd.f32 %v4361, %v4557
  %v4559 = vpop.f32.mrf.mxu0
  %v4560 = vadd.f32 %v4361, %v4559
  %4561 = vmatmul.bf16.gmra.mxu0 %v4266
  %v4562 = vpop.f32.mrf.mxu0
  %v4563 = vadd.f32 %v4361, %v4562
  %v4564 = vpop.f32.mrf.mxu0
  %v4565 = vadd.f32 %v4361, %v4564
  %4566 = vmatmul.bf16.gmra.mxu0 %v4269
  %v4567 = vpop.f32.mrf.mxu0
  %v4568 = vadd.f32 %v4361, %v4567
  %v4569 = vpop.f32.mrf.mxu0
  %v4570 = vadd.f32 %v4361, %v4569
  %4571 = vmatmul.bf16.gmra.mxu0 %v4272
  %v4572 = vpop.f32.mrf.mxu0
  %v4573 = vadd.f32 %v4361, %v4572
  %v4574 = vpop.f32.mrf.mxu0
  %v4575 = vadd.f32 %v4361, %v4574
  %4576 = vmatmul.bf16.gmra.mxu0 %v4275
  %v4577 = vpop.f32.mrf.mxu0
  %v4578 = vadd.f32 %v4361, %v4577
  %v4579 = vpop.f32.mrf.mxu0
  %v4580 = vadd.f32 %v4361, %v4579
  %4581 = vmatmul.bf16.gmra.mxu0 %v4278
  %v4582 = vpop.f32.mrf.mxu0
  %v4583 = vadd.f32 %v4361, %v4582
  %v4584 = vpop.f32.mrf.mxu0
  %v4585 = vadd.f32 %v4361, %v4584
  %4586 = vmatmul.bf16.gmra.mxu0 %v4281
  %v4587 = vpop.f32.mrf.mxu0
  %v4588 = vadd.f32 %v4361, %v4587
  %v4589 = vpop.f32.mrf.mxu0
  %v4590 = vadd.f32 %v4361, %v4589
  %4591 = vmatmul.bf16.gmra.mxu0 %v4284
  %v4592 = vpop.f32.mrf.mxu0
  %v4593 = vadd.f32 %v4361, %v4592
  %v4594 = vpop.f32.mrf.mxu0
  %v4595 = vadd.f32 %v4361, %v4594
  %4596 = vmatmul.bf16.gmra.mxu0 %v4287
  %v4597 = vpop.f32.mrf.mxu0
  %v4598 = vadd.f32 %v4361, %v4597
  %v4599 = vpop.f32.mrf.mxu0
  %v4600 = vadd.f32 %v4361, %v4599
  %4601 = vmatmul.bf16.gmra.mxu0 %v4290
  %v4602 = vpop.f32.mrf.mxu0
  %v4603 = vadd.f32 %v4361, %v4602
  %v4604 = vpop.f32.mrf.mxu0
  %v4605 = vadd.f32 %v4361, %v4604
  %4606 = vmatmul.bf16.gmra.mxu0 %v4293
  %v4607 = vpop.f32.mrf.mxu0
  %v4608 = vadd.f32 %v4361, %v4607
  %v4609 = vpop.f32.mrf.mxu0
  %v4610 = vadd.f32 %v4361, %v4609
  %4611 = vmatmul.bf16.gmra.mxu0 %v4296
  %v4612 = vpop.f32.mrf.mxu0
  %v4613 = vadd.f32 %v4361, %v4612
  %v4614 = vpop.f32.mrf.mxu0
  %v4615 = vadd.f32 %v4361, %v4614
  %4616 = vmatmul.bf16.gmra.mxu0 %v4299
  %v4617 = vpop.f32.mrf.mxu0
  %v4618 = vadd.f32 %v4361, %v4617
  %v4619 = vpop.f32.mrf.mxu0
  %v4620 = vadd.f32 %v4361, %v4619
  %4621 = vmatmul.bf16.gmra.mxu0 %v4302
  %v4622 = vpop.f32.mrf.mxu0
  %v4623 = vadd.f32 %v4361, %v4622
  %v4624 = vpop.f32.mrf.mxu0
  %v4625 = vadd.f32 %v4361, %v4624
  %4626 = vmatmul.bf16.gmra.mxu0 %v4305
  %v4627 = vpop.f32.mrf.mxu0
  %v4628 = vadd.f32 %v4361, %v4627
  %v4629 = vpop.f32.mrf.mxu0
  %v4630 = vadd.f32 %v4361, %v4629
  %4631 = vmatmul.bf16.gmra.mxu0 %v4308
  %v4632 = vpop.f32.mrf.mxu0
  %v4633 = vadd.f32 %v4361, %v4632
  %v4634 = vpop.f32.mrf.mxu0
  %v4635 = vadd.f32 %v4361, %v4634
  %4636 = vmatmul.bf16.gmra.mxu0 %v4311
  %v4637 = vpop.f32.mrf.mxu0
  %v4638 = vadd.f32 %v4361, %v4637
  %v4639 = vpop.f32.mrf.mxu0
  %v4640 = vadd.f32 %v4361, %v4639
  %4641 = vmatmul.bf16.gmra.mxu0 %v4314
  %v4642 = vpop.f32.mrf.mxu0
  %v4643 = vadd.f32 %v4361, %v4642
  %v4644 = vpop.f32.mrf.mxu0
  %v4645 = vadd.f32 %v4361, %v4644
  %4646 = vmatmul.bf16.gmra.mxu0 %v4317
  %v4647 = vpop.f32.mrf.mxu0
  %v4648 = vadd.f32 %v4361, %v4647
  %v4649 = vpop.f32.mrf.mxu0
  %v4650 = vadd.f32 %v4361, %v4649
  %4651 = vmatmul.bf16.gmra.mxu0 %v4320
  %v4652 = vpop.f32.mrf.mxu0
  %v4653 = vadd.f32 %v4361, %v4652
  %v4654 = vpop.f32.mrf.mxu0
  %v4655 = vadd.f32 %v4361, %v4654
  %4656 = vmatmul.bf16.gmra.mxu0 %v4323
  %v4657 = vpop.f32.mrf.mxu0
  %v4658 = vadd.f32 %v4361, %v4657
  %v4659 = vpop.f32.mrf.mxu0
  %v4660 = vadd.f32 %v4361, %v4659
  %4661 = vmatmul.bf16.gmra.mxu0 %v4326
  %v4662 = vpop.f32.mrf.mxu0
  %v4663 = vadd.f32 %v4361, %v4662
  %v4664 = vpop.f32.mrf.mxu0
  %v4665 = vadd.f32 %v4361, %v4664
  %4666 = vmatmul.bf16.gmra.mxu0 %v4329
  %v4667 = vpop.f32.mrf.mxu0
  %v4668 = vadd.f32 %v4361, %v4667
  %v4669 = vpop.f32.mrf.mxu0
  %v4670 = vadd.f32 %v4361, %v4669
  %4671 = vmatmul.bf16.gmra.mxu0 %v4332
  %v4672 = vpop.f32.mrf.mxu0
  %v4673 = vadd.f32 %v4361, %v4672
  %v4674 = vpop.f32.mrf.mxu0
  %v4675 = vadd.f32 %v4361, %v4674
  %4676 = vmatmul.bf16.gmra.mxu0 %v4335
  %v4677 = vpop.f32.mrf.mxu0
  %v4678 = vadd.f32 %v4361, %v4677
  %v4679 = vpop.f32.mrf.mxu0
  %v4680 = vadd.f32 %v4361, %v4679
  %4681 = vmatmul.bf16.gmra.mxu0 %v4338
  %v4682 = vpop.f32.mrf.mxu0
  %v4683 = vadd.f32 %v4361, %v4682
  %v4684 = vpop.f32.mrf.mxu0
  %v4685 = vadd.f32 %v4361, %v4684
  %4686 = vdwg.mxu0
  %4687 = vmatpush.bf16.msra.mxu0 0
  %4688 = vmatpush.bf16.msra.mxu0 0
  %4689 = vmatpush.bf16.msra.mxu0 0
  %4690 = vmatpush.bf16.msra.mxu0 0
  %4691 = vmatpush.bf16.msra.mxu0 0
  %4692 = vmatpush.bf16.msra.mxu0 0
  %4693 = vmatpush.bf16.msra.mxu0 %v4411
  %4694 = vmatpush.bf16.msra.mxu0 %v4410
  %4695 = vmatmul.bf16.gmra.mxu0 %v4423
  %v4696 = vpop.f32.mrf.mxu0
  %v4697 = vadd.f32 %v4528, %v4696
  %v4698 = vpop.f32.mrf.mxu0
  %v4699 = vadd.f32 %v4530, %v4698
  %4700 = vmatmul.bf16.gmra.mxu0 %v4426
  %v4701 = vpop.f32.mrf.mxu0
  %v4702 = vadd.f32 %v4533, %v4701
  %v4703 = vpop.f32.mrf.mxu0
  %v4704 = vadd.f32 %v4535, %v4703
  %4705 = vmatmul.bf16.gmra.mxu0 %v4429
  %v4706 = vpop.f32.mrf.mxu0
  %v4707 = vadd.f32 %v4538, %v4706
  %v4708 = vpop.f32.mrf.mxu0
  %v4709 = vadd.f32 %v4540, %v4708
  %4710 = vmatmul.bf16.gmra.mxu0 %v4432
  %v4711 = vpop.f32.mrf.mxu0
  %v4712 = vadd.f32 %v4543, %v4711
  %v4713 = vpop.f32.mrf.mxu0
  %v4714 = vadd.f32 %v4545, %v4713
  %4715 = vmatmul.bf16.gmra.mxu0 %v4435
  %v4716 = vpop.f32.mrf.mxu0
  %v4717 = vadd.f32 %v4548, %v4716
  %v4718 = vpop.f32.mrf.mxu0
  %v4719 = vadd.f32 %v4550, %v4718
  %4720 = vmatmul.bf16.gmra.mxu0 %v4438
  %v4721 = vpop.f32.mrf.mxu0
  %v4722 = vadd.f32 %v4553, %v4721
  %v4723 = vpop.f32.mrf.mxu0
  %v4724 = vadd.f32 %v4555, %v4723
  %4725 = vmatmul.bf16.gmra.mxu0 %v4441
  %v4726 = vpop.f32.mrf.mxu0
  %v4727 = vadd.f32 %v4558, %v4726
  %v4728 = vpop.f32.mrf.mxu0
  %v4729 = vadd.f32 %v4560, %v4728
  %4730 = vmatmul.bf16.gmra.mxu0 %v4444
  %v4731 = vpop.f32.mrf.mxu0
  %v4732 = vadd.f32 %v4563, %v4731
  %v4733 = vpop.f32.mrf.mxu0
  %v4734 = vadd.f32 %v4565, %v4733
  %4735 = vmatmul.bf16.gmra.mxu0 %v4447
  %v4736 = vpop.f32.mrf.mxu0
  %v4737 = vadd.f32 %v4568, %v4736
  %v4738 = vpop.f32.mrf.mxu0
  %v4739 = vadd.f32 %v4570, %v4738
  %4740 = vmatmul.bf16.gmra.mxu0 %v4450
  %v4741 = vpop.f32.mrf.mxu0
  %v4742 = vadd.f32 %v4573, %v4741
  %v4743 = vpop.f32.mrf.mxu0
  %v4744 = vadd.f32 %v4575, %v4743
  %4745 = vmatmul.bf16.gmra.mxu0 %v4453
  %v4746 = vpop.f32.mrf.mxu0
  %v4747 = vadd.f32 %v4578, %v4746
  %v4748 = vpop.f32.mrf.mxu0
  %v4749 = vadd.f32 %v4580, %v4748
  %4750 = vmatmul.bf16.gmra.mxu0 %v4456
  %v4751 = vpop.f32.mrf.mxu0
  %v4752 = vadd.f32 %v4583, %v4751
  %v4753 = vpop.f32.mrf.mxu0
  %v4754 = vadd.f32 %v4585, %v4753
  %4755 = vmatmul.bf16.gmra.mxu0 %v4459
  %v4756 = vpop.f32.mrf.mxu0
  %v4757 = vadd.f32 %v4588, %v4756
  %v4758 = vpop.f32.mrf.mxu0
  %v4759 = vadd.f32 %v4590, %v4758
  %4760 = vmatmul.bf16.gmra.mxu0 %v4462
  %v4761 = vpop.f32.mrf.mxu0
  %v4762 = vadd.f32 %v4593, %v4761
  %v4763 = vpop.f32.mrf.mxu0
  %v4764 = vadd.f32 %v4595, %v4763
  %4765 = vmatmul.bf16.gmra.mxu0 %v4465
  %v4766 = vpop.f32.mrf.mxu0
  %v4767 = vadd.f32 %v4598, %v4766
  %v4768 = vpop.f32.mrf.mxu0
  %v4769 = vadd.f32 %v4600, %v4768
  %4770 = vmatmul.bf16.gmra.mxu0 %v4468
  %v4771 = vpop.f32.mrf.mxu0
  %v4772 = vadd.f32 %v4603, %v4771
  %v4773 = vpop.f32.mrf.mxu0
  %v4774 = vadd.f32 %v4605, %v4773
  %4775 = vmatmul.bf16.gmra.mxu0 %v4471
  %v4776 = vpop.f32.mrf.mxu0
  %v4777 = vadd.f32 %v4608, %v4776
  %v4778 = vpop.f32.mrf.mxu0
  %v4779 = vadd.f32 %v4610, %v4778
  %4780 = vmatmul.bf16.gmra.mxu0 %v4474
  %v4781 = vpop.f32.mrf.mxu0
  %v4782 = vadd.f32 %v4613, %v4781
  %v4783 = vpop.f32.mrf.mxu0
  %v4784 = vadd.f32 %v4615, %v4783
  %4785 = vmatmul.bf16.gmra.mxu0 %v4477
  %v4786 = vpop.f32.mrf.mxu0
  %v4787 = vadd.f32 %v4618, %v4786
  %v4788 = vpop.f32.mrf.mxu0
  %v4789 = vadd.f32 %v4620, %v4788
  %4790 = vmatmul.bf16.gmra.mxu0 %v4480
  %v4791 = vpop.f32.mrf.mxu0
  %v4792 = vadd.f32 %v4623, %v4791
  %v4793 = vpop.f32.mrf.mxu0
  %v4794 = vadd.f32 %v4625, %v4793
  %4795 = vmatmul.bf16.gmra.mxu0 %v4483
  %v4796 = vpop.f32.mrf.mxu0
  %v4797 = vadd.f32 %v4628, %v4796
  %v4798 = vpop.f32.mrf.mxu0
  %v4799 = vadd.f32 %v4630, %v4798
  %4800 = vmatmul.bf16.gmra.mxu0 %v4486
  %v4801 = vpop.f32.mrf.mxu0
  %v4802 = vadd.f32 %v4633, %v4801
  %v4803 = vpop.f32.mrf.mxu0
  %v4804 = vadd.f32 %v4635, %v4803
  %4805 = vmatmul.bf16.gmra.mxu0 %v4489
  %v4806 = vpop.f32.mrf.mxu0
  %v4807 = vadd.f32 %v4638, %v4806
  %v4808 = vpop.f32.mrf.mxu0
  %v4809 = vadd.f32 %v4640, %v4808
  %4810 = vmatmul.bf16.gmra.mxu0 %v4492
  %v4811 = vpop.f32.mrf.mxu0
  %v4812 = vadd.f32 %v4643, %v4811
  %v4813 = vpop.f32.mrf.mxu0
  %v4814 = vadd.f32 %v4645, %v4813
  %4815 = vmatmul.bf16.gmra.mxu0 %v4495
  %v4816 = vpop.f32.mrf.mxu0
  %v4817 = vadd.f32 %v4648, %v4816
  %v4818 = vpop.f32.mrf.mxu0
  %v4819 = vadd.f32 %v4650, %v4818
  %4820 = vmatmul.bf16.gmra.mxu0 %v4498
  %v4821 = vpop.f32.mrf.mxu0
  %v4822 = vadd.f32 %v4653, %v4821
  %v4823 = vpop.f32.mrf.mxu0
  %v4824 = vadd.f32 %v4655, %v4823
  %4825 = vmatmul.bf16.gmra.mxu0 %v4501
  %v4826 = vpop.f32.mrf.mxu0
  %v4827 = vadd.f32 %v4658, %v4826
  %v4828 = vpop.f32.mrf.mxu0
  %v4829 = vadd.f32 %v4660, %v4828
  %4830 = vmatmul.bf16.gmra.mxu0 %v4504
  %v4831 = vpop.f32.mrf.mxu0
  %v4832 = vadd.f32 %v4663, %v4831
  %v4833 = vpop.f32.mrf.mxu0
  %v4834 = vadd.f32 %v4665, %v4833
  %4835 = vmatmul.bf16.gmra.mxu0 %v4507
  %v4836 = vpop.f32.mrf.mxu0
  %v4837 = vadd.f32 %v4668, %v4836
  %v4838 = vpop.f32.mrf.mxu0
  %v4839 = vadd.f32 %v4670, %v4838
  %4840 = vmatmul.bf16.gmra.mxu0 %v4510
  %v4841 = vpop.f32.mrf.mxu0
  %v4842 = vadd.f32 %v4673, %v4841
  %v4843 = vpop.f32.mrf.mxu0
  %v4844 = vadd.f32 %v4675, %v4843
  %4845 = vmatmul.bf16.gmra.mxu0 %v4513
  %v4846 = vpop.f32.mrf.mxu0
  %v4847 = vadd.f32 %v4678, %v4846
  %v4848 = vpop.f32.mrf.mxu0
  %v4849 = vadd.f32 %v4680, %v4848
  %4850 = vmatmul.bf16.gmra.mxu0 %v4516
  %v4851 = vpop.f32.mrf.mxu0
  %v4852 = vadd.f32 %v4683, %v4851
  %v4853 = vpop.f32.mrf.mxu0
  %v4854 = vadd.f32 %v4685, %v4853
  %4855 = vdwg.mxu0
  %vm4856 = vcmp.gt.f32.partialorder %v4697, 0.0
  %vm4857 = vcmp.gt.f32.partialorder %v4699, 0.0
  %vm4858 = vcmp.gt.f32.partialorder %v4702, 0.0
  %vm4859 = vcmp.gt.f32.partialorder %v4704, 0.0
  %vm4860 = vcmp.gt.f32.partialorder %v4707, 0.0
  %vm4861 = vcmp.gt.f32.partialorder %v4709, 0.0
  %vm4862 = vcmp.gt.f32.partialorder %v4712, 0.0
  %vm4863 = vcmp.gt.f32.partialorder %v4714, 0.0
  %vm4864 = vcmp.gt.f32.partialorder %v4717, 0.0
  %vm4865 = vcmp.gt.f32.partialorder %v4719, 0.0
  %vm4866 = vcmp.gt.f32.partialorder %v4722, 0.0
  %vm4867 = vcmp.gt.f32.partialorder %v4724, 0.0
  %vm4868 = vcmp.gt.f32.partialorder %v4727, 0.0
  %vm4869 = vcmp.gt.f32.partialorder %v4729, 0.0
  %vm4870 = vcmp.gt.f32.partialorder %v4732, 0.0
  %vm4871 = vcmp.gt.f32.partialorder %v4734, 0.0
  %vm4872 = vcmp.gt.f32.partialorder %v4737, 0.0
  %vm4873 = vcmp.gt.f32.partialorder %v4739, 0.0
  %vm4874 = vcmp.gt.f32.partialorder %v4742, 0.0
  %vm4875 = vcmp.gt.f32.partialorder %v4744, 0.0
  %vm4876 = vcmp.gt.f32.partialorder %v4747, 0.0
  %vm4877 = vcmp.gt.f32.partialorder %v4749, 0.0
  %vm4878 = vcmp.gt.f32.partialorder %v4752, 0.0
  %vm4879 = vcmp.gt.f32.partialorder %v4754, 0.0
  %vm4880 = vcmp.gt.f32.partialorder %v4757, 0.0
  %vm4881 = vcmp.gt.f32.partialorder %v4759, 0.0
  %vm4882 = vcmp.gt.f32.partialorder %v4762, 0.0
  %vm4883 = vcmp.gt.f32.partialorder %v4764, 0.0
  %vm4884 = vcmp.gt.f32.partialorder %v4767, 0.0
  %vm4885 = vcmp.gt.f32.partialorder %v4769, 0.0
  %vm4886 = vcmp.gt.f32.partialorder %v4772, 0.0
  %vm4887 = vcmp.gt.f32.partialorder %v4774, 0.0
  %vm4888 = vcmp.gt.f32.partialorder %v4777, 0.0
  %vm4889 = vcmp.gt.f32.partialorder %v4779, 0.0
  %vm4890 = vcmp.gt.f32.partialorder %v4782, 0.0
  %vm4891 = vcmp.gt.f32.partialorder %v4784, 0.0
  %vm4892 = vcmp.gt.f32.partialorder %v4787, 0.0
  %vm4893 = vcmp.gt.f32.partialorder %v4789, 0.0
  %vm4894 = vcmp.gt.f32.partialorder %v4792, 0.0
  %vm4895 = vcmp.gt.f32.partialorder %v4794, 0.0
  %vm4896 = vcmp.gt.f32.partialorder %v4797, 0.0
  %vm4897 = vcmp.gt.f32.partialorder %v4799, 0.0
  %vm4898 = vcmp.gt.f32.partialorder %v4802, 0.0
  %vm4899 = vcmp.gt.f32.partialorder %v4804, 0.0
  %vm4900 = vcmp.gt.f32.partialorder %v4807, 0.0
  %vm4901 = vcmp.gt.f32.partialorder %v4809, 0.0
  %vm4902 = vcmp.gt.f32.partialorder %v4812, 0.0
  %vm4903 = vcmp.gt.f32.partialorder %v4814, 0.0
  %vm4904 = vcmp.gt.f32.partialorder %v4817, 0.0
  %vm4905 = vcmp.gt.f32.partialorder %v4819, 0.0
  %vm4906 = vcmp.gt.f32.partialorder %v4822, 0.0
  %vm4907 = vcmp.gt.f32.partialorder %v4824, 0.0
  %vm4908 = vcmp.gt.f32.partialorder %v4827, 0.0
  %vm4909 = vcmp.gt.f32.partialorder %v4829, 0.0
  %vm4910 = vcmp.gt.f32.partialorder %v4832, 0.0
  %vm4911 = vcmp.gt.f32.partialorder %v4834, 0.0
  %vm4912 = vcmp.gt.f32.partialorder %v4837, 0.0
  %vm4913 = vcmp.gt.f32.partialorder %v4839, 0.0
  %vm4914 = vcmp.gt.f32.partialorder %v4842, 0.0
  %vm4915 = vcmp.gt.f32.partialorder %v4844, 0.0
  %vm4916 = vcmp.gt.f32.partialorder %v4847, 0.0
  %vm4917 = vcmp.gt.f32.partialorder %v4849, 0.0
  %vm4918 = vcmp.gt.f32.partialorder %v4852, 0.0
  %vm4919 = vcmp.gt.f32.partialorder %v4854, 0.0
  %v4920 = vmul.f32 %v4697, 1.442695
  %v4921 = vpow.pop %v4920
  %v4922 = vmul.f32 %v4699, 1.442695
  %v4923 = vpow.pop %v4922
  %v4924 = vmul.f32 %v4702, 1.442695
  %v4925 = vpow.pop %v4924
  %v4926 = vmul.f32 %v4704, 1.442695
  %v4927 = vpow.pop %v4926
  %v4928 = vmul.f32 %v4707, 1.442695
  %v4929 = vpow.pop %v4928
  %v4930 = vmul.f32 %v4709, 1.442695
  %v4931 = vpow.pop %v4930
  %v4932 = vmul.f32 %v4712, 1.442695
  %v4933 = vpow.pop %v4932
  %v4934 = vmul.f32 %v4714, 1.442695
  %v4935 = vpow.pop %v4934
  %v4936 = vmul.f32 %v4717, 1.442695
  %v4937 = vpow.pop %v4936
  %v4938 = vmul.f32 %v4719, 1.442695
  %v4939 = vpow.pop %v4938
  %v4940 = vmul.f32 %v4722, 1.442695
  %v4941 = vpow.pop %v4940
  %v4942 = vmul.f32 %v4724, 1.442695
  %v4943 = vpow.pop %v4942
  %v4944 = vmul.f32 %v4727, 1.442695
  %v4945 = vpow.pop %v4944
  %v4946 = vmul.f32 %v4729, 1.442695
  %v4947 = vpow.pop %v4946
  %v4948 = vmul.f32 %v4732, 1.442695
  %v4949 = vpow.pop %v4948
  %v4950 = vmul.f32 %v4734, 1.442695
  %v4951 = vpow.pop %v4950
  %v4952 = vmul.f32 %v4737, 1.442695
  %v4953 = vpow.pop %v4952
  %v4954 = vmul.f32 %v4739, 1.442695
  %v4955 = vpow.pop %v4954
  %v4956 = vmul.f32 %v4742, 1.442695
  %v4957 = vpow.pop %v4956
  %v4958 = vmul.f32 %v4744, 1.442695
  %v4959 = vpow.pop %v4958
  %v4960 = vmul.f32 %v4747, 1.442695
  %v4961 = vpow.pop %v4960
  %v4962 = vmul.f32 %v4749, 1.442695
  %v4963 = vpow.pop %v4962
  %v4964 = vmul.f32 %v4752, 1.442695
  %v4965 = vpow.pop %v4964
  %v4966 = vmul.f32 %v4754, 1.442695
  %v4967 = vpow.pop %v4966
  %v4968 = vmul.f32 %v4757, 1.442695
  %v4969 = vpow.pop %v4968
  %v4970 = vmul.f32 %v4759, 1.442695
  %v4971 = vpow.pop %v4970
  %v4972 = vmul.f32 %v4762, 1.442695
  %v4973 = vpow.pop %v4972
  %v4974 = vmul.f32 %v4764, 1.442695
  %v4975 = vpow.pop %v4974
  %v4976 = vmul.f32 %v4767, 1.442695
  %v4977 = vpow.pop %v4976
  %v4978 = vmul.f32 %v4769, 1.442695
  %v4979 = vpow.pop %v4978
  %v4980 = vmul.f32 %v4772, 1.442695
  %v4981 = vpow.pop %v4980
  %v4982 = vmul.f32 %v4774, 1.442695
  %v4983 = vpow.pop %v4982
  %v4984 = vmul.f32 %v4777, 1.442695
  %v4985 = vpow.pop %v4984
  %v4986 = vmul.f32 %v4779, 1.442695
  %v4987 = vpow.pop %v4986
  %v4988 = vmul.f32 %v4782, 1.442695
  %v4989 = vpow.pop %v4988
  %v4990 = vmul.f32 %v4784, 1.442695
  %v4991 = vpow.pop %v4990
  %v4992 = vmul.f32 %v4787, 1.442695
  %v4993 = vpow.pop %v4992
  %v4994 = vmul.f32 %v4789, 1.442695
  %v4995 = vpow.pop %v4994
  %v4996 = vmul.f32 %v4792, 1.442695
  %v4997 = vpow.pop %v4996
  %v4998 = vmul.f32 %v4794, 1.442695
  %v4999 = vpow.pop %v4998
  %v5000 = vmul.f32 %v4797, 1.442695
  %v5001 = vpow.pop %v5000
  %v5002 = vmul.f32 %v4799, 1.442695
  %v5003 = vpow.pop %v5002
  %v5004 = vmul.f32 %v4802, 1.442695
  %v5005 = vpow.pop %v5004
  %v5006 = vmul.f32 %v4804, 1.442695
  %v5007 = vpow.pop %v5006
  %v5008 = vmul.f32 %v4807, 1.442695
  %v5009 = vpow.pop %v5008
  %v5010 = vmul.f32 %v4809, 1.442695
  %v5011 = vpow.pop %v5010
  %v5012 = vmul.f32 %v4812, 1.442695
  %v5013 = vpow.pop %v5012
  %v5014 = vmul.f32 %v4814, 1.442695
  %v5015 = vpow.pop %v5014
  %v5016 = vmul.f32 %v4817, 1.442695
  %v5017 = vpow.pop %v5016
  %v5018 = vmul.f32 %v4819, 1.442695
  %v5019 = vpow.pop %v5018
  %v5020 = vmul.f32 %v4822, 1.442695
  %v5021 = vpow.pop %v5020
  %v5022 = vmul.f32 %v4824, 1.442695
  %v5023 = vpow.pop %v5022
  %v5024 = vmul.f32 %v4827, 1.442695
  %v5025 = vpow.pop %v5024
  %v5026 = vmul.f32 %v4829, 1.442695
  %v5027 = vpow.pop %v5026
  %v5028 = vmul.f32 %v4832, 1.442695
  %v5029 = vpow.pop %v5028
  %v5030 = vmul.f32 %v4834, 1.442695
  %v5031 = vpow.pop %v5030
  %v5032 = vmul.f32 %v4837, 1.442695
  %v5033 = vpow.pop %v5032
  %v5034 = vmul.f32 %v4839, 1.442695
  %v5035 = vpow.pop %v5034
  %v5036 = vmul.f32 %v4842, 1.442695
  %v5037 = vpow.pop %v5036
  %v5038 = vmul.f32 %v4844, 1.442695
  %v5039 = vpow.pop %v5038
  %v5040 = vmul.f32 %v4847, 1.442695
  %v5041 = vpow.pop %v5040
  %v5042 = vmul.f32 %v4849, 1.442695
  %v5043 = vpow.pop %v5042
  %v5044 = vmul.f32 %v4852, 1.442695
  %v5045 = vpow.pop %v5044
  %v5046 = vmul.f32 %v4854, 1.442695
  %v5047 = vpow.pop %v5046
  %v5048 = vsub.f32 %v4921, 1.0
  %v5049 = vsub.f32 %v4923, 1.0
  %v5050 = vsub.f32 %v4925, 1.0
  %v5051 = vsub.f32 %v4927, 1.0
  %v5052 = vsub.f32 %v4929, 1.0
  %v5053 = vsub.f32 %v4931, 1.0
  %v5054 = vsub.f32 %v4933, 1.0
  %v5055 = vsub.f32 %v4935, 1.0
  %v5056 = vsub.f32 %v4937, 1.0
  %v5057 = vsub.f32 %v4939, 1.0
  %v5058 = vsub.f32 %v4941, 1.0
  %v5059 = vsub.f32 %v4943, 1.0
  %v5060 = vsub.f32 %v4945, 1.0
  %v5061 = vsub.f32 %v4947, 1.0
  %v5062 = vsub.f32 %v4949, 1.0
  %v5063 = vsub.f32 %v4951, 1.0
  %v5064 = vsub.f32 %v4953, 1.0
  %v5065 = vsub.f32 %v4955, 1.0
  %v5066 = vsub.f32 %v4957, 1.0
  %v5067 = vsub.f32 %v4959, 1.0
  %v5068 = vsub.f32 %v4961, 1.0
  %v5069 = vsub.f32 %v4963, 1.0
  %v5070 = vsub.f32 %v4965, 1.0
  %v5071 = vsub.f32 %v4967, 1.0
  %v5072 = vsub.f32 %v4969, 1.0
  %v5073 = vsub.f32 %v4971, 1.0
  %v5074 = vsub.f32 %v4973, 1.0
  %v5075 = vsub.f32 %v4975, 1.0
  %v5076 = vsub.f32 %v4977, 1.0
  %v5077 = vsub.f32 %v4979, 1.0
  %v5078 = vsub.f32 %v4981, 1.0
  %v5079 = vsub.f32 %v4983, 1.0
  %v5080 = vsub.f32 %v4985, 1.0
  %v5081 = vsub.f32 %v4987, 1.0
  %v5082 = vsub.f32 %v4989, 1.0
  %v5083 = vsub.f32 %v4991, 1.0
  %v5084 = vsub.f32 %v4993, 1.0
  %v5085 = vsub.f32 %v4995, 1.0
  %v5086 = vsub.f32 %v4997, 1.0
  %v5087 = vsub.f32 %v4999, 1.0
  %v5088 = vsub.f32 %v5001, 1.0
  %v5089 = vsub.f32 %v5003, 1.0
  %v5090 = vsub.f32 %v5005, 1.0
  %v5091 = vsub.f32 %v5007, 1.0
  %v5092 = vsub.f32 %v5009, 1.0
  %v5093 = vsub.f32 %v5011, 1.0
  %v5094 = vsub.f32 %v5013, 1.0
  %v5095 = vsub.f32 %v5015, 1.0
  %v5096 = vsub.f32 %v5017, 1.0
  %v5097 = vsub.f32 %v5019, 1.0
  %v5098 = vsub.f32 %v5021, 1.0
  %v5099 = vsub.f32 %v5023, 1.0
  %v5100 = vsub.f32 %v5025, 1.0
  %v5101 = vsub.f32 %v5027, 1.0
  %v5102 = vsub.f32 %v5029, 1.0
  %v5103 = vsub.f32 %v5031, 1.0
  %v5104 = vsub.f32 %v5033, 1.0
  %v5105 = vsub.f32 %v5035, 1.0
  %v5106 = vsub.f32 %v5037, 1.0
  %v5107 = vsub.f32 %v5039, 1.0
  %v5108 = vsub.f32 %v5041, 1.0
  %v5109 = vsub.f32 %v5043, 1.0
  %v5110 = vsub.f32 %v5045, 1.0
  %v5111 = vsub.f32 %v5047, 1.0
  %v5112 = vsel %vm4856, %v4697, %v5048
  %v5113 = vsel %vm4857, %v4699, %v5049
  %v5114 = vsel %vm4858, %v4702, %v5050
  %v5115 = vsel %vm4859, %v4704, %v5051
  %v5116 = vsel %vm4860, %v4707, %v5052
  %v5117 = vsel %vm4861, %v4709, %v5053
  %v5118 = vsel %vm4862, %v4712, %v5054
  %v5119 = vsel %vm4863, %v4714, %v5055
  %v5120 = vsel %vm4864, %v4717, %v5056
  %v5121 = vsel %vm4865, %v4719, %v5057
  %v5122 = vsel %vm4866, %v4722, %v5058
  %v5123 = vsel %vm4867, %v4724, %v5059
  %v5124 = vsel %vm4868, %v4727, %v5060
  %v5125 = vsel %vm4869, %v4729, %v5061
  %v5126 = vsel %vm4870, %v4732, %v5062
  %v5127 = vsel %vm4871, %v4734, %v5063
  %v5128 = vsel %vm4872, %v4737, %v5064
  %v5129 = vsel %vm4873, %v4739, %v5065
  %v5130 = vsel %vm4874, %v4742, %v5066
  %v5131 = vsel %vm4875, %v4744, %v5067
  %v5132 = vsel %vm4876, %v4747, %v5068
  %v5133 = vsel %vm4877, %v4749, %v5069
  %v5134 = vsel %vm4878, %v4752, %v5070
  %v5135 = vsel %vm4879, %v4754, %v5071
  %v5136 = vsel %vm4880, %v4757, %v5072
  %v5137 = vsel %vm4881, %v4759, %v5073
  %v5138 = vsel %vm4882, %v4762, %v5074
  %v5139 = vsel %vm4883, %v4764, %v5075
  %v5140 = vsel %vm4884, %v4767, %v5076
  %v5141 = vsel %vm4885, %v4769, %v5077
  %v5142 = vsel %vm4886, %v4772, %v5078
  %v5143 = vsel %vm4887, %v4774, %v5079
  %v5144 = vsel %vm4888, %v4777, %v5080
  %v5145 = vsel %vm4889, %v4779, %v5081
  %v5146 = vsel %vm4890, %v4782, %v5082
  %v5147 = vsel %vm4891, %v4784, %v5083
  %v5148 = vsel %vm4892, %v4787, %v5084
  %v5149 = vsel %vm4893, %v4789, %v5085
  %v5150 = vsel %vm4894, %v4792, %v5086
  %v5151 = vsel %vm4895, %v4794, %v5087
  %v5152 = vsel %vm4896, %v4797, %v5088
  %v5153 = vsel %vm4897, %v4799, %v5089
  %v5154 = vsel %vm4898, %v4802, %v5090
  %v5155 = vsel %vm4899, %v4804, %v5091
  %v5156 = vsel %vm4900, %v4807, %v5092
  %v5157 = vsel %vm4901, %v4809, %v5093
  %v5158 = vsel %vm4902, %v4812, %v5094
  %v5159 = vsel %vm4903, %v4814, %v5095
  %v5160 = vsel %vm4904, %v4817, %v5096
  %v5161 = vsel %vm4905, %v4819, %v5097
  %v5162 = vsel %vm4906, %v4822, %v5098
  %v5163 = vsel %vm4907, %v4824, %v5099
  %v5164 = vsel %vm4908, %v4827, %v5100
  %v5165 = vsel %vm4909, %v4829, %v5101
  %v5166 = vsel %vm4910, %v4832, %v5102
  %v5167 = vsel %vm4911, %v4834, %v5103
  %v5168 = vsel %vm4912, %v4837, %v5104
  %v5169 = vsel %vm4913, %v4839, %v5105
  %v5170 = vsel %vm4914, %v4842, %v5106
  %v5171 = vsel %vm4915, %v4844, %v5107
  %v5172 = vsel %vm4916, %v4847, %v5108
  %v5173 = vsel %vm4917, %v4849, %v5109
  %v5174 = vsel %vm4918, %v4852, %v5110
  %v5175 = vsel %vm4919, %v4854, %v5111
  %v5176 = vpack.c.bf16 %v5112, %v5112
  %v5177 = vpack.c.bf16 %v5113, %v5113
  %v5178 = vpack.c.bf16 %v5114, %v5114
  %v5179 = vpack.c.bf16 %v5115, %v5115
  %v5180 = vpack.c.bf16 %v5116, %v5116
  %v5181 = vpack.c.bf16 %v5117, %v5117
  %v5182 = vpack.c.bf16 %v5118, %v5118
  %v5183 = vpack.c.bf16 %v5119, %v5119
  %v5184 = vpack.c.bf16 %v5120, %v5120
  %v5185 = vpack.c.bf16 %v5121, %v5121
  %v5186 = vpack.c.bf16 %v5122, %v5122
  %v5187 = vpack.c.bf16 %v5123, %v5123
  %v5188 = vpack.c.bf16 %v5124, %v5124
  %v5189 = vpack.c.bf16 %v5125, %v5125
  %v5190 = vpack.c.bf16 %v5126, %v5126
  %v5191 = vpack.c.bf16 %v5127, %v5127
  %v5192 = vpack.c.bf16 %v5128, %v5128
  %v5193 = vpack.c.bf16 %v5129, %v5129
  %v5194 = vpack.c.bf16 %v5130, %v5130
  %v5195 = vpack.c.bf16 %v5131, %v5131
  %v5196 = vpack.c.bf16 %v5132, %v5132
  %v5197 = vpack.c.bf16 %v5133, %v5133
  %v5198 = vpack.c.bf16 %v5134, %v5134
  %v5199 = vpack.c.bf16 %v5135, %v5135
  %v5200 = vpack.c.bf16 %v5136, %v5136
  %v5201 = vpack.c.bf16 %v5137, %v5137
  %v5202 = vpack.c.bf16 %v5138, %v5138
  %v5203 = vpack.c.bf16 %v5139, %v5139
  %v5204 = vpack.c.bf16 %v5140, %v5140
  %v5205 = vpack.c.bf16 %v5141, %v5141
  %v5206 = vpack.c.bf16 %v5142, %v5142
  %v5207 = vpack.c.bf16 %v5143, %v5143
  %v5208 = vpack.c.bf16 %v5144, %v5144
  %v5209 = vpack.c.bf16 %v5145, %v5145
  %v5210 = vpack.c.bf16 %v5146, %v5146
  %v5211 = vpack.c.bf16 %v5147, %v5147
  %v5212 = vpack.c.bf16 %v5148, %v5148
  %v5213 = vpack.c.bf16 %v5149, %v5149
  %v5214 = vpack.c.bf16 %v5150, %v5150
  %v5215 = vpack.c.bf16 %v5151, %v5151
  %v5216 = vpack.c.bf16 %v5152, %v5152
  %v5217 = vpack.c.bf16 %v5153, %v5153
  %v5218 = vpack.c.bf16 %v5154, %v5154
  %v5219 = vpack.c.bf16 %v5155, %v5155
  %v5220 = vpack.c.bf16 %v5156, %v5156
  %v5221 = vpack.c.bf16 %v5157, %v5157
  %v5222 = vpack.c.bf16 %v5158, %v5158
  %v5223 = vpack.c.bf16 %v5159, %v5159
  %v5224 = vpack.c.bf16 %v5160, %v5160
  %v5225 = vpack.c.bf16 %v5161, %v5161
  %v5226 = vpack.c.bf16 %v5162, %v5162
  %v5227 = vpack.c.bf16 %v5163, %v5163
  %v5228 = vpack.c.bf16 %v5164, %v5164
  %v5229 = vpack.c.bf16 %v5165, %v5165
  %v5230 = vpack.c.bf16 %v5166, %v5166
  %v5231 = vpack.c.bf16 %v5167, %v5167
  %v5232 = vpack.c.bf16 %v5168, %v5168
  %v5233 = vpack.c.bf16 %v5169, %v5169
  %v5234 = vpack.c.bf16 %v5170, %v5170
  %v5235 = vpack.c.bf16 %v5171, %v5171
  %v5236 = vpack.c.bf16 %v5172, %v5172
  %v5237 = vpack.c.bf16 %v5173, %v5173
  %v5238 = vpack.c.bf16 %v5174, %v5174
  %v5239 = vpack.c.bf16 %v5175, %v5175
  %v5240 = vrot.slane %v5112, 1
  %v5241 = vrot.slane %v5113, 1
  %v5242 = vrot.slane %v5114, 1
  %v5243 = vrot.slane %v5115, 1
  %v5244 = vrot.slane %v5116, 1
  %v5245 = vrot.slane %v5117, 1
  %v5246 = vrot.slane %v5118, 1
  %v5247 = vrot.slane %v5119, 1
  %v5248 = vrot.slane %v5120, 1
  %v5249 = vrot.slane %v5121, 1
  %v5250 = vrot.slane %v5122, 1
  %v5251 = vrot.slane %v5123, 1
  %v5252 = vrot.slane %v5124, 1
  %v5253 = vrot.slane %v5125, 1
  %v5254 = vrot.slane %v5126, 1
  %v5255 = vrot.slane %v5127, 1
  %v5256 = vrot.slane %v5128, 1
  %v5257 = vrot.slane %v5129, 1
  %v5258 = vrot.slane %v5130, 1
  %v5259 = vrot.slane %v5131, 1
  %v5260 = vrot.slane %v5132, 1
  %v5261 = vrot.slane %v5133, 1
  %v5262 = vrot.slane %v5134, 1
  %v5263 = vrot.slane %v5135, 1
  %v5264 = vrot.slane %v5136, 1
  %v5265 = vrot.slane %v5137, 1
  %v5266 = vrot.slane %v5138, 1
  %v5267 = vrot.slane %v5139, 1
  %v5268 = vrot.slane %v5140, 1
  %v5269 = vrot.slane %v5141, 1
  %v5270 = vrot.slane %v5142, 1
  %v5271 = vrot.slane %v5143, 1
  %v5272 = vrot.slane %v5144, 1
  %v5273 = vrot.slane %v5145, 1
  %v5274 = vrot.slane %v5146, 1
  %v5275 = vrot.slane %v5147, 1
  %v5276 = vrot.slane %v5148, 1
  %v5277 = vrot.slane %v5149, 1
  %v5278 = vrot.slane %v5150, 1
  %v5279 = vrot.slane %v5151, 1
  %v5280 = vrot.slane %v5152, 1
  %v5281 = vrot.slane %v5153, 1
  %v5282 = vrot.slane %v5154, 1
  %v5283 = vrot.slane %v5155, 1
  %v5284 = vrot.slane %v5156, 1
  %v5285 = vrot.slane %v5157, 1
  %v5286 = vrot.slane %v5158, 1
  %v5287 = vrot.slane %v5159, 1
  %v5288 = vrot.slane %v5160, 1
  %v5289 = vrot.slane %v5161, 1
  %v5290 = vrot.slane %v5162, 1
  %v5291 = vrot.slane %v5163, 1
  %v5292 = vrot.slane %v5164, 1
  %v5293 = vrot.slane %v5165, 1
  %v5294 = vrot.slane %v5166, 1
  %v5295 = vrot.slane %v5167, 1
  %v5296 = vrot.slane %v5168, 1
  %v5297 = vrot.slane %v5169, 1
  %v5298 = vrot.slane %v5170, 1
  %v5299 = vrot.slane %v5171, 1
  %v5300 = vrot.slane %v5172, 1
  %v5301 = vrot.slane %v5173, 1
  %v5302 = vrot.slane %v5174, 1
  %v5303 = vrot.slane %v5175, 1
  %v5304 = vsel %vm402, %v5302, %v5303
  %v5305 = vsel %vm402, %v5301, %v5302
  %v5306 = vsel %vm402, %v5300, %v5301
  %v5307 = vsel %vm402, %v5299, %v5300
  %v5308 = vsel %vm402, %v5298, %v5299
  %v5309 = vsel %vm402, %v5297, %v5298
  %v5310 = vsel %vm402, %v5296, %v5297
  %v5311 = vsel %vm402, %v5295, %v5296
  %v5312 = vsel %vm402, %v5294, %v5295
  %v5313 = vsel %vm402, %v5293, %v5294
  %v5314 = vsel %vm402, %v5292, %v5293
  %v5315 = vsel %vm402, %v5291, %v5292
  %v5316 = vsel %vm402, %v5290, %v5291
  %v5317 = vsel %vm402, %v5289, %v5290
  %v5318 = vsel %vm402, %v5288, %v5289
  %v5319 = vsel %vm402, %v5287, %v5288
  %v5320 = vsel %vm402, %v5286, %v5287
  %v5321 = vsel %vm402, %v5285, %v5286
  %v5322 = vsel %vm402, %v5284, %v5285
  %v5323 = vsel %vm402, %v5283, %v5284
  %v5324 = vsel %vm402, %v5282, %v5283
  %v5325 = vsel %vm402, %v5281, %v5282
  %v5326 = vsel %vm402, %v5280, %v5281
  %v5327 = vsel %vm402, %v5279, %v5280
  %v5328 = vsel %vm402, %v5278, %v5279
  %v5329 = vsel %vm402, %v5277, %v5278
  %v5330 = vsel %vm402, %v5276, %v5277
  %v5331 = vsel %vm402, %v5275, %v5276
  %v5332 = vsel %vm402, %v5274, %v5275
  %v5333 = vsel %vm402, %v5273, %v5274
  %v5334 = vsel %vm402, %v5272, %v5273
  %v5335 = vsel %vm402, %v5271, %v5272
  %v5336 = vsel %vm402, %v5270, %v5271
  %v5337 = vsel %vm402, %v5269, %v5270
  %v5338 = vsel %vm402, %v5268, %v5269
  %v5339 = vsel %vm402, %v5267, %v5268
  %v5340 = vsel %vm402, %v5266, %v5267
  %v5341 = vsel %vm402, %v5265, %v5266
  %v5342 = vsel %vm402, %v5264, %v5265
  %v5343 = vsel %vm402, %v5263, %v5264
  %v5344 = vsel %vm402, %v5262, %v5263
  %v5345 = vsel %vm402, %v5261, %v5262
  %v5346 = vsel %vm402, %v5260, %v5261
  %v5347 = vsel %vm402, %v5259, %v5260
  %v5348 = vsel %vm402, %v5258, %v5259
  %v5349 = vsel %vm402, %v5257, %v5258
  %v5350 = vsel %vm402, %v5256, %v5257
  %v5351 = vsel %vm402, %v5255, %v5256
  %v5352 = vsel %vm402, %v5254, %v5255
  %v5353 = vsel %vm402, %v5253, %v5254
  %v5354 = vsel %vm402, %v5252, %v5253
  %v5355 = vsel %vm402, %v5251, %v5252
  %v5356 = vsel %vm402, %v5250, %v5251
  %v5357 = vsel %vm402, %v5249, %v5250
  %v5358 = vsel %vm402, %v5248, %v5249
  %v5359 = vsel %vm402, %v5247, %v5248
  %v5360 = vsel %vm402, %v5246, %v5247
  %v5361 = vsel %vm402, %v5245, %v5246
  %v5362 = vsel %vm402, %v5244, %v5245
  %v5363 = vsel %vm402, %v5243, %v5244
  %v5364 = vsel %vm402, %v5242, %v5243
  %v5365 = vsel %vm402, %v5241, %v5242
  %v5366 = vsel %vm402, %v5240, %v5241
  %v5367 = vsel %vm402, %v5303, %v5240
  %v5368 = vpack.c.bf16 %v5366, %v5366
  %v5369 = vpack.c.bf16 %v5365, %v5365
  %v5370 = vpack.c.bf16 %v5364, %v5364
  %v5371 = vpack.c.bf16 %v5363, %v5363
  %v5372 = vpack.c.bf16 %v5362, %v5362
  %v5373 = vpack.c.bf16 %v5361, %v5361
  %v5374 = vpack.c.bf16 %v5360, %v5360
  %v5375 = vpack.c.bf16 %v5359, %v5359
  %v5376 = vpack.c.bf16 %v5358, %v5358
  %v5377 = vpack.c.bf16 %v5357, %v5357
  %v5378 = vpack.c.bf16 %v5356, %v5356
  %v5379 = vpack.c.bf16 %v5355, %v5355
  %v5380 = vpack.c.bf16 %v5354, %v5354
  %v5381 = vpack.c.bf16 %v5353, %v5353
  %v5382 = vpack.c.bf16 %v5352, %v5352
  %v5383 = vpack.c.bf16 %v5351, %v5351
  %v5384 = vpack.c.bf16 %v5350, %v5350
  %v5385 = vpack.c.bf16 %v5349, %v5349
  %v5386 = vpack.c.bf16 %v5348, %v5348
  %v5387 = vpack.c.bf16 %v5347, %v5347
  %v5388 = vpack.c.bf16 %v5346, %v5346
  %v5389 = vpack.c.bf16 %v5345, %v5345
  %v5390 = vpack.c.bf16 %v5344, %v5344
  %v5391 = vpack.c.bf16 %v5343, %v5343
  %v5392 = vpack.c.bf16 %v5342, %v5342
  %v5393 = vpack.c.bf16 %v5341, %v5341
  %v5394 = vpack.c.bf16 %v5340, %v5340
  %v5395 = vpack.c.bf16 %v5339, %v5339
  %v5396 = vpack.c.bf16 %v5338, %v5338
  %v5397 = vpack.c.bf16 %v5337, %v5337
  %v5398 = vpack.c.bf16 %v5336, %v5336
  %v5399 = vpack.c.bf16 %v5335, %v5335
  %v5400 = vpack.c.bf16 %v5334, %v5334
  %v5401 = vpack.c.bf16 %v5333, %v5333
  %v5402 = vpack.c.bf16 %v5332, %v5332
  %v5403 = vpack.c.bf16 %v5331, %v5331
  %v5404 = vpack.c.bf16 %v5330, %v5330
  %v5405 = vpack.c.bf16 %v5329, %v5329
  %v5406 = vpack.c.bf16 %v5328, %v5328
  %v5407 = vpack.c.bf16 %v5327, %v5327
  %v5408 = vpack.c.bf16 %v5326, %v5326
  %v5409 = vpack.c.bf16 %v5325, %v5325
  %v5410 = vpack.c.bf16 %v5324, %v5324
  %v5411 = vpack.c.bf16 %v5323, %v5323
  %v5412 = vpack.c.bf16 %v5322, %v5322
  %v5413 = vpack.c.bf16 %v5321, %v5321
  %v5414 = vpack.c.bf16 %v5320, %v5320
  %v5415 = vpack.c.bf16 %v5319, %v5319
  %v5416 = vpack.c.bf16 %v5318, %v5318
  %v5417 = vpack.c.bf16 %v5317, %v5317
  %v5418 = vpack.c.bf16 %v5316, %v5316
  %v5419 = vpack.c.bf16 %v5315, %v5315
  %v5420 = vpack.c.bf16 %v5314, %v5314
  %v5421 = vpack.c.bf16 %v5313, %v5313
  %v5422 = vpack.c.bf16 %v5312, %v5312
  %v5423 = vpack.c.bf16 %v5311, %v5311
  %v5424 = vpack.c.bf16 %v5310, %v5310
  %v5425 = vpack.c.bf16 %v5309, %v5309
  %v5426 = vpack.c.bf16 %v5308, %v5308
  %v5427 = vpack.c.bf16 %v5307, %v5307
  %v5428 = vpack.c.bf16 %v5306, %v5306
  %v5429 = vpack.c.bf16 %v5305, %v5305
  %v5430 = vpack.c.bf16 %v5304, %v5304
  %v5431 = vpack.c.bf16 %v5367, %v5367
  %v5432 = vrot.slane %v5112, 2
  %v5433 = vrot.slane %v5113, 2
  %v5434 = vrot.slane %v5114, 2
  %v5435 = vrot.slane %v5115, 2
  %v5436 = vrot.slane %v5116, 2
  %v5437 = vrot.slane %v5117, 2
  %v5438 = vrot.slane %v5118, 2
  %v5439 = vrot.slane %v5119, 2
  %v5440 = vrot.slane %v5120, 2
  %v5441 = vrot.slane %v5121, 2
  %v5442 = vrot.slane %v5122, 2
  %v5443 = vrot.slane %v5123, 2
  %v5444 = vrot.slane %v5124, 2
  %v5445 = vrot.slane %v5125, 2
  %v5446 = vrot.slane %v5126, 2
  %v5447 = vrot.slane %v5127, 2
  %v5448 = vrot.slane %v5128, 2
  %v5449 = vrot.slane %v5129, 2
  %v5450 = vrot.slane %v5130, 2
  %v5451 = vrot.slane %v5131, 2
  %v5452 = vrot.slane %v5132, 2
  %v5453 = vrot.slane %v5133, 2
  %v5454 = vrot.slane %v5134, 2
  %v5455 = vrot.slane %v5135, 2
  %v5456 = vrot.slane %v5136, 2
  %v5457 = vrot.slane %v5137, 2
  %v5458 = vrot.slane %v5138, 2
  %v5459 = vrot.slane %v5139, 2
  %v5460 = vrot.slane %v5140, 2
  %v5461 = vrot.slane %v5141, 2
  %v5462 = vrot.slane %v5142, 2
  %v5463 = vrot.slane %v5143, 2
  %v5464 = vrot.slane %v5144, 2
  %v5465 = vrot.slane %v5145, 2
  %v5466 = vrot.slane %v5146, 2
  %v5467 = vrot.slane %v5147, 2
  %v5468 = vrot.slane %v5148, 2
  %v5469 = vrot.slane %v5149, 2
  %v5470 = vrot.slane %v5150, 2
  %v5471 = vrot.slane %v5151, 2
  %v5472 = vrot.slane %v5152, 2
  %v5473 = vrot.slane %v5153, 2
  %v5474 = vrot.slane %v5154, 2
  %v5475 = vrot.slane %v5155, 2
  %v5476 = vrot.slane %v5156, 2
  %v5477 = vrot.slane %v5157, 2
  %v5478 = vrot.slane %v5158, 2
  %v5479 = vrot.slane %v5159, 2
  %v5480 = vrot.slane %v5160, 2
  %v5481 = vrot.slane %v5161, 2
  %v5482 = vrot.slane %v5162, 2
  %v5483 = vrot.slane %v5163, 2
  %v5484 = vrot.slane %v5164, 2
  %v5485 = vrot.slane %v5165, 2
  %v5486 = vrot.slane %v5166, 2
  %v5487 = vrot.slane %v5167, 2
  %v5488 = vrot.slane %v5168, 2
  %v5489 = vrot.slane %v5169, 2
  %v5490 = vrot.slane %v5170, 2
  %v5491 = vrot.slane %v5171, 2
  %v5492 = vrot.slane %v5172, 2
  %v5493 = vrot.slane %v5173, 2
  %v5494 = vrot.slane %v5174, 2
  %v5495 = vrot.slane %v5175, 2
  %v5496 = vsel %vm2960, %v5494, %v5495
  %v5497 = vsel %vm2960, %v5493, %v5494
  %v5498 = vsel %vm2960, %v5492, %v5493
  %v5499 = vsel %vm2960, %v5491, %v5492
  %v5500 = vsel %vm2960, %v5490, %v5491
  %v5501 = vsel %vm2960, %v5489, %v5490
  %v5502 = vsel %vm2960, %v5488, %v5489
  %v5503 = vsel %vm2960, %v5487, %v5488
  %v5504 = vsel %vm2960, %v5486, %v5487
  %v5505 = vsel %vm2960, %v5485, %v5486
  %v5506 = vsel %vm2960, %v5484, %v5485
  %v5507 = vsel %vm2960, %v5483, %v5484
  %v5508 = vsel %vm2960, %v5482, %v5483
  %v5509 = vsel %vm2960, %v5481, %v5482
  %v5510 = vsel %vm2960, %v5480, %v5481
  %v5511 = vsel %vm2960, %v5479, %v5480
  %v5512 = vsel %vm2960, %v5478, %v5479
  %v5513 = vsel %vm2960, %v5477, %v5478
  %v5514 = vsel %vm2960, %v5476, %v5477
  %v5515 = vsel %vm2960, %v5475, %v5476
  %v5516 = vsel %vm2960, %v5474, %v5475
  %v5517 = vsel %vm2960, %v5473, %v5474
  %v5518 = vsel %vm2960, %v5472, %v5473
  %v5519 = vsel %vm2960, %v5471, %v5472
  %v5520 = vsel %vm2960, %v5470, %v5471
  %v5521 = vsel %vm2960, %v5469, %v5470
  %v5522 = vsel %vm2960, %v5468, %v5469
  %v5523 = vsel %vm2960, %v5467, %v5468
  %v5524 = vsel %vm2960, %v5466, %v5467
  %v5525 = vsel %vm2960, %v5465, %v5466
  %v5526 = vsel %vm2960, %v5464, %v5465
  %v5527 = vsel %vm2960, %v5463, %v5464
  %v5528 = vsel %vm2960, %v5462, %v5463
  %v5529 = vsel %vm2960, %v5461, %v5462
  %v5530 = vsel %vm2960, %v5460, %v5461
  %v5531 = vsel %vm2960, %v5459, %v5460
  %v5532 = vsel %vm2960, %v5458, %v5459
  %v5533 = vsel %vm2960, %v5457, %v5458
  %v5534 = vsel %vm2960, %v5456, %v5457
  %v5535 = vsel %vm2960, %v5455, %v5456
  %v5536 = vsel %vm2960, %v5454, %v5455
  %v5537 = vsel %vm2960, %v5453, %v5454
  %v5538 = vsel %vm2960, %v5452, %v5453
  %v5539 = vsel %vm2960, %v5451, %v5452
  %v5540 = vsel %vm2960, %v5450, %v5451
  %v5541 = vsel %vm2960, %v5449, %v5450
  %v5542 = vsel %vm2960, %v5448, %v5449
  %v5543 = vsel %vm2960, %v5447, %v5448
  %v5544 = vsel %vm2960, %v5446, %v5447
  %v5545 = vsel %vm2960, %v5445, %v5446
  %v5546 = vsel %vm2960, %v5444, %v5445
  %v5547 = vsel %vm2960, %v5443, %v5444
  %v5548 = vsel %vm2960, %v5442, %v5443
  %v5549 = vsel %vm2960, %v5441, %v5442
  %v5550 = vsel %vm2960, %v5440, %v5441
  %v5551 = vsel %vm2960, %v5439, %v5440
  %v5552 = vsel %vm2960, %v5438, %v5439
  %v5553 = vsel %vm2960, %v5437, %v5438
  %v5554 = vsel %vm2960, %v5436, %v5437
  %v5555 = vsel %vm2960, %v5435, %v5436
  %v5556 = vsel %vm2960, %v5434, %v5435
  %v5557 = vsel %vm2960, %v5433, %v5434
  %v5558 = vsel %vm2960, %v5432, %v5433
  %v5559 = vsel %vm2960, %v5495, %v5432
  %v5560 = vpack.c.bf16 %v5558, %v5558
  %v5561 = vpack.c.bf16 %v5557, %v5557
  %v5562 = vpack.c.bf16 %v5556, %v5556
  %v5563 = vpack.c.bf16 %v5555, %v5555
  %v5564 = vpack.c.bf16 %v5554, %v5554
  %v5565 = vpack.c.bf16 %v5553, %v5553
  %v5566 = vpack.c.bf16 %v5552, %v5552
  %v5567 = vpack.c.bf16 %v5551, %v5551
  %v5568 = vpack.c.bf16 %v5550, %v5550
  %v5569 = vpack.c.bf16 %v5549, %v5549
  %v5570 = vpack.c.bf16 %v5548, %v5548
  %v5571 = vpack.c.bf16 %v5547, %v5547
  %v5572 = vpack.c.bf16 %v5546, %v5546
  %v5573 = vpack.c.bf16 %v5545, %v5545
  %v5574 = vpack.c.bf16 %v5544, %v5544
  %v5575 = vpack.c.bf16 %v5543, %v5543
  %v5576 = vpack.c.bf16 %v5542, %v5542
  %v5577 = vpack.c.bf16 %v5541, %v5541
  %v5578 = vpack.c.bf16 %v5540, %v5540
  %v5579 = vpack.c.bf16 %v5539, %v5539
  %v5580 = vpack.c.bf16 %v5538, %v5538
  %v5581 = vpack.c.bf16 %v5537, %v5537
  %v5582 = vpack.c.bf16 %v5536, %v5536
  %v5583 = vpack.c.bf16 %v5535, %v5535
  %v5584 = vpack.c.bf16 %v5534, %v5534
  %v5585 = vpack.c.bf16 %v5533, %v5533
  %v5586 = vpack.c.bf16 %v5532, %v5532
  %v5587 = vpack.c.bf16 %v5531, %v5531
  %v5588 = vpack.c.bf16 %v5530, %v5530
  %v5589 = vpack.c.bf16 %v5529, %v5529
  %v5590 = vpack.c.bf16 %v5528, %v5528
  %v5591 = vpack.c.bf16 %v5527, %v5527
  %v5592 = vpack.c.bf16 %v5526, %v5526
  %v5593 = vpack.c.bf16 %v5525, %v5525
  %v5594 = vpack.c.bf16 %v5524, %v5524
  %v5595 = vpack.c.bf16 %v5523, %v5523
  %v5596 = vpack.c.bf16 %v5522, %v5522
  %v5597 = vpack.c.bf16 %v5521, %v5521
  %v5598 = vpack.c.bf16 %v5520, %v5520
  %v5599 = vpack.c.bf16 %v5519, %v5519
  %v5600 = vpack.c.bf16 %v5518, %v5518
  %v5601 = vpack.c.bf16 %v5517, %v5517
  %v5602 = vpack.c.bf16 %v5516, %v5516
  %v5603 = vpack.c.bf16 %v5515, %v5515
  %v5604 = vpack.c.bf16 %v5514, %v5514
  %v5605 = vpack.c.bf16 %v5513, %v5513
  %v5606 = vpack.c.bf16 %v5512, %v5512
  %v5607 = vpack.c.bf16 %v5511, %v5511
  %v5608 = vpack.c.bf16 %v5510, %v5510
  %v5609 = vpack.c.bf16 %v5509, %v5509
  %v5610 = vpack.c.bf16 %v5508, %v5508
  %v5611 = vpack.c.bf16 %v5507, %v5507
  %v5612 = vpack.c.bf16 %v5506, %v5506
  %v5613 = vpack.c.bf16 %v5505, %v5505
  %v5614 = vpack.c.bf16 %v5504, %v5504
  %v5615 = vpack.c.bf16 %v5503, %v5503
  %v5616 = vpack.c.bf16 %v5502, %v5502
  %v5617 = vpack.c.bf16 %v5501, %v5501
  %v5618 = vpack.c.bf16 %v5500, %v5500
  %v5619 = vpack.c.bf16 %v5499, %v5499
  %v5620 = vpack.c.bf16 %v5498, %v5498
  %v5621 = vpack.c.bf16 %v5497, %v5497
  %v5622 = vpack.c.bf16 %v5496, %v5496
  %v5623 = vpack.c.bf16 %v5559, %v5559
  %v5624 = vrot.slane %v5112, 3
  %v5625 = vrot.slane %v5113, 3
  %v5626 = vrot.slane %v5114, 3
  %v5627 = vrot.slane %v5115, 3
  %v5628 = vrot.slane %v5116, 3
  %v5629 = vrot.slane %v5117, 3
  %v5630 = vrot.slane %v5118, 3
  %v5631 = vrot.slane %v5119, 3
  %v5632 = vrot.slane %v5120, 3
  %v5633 = vrot.slane %v5121, 3
  %v5634 = vrot.slane %v5122, 3
  %v5635 = vrot.slane %v5123, 3
  %v5636 = vrot.slane %v5124, 3
  %v5637 = vrot.slane %v5125, 3
  %v5638 = vrot.slane %v5126, 3
  %v5639 = vrot.slane %v5127, 3
  %v5640 = vrot.slane %v5128, 3
  %v5641 = vrot.slane %v5129, 3
  %v5642 = vrot.slane %v5130, 3
  %v5643 = vrot.slane %v5131, 3
  %v5644 = vrot.slane %v5132, 3
  %v5645 = vrot.slane %v5133, 3
  %v5646 = vrot.slane %v5134, 3
  %v5647 = vrot.slane %v5135, 3
  %v5648 = vrot.slane %v5136, 3
  %v5649 = vrot.slane %v5137, 3
  %v5650 = vrot.slane %v5138, 3
  %v5651 = vrot.slane %v5139, 3
  %v5652 = vrot.slane %v5140, 3
  %v5653 = vrot.slane %v5141, 3
  %v5654 = vrot.slane %v5142, 3
  %v5655 = vrot.slane %v5143, 3
  %v5656 = vrot.slane %v5144, 3
  %v5657 = vrot.slane %v5145, 3
  %v5658 = vrot.slane %v5146, 3
  %v5659 = vrot.slane %v5147, 3
  %v5660 = vrot.slane %v5148, 3
  %v5661 = vrot.slane %v5149, 3
  %v5662 = vrot.slane %v5150, 3
  %v5663 = vrot.slane %v5151, 3
  %v5664 = vrot.slane %v5152, 3
  %v5665 = vrot.slane %v5153, 3
  %v5666 = vrot.slane %v5154, 3
  %v5667 = vrot.slane %v5155, 3
  %v5668 = vrot.slane %v5156, 3
  %v5669 = vrot.slane %v5157, 3
  %v5670 = vrot.slane %v5158, 3
  %v5671 = vrot.slane %v5159, 3
  %v5672 = vrot.slane %v5160, 3
  %v5673 = vrot.slane %v5161, 3
  %v5674 = vrot.slane %v5162, 3
  %v5675 = vrot.slane %v5163, 3
  %v5676 = vrot.slane %v5164, 3
  %v5677 = vrot.slane %v5165, 3
  %v5678 = vrot.slane %v5166, 3
  %v5679 = vrot.slane %v5167, 3
  %v5680 = vrot.slane %v5168, 3
  %v5681 = vrot.slane %v5169, 3
  %v5682 = vrot.slane %v5170, 3
  %v5683 = vrot.slane %v5171, 3
  %v5684 = vrot.slane %v5172, 3
  %v5685 = vrot.slane %v5173, 3
  %v5686 = vrot.slane %v5174, 3
  %v5687 = vrot.slane %v5175, 3
  %vm5688 = vcmp.lt.s32.totalorder %v208, 5
  %v5689 = vsel %vm5688, %v5686, %v5687
  %v5690 = vsel %vm5688, %v5685, %v5686
  %v5691 = vsel %vm5688, %v5684, %v5685
  %v5692 = vsel %vm5688, %v5683, %v5684
  %v5693 = vsel %vm5688, %v5682, %v5683
  %v5694 = vsel %vm5688, %v5681, %v5682
  %v5695 = vsel %vm5688, %v5680, %v5681
  %v5696 = vsel %vm5688, %v5679, %v5680
  %v5697 = vsel %vm5688, %v5678, %v5679
  %v5698 = vsel %vm5688, %v5677, %v5678
  %v5699 = vsel %vm5688, %v5676, %v5677
  %v5700 = vsel %vm5688, %v5675, %v5676
  %v5701 = vsel %vm5688, %v5674, %v5675
  %v5702 = vsel %vm5688, %v5673, %v5674
  %v5703 = vsel %vm5688, %v5672, %v5673
  %v5704 = vsel %vm5688, %v5671, %v5672
  %v5705 = vsel %vm5688, %v5670, %v5671
  %v5706 = vsel %vm5688, %v5669, %v5670
  %v5707 = vsel %vm5688, %v5668, %v5669
  %v5708 = vsel %vm5688, %v5667, %v5668
  %v5709 = vsel %vm5688, %v5666, %v5667
  %v5710 = vsel %vm5688, %v5665, %v5666
  %v5711 = vsel %vm5688, %v5664, %v5665
  %v5712 = vsel %vm5688, %v5663, %v5664
  %v5713 = vsel %vm5688, %v5662, %v5663
  %v5714 = vsel %vm5688, %v5661, %v5662
  %v5715 = vsel %vm5688, %v5660, %v5661
  %v5716 = vsel %vm5688, %v5659, %v5660
  %v5717 = vsel %vm5688, %v5658, %v5659
  %v5718 = vsel %vm5688, %v5657, %v5658
  %v5719 = vsel %vm5688, %v5656, %v5657
  %v5720 = vsel %vm5688, %v5655, %v5656
  %v5721 = vsel %vm5688, %v5654, %v5655
  %v5722 = vsel %vm5688, %v5653, %v5654
  %v5723 = vsel %vm5688, %v5652, %v5653
  %v5724 = vsel %vm5688, %v5651, %v5652
  %v5725 = vsel %vm5688, %v5650, %v5651
  %v5726 = vsel %vm5688, %v5649, %v5650
  %v5727 = vsel %vm5688, %v5648, %v5649
  %v5728 = vsel %vm5688, %v5647, %v5648
  %v5729 = vsel %vm5688, %v5646, %v5647
  %v5730 = vsel %vm5688, %v5645, %v5646
  %v5731 = vsel %vm5688, %v5644, %v5645
  %v5732 = vsel %vm5688, %v5643, %v5644
  %v5733 = vsel %vm5688, %v5642, %v5643
  %v5734 = vsel %vm5688, %v5641, %v5642
  %v5735 = vsel %vm5688, %v5640, %v5641
  %v5736 = vsel %vm5688, %v5639, %v5640
  %v5737 = vsel %vm5688, %v5638, %v5639
  %v5738 = vsel %vm5688, %v5637, %v5638
  %v5739 = vsel %vm5688, %v5636, %v5637
  %v5740 = vsel %vm5688, %v5635, %v5636
  %v5741 = vsel %vm5688, %v5634, %v5635
  %v5742 = vsel %vm5688, %v5633, %v5634
  %v5743 = vsel %vm5688, %v5632, %v5633
  %v5744 = vsel %vm5688, %v5631, %v5632
  %v5745 = vsel %vm5688, %v5630, %v5631
  %v5746 = vsel %vm5688, %v5629, %v5630
  %v5747 = vsel %vm5688, %v5628, %v5629
  %v5748 = vsel %vm5688, %v5627, %v5628
  %v5749 = vsel %vm5688, %v5626, %v5627
  %v5750 = vsel %vm5688, %v5625, %v5626
  %v5751 = vsel %vm5688, %v5624, %v5625
  %v5752 = vsel %vm5688, %v5687, %v5624
  %v5753 = vpack.c.bf16 %v5751, %v5751
  %v5754 = vpack.c.bf16 %v5750, %v5750
  %v5755 = vpack.c.bf16 %v5749, %v5749
  %v5756 = vpack.c.bf16 %v5748, %v5748
  %v5757 = vpack.c.bf16 %v5747, %v5747
  %v5758 = vpack.c.bf16 %v5746, %v5746
  %v5759 = vpack.c.bf16 %v5745, %v5745
  %v5760 = vpack.c.bf16 %v5744, %v5744
  %v5761 = vpack.c.bf16 %v5743, %v5743
  %v5762 = vpack.c.bf16 %v5742, %v5742
  %v5763 = vpack.c.bf16 %v5741, %v5741
  %v5764 = vpack.c.bf16 %v5740, %v5740
  %v5765 = vpack.c.bf16 %v5739, %v5739
  %v5766 = vpack.c.bf16 %v5738, %v5738
  %v5767 = vpack.c.bf16 %v5737, %v5737
  %v5768 = vpack.c.bf16 %v5736, %v5736
  %v5769 = vpack.c.bf16 %v5735, %v5735
  %v5770 = vpack.c.bf16 %v5734, %v5734
  %v5771 = vpack.c.bf16 %v5733, %v5733
  %v5772 = vpack.c.bf16 %v5732, %v5732
  %v5773 = vpack.c.bf16 %v5731, %v5731
  %v5774 = vpack.c.bf16 %v5730, %v5730
  %v5775 = vpack.c.bf16 %v5729, %v5729
  %v5776 = vpack.c.bf16 %v5728, %v5728
  %v5777 = vpack.c.bf16 %v5727, %v5727
  %v5778 = vpack.c.bf16 %v5726, %v5726
  %v5779 = vpack.c.bf16 %v5725, %v5725
  %v5780 = vpack.c.bf16 %v5724, %v5724
  %v5781 = vpack.c.bf16 %v5723, %v5723
  %v5782 = vpack.c.bf16 %v5722, %v5722
  %v5783 = vpack.c.bf16 %v5721, %v5721
  %v5784 = vpack.c.bf16 %v5720, %v5720
  %v5785 = vpack.c.bf16 %v5719, %v5719
  %v5786 = vpack.c.bf16 %v5718, %v5718
  %v5787 = vpack.c.bf16 %v5717, %v5717
  %v5788 = vpack.c.bf16 %v5716, %v5716
  %v5789 = vpack.c.bf16 %v5715, %v5715
  %v5790 = vpack.c.bf16 %v5714, %v5714
  %v5791 = vpack.c.bf16 %v5713, %v5713
  %v5792 = vpack.c.bf16 %v5712, %v5712
  %v5793 = vpack.c.bf16 %v5711, %v5711
  %v5794 = vpack.c.bf16 %v5710, %v5710
  %v5795 = vpack.c.bf16 %v5709, %v5709
  %v5796 = vpack.c.bf16 %v5708, %v5708
  %v5797 = vpack.c.bf16 %v5707, %v5707
  %v5798 = vpack.c.bf16 %v5706, %v5706
  %v5799 = vpack.c.bf16 %v5705, %v5705
  %v5800 = vpack.c.bf16 %v5704, %v5704
  %v5801 = vpack.c.bf16 %v5703, %v5703
  %v5802 = vpack.c.bf16 %v5702, %v5702
  %v5803 = vpack.c.bf16 %v5701, %v5701
  %v5804 = vpack.c.bf16 %v5700, %v5700
  %v5805 = vpack.c.bf16 %v5699, %v5699
  %v5806 = vpack.c.bf16 %v5698, %v5698
  %v5807 = vpack.c.bf16 %v5697, %v5697
  %v5808 = vpack.c.bf16 %v5696, %v5696
  %v5809 = vpack.c.bf16 %v5695, %v5695
  %v5810 = vpack.c.bf16 %v5694, %v5694
  %v5811 = vpack.c.bf16 %v5693, %v5693
  %v5812 = vpack.c.bf16 %v5692, %v5692
  %v5813 = vpack.c.bf16 %v5691, %v5691
  %v5814 = vpack.c.bf16 %v5690, %v5690
  %v5815 = vpack.c.bf16 %v5689, %v5689
  %v5816 = vpack.c.bf16 %v5752, %v5752
  %v5817 = vrot.slane %v5112, 4
  %v5818 = vrot.slane %v5113, 4
  %v5819 = vrot.slane %v5114, 4
  %v5820 = vrot.slane %v5115, 4
  %v5821 = vrot.slane %v5116, 4
  %v5822 = vrot.slane %v5117, 4
  %v5823 = vrot.slane %v5118, 4
  %v5824 = vrot.slane %v5119, 4
  %v5825 = vrot.slane %v5120, 4
  %v5826 = vrot.slane %v5121, 4
  %v5827 = vrot.slane %v5122, 4
  %v5828 = vrot.slane %v5123, 4
  %v5829 = vrot.slane %v5124, 4
  %v5830 = vrot.slane %v5125, 4
  %v5831 = vrot.slane %v5126, 4
  %v5832 = vrot.slane %v5127, 4
  %v5833 = vrot.slane %v5128, 4
  %v5834 = vrot.slane %v5129, 4
  %v5835 = vrot.slane %v5130, 4
  %v5836 = vrot.slane %v5131, 4
  %v5837 = vrot.slane %v5132, 4
  %v5838 = vrot.slane %v5133, 4
  %v5839 = vrot.slane %v5134, 4
  %v5840 = vrot.slane %v5135, 4
  %v5841 = vrot.slane %v5136, 4
  %v5842 = vrot.slane %v5137, 4
  %v5843 = vrot.slane %v5138, 4
  %v5844 = vrot.slane %v5139, 4
  %v5845 = vrot.slane %v5140, 4
  %v5846 = vrot.slane %v5141, 4
  %v5847 = vrot.slane %v5142, 4
  %v5848 = vrot.slane %v5143, 4
  %v5849 = vrot.slane %v5144, 4
  %v5850 = vrot.slane %v5145, 4
  %v5851 = vrot.slane %v5146, 4
  %v5852 = vrot.slane %v5147, 4
  %v5853 = vrot.slane %v5148, 4
  %v5854 = vrot.slane %v5149, 4
  %v5855 = vrot.slane %v5150, 4
  %v5856 = vrot.slane %v5151, 4
  %v5857 = vrot.slane %v5152, 4
  %v5858 = vrot.slane %v5153, 4
  %v5859 = vrot.slane %v5154, 4
  %v5860 = vrot.slane %v5155, 4
  %v5861 = vrot.slane %v5156, 4
  %v5862 = vrot.slane %v5157, 4
  %v5863 = vrot.slane %v5158, 4
  %v5864 = vrot.slane %v5159, 4
  %v5865 = vrot.slane %v5160, 4
  %v5866 = vrot.slane %v5161, 4
  %v5867 = vrot.slane %v5162, 4
  %v5868 = vrot.slane %v5163, 4
  %v5869 = vrot.slane %v5164, 4
  %v5870 = vrot.slane %v5165, 4
  %v5871 = vrot.slane %v5166, 4
  %v5872 = vrot.slane %v5167, 4
  %v5873 = vrot.slane %v5168, 4
  %v5874 = vrot.slane %v5169, 4
  %v5875 = vrot.slane %v5170, 4
  %v5876 = vrot.slane %v5171, 4
  %v5877 = vrot.slane %v5172, 4
  %v5878 = vrot.slane %v5173, 4
  %v5879 = vrot.slane %v5174, 4
  %v5880 = vrot.slane %v5175, 4
  %vm5881 = vcmp.lt.s32.totalorder %v208, 4
  %v5882 = vsel %vm5881, %v5879, %v5880
  %v5883 = vsel %vm5881, %v5878, %v5879
  %v5884 = vsel %vm5881, %v5877, %v5878
  %v5885 = vsel %vm5881, %v5876, %v5877
  %v5886 = vsel %vm5881, %v5875, %v5876
  %v5887 = vsel %vm5881, %v5874, %v5875
  %v5888 = vsel %vm5881, %v5873, %v5874
  %v5889 = vsel %vm5881, %v5872, %v5873
  %v5890 = vsel %vm5881, %v5871, %v5872
  %v5891 = vsel %vm5881, %v5870, %v5871
  %v5892 = vsel %vm5881, %v5869, %v5870
  %v5893 = vsel %vm5881, %v5868, %v5869
  %v5894 = vsel %vm5881, %v5867, %v5868
  %v5895 = vsel %vm5881, %v5866, %v5867
  %v5896 = vsel %vm5881, %v5865, %v5866
  %v5897 = vsel %vm5881, %v5864, %v5865
  %v5898 = vsel %vm5881, %v5863, %v5864
  %v5899 = vsel %vm5881, %v5862, %v5863
  %v5900 = vsel %vm5881, %v5861, %v5862
  %v5901 = vsel %vm5881, %v5860, %v5861
  %v5902 = vsel %vm5881, %v5859, %v5860
  %v5903 = vsel %vm5881, %v5858, %v5859
  %v5904 = vsel %vm5881, %v5857, %v5858
  %v5905 = vsel %vm5881, %v5856, %v5857
  %v5906 = vsel %vm5881, %v5855, %v5856
  %v5907 = vsel %vm5881, %v5854, %v5855
  %v5908 = vsel %vm5881, %v5853, %v5854
  %v5909 = vsel %vm5881, %v5852, %v5853
  %v5910 = vsel %vm5881, %v5851, %v5852
  %v5911 = vsel %vm5881, %v5850, %v5851
  %v5912 = vsel %vm5881, %v5849, %v5850
  %v5913 = vsel %vm5881, %v5848, %v5849
  %v5914 = vsel %vm5881, %v5847, %v5848
  %v5915 = vsel %vm5881, %v5846, %v5847
  %v5916 = vsel %vm5881, %v5845, %v5846
  %v5917 = vsel %vm5881, %v5844, %v5845
  %v5918 = vsel %vm5881, %v5843, %v5844
  %v5919 = vsel %vm5881, %v5842, %v5843
  %v5920 = vsel %vm5881, %v5841, %v5842
  %v5921 = vsel %vm5881, %v5840, %v5841
  %v5922 = vsel %vm5881, %v5839, %v5840
  %v5923 = vsel %vm5881, %v5838, %v5839
  %v5924 = vsel %vm5881, %v5837, %v5838
  %v5925 = vsel %vm5881, %v5836, %v5837
  %v5926 = vsel %vm5881, %v5835, %v5836
  %v5927 = vsel %vm5881, %v5834, %v5835
  %v5928 = vsel %vm5881, %v5833, %v5834
  %v5929 = vsel %vm5881, %v5832, %v5833
  %v5930 = vsel %vm5881, %v5831, %v5832
  %v5931 = vsel %vm5881, %v5830, %v5831
  %v5932 = vsel %vm5881, %v5829, %v5830
  %v5933 = vsel %vm5881, %v5828, %v5829
  %v5934 = vsel %vm5881, %v5827, %v5828
  %v5935 = vsel %vm5881, %v5826, %v5827
  %v5936 = vsel %vm5881, %v5825, %v5826
  %v5937 = vsel %vm5881, %v5824, %v5825
  %v5938 = vsel %vm5881, %v5823, %v5824
  %v5939 = vsel %vm5881, %v5822, %v5823
  %v5940 = vsel %vm5881, %v5821, %v5822
  %v5941 = vsel %vm5881, %v5820, %v5821
  %v5942 = vsel %vm5881, %v5819, %v5820
  %v5943 = vsel %vm5881, %v5818, %v5819
  %v5944 = vsel %vm5881, %v5817, %v5818
  %v5945 = vsel %vm5881, %v5880, %v5817
  %v5946 = vpack.c.bf16 %v5944, %v5944
  %v5947 = vpack.c.bf16 %v5943, %v5943
  %v5948 = vpack.c.bf16 %v5942, %v5942
  %v5949 = vpack.c.bf16 %v5941, %v5941
  %v5950 = vpack.c.bf16 %v5940, %v5940
  %v5951 = vpack.c.bf16 %v5939, %v5939
  %v5952 = vpack.c.bf16 %v5938, %v5938
  %v5953 = vpack.c.bf16 %v5937, %v5937
  %v5954 = vpack.c.bf16 %v5936, %v5936
  %v5955 = vpack.c.bf16 %v5935, %v5935
  %v5956 = vpack.c.bf16 %v5934, %v5934
  %v5957 = vpack.c.bf16 %v5933, %v5933
  %v5958 = vpack.c.bf16 %v5932, %v5932
  %v5959 = vpack.c.bf16 %v5931, %v5931
  %v5960 = vpack.c.bf16 %v5930, %v5930
  %v5961 = vpack.c.bf16 %v5929, %v5929
  %v5962 = vpack.c.bf16 %v5928, %v5928
  %v5963 = vpack.c.bf16 %v5927, %v5927
  %v5964 = vpack.c.bf16 %v5926, %v5926
  %v5965 = vpack.c.bf16 %v5925, %v5925
  %v5966 = vpack.c.bf16 %v5924, %v5924
  %v5967 = vpack.c.bf16 %v5923, %v5923
  %v5968 = vpack.c.bf16 %v5922, %v5922
  %v5969 = vpack.c.bf16 %v5921, %v5921
  %v5970 = vpack.c.bf16 %v5920, %v5920
  %v5971 = vpack.c.bf16 %v5919, %v5919
  %v5972 = vpack.c.bf16 %v5918, %v5918
  %v5973 = vpack.c.bf16 %v5917, %v5917
  %v5974 = vpack.c.bf16 %v5916, %v5916
  %v5975 = vpack.c.bf16 %v5915, %v5915
  %v5976 = vpack.c.bf16 %v5914, %v5914
  %v5977 = vpack.c.bf16 %v5913, %v5913
  %v5978 = vpack.c.bf16 %v5912, %v5912
  %v5979 = vpack.c.bf16 %v5911, %v5911
  %v5980 = vpack.c.bf16 %v5910, %v5910
  %v5981 = vpack.c.bf16 %v5909, %v5909
  %v5982 = vpack.c.bf16 %v5908, %v5908
  %v5983 = vpack.c.bf16 %v5907, %v5907
  %v5984 = vpack.c.bf16 %v5906, %v5906
  %v5985 = vpack.c.bf16 %v5905, %v5905
  %v5986 = vpack.c.bf16 %v5904, %v5904
  %v5987 = vpack.c.bf16 %v5903, %v5903
  %v5988 = vpack.c.bf16 %v5902, %v5902
  %v5989 = vpack.c.bf16 %v5901, %v5901
  %v5990 = vpack.c.bf16 %v5900, %v5900
  %v5991 = vpack.c.bf16 %v5899, %v5899
  %v5992 = vpack.c.bf16 %v5898, %v5898
  %v5993 = vpack.c.bf16 %v5897, %v5897
  %v5994 = vpack.c.bf16 %v5896, %v5896
  %v5995 = vpack.c.bf16 %v5895, %v5895
  %v5996 = vpack.c.bf16 %v5894, %v5894
  %v5997 = vpack.c.bf16 %v5893, %v5893
  %v5998 = vpack.c.bf16 %v5892, %v5892
  %v5999 = vpack.c.bf16 %v5891, %v5891
  %v6000 = vpack.c.bf16 %v5890, %v5890
  %v6001 = vpack.c.bf16 %v5889, %v5889
  %v6002 = vpack.c.bf16 %v5888, %v5888
  %v6003 = vpack.c.bf16 %v5887, %v5887
  %v6004 = vpack.c.bf16 %v5886, %v5886
  %v6005 = vpack.c.bf16 %v5885, %v5885
  %v6006 = vpack.c.bf16 %v5884, %v5884
  %v6007 = vpack.c.bf16 %v5883, %v5883
  %v6008 = vpack.c.bf16 %v5882, %v5882
  %v6009 = vpack.c.bf16 %v5945, %v5945
  %v6074 = vunpack.c.l.b16 %v5176
  %v6075 = vunpack.c.l.b16 %v5177
  %v6076 = vunpack.c.l.b16 %v5178
  %v6077 = vunpack.c.l.b16 %v5179
  %v6078 = vunpack.c.l.b16 %v5180
  %v6079 = vunpack.c.l.b16 %v5181
  %v6080 = vunpack.c.l.b16 %v5182
  %v6081 = vunpack.c.l.b16 %v5183
  %v6082 = vunpack.c.l.b16 %v5184
  %v6083 = vunpack.c.l.b16 %v5185
  %v6084 = vunpack.c.l.b16 %v5186
  %v6085 = vunpack.c.l.b16 %v5187
  %v6086 = vunpack.c.l.b16 %v5188
  %v6087 = vunpack.c.l.b16 %v5189
  %v6088 = vunpack.c.l.b16 %v5190
  %v6089 = vunpack.c.l.b16 %v5191
  %v6090 = vunpack.c.l.b16 %v5192
  %v6091 = vunpack.c.l.b16 %v5193
  %v6092 = vunpack.c.l.b16 %v5194
  %v6093 = vunpack.c.l.b16 %v5195
  %v6094 = vunpack.c.l.b16 %v5196
  %v6095 = vunpack.c.l.b16 %v5197
  %v6096 = vunpack.c.l.b16 %v5198
  %v6097 = vunpack.c.l.b16 %v5199
  %v6098 = vunpack.c.l.b16 %v5200
  %v6099 = vunpack.c.l.b16 %v5201
  %v6100 = vunpack.c.l.b16 %v5202
  %v6101 = vunpack.c.l.b16 %v5203
  %v6102 = vunpack.c.l.b16 %v5204
  %v6103 = vunpack.c.l.b16 %v5205
  %v6104 = vunpack.c.l.b16 %v5206
  %v6105 = vunpack.c.l.b16 %v5207
  %v6106 = vunpack.c.l.b16 %v5208
  %v6107 = vunpack.c.l.b16 %v5209
  %v6108 = vunpack.c.l.b16 %v5210
  %v6109 = vunpack.c.l.b16 %v5211
  %v6110 = vunpack.c.l.b16 %v5212
  %v6111 = vunpack.c.l.b16 %v5213
  %v6112 = vunpack.c.l.b16 %v5214
  %v6113 = vunpack.c.l.b16 %v5215
  %v6114 = vunpack.c.l.b16 %v5216
  %v6115 = vunpack.c.l.b16 %v5217
  %v6116 = vunpack.c.l.b16 %v5218
  %v6117 = vunpack.c.l.b16 %v5219
  %v6118 = vunpack.c.l.b16 %v5220
  %v6119 = vunpack.c.l.b16 %v5221
  %v6120 = vunpack.c.l.b16 %v5222
  %v6121 = vunpack.c.l.b16 %v5223
  %v6122 = vunpack.c.l.b16 %v5224
  %v6123 = vunpack.c.l.b16 %v5225
  %v6124 = vunpack.c.l.b16 %v5226
  %v6125 = vunpack.c.l.b16 %v5227
  %v6126 = vunpack.c.l.b16 %v5228
  %v6127 = vunpack.c.l.b16 %v5229
  %v6128 = vunpack.c.l.b16 %v5230
  %v6129 = vunpack.c.l.b16 %v5231
  %v6130 = vunpack.c.l.b16 %v5232
  %v6131 = vunpack.c.l.b16 %v5233
  %v6132 = vunpack.c.l.b16 %v5234
  %v6133 = vunpack.c.l.b16 %v5235
  %v6134 = vunpack.c.l.b16 %v5236
  %v6135 = vunpack.c.l.b16 %v5237
  %v6136 = vunpack.c.l.b16 %v5238
  %v6137 = vunpack.c.l.b16 %v5239
  %v6138 = vpack.c.b16 %v6075, %v6074
  %v6139 = vpack.c.b16 %v6077, %v6076
  %v6140 = vpack.c.b16 %v6079, %v6078
  %v6141 = vpack.c.b16 %v6081, %v6080
  %v6142 = vpack.c.b16 %v6083, %v6082
  %v6143 = vpack.c.b16 %v6085, %v6084
  %v6144 = vpack.c.b16 %v6087, %v6086
  %v6145 = vpack.c.b16 %v6089, %v6088
  %v6146 = vpack.c.b16 %v6091, %v6090
  %v6147 = vpack.c.b16 %v6093, %v6092
  %v6148 = vpack.c.b16 %v6095, %v6094
  %v6149 = vpack.c.b16 %v6097, %v6096
  %v6150 = vpack.c.b16 %v6099, %v6098
  %v6151 = vpack.c.b16 %v6101, %v6100
  %v6152 = vpack.c.b16 %v6103, %v6102
  %v6153 = vpack.c.b16 %v6105, %v6104
  %v6154 = vpack.c.b16 %v6107, %v6106
  %v6155 = vpack.c.b16 %v6109, %v6108
  %v6156 = vpack.c.b16 %v6111, %v6110
  %v6157 = vpack.c.b16 %v6113, %v6112
  %v6158 = vpack.c.b16 %v6115, %v6114
  %v6159 = vpack.c.b16 %v6117, %v6116
  %v6160 = vpack.c.b16 %v6119, %v6118
  %v6161 = vpack.c.b16 %v6121, %v6120
  %v6162 = vpack.c.b16 %v6123, %v6122
  %v6163 = vpack.c.b16 %v6125, %v6124
  %v6164 = vpack.c.b16 %v6127, %v6126
  %v6165 = vpack.c.b16 %v6129, %v6128
  %v6166 = vpack.c.b16 %v6131, %v6130
  %v6167 = vpack.c.b16 %v6133, %v6132
  %v6168 = vpack.c.b16 %v6135, %v6134
  %v6169 = vpack.c.b16 %v6137, %v6136
  %v6234 = vunpack.c.l.b16 %v5368
  %v6235 = vunpack.c.l.b16 %v5369
  %v6236 = vunpack.c.l.b16 %v5370
  %v6237 = vunpack.c.l.b16 %v5371
  %v6238 = vunpack.c.l.b16 %v5372
  %v6239 = vunpack.c.l.b16 %v5373
  %v6240 = vunpack.c.l.b16 %v5374
  %v6241 = vunpack.c.l.b16 %v5375
  %v6242 = vunpack.c.l.b16 %v5376
  %v6243 = vunpack.c.l.b16 %v5377
  %v6244 = vunpack.c.l.b16 %v5378
  %v6245 = vunpack.c.l.b16 %v5379
  %v6246 = vunpack.c.l.b16 %v5380
  %v6247 = vunpack.c.l.b16 %v5381
  %v6248 = vunpack.c.l.b16 %v5382
  %v6249 = vunpack.c.l.b16 %v5383
  %v6250 = vunpack.c.l.b16 %v5384
  %v6251 = vunpack.c.l.b16 %v5385
  %v6252 = vunpack.c.l.b16 %v5386
  %v6253 = vunpack.c.l.b16 %v5387
  %v6254 = vunpack.c.l.b16 %v5388
  %v6255 = vunpack.c.l.b16 %v5389
  %v6256 = vunpack.c.l.b16 %v5390
  %v6257 = vunpack.c.l.b16 %v5391
  %v6258 = vunpack.c.l.b16 %v5392
  %v6259 = vunpack.c.l.b16 %v5393
  %v6260 = vunpack.c.l.b16 %v5394
  %v6261 = vunpack.c.l.b16 %v5395
  %v6262 = vunpack.c.l.b16 %v5396
  %v6263 = vunpack.c.l.b16 %v5397
  %v6264 = vunpack.c.l.b16 %v5398
  %v6265 = vunpack.c.l.b16 %v5399
  %v6266 = vunpack.c.l.b16 %v5400
  %v6267 = vunpack.c.l.b16 %v5401
  %v6268 = vunpack.c.l.b16 %v5402
  %v6269 = vunpack.c.l.b16 %v5403
  %v6270 = vunpack.c.l.b16 %v5404
  %v6271 = vunpack.c.l.b16 %v5405
  %v6272 = vunpack.c.l.b16 %v5406
  %v6273 = vunpack.c.l.b16 %v5407
  %v6274 = vunpack.c.l.b16 %v5408
  %v6275 = vunpack.c.l.b16 %v5409
  %v6276 = vunpack.c.l.b16 %v5410
  %v6277 = vunpack.c.l.b16 %v5411
  %v6278 = vunpack.c.l.b16 %v5412
  %v6279 = vunpack.c.l.b16 %v5413
  %v6280 = vunpack.c.l.b16 %v5414
  %v6281 = vunpack.c.l.b16 %v5415
  %v6282 = vunpack.c.l.b16 %v5416
  %v6283 = vunpack.c.l.b16 %v5417
  %v6284 = vunpack.c.l.b16 %v5418
  %v6285 = vunpack.c.l.b16 %v5419
  %v6286 = vunpack.c.l.b16 %v5420
  %v6287 = vunpack.c.l.b16 %v5421
  %v6288 = vunpack.c.l.b16 %v5422
  %v6289 = vunpack.c.l.b16 %v5423
  %v6290 = vunpack.c.l.b16 %v5424
  %v6291 = vunpack.c.l.b16 %v5425
  %v6292 = vunpack.c.l.b16 %v5426
  %v6293 = vunpack.c.l.b16 %v5427
  %v6294 = vunpack.c.l.b16 %v5428
  %v6295 = vunpack.c.l.b16 %v5429
  %v6296 = vunpack.c.l.b16 %v5430
  %v6297 = vunpack.c.l.b16 %v5431
  %v6298 = vpack.c.b16 %v6235, %v6234
  %v6299 = vpack.c.b16 %v6237, %v6236
  %v6300 = vpack.c.b16 %v6239, %v6238
  %v6301 = vpack.c.b16 %v6241, %v6240
  %v6302 = vpack.c.b16 %v6243, %v6242
  %v6303 = vpack.c.b16 %v6245, %v6244
  %v6304 = vpack.c.b16 %v6247, %v6246
  %v6305 = vpack.c.b16 %v6249, %v6248
  %v6306 = vpack.c.b16 %v6251, %v6250
  %v6307 = vpack.c.b16 %v6253, %v6252
  %v6308 = vpack.c.b16 %v6255, %v6254
  %v6309 = vpack.c.b16 %v6257, %v6256
  %v6310 = vpack.c.b16 %v6259, %v6258
  %v6311 = vpack.c.b16 %v6261, %v6260
  %v6312 = vpack.c.b16 %v6263, %v6262
  %v6313 = vpack.c.b16 %v6265, %v6264
  %v6314 = vpack.c.b16 %v6267, %v6266
  %v6315 = vpack.c.b16 %v6269, %v6268
  %v6316 = vpack.c.b16 %v6271, %v6270
  %v6317 = vpack.c.b16 %v6273, %v6272
  %v6318 = vpack.c.b16 %v6275, %v6274
  %v6319 = vpack.c.b16 %v6277, %v6276
  %v6320 = vpack.c.b16 %v6279, %v6278
  %v6321 = vpack.c.b16 %v6281, %v6280
  %v6322 = vpack.c.b16 %v6283, %v6282
  %v6323 = vpack.c.b16 %v6285, %v6284
  %v6324 = vpack.c.b16 %v6287, %v6286
  %v6325 = vpack.c.b16 %v6289, %v6288
  %v6326 = vpack.c.b16 %v6291, %v6290
  %v6327 = vpack.c.b16 %v6293, %v6292
  %v6328 = vpack.c.b16 %v6295, %v6294
  %v6329 = vpack.c.b16 %v6297, %v6296
  %6330 = vrot.lane.b32.xlu0 %v6298, 32
  %v6331 = vpop.permute.xlu0 %6330
  %6332 = vrot.lane.b32.xlu0 %v6299, 32
  %v6333 = vpop.permute.xlu0 %6332
  %6334 = vrot.lane.b32.xlu0 %v6300, 32
  %v6335 = vpop.permute.xlu0 %6334
  %6336 = vrot.lane.b32.xlu0 %v6301, 32
  %v6337 = vpop.permute.xlu0 %6336
  %6338 = vrot.lane.b32.xlu0 %v6302, 32
  %v6339 = vpop.permute.xlu0 %6338
  %6340 = vrot.lane.b32.xlu0 %v6303, 32
  %v6341 = vpop.permute.xlu0 %6340
  %6342 = vrot.lane.b32.xlu0 %v6304, 32
  %v6343 = vpop.permute.xlu0 %6342
  %6344 = vrot.lane.b32.xlu0 %v6305, 32
  %v6345 = vpop.permute.xlu0 %6344
  %6346 = vrot.lane.b32.xlu0 %v6306, 32
  %v6347 = vpop.permute.xlu0 %6346
  %6348 = vrot.lane.b32.xlu0 %v6307, 32
  %v6349 = vpop.permute.xlu0 %6348
  %6350 = vrot.lane.b32.xlu0 %v6308, 32
  %v6351 = vpop.permute.xlu0 %6350
  %6352 = vrot.lane.b32.xlu0 %v6309, 32
  %v6353 = vpop.permute.xlu0 %6352
  %6354 = vrot.lane.b32.xlu0 %v6310, 32
  %v6355 = vpop.permute.xlu0 %6354
  %6356 = vrot.lane.b32.xlu0 %v6311, 32
  %v6357 = vpop.permute.xlu0 %6356
  %6358 = vrot.lane.b32.xlu0 %v6312, 32
  %v6359 = vpop.permute.xlu0 %6358
  %6360 = vrot.lane.b32.xlu0 %v6313, 32
  %v6361 = vpop.permute.xlu0 %6360
  %6362 = vrot.lane.b32.xlu0 %v6314, 32
  %v6363 = vpop.permute.xlu0 %6362
  %6364 = vrot.lane.b32.xlu0 %v6315, 32
  %v6365 = vpop.permute.xlu0 %6364
  %6366 = vrot.lane.b32.xlu0 %v6316, 32
  %v6367 = vpop.permute.xlu0 %6366
  %6368 = vrot.lane.b32.xlu0 %v6317, 32
  %v6369 = vpop.permute.xlu0 %6368
  %6370 = vrot.lane.b32.xlu0 %v6318, 32
  %v6371 = vpop.permute.xlu0 %6370
  %6372 = vrot.lane.b32.xlu0 %v6319, 32
  %v6373 = vpop.permute.xlu0 %6372
  %6374 = vrot.lane.b32.xlu0 %v6320, 32
  %v6375 = vpop.permute.xlu0 %6374
  %6376 = vrot.lane.b32.xlu0 %v6321, 32
  %v6377 = vpop.permute.xlu0 %6376
  %6378 = vrot.lane.b32.xlu0 %v6322, 32
  %v6379 = vpop.permute.xlu0 %6378
  %6380 = vrot.lane.b32.xlu0 %v6323, 32
  %v6381 = vpop.permute.xlu0 %6380
  %6382 = vrot.lane.b32.xlu0 %v6324, 32
  %v6383 = vpop.permute.xlu0 %6382
  %6384 = vrot.lane.b32.xlu0 %v6325, 32
  %v6385 = vpop.permute.xlu0 %6384
  %6386 = vrot.lane.b32.xlu0 %v6326, 32
  %v6387 = vpop.permute.xlu0 %6386
  %6388 = vrot.lane.b32.xlu0 %v6327, 32
  %v6389 = vpop.permute.xlu0 %6388
  %6390 = vrot.lane.b32.xlu0 %v6328, 32
  %v6391 = vpop.permute.xlu0 %6390
  %6392 = vrot.lane.b32.xlu0 %v6329, 32
  %v6393 = vpop.permute.xlu0 %6392
  %v6458 = vunpack.c.l.b16 %v5560
  %v6459 = vunpack.c.l.b16 %v5561
  %v6460 = vunpack.c.l.b16 %v5562
  %v6461 = vunpack.c.l.b16 %v5563
  %v6462 = vunpack.c.l.b16 %v5564
  %v6463 = vunpack.c.l.b16 %v5565
  %v6464 = vunpack.c.l.b16 %v5566
  %v6465 = vunpack.c.l.b16 %v5567
  %v6466 = vunpack.c.l.b16 %v5568
  %v6467 = vunpack.c.l.b16 %v5569
  %v6468 = vunpack.c.l.b16 %v5570
  %v6469 = vunpack.c.l.b16 %v5571
  %v6470 = vunpack.c.l.b16 %v5572
  %v6471 = vunpack.c.l.b16 %v5573
  %v6472 = vunpack.c.l.b16 %v5574
  %v6473 = vunpack.c.l.b16 %v5575
  %v6474 = vunpack.c.l.b16 %v5576
  %v6475 = vunpack.c.l.b16 %v5577
  %v6476 = vunpack.c.l.b16 %v5578
  %v6477 = vunpack.c.l.b16 %v5579
  %v6478 = vunpack.c.l.b16 %v5580
  %v6479 = vunpack.c.l.b16 %v5581
  %v6480 = vunpack.c.l.b16 %v5582
  %v6481 = vunpack.c.l.b16 %v5583
  %v6482 = vunpack.c.l.b16 %v5584
  %v6483 = vunpack.c.l.b16 %v5585
  %v6484 = vunpack.c.l.b16 %v5586
  %v6485 = vunpack.c.l.b16 %v5587
  %v6486 = vunpack.c.l.b16 %v5588
  %v6487 = vunpack.c.l.b16 %v5589
  %v6488 = vunpack.c.l.b16 %v5590
  %v6489 = vunpack.c.l.b16 %v5591
  %v6490 = vunpack.c.l.b16 %v5592
  %v6491 = vunpack.c.l.b16 %v5593
  %v6492 = vunpack.c.l.b16 %v5594
  %v6493 = vunpack.c.l.b16 %v5595
  %v6494 = vunpack.c.l.b16 %v5596
  %v6495 = vunpack.c.l.b16 %v5597
  %v6496 = vunpack.c.l.b16 %v5598
  %v6497 = vunpack.c.l.b16 %v5599
  %v6498 = vunpack.c.l.b16 %v5600
  %v6499 = vunpack.c.l.b16 %v5601
  %v6500 = vunpack.c.l.b16 %v5602
  %v6501 = vunpack.c.l.b16 %v5603
  %v6502 = vunpack.c.l.b16 %v5604
  %v6503 = vunpack.c.l.b16 %v5605
  %v6504 = vunpack.c.l.b16 %v5606
  %v6505 = vunpack.c.l.b16 %v5607
  %v6506 = vunpack.c.l.b16 %v5608
  %v6507 = vunpack.c.l.b16 %v5609
  %v6508 = vunpack.c.l.b16 %v5610
  %v6509 = vunpack.c.l.b16 %v5611
  %v6510 = vunpack.c.l.b16 %v5612
  %v6511 = vunpack.c.l.b16 %v5613
  %v6512 = vunpack.c.l.b16 %v5614
  %v6513 = vunpack.c.l.b16 %v5615
  %v6514 = vunpack.c.l.b16 %v5616
  %v6515 = vunpack.c.l.b16 %v5617
  %v6516 = vunpack.c.l.b16 %v5618
  %v6517 = vunpack.c.l.b16 %v5619
  %v6518 = vunpack.c.l.b16 %v5620
  %v6519 = vunpack.c.l.b16 %v5621
  %v6520 = vunpack.c.l.b16 %v5622
  %v6521 = vunpack.c.l.b16 %v5623
  %v6522 = vpack.c.b16 %v6459, %v6458
  %v6523 = vpack.c.b16 %v6461, %v6460
  %v6524 = vpack.c.b16 %v6463, %v6462
  %v6525 = vpack.c.b16 %v6465, %v6464
  %v6526 = vpack.c.b16 %v6467, %v6466
  %v6527 = vpack.c.b16 %v6469, %v6468
  %v6528 = vpack.c.b16 %v6471, %v6470
  %v6529 = vpack.c.b16 %v6473, %v6472
  %v6530 = vpack.c.b16 %v6475, %v6474
  %v6531 = vpack.c.b16 %v6477, %v6476
  %v6532 = vpack.c.b16 %v6479, %v6478
  %v6533 = vpack.c.b16 %v6481, %v6480
  %v6534 = vpack.c.b16 %v6483, %v6482
  %v6535 = vpack.c.b16 %v6485, %v6484
  %v6536 = vpack.c.b16 %v6487, %v6486
  %v6537 = vpack.c.b16 %v6489, %v6488
  %v6538 = vpack.c.b16 %v6491, %v6490
  %v6539 = vpack.c.b16 %v6493, %v6492
  %v6540 = vpack.c.b16 %v6495, %v6494
  %v6541 = vpack.c.b16 %v6497, %v6496
  %v6542 = vpack.c.b16 %v6499, %v6498
  %v6543 = vpack.c.b16 %v6501, %v6500
  %v6544 = vpack.c.b16 %v6503, %v6502
  %v6545 = vpack.c.b16 %v6505, %v6504
  %v6546 = vpack.c.b16 %v6507, %v6506
  %v6547 = vpack.c.b16 %v6509, %v6508
  %v6548 = vpack.c.b16 %v6511, %v6510
  %v6549 = vpack.c.b16 %v6513, %v6512
  %v6550 = vpack.c.b16 %v6515, %v6514
  %v6551 = vpack.c.b16 %v6517, %v6516
  %v6552 = vpack.c.b16 %v6519, %v6518
  %v6553 = vpack.c.b16 %v6521, %v6520
  %6554 = vrot.lane.b32.xlu0 %v6522, 64
  %v6555 = vpop.permute.xlu0 %6554
  %6556 = vrot.lane.b32.xlu0 %v6523, 64
  %v6557 = vpop.permute.xlu0 %6556
  %6558 = vrot.lane.b32.xlu0 %v6524, 64
  %v6559 = vpop.permute.xlu0 %6558
  %6560 = vrot.lane.b32.xlu0 %v6525, 64
  %v6561 = vpop.permute.xlu0 %6560
  %6562 = vrot.lane.b32.xlu0 %v6526, 64
  %v6563 = vpop.permute.xlu0 %6562
  %6564 = vrot.lane.b32.xlu0 %v6527, 64
  %v6565 = vpop.permute.xlu0 %6564
  %6566 = vrot.lane.b32.xlu0 %v6528, 64
  %v6567 = vpop.permute.xlu0 %6566
  %6568 = vrot.lane.b32.xlu0 %v6529, 64
  %v6569 = vpop.permute.xlu0 %6568
  %6570 = vrot.lane.b32.xlu0 %v6530, 64
  %v6571 = vpop.permute.xlu0 %6570
  %6572 = vrot.lane.b32.xlu0 %v6531, 64
  %v6573 = vpop.permute.xlu0 %6572
  %6574 = vrot.lane.b32.xlu0 %v6532, 64
  %v6575 = vpop.permute.xlu0 %6574
  %6576 = vrot.lane.b32.xlu0 %v6533, 64
  %v6577 = vpop.permute.xlu0 %6576
  %6578 = vrot.lane.b32.xlu0 %v6534, 64
  %v6579 = vpop.permute.xlu0 %6578
  %6580 = vrot.lane.b32.xlu0 %v6535, 64
  %v6581 = vpop.permute.xlu0 %6580
  %6582 = vrot.lane.b32.xlu0 %v6536, 64
  %v6583 = vpop.permute.xlu0 %6582
  %6584 = vrot.lane.b32.xlu0 %v6537, 64
  %v6585 = vpop.permute.xlu0 %6584
  %6586 = vrot.lane.b32.xlu0 %v6538, 64
  %v6587 = vpop.permute.xlu0 %6586
  %6588 = vrot.lane.b32.xlu0 %v6539, 64
  %v6589 = vpop.permute.xlu0 %6588
  %6590 = vrot.lane.b32.xlu0 %v6540, 64
  %v6591 = vpop.permute.xlu0 %6590
  %6592 = vrot.lane.b32.xlu0 %v6541, 64
  %v6593 = vpop.permute.xlu0 %6592
  %6594 = vrot.lane.b32.xlu0 %v6542, 64
  %v6595 = vpop.permute.xlu0 %6594
  %6596 = vrot.lane.b32.xlu0 %v6543, 64
  %v6597 = vpop.permute.xlu0 %6596
  %6598 = vrot.lane.b32.xlu0 %v6544, 64
  %v6599 = vpop.permute.xlu0 %6598
  %6600 = vrot.lane.b32.xlu0 %v6545, 64
  %v6601 = vpop.permute.xlu0 %6600
  %6602 = vrot.lane.b32.xlu0 %v6546, 64
  %v6603 = vpop.permute.xlu0 %6602
  %6604 = vrot.lane.b32.xlu0 %v6547, 64
  %v6605 = vpop.permute.xlu0 %6604
  %6606 = vrot.lane.b32.xlu0 %v6548, 64
  %v6607 = vpop.permute.xlu0 %6606
  %6608 = vrot.lane.b32.xlu0 %v6549, 64
  %v6609 = vpop.permute.xlu0 %6608
  %6610 = vrot.lane.b32.xlu0 %v6550, 64
  %v6611 = vpop.permute.xlu0 %6610
  %6612 = vrot.lane.b32.xlu0 %v6551, 64
  %v6613 = vpop.permute.xlu0 %6612
  %6614 = vrot.lane.b32.xlu0 %v6552, 64
  %v6615 = vpop.permute.xlu0 %6614
  %6616 = vrot.lane.b32.xlu0 %v6553, 64
  %v6617 = vpop.permute.xlu0 %6616
  %v6682 = vunpack.c.l.b16 %v5753
  %v6683 = vunpack.c.l.b16 %v5754
  %v6684 = vunpack.c.l.b16 %v5755
  %v6685 = vunpack.c.l.b16 %v5756
  %v6686 = vunpack.c.l.b16 %v5757
  %v6687 = vunpack.c.l.b16 %v5758
  %v6688 = vunpack.c.l.b16 %v5759
  %v6689 = vunpack.c.l.b16 %v5760
  %v6690 = vunpack.c.l.b16 %v5761
  %v6691 = vunpack.c.l.b16 %v5762
  %v6692 = vunpack.c.l.b16 %v5763
  %v6693 = vunpack.c.l.b16 %v5764
  %v6694 = vunpack.c.l.b16 %v5765
  %v6695 = vunpack.c.l.b16 %v5766
  %v6696 = vunpack.c.l.b16 %v5767
  %v6697 = vunpack.c.l.b16 %v5768
  %v6698 = vunpack.c.l.b16 %v5769
  %v6699 = vunpack.c.l.b16 %v5770
  %v6700 = vunpack.c.l.b16 %v5771
  %v6701 = vunpack.c.l.b16 %v5772
  %v6702 = vunpack.c.l.b16 %v5773
  %v6703 = vunpack.c.l.b16 %v5774
  %v6704 = vunpack.c.l.b16 %v5775
  %v6705 = vunpack.c.l.b16 %v5776
  %v6706 = vunpack.c.l.b16 %v5777
  %v6707 = vunpack.c.l.b16 %v5778
  %v6708 = vunpack.c.l.b16 %v5779
  %v6709 = vunpack.c.l.b16 %v5780
  %v6710 = vunpack.c.l.b16 %v5781
  %v6711 = vunpack.c.l.b16 %v5782
  %v6712 = vunpack.c.l.b16 %v5783
  %v6713 = vunpack.c.l.b16 %v5784
  %v6714 = vunpack.c.l.b16 %v5785
  %v6715 = vunpack.c.l.b16 %v5786
  %v6716 = vunpack.c.l.b16 %v5787
  %v6717 = vunpack.c.l.b16 %v5788
  %v6718 = vunpack.c.l.b16 %v5789
  %v6719 = vunpack.c.l.b16 %v5790
  %v6720 = vunpack.c.l.b16 %v5791
  %v6721 = vunpack.c.l.b16 %v5792
  %v6722 = vunpack.c.l.b16 %v5793
  %v6723 = vunpack.c.l.b16 %v5794
  %v6724 = vunpack.c.l.b16 %v5795
  %v6725 = vunpack.c.l.b16 %v5796
  %v6726 = vunpack.c.l.b16 %v5797
  %v6727 = vunpack.c.l.b16 %v5798
  %v6728 = vunpack.c.l.b16 %v5799
  %v6729 = vunpack.c.l.b16 %v5800
  %v6730 = vunpack.c.l.b16 %v5801
  %v6731 = vunpack.c.l.b16 %v5802
  %v6732 = vunpack.c.l.b16 %v5803
  %v6733 = vunpack.c.l.b16 %v5804
  %v6734 = vunpack.c.l.b16 %v5805
  %v6735 = vunpack.c.l.b16 %v5806
  %v6736 = vunpack.c.l.b16 %v5807
  %v6737 = vunpack.c.l.b16 %v5808
  %v6738 = vunpack.c.l.b16 %v5809
  %v6739 = vunpack.c.l.b16 %v5810
  %v6740 = vunpack.c.l.b16 %v5811
  %v6741 = vunpack.c.l.b16 %v5812
  %v6742 = vunpack.c.l.b16 %v5813
  %v6743 = vunpack.c.l.b16 %v5814
  %v6744 = vunpack.c.l.b16 %v5815
  %v6745 = vunpack.c.l.b16 %v5816
  %v6746 = vpack.c.b16 %v6683, %v6682
  %v6747 = vpack.c.b16 %v6685, %v6684
  %v6748 = vpack.c.b16 %v6687, %v6686
  %v6749 = vpack.c.b16 %v6689, %v6688
  %v6750 = vpack.c.b16 %v6691, %v6690
  %v6751 = vpack.c.b16 %v6693, %v6692
  %v6752 = vpack.c.b16 %v6695, %v6694
  %v6753 = vpack.c.b16 %v6697, %v6696
  %v6754 = vpack.c.b16 %v6699, %v6698
  %v6755 = vpack.c.b16 %v6701, %v6700
  %v6756 = vpack.c.b16 %v6703, %v6702
  %v6757 = vpack.c.b16 %v6705, %v6704
  %v6758 = vpack.c.b16 %v6707, %v6706
  %v6759 = vpack.c.b16 %v6709, %v6708
  %v6760 = vpack.c.b16 %v6711, %v6710
  %v6761 = vpack.c.b16 %v6713, %v6712
  %v6762 = vpack.c.b16 %v6715, %v6714
  %v6763 = vpack.c.b16 %v6717, %v6716
  %v6764 = vpack.c.b16 %v6719, %v6718
  %v6765 = vpack.c.b16 %v6721, %v6720
  %v6766 = vpack.c.b16 %v6723, %v6722
  %v6767 = vpack.c.b16 %v6725, %v6724
  %v6768 = vpack.c.b16 %v6727, %v6726
  %v6769 = vpack.c.b16 %v6729, %v6728
  %v6770 = vpack.c.b16 %v6731, %v6730
  %v6771 = vpack.c.b16 %v6733, %v6732
  %v6772 = vpack.c.b16 %v6735, %v6734
  %v6773 = vpack.c.b16 %v6737, %v6736
  %v6774 = vpack.c.b16 %v6739, %v6738
  %v6775 = vpack.c.b16 %v6741, %v6740
  %v6776 = vpack.c.b16 %v6743, %v6742
  %v6777 = vpack.c.b16 %v6745, %v6744
  %6778 = vrot.lane.b32.xlu0 %v6746, 96
  %v6779 = vpop.permute.xlu0 %6778
  %6780 = vrot.lane.b32.xlu0 %v6747, 96
  %v6781 = vpop.permute.xlu0 %6780
  %6782 = vrot.lane.b32.xlu0 %v6748, 96
  %v6783 = vpop.permute.xlu0 %6782
  %6784 = vrot.lane.b32.xlu0 %v6749, 96
  %v6785 = vpop.permute.xlu0 %6784
  %6786 = vrot.lane.b32.xlu0 %v6750, 96
  %v6787 = vpop.permute.xlu0 %6786
  %6788 = vrot.lane.b32.xlu0 %v6751, 96
  %v6789 = vpop.permute.xlu0 %6788
  %6790 = vrot.lane.b32.xlu0 %v6752, 96
  %v6791 = vpop.permute.xlu0 %6790
  %6792 = vrot.lane.b32.xlu0 %v6753, 96
  %v6793 = vpop.permute.xlu0 %6792
  %6794 = vrot.lane.b32.xlu0 %v6754, 96
  %v6795 = vpop.permute.xlu0 %6794
  %6796 = vrot.lane.b32.xlu0 %v6755, 96
  %v6797 = vpop.permute.xlu0 %6796
  %6798 = vrot.lane.b32.xlu0 %v6756, 96
  %v6799 = vpop.permute.xlu0 %6798
  %6800 = vrot.lane.b32.xlu0 %v6757, 96
  %v6801 = vpop.permute.xlu0 %6800
  %6802 = vrot.lane.b32.xlu0 %v6758, 96
  %v6803 = vpop.permute.xlu0 %6802
  %6804 = vrot.lane.b32.xlu0 %v6759, 96
  %v6805 = vpop.permute.xlu0 %6804
  %6806 = vrot.lane.b32.xlu0 %v6760, 96
  %v6807 = vpop.permute.xlu0 %6806
  %6808 = vrot.lane.b32.xlu0 %v6761, 96
  %v6809 = vpop.permute.xlu0 %6808
  %6810 = vrot.lane.b32.xlu0 %v6762, 96
  %v6811 = vpop.permute.xlu0 %6810
  %6812 = vrot.lane.b32.xlu0 %v6763, 96
  %v6813 = vpop.permute.xlu0 %6812
  %6814 = vrot.lane.b32.xlu0 %v6764, 96
  %v6815 = vpop.permute.xlu0 %6814
  %6816 = vrot.lane.b32.xlu0 %v6765, 96
  %v6817 = vpop.permute.xlu0 %6816
  %6818 = vrot.lane.b32.xlu0 %v6766, 96
  %v6819 = vpop.permute.xlu0 %6818
  %6820 = vrot.lane.b32.xlu0 %v6767, 96
  %v6821 = vpop.permute.xlu0 %6820
  %6822 = vrot.lane.b32.xlu0 %v6768, 96
  %v6823 = vpop.permute.xlu0 %6822
  %6824 = vrot.lane.b32.xlu0 %v6769, 96
  %v6825 = vpop.permute.xlu0 %6824
  %6826 = vrot.lane.b32.xlu0 %v6770, 96
  %v6827 = vpop.permute.xlu0 %6826
  %6828 = vrot.lane.b32.xlu0 %v6771, 96
  %v6829 = vpop.permute.xlu0 %6828
  %6830 = vrot.lane.b32.xlu0 %v6772, 96
  %v6831 = vpop.permute.xlu0 %6830
  %6832 = vrot.lane.b32.xlu0 %v6773, 96
  %v6833 = vpop.permute.xlu0 %6832
  %6834 = vrot.lane.b32.xlu0 %v6774, 96
  %v6835 = vpop.permute.xlu0 %6834
  %6836 = vrot.lane.b32.xlu0 %v6775, 96
  %v6837 = vpop.permute.xlu0 %6836
  %6838 = vrot.lane.b32.xlu0 %v6776, 96
  %v6839 = vpop.permute.xlu0 %6838
  %6840 = vrot.lane.b32.xlu0 %v6777, 96
  %v6841 = vpop.permute.xlu0 %6840
  %v6906 = vunpack.c.l.b16 %v5946
  %v6907 = vunpack.c.l.b16 %v5947
  %v6908 = vunpack.c.l.b16 %v5948
  %v6909 = vunpack.c.l.b16 %v5949
  %v6910 = vunpack.c.l.b16 %v5950
  %v6911 = vunpack.c.l.b16 %v5951
  %v6912 = vunpack.c.l.b16 %v5952
  %v6913 = vunpack.c.l.b16 %v5953
  %v6914 = vunpack.c.l.b16 %v5954
  %v6915 = vunpack.c.l.b16 %v5955
  %v6916 = vunpack.c.l.b16 %v5956
  %v6917 = vunpack.c.l.b16 %v5957
  %v6918 = vunpack.c.l.b16 %v5958
  %v6919 = vunpack.c.l.b16 %v5959
  %v6920 = vunpack.c.l.b16 %v5960
  %v6921 = vunpack.c.l.b16 %v5961
  %v6922 = vunpack.c.l.b16 %v5962
  %v6923 = vunpack.c.l.b16 %v5963
  %v6924 = vunpack.c.l.b16 %v5964
  %v6925 = vunpack.c.l.b16 %v5965
  %v6926 = vunpack.c.l.b16 %v5966
  %v6927 = vunpack.c.l.b16 %v5967
  %v6928 = vunpack.c.l.b16 %v5968
  %v6929 = vunpack.c.l.b16 %v5969
  %v6930 = vunpack.c.l.b16 %v5970
  %v6931 = vunpack.c.l.b16 %v5971
  %v6932 = vunpack.c.l.b16 %v5972
  %v6933 = vunpack.c.l.b16 %v5973
  %v6934 = vunpack.c.l.b16 %v5974
  %v6935 = vunpack.c.l.b16 %v5975
  %v6936 = vunpack.c.l.b16 %v5976
  %v6937 = vunpack.c.l.b16 %v5977
  %v6938 = vunpack.c.l.b16 %v5978
  %v6939 = vunpack.c.l.b16 %v5979
  %v6940 = vunpack.c.l.b16 %v5980
  %v6941 = vunpack.c.l.b16 %v5981
  %v6942 = vunpack.c.l.b16 %v5982
  %v6943 = vunpack.c.l.b16 %v5983
  %v6944 = vunpack.c.l.b16 %v5984
  %v6945 = vunpack.c.l.b16 %v5985
  %v6946 = vunpack.c.l.b16 %v5986
  %v6947 = vunpack.c.l.b16 %v5987
  %v6948 = vunpack.c.l.b16 %v5988
  %v6949 = vunpack.c.l.b16 %v5989
  %v6950 = vunpack.c.l.b16 %v5990
  %v6951 = vunpack.c.l.b16 %v5991
  %v6952 = vunpack.c.l.b16 %v5992
  %v6953 = vunpack.c.l.b16 %v5993
  %v6954 = vunpack.c.l.b16 %v5994
  %v6955 = vunpack.c.l.b16 %v5995
  %v6956 = vunpack.c.l.b16 %v5996
  %v6957 = vunpack.c.l.b16 %v5997
  %v6958 = vunpack.c.l.b16 %v5998
  %v6959 = vunpack.c.l.b16 %v5999
  %v6960 = vunpack.c.l.b16 %v6000
  %v6961 = vunpack.c.l.b16 %v6001
  %v6962 = vunpack.c.l.b16 %v6002
  %v6963 = vunpack.c.l.b16 %v6003
  %v6964 = vunpack.c.l.b16 %v6004
  %v6965 = vunpack.c.l.b16 %v6005
  %v6966 = vunpack.c.l.b16 %v6006
  %v6967 = vunpack.c.l.b16 %v6007
  %v6968 = vunpack.c.l.b16 %v6008
  %v6969 = vunpack.c.l.b16 %v6009
  %v6970 = vpack.c.b16 %v6907, %v6906
  %v6971 = vpack.c.b16 %v6909, %v6908
  %v6972 = vpack.c.b16 %v6911, %v6910
  %v6973 = vpack.c.b16 %v6913, %v6912
  %v6974 = vpack.c.b16 %v6915, %v6914
  %v6975 = vpack.c.b16 %v6917, %v6916
  %v6976 = vpack.c.b16 %v6919, %v6918
  %v6977 = vpack.c.b16 %v6921, %v6920
  %v6978 = vpack.c.b16 %v6923, %v6922
  %v6979 = vpack.c.b16 %v6925, %v6924
  %v6980 = vpack.c.b16 %v6927, %v6926
  %v6981 = vpack.c.b16 %v6929, %v6928
  %v6982 = vpack.c.b16 %v6931, %v6930
  %v6983 = vpack.c.b16 %v6933, %v6932
  %v6984 = vpack.c.b16 %v6935, %v6934
  %v6985 = vpack.c.b16 %v6937, %v6936
  %v6986 = vpack.c.b16 %v6939, %v6938
  %v6987 = vpack.c.b16 %v6941, %v6940
  %v6988 = vpack.c.b16 %v6943, %v6942
  %v6989 = vpack.c.b16 %v6945, %v6944
  %v6990 = vpack.c.b16 %v6947, %v6946
  %v6991 = vpack.c.b16 %v6949, %v6948
  %v6992 = vpack.c.b16 %v6951, %v6950
  %v6993 = vpack.c.b16 %v6953, %v6952
  %v6994 = vpack.c.b16 %v6955, %v6954
  %v6995 = vpack.c.b16 %v6957, %v6956
  %v6996 = vpack.c.b16 %v6959, %v6958
  %v6997 = vpack.c.b16 %v6961, %v6960
  %v6998 = vpack.c.b16 %v6963, %v6962
  %v6999 = vpack.c.b16 %v6965, %v6964
  %v7000 = vpack.c.b16 %v6967, %v6966
  %v7001 = vpack.c.b16 %v6969, %v6968
  %v7004 = vsel %vm4081, %v6138, %v6331
  %v7007 = vsel %vm4081, %v6139, %v6333
  %v7010 = vsel %vm4081, %v6140, %v6335
  %v7013 = vsel %vm4081, %v6141, %v6337
  %v7016 = vsel %vm4081, %v6142, %v6339
  %v7019 = vsel %vm4081, %v6143, %v6341
  %v7022 = vsel %vm4081, %v6144, %v6343
  %v7025 = vsel %vm4081, %v6145, %v6345
  %v7028 = vsel %vm4081, %v6146, %v6347
  %v7031 = vsel %vm4081, %v6147, %v6349
  %v7034 = vsel %vm4081, %v6148, %v6351
  %v7037 = vsel %vm4081, %v6149, %v6353
  %v7040 = vsel %vm4081, %v6150, %v6355
  %v7043 = vsel %vm4081, %v6151, %v6357
  %v7046 = vsel %vm4081, %v6152, %v6359
  %v7049 = vsel %vm4081, %v6153, %v6361
  %v7052 = vsel %vm4081, %v6154, %v6363
  %v7055 = vsel %vm4081, %v6155, %v6365
  %v7058 = vsel %vm4081, %v6156, %v6367
  %v7061 = vsel %vm4081, %v6157, %v6369
  %v7064 = vsel %vm4081, %v6158, %v6371
  %v7067 = vsel %vm4081, %v6159, %v6373
  %v7070 = vsel %vm4081, %v6160, %v6375
  %v7073 = vsel %vm4081, %v6161, %v6377
  %v7076 = vsel %vm4081, %v6162, %v6379
  %v7079 = vsel %vm4081, %v6163, %v6381
  %v7082 = vsel %vm4081, %v6164, %v6383
  %v7085 = vsel %vm4081, %v6165, %v6385
  %v7088 = vsel %vm4081, %v6166, %v6387
  %v7091 = vsel %vm4081, %v6167, %v6389
  %v7094 = vsel %vm4081, %v6168, %v6391
  %v7097 = vsel %vm4081, %v6169, %v6393
  %v7099 = vsel %vm4178, %v7004, %v6555
  %v7101 = vsel %vm4178, %v7007, %v6557
  %v7103 = vsel %vm4178, %v7010, %v6559
  %v7105 = vsel %vm4178, %v7013, %v6561
  %v7107 = vsel %vm4178, %v7016, %v6563
  %v7109 = vsel %vm4178, %v7019, %v6565
  %v7111 = vsel %vm4178, %v7022, %v6567
  %v7113 = vsel %vm4178, %v7025, %v6569
  %v7115 = vsel %vm4178, %v7028, %v6571
  %v7117 = vsel %vm4178, %v7031, %v6573
  %v7119 = vsel %vm4178, %v7034, %v6575
  %v7121 = vsel %vm4178, %v7037, %v6577
  %v7123 = vsel %vm4178, %v7040, %v6579
  %v7125 = vsel %vm4178, %v7043, %v6581
  %v7127 = vsel %vm4178, %v7046, %v6583
  %v7129 = vsel %vm4178, %v7049, %v6585
  %v7131 = vsel %vm4178, %v7052, %v6587
  %v7133 = vsel %vm4178, %v7055, %v6589
  %v7135 = vsel %vm4178, %v7058, %v6591
  %v7137 = vsel %vm4178, %v7061, %v6593
  %v7139 = vsel %vm4178, %v7064, %v6595
  %v7141 = vsel %vm4178, %v7067, %v6597
  %v7143 = vsel %vm4178, %v7070, %v6599
  %v7145 = vsel %vm4178, %v7073, %v6601
  %v7147 = vsel %vm4178, %v7076, %v6603
  %v7149 = vsel %vm4178, %v7079, %v6605
  %v7151 = vsel %vm4178, %v7082, %v6607
  %v7153 = vsel %vm4178, %v7085, %v6609
  %v7155 = vsel %vm4178, %v7088, %v6611
  %v7157 = vsel %vm4178, %v7091, %v6613
  %v7159 = vsel %vm4178, %v7094, %v6615
  %v7161 = vsel %vm4178, %v7097, %v6617
  %v7163 = vsel %vm4243, %v7099, %v6779
  %v7166 = vsel %vm4243, %v7101, %v6781
  %v7169 = vsel %vm4243, %v7103, %v6783
  %v7172 = vsel %vm4243, %v7105, %v6785
  %v7175 = vsel %vm4243, %v7107, %v6787
  %v7178 = vsel %vm4243, %v7109, %v6789
  %v7181 = vsel %vm4243, %v7111, %v6791
  %v7184 = vsel %vm4243, %v7113, %v6793
  %v7187 = vsel %vm4243, %v7115, %v6795
  %v7190 = vsel %vm4243, %v7117, %v6797
  %v7193 = vsel %vm4243, %v7119, %v6799
  %v7196 = vsel %vm4243, %v7121, %v6801
  %v7199 = vsel %vm4243, %v7123, %v6803
  %v7202 = vsel %vm4243, %v7125, %v6805
  %v7205 = vsel %vm4243, %v7127, %v6807
  %v7208 = vsel %vm4243, %v7129, %v6809
  %v7211 = vsel %vm4243, %v7131, %v6811
  %v7214 = vsel %vm4243, %v7133, %v6813
  %v7217 = vsel %vm4243, %v7135, %v6815
  %v7220 = vsel %vm4243, %v7137, %v6817
  %v7223 = vsel %vm4243, %v7139, %v6819
  %v7226 = vsel %vm4243, %v7141, %v6821
  %v7229 = vsel %vm4243, %v7143, %v6823
  %v7232 = vsel %vm4243, %v7145, %v6825
  %v7235 = vsel %vm4243, %v7147, %v6827
  %v7238 = vsel %vm4243, %v7149, %v6829
  %v7241 = vsel %vm4243, %v7151, %v6831
  %v7244 = vsel %vm4243, %v7153, %v6833
  %v7247 = vsel %vm4243, %v7155, %v6835
  %v7250 = vsel %vm4243, %v7157, %v6837
  %v7253 = vsel %vm4243, %v7159, %v6839
  %v7256 = vsel %vm4243, %v7161, %v6841
  %v7258 = vld [vmem:[%s1 + $0x58] sm:$0xf]
  %v7259 = vld [vmem:[%s1 + $0x5c] sm:$0xf]
  %v7260 = vld [vmem:[%s1 + $0x60] sm:$0xf]
  %v7261 = vld [vmem:[%s1 + $0x64] sm:$0xf]
  %v7262 = vld [vmem:[%s1 + $0x68] sm:$0xf]
  %v7263 = vld [vmem:[%s1 + $0x6c] sm:$0xf]
  %v7264 = vld [vmem:[%s1 + $0x70] sm:$0xf]
  %v7265 = vld [vmem:[%s1 + $0x74] sm:$0xf]
  %v7266 = vld [vmem:[%s1 + $0x78] sm:$0xf]
  %v7267 = vld [vmem:[%s1 + $0x7c] sm:$0xf]
  %v7268 = vld [vmem:[%s1 + $0x80] sm:$0xf]
  %v7269 = vld [vmem:[%s1 + $0x84] sm:$0xf]
  %v7270 = vld [vmem:[%s1 + $0x88] sm:$0xf]
  %v7271 = vld [vmem:[%s1 + $0x8c] sm:$0xf]
  %v7272 = vld [vmem:[%s1 + $0x90] sm:$0xf]
  %v7273 = vld [vmem:[%s1 + $0x94] sm:$0xf]
  %v7274 = vld [vmem:[%s1 + $0x98] sm:$0xf]
  %v7275 = vld [vmem:[%s1 + $0x9c] sm:$0xf]
  %v7276 = vld [vmem:[%s1 + $0xa0] sm:$0xf]
  %v7277 = vld [vmem:[%s1 + $0xa4] sm:$0xf]
  %v7278 = vld [vmem:[%s2 + $0x2] sm:$0x1]
  %v7279 = vperm.slane %v7278, 0
  %v7300 = vunpack.c.l.b16 %v7258
  %v7301 = vunpack.c.l.b16 %v7259
  %v7302 = vunpack.c.l.b16 %v7260
  %v7303 = vunpack.c.l.b16 %v7261
  %v7304 = vunpack.c.l.b16 %v7262
  %v7305 = vunpack.c.l.b16 %v7263
  %v7306 = vunpack.c.l.b16 %v7264
  %v7307 = vunpack.c.l.b16 %v7265
  %v7308 = vunpack.c.l.b16 %v7266
  %v7309 = vunpack.c.l.b16 %v7267
  %v7310 = vunpack.c.l.b16 %v7268
  %v7311 = vunpack.c.l.b16 %v7269
  %v7312 = vunpack.c.l.b16 %v7270
  %v7313 = vunpack.c.l.b16 %v7271
  %v7314 = vunpack.c.l.b16 %v7272
  %v7315 = vunpack.c.l.b16 %v7273
  %v7316 = vunpack.c.l.b16 %v7274
  %v7317 = vunpack.c.l.b16 %v7275
  %v7318 = vunpack.c.l.b16 %v7276
  %v7319 = vunpack.c.l.b16 %v7277
  %v7320 = vpack.c.b16 %v7301, %v7300
  %v7321 = vpack.c.b16 %v7303, %v7302
  %v7322 = vpack.c.b16 %v7305, %v7304
  %v7323 = vpack.c.b16 %v7307, %v7306
  %v7324 = vpack.c.b16 %v7309, %v7308
  %v7325 = vpack.c.b16 %v7311, %v7310
  %v7326 = vpack.c.b16 %v7313, %v7312
  %v7327 = vpack.c.b16 %v7315, %v7314
  %v7328 = vpack.c.b16 %v7317, %v7316
  %v7329 = vpack.c.b16 %v7319, %v7318
  %v7341 = vsel %vm4081, %v6970, 0
  %v7344 = vsel %vm4081, %v6971, 0
  %v7347 = vsel %vm4081, %v6972, 0
  %v7350 = vsel %vm4081, %v6973, 0
  %v7353 = vsel %vm4081, %v6974, 0
  %v7356 = vsel %vm4081, %v6975, 0
  %v7359 = vsel %vm4081, %v6976, 0
  %v7362 = vsel %vm4081, %v6977, 0
  %v7365 = vsel %vm4081, %v6978, 0
  %v7368 = vsel %vm4081, %v6979, 0
  %v7371 = vsel %vm4081, %v6980, 0
  %v7374 = vsel %vm4081, %v6981, 0
  %v7377 = vsel %vm4081, %v6982, 0
  %v7380 = vsel %vm4081, %v6983, 0
  %v7383 = vsel %vm4081, %v6984, 0
  %v7386 = vsel %vm4081, %v6985, 0
  %v7389 = vsel %vm4081, %v6986, 0
  %v7392 = vsel %vm4081, %v6987, 0
  %v7395 = vsel %vm4081, %v6988, 0
  %v7398 = vsel %vm4081, %v6989, 0
  %v7401 = vsel %vm4081, %v6990, 0
  %v7404 = vsel %vm4081, %v6991, 0
  %v7407 = vsel %vm4081, %v6992, 0
  %v7410 = vsel %vm4081, %v6993, 0
  %v7413 = vsel %vm4081, %v6994, 0
  %v7416 = vsel %vm4081, %v6995, 0
  %v7419 = vsel %vm4081, %v6996, 0
  %v7422 = vsel %vm4081, %v6997, 0
  %v7425 = vsel %vm4081, %v6998, 0
  %v7428 = vsel %vm4081, %v6999, 0
  %v7431 = vsel %vm4081, %v7000, 0
  %v7434 = vsel %vm4081, %v7001, 0
  %7436 = vmatpush.bf16.msra.mxu0 %v7327
  %7437 = vmatpush.bf16.msra.mxu0 %v7326
  %7438 = vmatpush.bf16.msra.mxu0 %v7325
  %7439 = vmatpush.bf16.msra.mxu0 %v7324
  %7440 = vmatpush.bf16.msra.mxu0 %v7323
  %7441 = vmatpush.bf16.msra.mxu0 %v7322
  %7442 = vmatpush.bf16.msra.mxu0 %v7321
  %7443 = vmatpush.bf16.msra.mxu0 %v7320
  %7444 = vmatmul.bf16.gmra.mxu0 %v7163
  %v7445 = vpop.f32.mrf.mxu0
  %v7446 = vadd.f32 %v7279, %v7445
  %v7447 = vpop.f32.mrf.mxu0
  %v7448 = vadd.f32 %v7279, %v7447
  %7449 = vmatmul.bf16.gmra.mxu0 %v7166
  %v7450 = vpop.f32.mrf.mxu0
  %v7451 = vadd.f32 %v7279, %v7450
  %v7452 = vpop.f32.mrf.mxu0
  %v7453 = vadd.f32 %v7279, %v7452
  %7454 = vmatmul.bf16.gmra.mxu0 %v7169
  %v7455 = vpop.f32.mrf.mxu0
  %v7456 = vadd.f32 %v7279, %v7455
  %v7457 = vpop.f32.mrf.mxu0
  %v7458 = vadd.f32 %v7279, %v7457
  %7459 = vmatmul.bf16.gmra.mxu0 %v7172
  %v7460 = vpop.f32.mrf.mxu0
  %v7461 = vadd.f32 %v7279, %v7460
  %v7462 = vpop.f32.mrf.mxu0
  %v7463 = vadd.f32 %v7279, %v7462
  %7464 = vmatmul.bf16.gmra.mxu0 %v7175
  %v7465 = vpop.f32.mrf.mxu0
  %v7466 = vadd.f32 %v7279, %v7465
  %v7467 = vpop.f32.mrf.mxu0
  %v7468 = vadd.f32 %v7279, %v7467
  %7469 = vmatmul.bf16.gmra.mxu0 %v7178
  %v7470 = vpop.f32.mrf.mxu0
  %v7471 = vadd.f32 %v7279, %v7470
  %v7472 = vpop.f32.mrf.mxu0
  %v7473 = vadd.f32 %v7279, %v7472
  %7474 = vmatmul.bf16.gmra.mxu0 %v7181
  %v7475 = vpop.f32.mrf.mxu0
  %v7476 = vadd.f32 %v7279, %v7475
  %v7477 = vpop.f32.mrf.mxu0
  %v7478 = vadd.f32 %v7279, %v7477
  %7479 = vmatmul.bf16.gmra.mxu0 %v7184
  %v7480 = vpop.f32.mrf.mxu0
  %v7481 = vadd.f32 %v7279, %v7480
  %v7482 = vpop.f32.mrf.mxu0
  %v7483 = vadd.f32 %v7279, %v7482
  %7484 = vmatmul.bf16.gmra.mxu0 %v7187
  %v7485 = vpop.f32.mrf.mxu0
  %v7486 = vadd.f32 %v7279, %v7485
  %v7487 = vpop.f32.mrf.mxu0
  %v7488 = vadd.f32 %v7279, %v7487
  %7489 = vmatmul.bf16.gmra.mxu0 %v7190
  %v7490 = vpop.f32.mrf.mxu0
  %v7491 = vadd.f32 %v7279, %v7490
  %v7492 = vpop.f32.mrf.mxu0
  %v7493 = vadd.f32 %v7279, %v7492
  %7494 = vmatmul.bf16.gmra.mxu0 %v7193
  %v7495 = vpop.f32.mrf.mxu0
  %v7496 = vadd.f32 %v7279, %v7495
  %v7497 = vpop.f32.mrf.mxu0
  %v7498 = vadd.f32 %v7279, %v7497
  %7499 = vmatmul.bf16.gmra.mxu0 %v7196
  %v7500 = vpop.f32.mrf.mxu0
  %v7501 = vadd.f32 %v7279, %v7500
  %v7502 = vpop.f32.mrf.mxu0
  %v7503 = vadd.f32 %v7279, %v7502
  %7504 = vmatmul.bf16.gmra.mxu0 %v7199
  %v7505 = vpop.f32.mrf.mxu0
  %v7506 = vadd.f32 %v7279, %v7505
  %v7507 = vpop.f32.mrf.mxu0
  %v7508 = vadd.f32 %v7279, %v7507
  %7509 = vmatmul.bf16.gmra.mxu0 %v7202
  %v7510 = vpop.f32.mrf.mxu0
  %v7511 = vadd.f32 %v7279, %v7510
  %v7512 = vpop.f32.mrf.mxu0
  %v7513 = vadd.f32 %v7279, %v7512
  %7514 = vmatmul.bf16.gmra.mxu0 %v7205
  %v7515 = vpop.f32.mrf.mxu0
  %v7516 = vadd.f32 %v7279, %v7515
  %v7517 = vpop.f32.mrf.mxu0
  %v7518 = vadd.f32 %v7279, %v7517
  %7519 = vmatmul.bf16.gmra.mxu0 %v7208
  %v7520 = vpop.f32.mrf.mxu0
  %v7521 = vadd.f32 %v7279, %v7520
  %v7522 = vpop.f32.mrf.mxu0
  %v7523 = vadd.f32 %v7279, %v7522
  %7524 = vmatmul.bf16.gmra.mxu0 %v7211
  %v7525 = vpop.f32.mrf.mxu0
  %v7526 = vadd.f32 %v7279, %v7525
  %v7527 = vpop.f32.mrf.mxu0
  %v7528 = vadd.f32 %v7279, %v7527
  %7529 = vmatmul.bf16.gmra.mxu0 %v7214
  %v7530 = vpop.f32.mrf.mxu0
  %v7531 = vadd.f32 %v7279, %v7530
  %v7532 = vpop.f32.mrf.mxu0
  %v7533 = vadd.f32 %v7279, %v7532
  %7534 = vmatmul.bf16.gmra.mxu0 %v7217
  %v7535 = vpop.f32.mrf.mxu0
  %v7536 = vadd.f32 %v7279, %v7535
  %v7537 = vpop.f32.mrf.mxu0
  %v7538 = vadd.f32 %v7279, %v7537
  %7539 = vmatmul.bf16.gmra.mxu0 %v7220
  %v7540 = vpop.f32.mrf.mxu0
  %v7541 = vadd.f32 %v7279, %v7540
  %v7542 = vpop.f32.mrf.mxu0
  %v7543 = vadd.f32 %v7279, %v7542
  %7544 = vmatmul.bf16.gmra.mxu0 %v7223
  %v7545 = vpop.f32.mrf.mxu0
  %v7546 = vadd.f32 %v7279, %v7545
  %v7547 = vpop.f32.mrf.mxu0
  %v7548 = vadd.f32 %v7279, %v7547
  %7549 = vmatmul.bf16.gmra.mxu0 %v7226
  %v7550 = vpop.f32.mrf.mxu0
  %v7551 = vadd.f32 %v7279, %v7550
  %v7552 = vpop.f32.mrf.mxu0
  %v7553 = vadd.f32 %v7279, %v7552
  %7554 = vmatmul.bf16.gmra.mxu0 %v7229
  %v7555 = vpop.f32.mrf.mxu0
  %v7556 = vadd.f32 %v7279, %v7555
  %v7557 = vpop.f32.mrf.mxu0
  %v7558 = vadd.f32 %v7279, %v7557
  %7559 = vmatmul.bf16.gmra.mxu0 %v7232
  %v7560 = vpop.f32.mrf.mxu0
  %v7561 = vadd.f32 %v7279, %v7560
  %v7562 = vpop.f32.mrf.mxu0
  %v7563 = vadd.f32 %v7279, %v7562
  %7564 = vmatmul.bf16.gmra.mxu0 %v7235
  %v7565 = vpop.f32.mrf.mxu0
  %v7566 = vadd.f32 %v7279, %v7565
  %v7567 = vpop.f32.mrf.mxu0
  %v7568 = vadd.f32 %v7279, %v7567
  %7569 = vmatmul.bf16.gmra.mxu0 %v7238
  %v7570 = vpop.f32.mrf.mxu0
  %v7571 = vadd.f32 %v7279, %v7570
  %v7572 = vpop.f32.mrf.mxu0
  %v7573 = vadd.f32 %v7279, %v7572
  %7574 = vmatmul.bf16.gmra.mxu0 %v7241
  %v7575 = vpop.f32.mrf.mxu0
  %v7576 = vadd.f32 %v7279, %v7575
  %v7577 = vpop.f32.mrf.mxu0
  %v7578 = vadd.f32 %v7279, %v7577
  %7579 = vmatmul.bf16.gmra.mxu0 %v7244
  %v7580 = vpop.f32.mrf.mxu0
  %v7581 = vadd.f32 %v7279, %v7580
  %v7582 = vpop.f32.mrf.mxu0
  %v7583 = vadd.f32 %v7279, %v7582
  %7584 = vmatmul.bf16.gmra.mxu0 %v7247
  %v7585 = vpop.f32.mrf.mxu0
  %v7586 = vadd.f32 %v7279, %v7585
  %v7587 = vpop.f32.mrf.mxu0
  %v7588 = vadd.f32 %v7279, %v7587
  %7589 = vmatmul.bf16.gmra.mxu0 %v7250
  %v7590 = vpop.f32.mrf.mxu0
  %v7591 = vadd.f32 %v7279, %v7590
  %v7592 = vpop.f32.mrf.mxu0
  %v7593 = vadd.f32 %v7279, %v7592
  %7594 = vmatmul.bf16.gmra.mxu0 %v7253
  %v7595 = vpop.f32.mrf.mxu0
  %v7596 = vadd.f32 %v7279, %v7595
  %v7597 = vpop.f32.mrf.mxu0
  %v7598 = vadd.f32 %v7279, %v7597
  %7599 = vmatmul.bf16.gmra.mxu0 %v7256
  %v7600 = vpop.f32.mrf.mxu0
  %v7601 = vadd.f32 %v7279, %v7600
  %v7602 = vpop.f32.mrf.mxu0
  %v7603 = vadd.f32 %v7279, %v7602
  %7604 = vdwg.mxu0
  %7605 = vmatpush.bf16.msra.mxu0 0
  %7606 = vmatpush.bf16.msra.mxu0 0
  %7607 = vmatpush.bf16.msra.mxu0 0
  %7608 = vmatpush.bf16.msra.mxu0 0
  %7609 = vmatpush.bf16.msra.mxu0 0
  %7610 = vmatpush.bf16.msra.mxu0 0
  %7611 = vmatpush.bf16.msra.mxu0 %v7329
  %7612 = vmatpush.bf16.msra.mxu0 %v7328
  %7613 = vmatmul.bf16.gmra.mxu0 %v7341
  %v7614 = vpop.f32.mrf.mxu0
  %v7615 = vadd.f32 %v7446, %v7614
  %v7616 = vpop.f32.mrf.mxu0
  %v7617 = vadd.f32 %v7448, %v7616
  %7618 = vmatmul.bf16.gmra.mxu0 %v7344
  %v7619 = vpop.f32.mrf.mxu0
  %v7620 = vadd.f32 %v7451, %v7619
  %v7621 = vpop.f32.mrf.mxu0
  %v7622 = vadd.f32 %v7453, %v7621
  %7623 = vmatmul.bf16.gmra.mxu0 %v7347
  %v7624 = vpop.f32.mrf.mxu0
  %v7625 = vadd.f32 %v7456, %v7624
  %v7626 = vpop.f32.mrf.mxu0
  %v7627 = vadd.f32 %v7458, %v7626
  %7628 = vmatmul.bf16.gmra.mxu0 %v7350
  %v7629 = vpop.f32.mrf.mxu0
  %v7630 = vadd.f32 %v7461, %v7629
  %v7631 = vpop.f32.mrf.mxu0
  %v7632 = vadd.f32 %v7463, %v7631
  %7633 = vmatmul.bf16.gmra.mxu0 %v7353
  %v7634 = vpop.f32.mrf.mxu0
  %v7635 = vadd.f32 %v7466, %v7634
  %v7636 = vpop.f32.mrf.mxu0
  %v7637 = vadd.f32 %v7468, %v7636
  %7638 = vmatmul.bf16.gmra.mxu0 %v7356
  %v7639 = vpop.f32.mrf.mxu0
  %v7640 = vadd.f32 %v7471, %v7639
  %v7641 = vpop.f32.mrf.mxu0
  %v7642 = vadd.f32 %v7473, %v7641
  %7643 = vmatmul.bf16.gmra.mxu0 %v7359
  %v7644 = vpop.f32.mrf.mxu0
  %v7645 = vadd.f32 %v7476, %v7644
  %v7646 = vpop.f32.mrf.mxu0
  %v7647 = vadd.f32 %v7478, %v7646
  %7648 = vmatmul.bf16.gmra.mxu0 %v7362
  %v7649 = vpop.f32.mrf.mxu0
  %v7650 = vadd.f32 %v7481, %v7649
  %v7651 = vpop.f32.mrf.mxu0
  %v7652 = vadd.f32 %v7483, %v7651
  %7653 = vmatmul.bf16.gmra.mxu0 %v7365
  %v7654 = vpop.f32.mrf.mxu0
  %v7655 = vadd.f32 %v7486, %v7654
  %v7656 = vpop.f32.mrf.mxu0
  %v7657 = vadd.f32 %v7488, %v7656
  %7658 = vmatmul.bf16.gmra.mxu0 %v7368
  %v7659 = vpop.f32.mrf.mxu0
  %v7660 = vadd.f32 %v7491, %v7659
  %v7661 = vpop.f32.mrf.mxu0
  %v7662 = vadd.f32 %v7493, %v7661
  %7663 = vmatmul.bf16.gmra.mxu0 %v7371
  %v7664 = vpop.f32.mrf.mxu0
  %v7665 = vadd.f32 %v7496, %v7664
  %v7666 = vpop.f32.mrf.mxu0
  %v7667 = vadd.f32 %v7498, %v7666
  %7668 = vmatmul.bf16.gmra.mxu0 %v7374
  %v7669 = vpop.f32.mrf.mxu0
  %v7670 = vadd.f32 %v7501, %v7669
  %v7671 = vpop.f32.mrf.mxu0
  %v7672 = vadd.f32 %v7503, %v7671
  %7673 = vmatmul.bf16.gmra.mxu0 %v7377
  %v7674 = vpop.f32.mrf.mxu0
  %v7675 = vadd.f32 %v7506, %v7674
  %v7676 = vpop.f32.mrf.mxu0
  %v7677 = vadd.f32 %v7508, %v7676
  %7678 = vmatmul.bf16.gmra.mxu0 %v7380
  %v7679 = vpop.f32.mrf.mxu0
  %v7680 = vadd.f32 %v7511, %v7679
  %v7681 = vpop.f32.mrf.mxu0
  %v7682 = vadd.f32 %v7513, %v7681
  %7683 = vmatmul.bf16.gmra.mxu0 %v7383
  %v7684 = vpop.f32.mrf.mxu0
  %v7685 = vadd.f32 %v7516, %v7684
  %v7686 = vpop.f32.mrf.mxu0
  %v7687 = vadd.f32 %v7518, %v7686
  %7688 = vmatmul.bf16.gmra.mxu0 %v7386
  %v7689 = vpop.f32.mrf.mxu0
  %v7690 = vadd.f32 %v7521, %v7689
  %v7691 = vpop.f32.mrf.mxu0
  %v7692 = vadd.f32 %v7523, %v7691
  %7693 = vmatmul.bf16.gmra.mxu0 %v7389
  %v7694 = vpop.f32.mrf.mxu0
  %v7695 = vadd.f32 %v7526, %v7694
  %v7696 = vpop.f32.mrf.mxu0
  %v7697 = vadd.f32 %v7528, %v7696
  %7698 = vmatmul.bf16.gmra.mxu0 %v7392
  %v7699 = vpop.f32.mrf.mxu0
  %v7700 = vadd.f32 %v7531, %v7699
  %v7701 = vpop.f32.mrf.mxu0
  %v7702 = vadd.f32 %v7533, %v7701
  %7703 = vmatmul.bf16.gmra.mxu0 %v7395
  %v7704 = vpop.f32.mrf.mxu0
  %v7705 = vadd.f32 %v7536, %v7704
  %v7706 = vpop.f32.mrf.mxu0
  %v7707 = vadd.f32 %v7538, %v7706
  %7708 = vmatmul.bf16.gmra.mxu0 %v7398
  %v7709 = vpop.f32.mrf.mxu0
  %v7710 = vadd.f32 %v7541, %v7709
  %v7711 = vpop.f32.mrf.mxu0
  %v7712 = vadd.f32 %v7543, %v7711
  %7713 = vmatmul.bf16.gmra.mxu0 %v7401
  %v7714 = vpop.f32.mrf.mxu0
  %v7715 = vadd.f32 %v7546, %v7714
  %v7716 = vpop.f32.mrf.mxu0
  %v7717 = vadd.f32 %v7548, %v7716
  %7718 = vmatmul.bf16.gmra.mxu0 %v7404
  %v7719 = vpop.f32.mrf.mxu0
  %v7720 = vadd.f32 %v7551, %v7719
  %v7721 = vpop.f32.mrf.mxu0
  %v7722 = vadd.f32 %v7553, %v7721
  %7723 = vmatmul.bf16.gmra.mxu0 %v7407
  %v7724 = vpop.f32.mrf.mxu0
  %v7725 = vadd.f32 %v7556, %v7724
  %v7726 = vpop.f32.mrf.mxu0
  %v7727 = vadd.f32 %v7558, %v7726
  %7728 = vmatmul.bf16.gmra.mxu0 %v7410
  %v7729 = vpop.f32.mrf.mxu0
  %v7730 = vadd.f32 %v7561, %v7729
  %v7731 = vpop.f32.mrf.mxu0
  %v7732 = vadd.f32 %v7563, %v7731
  %7733 = vmatmul.bf16.gmra.mxu0 %v7413
  %v7734 = vpop.f32.mrf.mxu0
  %v7735 = vadd.f32 %v7566, %v7734
  %v7736 = vpop.f32.mrf.mxu0
  %v7737 = vadd.f32 %v7568, %v7736
  %7738 = vmatmul.bf16.gmra.mxu0 %v7416
  %v7739 = vpop.f32.mrf.mxu0
  %v7740 = vadd.f32 %v7571, %v7739
  %v7741 = vpop.f32.mrf.mxu0
  %v7742 = vadd.f32 %v7573, %v7741
  %7743 = vmatmul.bf16.gmra.mxu0 %v7419
  %v7744 = vpop.f32.mrf.mxu0
  %v7745 = vadd.f32 %v7576, %v7744
  %v7746 = vpop.f32.mrf.mxu0
  %v7747 = vadd.f32 %v7578, %v7746
  %7748 = vmatmul.bf16.gmra.mxu0 %v7422
  %v7749 = vpop.f32.mrf.mxu0
  %v7750 = vadd.f32 %v7581, %v7749
  %v7751 = vpop.f32.mrf.mxu0
  %v7752 = vadd.f32 %v7583, %v7751
  %7753 = vmatmul.bf16.gmra.mxu0 %v7425
  %v7754 = vpop.f32.mrf.mxu0
  %v7755 = vadd.f32 %v7586, %v7754
  %v7756 = vpop.f32.mrf.mxu0
  %v7757 = vadd.f32 %v7588, %v7756
  %7758 = vmatmul.bf16.gmra.mxu0 %v7428
  %v7759 = vpop.f32.mrf.mxu0
  %v7760 = vadd.f32 %v7591, %v7759
  %v7761 = vpop.f32.mrf.mxu0
  %v7762 = vadd.f32 %v7593, %v7761
  %7763 = vmatmul.bf16.gmra.mxu0 %v7431
  %v7764 = vpop.f32.mrf.mxu0
  %v7765 = vadd.f32 %v7596, %v7764
  %v7766 = vpop.f32.mrf.mxu0
  %v7767 = vadd.f32 %v7598, %v7766
  %7768 = vmatmul.bf16.gmra.mxu0 %v7434
  %v7769 = vpop.f32.mrf.mxu0
  %v7770 = vadd.f32 %v7601, %v7769
  %v7771 = vpop.f32.mrf.mxu0
  %v7772 = vadd.f32 %v7603, %v7771
  %7773 = vdwg.mxu0
  %vm7774 = vcmp.gt.f32.partialorder %v7615, 0.0
  %vm7775 = vcmp.gt.f32.partialorder %v7617, 0.0
  %vm7776 = vcmp.gt.f32.partialorder %v7620, 0.0
  %vm7777 = vcmp.gt.f32.partialorder %v7622, 0.0
  %vm7778 = vcmp.gt.f32.partialorder %v7625, 0.0
  %vm7779 = vcmp.gt.f32.partialorder %v7627, 0.0
  %vm7780 = vcmp.gt.f32.partialorder %v7630, 0.0
  %vm7781 = vcmp.gt.f32.partialorder %v7632, 0.0
  %vm7782 = vcmp.gt.f32.partialorder %v7635, 0.0
  %vm7783 = vcmp.gt.f32.partialorder %v7637, 0.0
  %vm7784 = vcmp.gt.f32.partialorder %v7640, 0.0
  %vm7785 = vcmp.gt.f32.partialorder %v7642, 0.0
  %vm7786 = vcmp.gt.f32.partialorder %v7645, 0.0
  %vm7787 = vcmp.gt.f32.partialorder %v7647, 0.0
  %vm7788 = vcmp.gt.f32.partialorder %v7650, 0.0
  %vm7789 = vcmp.gt.f32.partialorder %v7652, 0.0
  %vm7790 = vcmp.gt.f32.partialorder %v7655, 0.0
  %vm7791 = vcmp.gt.f32.partialorder %v7657, 0.0
  %vm7792 = vcmp.gt.f32.partialorder %v7660, 0.0
  %vm7793 = vcmp.gt.f32.partialorder %v7662, 0.0
  %vm7794 = vcmp.gt.f32.partialorder %v7665, 0.0
  %vm7795 = vcmp.gt.f32.partialorder %v7667, 0.0
  %vm7796 = vcmp.gt.f32.partialorder %v7670, 0.0
  %vm7797 = vcmp.gt.f32.partialorder %v7672, 0.0
  %vm7798 = vcmp.gt.f32.partialorder %v7675, 0.0
  %vm7799 = vcmp.gt.f32.partialorder %v7677, 0.0
  %vm7800 = vcmp.gt.f32.partialorder %v7680, 0.0
  %vm7801 = vcmp.gt.f32.partialorder %v7682, 0.0
  %vm7802 = vcmp.gt.f32.partialorder %v7685, 0.0
  %vm7803 = vcmp.gt.f32.partialorder %v7687, 0.0
  %vm7804 = vcmp.gt.f32.partialorder %v7690, 0.0
  %vm7805 = vcmp.gt.f32.partialorder %v7692, 0.0
  %vm7806 = vcmp.gt.f32.partialorder %v7695, 0.0
  %vm7807 = vcmp.gt.f32.partialorder %v7697, 0.0
  %vm7808 = vcmp.gt.f32.partialorder %v7700, 0.0
  %vm7809 = vcmp.gt.f32.partialorder %v7702, 0.0
  %vm7810 = vcmp.gt.f32.partialorder %v7705, 0.0
  %vm7811 = vcmp.gt.f32.partialorder %v7707, 0.0
  %vm7812 = vcmp.gt.f32.partialorder %v7710, 0.0
  %vm7813 = vcmp.gt.f32.partialorder %v7712, 0.0
  %vm7814 = vcmp.gt.f32.partialorder %v7715, 0.0
  %vm7815 = vcmp.gt.f32.partialorder %v7717, 0.0
  %vm7816 = vcmp.gt.f32.partialorder %v7720, 0.0
  %vm7817 = vcmp.gt.f32.partialorder %v7722, 0.0
  %vm7818 = vcmp.gt.f32.partialorder %v7725, 0.0
  %vm7819 = vcmp.gt.f32.partialorder %v7727, 0.0
  %vm7820 = vcmp.gt.f32.partialorder %v7730, 0.0
  %vm7821 = vcmp.gt.f32.partialorder %v7732, 0.0
  %vm7822 = vcmp.gt.f32.partialorder %v7735, 0.0
  %vm7823 = vcmp.gt.f32.partialorder %v7737, 0.0
  %vm7824 = vcmp.gt.f32.partialorder %v7740, 0.0
  %vm7825 = vcmp.gt.f32.partialorder %v7742, 0.0
  %vm7826 = vcmp.gt.f32.partialorder %v7745, 0.0
  %vm7827 = vcmp.gt.f32.partialorder %v7747, 0.0
  %vm7828 = vcmp.gt.f32.partialorder %v7750, 0.0
  %vm7829 = vcmp.gt.f32.partialorder %v7752, 0.0
  %vm7830 = vcmp.gt.f32.partialorder %v7755, 0.0
  %vm7831 = vcmp.gt.f32.partialorder %v7757, 0.0
  %vm7832 = vcmp.gt.f32.partialorder %v7760, 0.0
  %vm7833 = vcmp.gt.f32.partialorder %v7762, 0.0
  %vm7834 = vcmp.gt.f32.partialorder %v7765, 0.0
  %vm7835 = vcmp.gt.f32.partialorder %v7767, 0.0
  %vm7836 = vcmp.gt.f32.partialorder %v7770, 0.0
  %vm7837 = vcmp.gt.f32.partialorder %v7772, 0.0
  %v7838 = vmul.f32 %v7615, 1.442695
  %v7839 = vpow.pop %v7838
  %v7840 = vmul.f32 %v7617, 1.442695
  %v7841 = vpow.pop %v7840
  %v7842 = vmul.f32 %v7620, 1.442695
  %v7843 = vpow.pop %v7842
  %v7844 = vmul.f32 %v7622, 1.442695
  %v7845 = vpow.pop %v7844
  %v7846 = vmul.f32 %v7625, 1.442695
  %v7847 = vpow.pop %v7846
  %v7848 = vmul.f32 %v7627, 1.442695
  %v7849 = vpow.pop %v7848
  %v7850 = vmul.f32 %v7630, 1.442695
  %v7851 = vpow.pop %v7850
  %v7852 = vmul.f32 %v7632, 1.442695
  %v7853 = vpow.pop %v7852
  %v7854 = vmul.f32 %v7635, 1.442695
  %v7855 = vpow.pop %v7854
  %v7856 = vmul.f32 %v7637, 1.442695
  %v7857 = vpow.pop %v7856
  %v7858 = vmul.f32 %v7640, 1.442695
  %v7859 = vpow.pop %v7858
  %v7860 = vmul.f32 %v7642, 1.442695
  %v7861 = vpow.pop %v7860
  %v7862 = vmul.f32 %v7645, 1.442695
  %v7863 = vpow.pop %v7862
  %v7864 = vmul.f32 %v7647, 1.442695
  %v7865 = vpow.pop %v7864
  %v7866 = vmul.f32 %v7650, 1.442695
  %v7867 = vpow.pop %v7866
  %v7868 = vmul.f32 %v7652, 1.442695
  %v7869 = vpow.pop %v7868
  %v7870 = vmul.f32 %v7655, 1.442695
  %v7871 = vpow.pop %v7870
  %v7872 = vmul.f32 %v7657, 1.442695
  %v7873 = vpow.pop %v7872
  %v7874 = vmul.f32 %v7660, 1.442695
  %v7875 = vpow.pop %v7874
  %v7876 = vmul.f32 %v7662, 1.442695
  %v7877 = vpow.pop %v7876
  %v7878 = vmul.f32 %v7665, 1.442695
  %v7879 = vpow.pop %v7878
  %v7880 = vmul.f32 %v7667, 1.442695
  %v7881 = vpow.pop %v7880
  %v7882 = vmul.f32 %v7670, 1.442695
  %v7883 = vpow.pop %v7882
  %v7884 = vmul.f32 %v7672, 1.442695
  %v7885 = vpow.pop %v7884
  %v7886 = vmul.f32 %v7675, 1.442695
  %v7887 = vpow.pop %v7886
  %v7888 = vmul.f32 %v7677, 1.442695
  %v7889 = vpow.pop %v7888
  %v7890 = vmul.f32 %v7680, 1.442695
  %v7891 = vpow.pop %v7890
  %v7892 = vmul.f32 %v7682, 1.442695
  %v7893 = vpow.pop %v7892
  %v7894 = vmul.f32 %v7685, 1.442695
  %v7895 = vpow.pop %v7894
  %v7896 = vmul.f32 %v7687, 1.442695
  %v7897 = vpow.pop %v7896
  %v7898 = vmul.f32 %v7690, 1.442695
  %v7899 = vpow.pop %v7898
  %v7900 = vmul.f32 %v7692, 1.442695
  %v7901 = vpow.pop %v7900
  %v7902 = vmul.f32 %v7695, 1.442695
  %v7903 = vpow.pop %v7902
  %v7904 = vmul.f32 %v7697, 1.442695
  %v7905 = vpow.pop %v7904
  %v7906 = vmul.f32 %v7700, 1.442695
  %v7907 = vpow.pop %v7906
  %v7908 = vmul.f32 %v7702, 1.442695
  %v7909 = vpow.pop %v7908
  %v7910 = vmul.f32 %v7705, 1.442695
  %v7911 = vpow.pop %v7910
  %v7912 = vmul.f32 %v7707, 1.442695
  %v7913 = vpow.pop %v7912
  %v7914 = vmul.f32 %v7710, 1.442695
  %v7915 = vpow.pop %v7914
  %v7916 = vmul.f32 %v7712, 1.442695
  %v7917 = vpow.pop %v7916
  %v7918 = vmul.f32 %v7715, 1.442695
  %v7919 = vpow.pop %v7918
  %v7920 = vmul.f32 %v7717, 1.442695
  %v7921 = vpow.pop %v7920
  %v7922 = vmul.f32 %v7720, 1.442695
  %v7923 = vpow.pop %v7922
  %v7924 = vmul.f32 %v7722, 1.442695
  %v7925 = vpow.pop %v7924
  %v7926 = vmul.f32 %v7725, 1.442695
  %v7927 = vpow.pop %v7926
  %v7928 = vmul.f32 %v7727, 1.442695
  %v7929 = vpow.pop %v7928
  %v7930 = vmul.f32 %v7730, 1.442695
  %v7931 = vpow.pop %v7930
  %v7932 = vmul.f32 %v7732, 1.442695
  %v7933 = vpow.pop %v7932
  %v7934 = vmul.f32 %v7735, 1.442695
  %v7935 = vpow.pop %v7934
  %v7936 = vmul.f32 %v7737, 1.442695
  %v7937 = vpow.pop %v7936
  %v7938 = vmul.f32 %v7740, 1.442695
  %v7939 = vpow.pop %v7938
  %v7940 = vmul.f32 %v7742, 1.442695
  %v7941 = vpow.pop %v7940
  %v7942 = vmul.f32 %v7745, 1.442695
  %v7943 = vpow.pop %v7942
  %v7944 = vmul.f32 %v7747, 1.442695
  %v7945 = vpow.pop %v7944
  %v7946 = vmul.f32 %v7750, 1.442695
  %v7947 = vpow.pop %v7946
  %v7948 = vmul.f32 %v7752, 1.442695
  %v7949 = vpow.pop %v7948
  %v7950 = vmul.f32 %v7755, 1.442695
  %v7951 = vpow.pop %v7950
  %v7952 = vmul.f32 %v7757, 1.442695
  %v7953 = vpow.pop %v7952
  %v7954 = vmul.f32 %v7760, 1.442695
  %v7955 = vpow.pop %v7954
  %v7956 = vmul.f32 %v7762, 1.442695
  %v7957 = vpow.pop %v7956
  %v7958 = vmul.f32 %v7765, 1.442695
  %v7959 = vpow.pop %v7958
  %v7960 = vmul.f32 %v7767, 1.442695
  %v7961 = vpow.pop %v7960
  %v7962 = vmul.f32 %v7770, 1.442695
  %v7963 = vpow.pop %v7962
  %v7964 = vmul.f32 %v7772, 1.442695
  %v7965 = vpow.pop %v7964
  %v7966 = vsub.f32 %v7839, 1.0
  %v7967 = vsub.f32 %v7841, 1.0
  %v7968 = vsub.f32 %v7843, 1.0
  %v7969 = vsub.f32 %v7845, 1.0
  %v7970 = vsub.f32 %v7847, 1.0
  %v7971 = vsub.f32 %v7849, 1.0
  %v7972 = vsub.f32 %v7851, 1.0
  %v7973 = vsub.f32 %v7853, 1.0
  %v7974 = vsub.f32 %v7855, 1.0
  %v7975 = vsub.f32 %v7857, 1.0
  %v7976 = vsub.f32 %v7859, 1.0
  %v7977 = vsub.f32 %v7861, 1.0
  %v7978 = vsub.f32 %v7863, 1.0
  %v7979 = vsub.f32 %v7865, 1.0
  %v7980 = vsub.f32 %v7867, 1.0
  %v7981 = vsub.f32 %v7869, 1.0
  %v7982 = vsub.f32 %v7871, 1.0
  %v7983 = vsub.f32 %v7873, 1.0
  %v7984 = vsub.f32 %v7875, 1.0
  %v7985 = vsub.f32 %v7877, 1.0
  %v7986 = vsub.f32 %v7879, 1.0
  %v7987 = vsub.f32 %v7881, 1.0
  %v7988 = vsub.f32 %v7883, 1.0
  %v7989 = vsub.f32 %v7885, 1.0
  %v7990 = vsub.f32 %v7887, 1.0
  %v7991 = vsub.f32 %v7889, 1.0
  %v7992 = vsub.f32 %v7891, 1.0
  %v7993 = vsub.f32 %v7893, 1.0
  %v7994 = vsub.f32 %v7895, 1.0
  %v7995 = vsub.f32 %v7897, 1.0
  %v7996 = vsub.f32 %v7899, 1.0
  %v7997 = vsub.f32 %v7901, 1.0
  %v7998 = vsub.f32 %v7903, 1.0
  %v7999 = vsub.f32 %v7905, 1.0
  %v8000 = vsub.f32 %v7907, 1.0
  %v8001 = vsub.f32 %v7909, 1.0
  %v8002 = vsub.f32 %v7911, 1.0
  %v8003 = vsub.f32 %v7913, 1.0
  %v8004 = vsub.f32 %v7915, 1.0
  %v8005 = vsub.f32 %v7917, 1.0
  %v8006 = vsub.f32 %v7919, 1.0
  %v8007 = vsub.f32 %v7921, 1.0
  %v8008 = vsub.f32 %v7923, 1.0
  %v8009 = vsub.f32 %v7925, 1.0
  %v8010 = vsub.f32 %v7927, 1.0
  %v8011 = vsub.f32 %v7929, 1.0
  %v8012 = vsub.f32 %v7931, 1.0
  %v8013 = vsub.f32 %v7933, 1.0
  %v8014 = vsub.f32 %v7935, 1.0
  %v8015 = vsub.f32 %v7937, 1.0
  %v8016 = vsub.f32 %v7939, 1.0
  %v8017 = vsub.f32 %v7941, 1.0
  %v8018 = vsub.f32 %v7943, 1.0
  %v8019 = vsub.f32 %v7945, 1.0
  %v8020 = vsub.f32 %v7947, 1.0
  %v8021 = vsub.f32 %v7949, 1.0
  %v8022 = vsub.f32 %v7951, 1.0
  %v8023 = vsub.f32 %v7953, 1.0
  %v8024 = vsub.f32 %v7955, 1.0
  %v8025 = vsub.f32 %v7957, 1.0
  %v8026 = vsub.f32 %v7959, 1.0
  %v8027 = vsub.f32 %v7961, 1.0
  %v8028 = vsub.f32 %v7963, 1.0
  %v8029 = vsub.f32 %v7965, 1.0
  %v8030 = vsel %vm7774, %v7615, %v7966
  %v8031 = vsel %vm7775, %v7617, %v7967
  %v8032 = vsel %vm7776, %v7620, %v7968
  %v8033 = vsel %vm7777, %v7622, %v7969
  %v8034 = vsel %vm7778, %v7625, %v7970
  %v8035 = vsel %vm7779, %v7627, %v7971
  %v8036 = vsel %vm7780, %v7630, %v7972
  %v8037 = vsel %vm7781, %v7632, %v7973
  %v8038 = vsel %vm7782, %v7635, %v7974
  %v8039 = vsel %vm7783, %v7637, %v7975
  %v8040 = vsel %vm7784, %v7640, %v7976
  %v8041 = vsel %vm7785, %v7642, %v7977
  %v8042 = vsel %vm7786, %v7645, %v7978
  %v8043 = vsel %vm7787, %v7647, %v7979
  %v8044 = vsel %vm7788, %v7650, %v7980
  %v8045 = vsel %vm7789, %v7652, %v7981
  %v8046 = vsel %vm7790, %v7655, %v7982
  %v8047 = vsel %vm7791, %v7657, %v7983
  %v8048 = vsel %vm7792, %v7660, %v7984
  %v8049 = vsel %vm7793, %v7662, %v7985
  %v8050 = vsel %vm7794, %v7665, %v7986
  %v8051 = vsel %vm7795, %v7667, %v7987
  %v8052 = vsel %vm7796, %v7670, %v7988
  %v8053 = vsel %vm7797, %v7672, %v7989
  %v8054 = vsel %vm7798, %v7675, %v7990
  %v8055 = vsel %vm7799, %v7677, %v7991
  %v8056 = vsel %vm7800, %v7680, %v7992
  %v8057 = vsel %vm7801, %v7682, %v7993
  %v8058 = vsel %vm7802, %v7685, %v7994
  %v8059 = vsel %vm7803, %v7687, %v7995
  %v8060 = vsel %vm7804, %v7690, %v7996
  %v8061 = vsel %vm7805, %v7692, %v7997
  %v8062 = vsel %vm7806, %v7695, %v7998
  %v8063 = vsel %vm7807, %v7697, %v7999
  %v8064 = vsel %vm7808, %v7700, %v8000
  %v8065 = vsel %vm7809, %v7702, %v8001
  %v8066 = vsel %vm7810, %v7705, %v8002
  %v8067 = vsel %vm7811, %v7707, %v8003
  %v8068 = vsel %vm7812, %v7710, %v8004
  %v8069 = vsel %vm7813, %v7712, %v8005
  %v8070 = vsel %vm7814, %v7715, %v8006
  %v8071 = vsel %vm7815, %v7717, %v8007
  %v8072 = vsel %vm7816, %v7720, %v8008
  %v8073 = vsel %vm7817, %v7722, %v8009
  %v8074 = vsel %vm7818, %v7725, %v8010
  %v8075 = vsel %vm7819, %v7727, %v8011
  %v8076 = vsel %vm7820, %v7730, %v8012
  %v8077 = vsel %vm7821, %v7732, %v8013
  %v8078 = vsel %vm7822, %v7735, %v8014
  %v8079 = vsel %vm7823, %v7737, %v8015
  %v8080 = vsel %vm7824, %v7740, %v8016
  %v8081 = vsel %vm7825, %v7742, %v8017
  %v8082 = vsel %vm7826, %v7745, %v8018
  %v8083 = vsel %vm7827, %v7747, %v8019
  %v8084 = vsel %vm7828, %v7750, %v8020
  %v8085 = vsel %vm7829, %v7752, %v8021
  %v8086 = vsel %vm7830, %v7755, %v8022
  %v8087 = vsel %vm7831, %v7757, %v8023
  %v8088 = vsel %vm7832, %v7760, %v8024
  %v8089 = vsel %vm7833, %v7762, %v8025
  %v8090 = vsel %vm7834, %v7765, %v8026
  %v8091 = vsel %vm7835, %v7767, %v8027
  %v8092 = vsel %vm7836, %v7770, %v8028
  %v8093 = vsel %vm7837, %v7772, %v8029
  %v8094 = vpack.c.bf16 %v8030, %v8030
  %v8095 = vpack.c.bf16 %v8031, %v8031
  %v8096 = vpack.c.bf16 %v8032, %v8032
  %v8097 = vpack.c.bf16 %v8033, %v8033
  %v8098 = vpack.c.bf16 %v8034, %v8034
  %v8099 = vpack.c.bf16 %v8035, %v8035
  %v8100 = vpack.c.bf16 %v8036, %v8036
  %v8101 = vpack.c.bf16 %v8037, %v8037
  %v8102 = vpack.c.bf16 %v8038, %v8038
  %v8103 = vpack.c.bf16 %v8039, %v8039
  %v8104 = vpack.c.bf16 %v8040, %v8040
  %v8105 = vpack.c.bf16 %v8041, %v8041
  %v8106 = vpack.c.bf16 %v8042, %v8042
  %v8107 = vpack.c.bf16 %v8043, %v8043
  %v8108 = vpack.c.bf16 %v8044, %v8044
  %v8109 = vpack.c.bf16 %v8045, %v8045
  %v8110 = vpack.c.bf16 %v8046, %v8046
  %v8111 = vpack.c.bf16 %v8047, %v8047
  %v8112 = vpack.c.bf16 %v8048, %v8048
  %v8113 = vpack.c.bf16 %v8049, %v8049
  %v8114 = vpack.c.bf16 %v8050, %v8050
  %v8115 = vpack.c.bf16 %v8051, %v8051
  %v8116 = vpack.c.bf16 %v8052, %v8052
  %v8117 = vpack.c.bf16 %v8053, %v8053
  %v8118 = vpack.c.bf16 %v8054, %v8054
  %v8119 = vpack.c.bf16 %v8055, %v8055
  %v8120 = vpack.c.bf16 %v8056, %v8056
  %v8121 = vpack.c.bf16 %v8057, %v8057
  %v8122 = vpack.c.bf16 %v8058, %v8058
  %v8123 = vpack.c.bf16 %v8059, %v8059
  %v8124 = vpack.c.bf16 %v8060, %v8060
  %v8125 = vpack.c.bf16 %v8061, %v8061
  %v8126 = vpack.c.bf16 %v8062, %v8062
  %v8127 = vpack.c.bf16 %v8063, %v8063
  %v8128 = vpack.c.bf16 %v8064, %v8064
  %v8129 = vpack.c.bf16 %v8065, %v8065
  %v8130 = vpack.c.bf16 %v8066, %v8066
  %v8131 = vpack.c.bf16 %v8067, %v8067
  %v8132 = vpack.c.bf16 %v8068, %v8068
  %v8133 = vpack.c.bf16 %v8069, %v8069
  %v8134 = vpack.c.bf16 %v8070, %v8070
  %v8135 = vpack.c.bf16 %v8071, %v8071
  %v8136 = vpack.c.bf16 %v8072, %v8072
  %v8137 = vpack.c.bf16 %v8073, %v8073
  %v8138 = vpack.c.bf16 %v8074, %v8074
  %v8139 = vpack.c.bf16 %v8075, %v8075
  %v8140 = vpack.c.bf16 %v8076, %v8076
  %v8141 = vpack.c.bf16 %v8077, %v8077
  %v8142 = vpack.c.bf16 %v8078, %v8078
  %v8143 = vpack.c.bf16 %v8079, %v8079
  %v8144 = vpack.c.bf16 %v8080, %v8080
  %v8145 = vpack.c.bf16 %v8081, %v8081
  %v8146 = vpack.c.bf16 %v8082, %v8082
  %v8147 = vpack.c.bf16 %v8083, %v8083
  %v8148 = vpack.c.bf16 %v8084, %v8084
  %v8149 = vpack.c.bf16 %v8085, %v8085
  %v8150 = vpack.c.bf16 %v8086, %v8086
  %v8151 = vpack.c.bf16 %v8087, %v8087
  %v8152 = vpack.c.bf16 %v8088, %v8088
  %v8153 = vpack.c.bf16 %v8089, %v8089
  %v8154 = vpack.c.bf16 %v8090, %v8090
  %v8155 = vpack.c.bf16 %v8091, %v8091
  %v8156 = vpack.c.bf16 %v8092, %v8092
  %v8157 = vpack.c.bf16 %v8093, %v8093
  %v8158 = vrot.slane %v8030, 1
  %v8159 = vrot.slane %v8031, 1
  %v8160 = vrot.slane %v8032, 1
  %v8161 = vrot.slane %v8033, 1
  %v8162 = vrot.slane %v8034, 1
  %v8163 = vrot.slane %v8035, 1
  %v8164 = vrot.slane %v8036, 1
  %v8165 = vrot.slane %v8037, 1
  %v8166 = vrot.slane %v8038, 1
  %v8167 = vrot.slane %v8039, 1
  %v8168 = vrot.slane %v8040, 1
  %v8169 = vrot.slane %v8041, 1
  %v8170 = vrot.slane %v8042, 1
  %v8171 = vrot.slane %v8043, 1
  %v8172 = vrot.slane %v8044, 1
  %v8173 = vrot.slane %v8045, 1
  %v8174 = vrot.slane %v8046, 1
  %v8175 = vrot.slane %v8047, 1
  %v8176 = vrot.slane %v8048, 1
  %v8177 = vrot.slane %v8049, 1
  %v8178 = vrot.slane %v8050, 1
  %v8179 = vrot.slane %v8051, 1
  %v8180 = vrot.slane %v8052, 1
  %v8181 = vrot.slane %v8053, 1
  %v8182 = vrot.slane %v8054, 1
  %v8183 = vrot.slane %v8055, 1
  %v8184 = vrot.slane %v8056, 1
  %v8185 = vrot.slane %v8057, 1
  %v8186 = vrot.slane %v8058, 1
  %v8187 = vrot.slane %v8059, 1
  %v8188 = vrot.slane %v8060, 1
  %v8189 = vrot.slane %v8061, 1
  %v8190 = vrot.slane %v8062, 1
  %v8191 = vrot.slane %v8063, 1
  %v8192 = vrot.slane %v8064, 1
  %v8193 = vrot.slane %v8065, 1
  %v8194 = vrot.slane %v8066, 1
  %v8195 = vrot.slane %v8067, 1
  %v8196 = vrot.slane %v8068, 1
  %v8197 = vrot.slane %v8069, 1
  %v8198 = vrot.slane %v8070, 1
  %v8199 = vrot.slane %v8071, 1
  %v8200 = vrot.slane %v8072, 1
  %v8201 = vrot.slane %v8073, 1
  %v8202 = vrot.slane %v8074, 1
  %v8203 = vrot.slane %v8075, 1
  %v8204 = vrot.slane %v8076, 1
  %v8205 = vrot.slane %v8077, 1
  %v8206 = vrot.slane %v8078, 1
  %v8207 = vrot.slane %v8079, 1
  %v8208 = vrot.slane %v8080, 1
  %v8209 = vrot.slane %v8081, 1
  %v8210 = vrot.slane %v8082, 1
  %v8211 = vrot.slane %v8083, 1
  %v8212 = vrot.slane %v8084, 1
  %v8213 = vrot.slane %v8085, 1
  %v8214 = vrot.slane %v8086, 1
  %v8215 = vrot.slane %v8087, 1
  %v8216 = vrot.slane %v8088, 1
  %v8217 = vrot.slane %v8089, 1
  %v8218 = vrot.slane %v8090, 1
  %v8219 = vrot.slane %v8091, 1
  %v8220 = vrot.slane %v8092, 1
  %v8221 = vrot.slane %v8093, 1
  %v8222 = vsel %vm402, %v8220, %v8221
  %v8223 = vsel %vm402, %v8219, %v8220
  %v8224 = vsel %vm402, %v8218, %v8219
  %v8225 = vsel %vm402, %v8217, %v8218
  %v8226 = vsel %vm402, %v8216, %v8217
  %v8227 = vsel %vm402, %v8215, %v8216
  %v8228 = vsel %vm402, %v8214, %v8215
  %v8229 = vsel %vm402, %v8213, %v8214
  %v8230 = vsel %vm402, %v8212, %v8213
  %v8231 = vsel %vm402, %v8211, %v8212
  %v8232 = vsel %vm402, %v8210, %v8211
  %v8233 = vsel %vm402, %v8209, %v8210
  %v8234 = vsel %vm402, %v8208, %v8209
  %v8235 = vsel %vm402, %v8207, %v8208
  %v8236 = vsel %vm402, %v8206, %v8207
  %v8237 = vsel %vm402, %v8205, %v8206
  %v8238 = vsel %vm402, %v8204, %v8205
  %v8239 = vsel %vm402, %v8203, %v8204
  %v8240 = vsel %vm402, %v8202, %v8203
  %v8241 = vsel %vm402, %v8201, %v8202
  %v8242 = vsel %vm402, %v8200, %v8201
  %v8243 = vsel %vm402, %v8199, %v8200
  %v8244 = vsel %vm402, %v8198, %v8199
  %v8245 = vsel %vm402, %v8197, %v8198
  %v8246 = vsel %vm402, %v8196, %v8197
  %v8247 = vsel %vm402, %v8195, %v8196
  %v8248 = vsel %vm402, %v8194, %v8195
  %v8249 = vsel %vm402, %v8193, %v8194
  %v8250 = vsel %vm402, %v8192, %v8193
  %v8251 = vsel %vm402, %v8191, %v8192
  %v8252 = vsel %vm402, %v8190, %v8191
  %v8253 = vsel %vm402, %v8189, %v8190
  %v8254 = vsel %vm402, %v8188, %v8189
  %v8255 = vsel %vm402, %v8187, %v8188
  %v8256 = vsel %vm402, %v8186, %v8187
  %v8257 = vsel %vm402, %v8185, %v8186
  %v8258 = vsel %vm402, %v8184, %v8185
  %v8259 = vsel %vm402, %v8183, %v8184
  %v8260 = vsel %vm402, %v8182, %v8183
  %v8261 = vsel %vm402, %v8181, %v8182
  %v8262 = vsel %vm402, %v8180, %v8181
  %v8263 = vsel %vm402, %v8179, %v8180
  %v8264 = vsel %vm402, %v8178, %v8179
  %v8265 = vsel %vm402, %v8177, %v8178
  %v8266 = vsel %vm402, %v8176, %v8177
  %v8267 = vsel %vm402, %v8175, %v8176
  %v8268 = vsel %vm402, %v8174, %v8175
  %v8269 = vsel %vm402, %v8173, %v8174
  %v8270 = vsel %vm402, %v8172, %v8173
  %v8271 = vsel %vm402, %v8171, %v8172
  %v8272 = vsel %vm402, %v8170, %v8171
  %v8273 = vsel %vm402, %v8169, %v8170
  %v8274 = vsel %vm402, %v8168, %v8169
  %v8275 = vsel %vm402, %v8167, %v8168
  %v8276 = vsel %vm402, %v8166, %v8167
  %v8277 = vsel %vm402, %v8165, %v8166
  %v8278 = vsel %vm402, %v8164, %v8165
  %v8279 = vsel %vm402, %v8163, %v8164
  %v8280 = vsel %vm402, %v8162, %v8163
  %v8281 = vsel %vm402, %v8161, %v8162
  %v8282 = vsel %vm402, %v8160, %v8161
  %v8283 = vsel %vm402, %v8159, %v8160
  %v8284 = vsel %vm402, %v8158, %v8159
  %v8285 = vsel %vm402, %v8221, %v8158
  %v8286 = vpack.c.bf16 %v8284, %v8284
  %v8287 = vpack.c.bf16 %v8283, %v8283
  %v8288 = vpack.c.bf16 %v8282, %v8282
  %v8289 = vpack.c.bf16 %v8281, %v8281
  %v8290 = vpack.c.bf16 %v8280, %v8280
  %v8291 = vpack.c.bf16 %v8279, %v8279
  %v8292 = vpack.c.bf16 %v8278, %v8278
  %v8293 = vpack.c.bf16 %v8277, %v8277
  %v8294 = vpack.c.bf16 %v8276, %v8276
  %v8295 = vpack.c.bf16 %v8275, %v8275
  %v8296 = vpack.c.bf16 %v8274, %v8274
  %v8297 = vpack.c.bf16 %v8273, %v8273
  %v8298 = vpack.c.bf16 %v8272, %v8272
  %v8299 = vpack.c.bf16 %v8271, %v8271
  %v8300 = vpack.c.bf16 %v8270, %v8270
  %v8301 = vpack.c.bf16 %v8269, %v8269
  %v8302 = vpack.c.bf16 %v8268, %v8268
  %v8303 = vpack.c.bf16 %v8267, %v8267
  %v8304 = vpack.c.bf16 %v8266, %v8266
  %v8305 = vpack.c.bf16 %v8265, %v8265
  %v8306 = vpack.c.bf16 %v8264, %v8264
  %v8307 = vpack.c.bf16 %v8263, %v8263
  %v8308 = vpack.c.bf16 %v8262, %v8262
  %v8309 = vpack.c.bf16 %v8261, %v8261
  %v8310 = vpack.c.bf16 %v8260, %v8260
  %v8311 = vpack.c.bf16 %v8259, %v8259
  %v8312 = vpack.c.bf16 %v8258, %v8258
  %v8313 = vpack.c.bf16 %v8257, %v8257
  %v8314 = vpack.c.bf16 %v8256, %v8256
  %v8315 = vpack.c.bf16 %v8255, %v8255
  %v8316 = vpack.c.bf16 %v8254, %v8254
  %v8317 = vpack.c.bf16 %v8253, %v8253
  %v8318 = vpack.c.bf16 %v8252, %v8252
  %v8319 = vpack.c.bf16 %v8251, %v8251
  %v8320 = vpack.c.bf16 %v8250, %v8250
  %v8321 = vpack.c.bf16 %v8249, %v8249
  %v8322 = vpack.c.bf16 %v8248, %v8248
  %v8323 = vpack.c.bf16 %v8247, %v8247
  %v8324 = vpack.c.bf16 %v8246, %v8246
  %v8325 = vpack.c.bf16 %v8245, %v8245
  %v8326 = vpack.c.bf16 %v8244, %v8244
  %v8327 = vpack.c.bf16 %v8243, %v8243
  %v8328 = vpack.c.bf16 %v8242, %v8242
  %v8329 = vpack.c.bf16 %v8241, %v8241
  %v8330 = vpack.c.bf16 %v8240, %v8240
  %v8331 = vpack.c.bf16 %v8239, %v8239
  %v8332 = vpack.c.bf16 %v8238, %v8238
  %v8333 = vpack.c.bf16 %v8237, %v8237
  %v8334 = vpack.c.bf16 %v8236, %v8236
  %v8335 = vpack.c.bf16 %v8235, %v8235
  %v8336 = vpack.c.bf16 %v8234, %v8234
  %v8337 = vpack.c.bf16 %v8233, %v8233
  %v8338 = vpack.c.bf16 %v8232, %v8232
  %v8339 = vpack.c.bf16 %v8231, %v8231
  %v8340 = vpack.c.bf16 %v8230, %v8230
  %v8341 = vpack.c.bf16 %v8229, %v8229
  %v8342 = vpack.c.bf16 %v8228, %v8228
  %v8343 = vpack.c.bf16 %v8227, %v8227
  %v8344 = vpack.c.bf16 %v8226, %v8226
  %v8345 = vpack.c.bf16 %v8225, %v8225
  %v8346 = vpack.c.bf16 %v8224, %v8224
  %v8347 = vpack.c.bf16 %v8223, %v8223
  %v8348 = vpack.c.bf16 %v8222, %v8222
  %v8349 = vpack.c.bf16 %v8285, %v8285
  %v8350 = vrot.slane %v8030, 2
  %v8351 = vrot.slane %v8031, 2
  %v8352 = vrot.slane %v8032, 2
  %v8353 = vrot.slane %v8033, 2
  %v8354 = vrot.slane %v8034, 2
  %v8355 = vrot.slane %v8035, 2
  %v8356 = vrot.slane %v8036, 2
  %v8357 = vrot.slane %v8037, 2
  %v8358 = vrot.slane %v8038, 2
  %v8359 = vrot.slane %v8039, 2
  %v8360 = vrot.slane %v8040, 2
  %v8361 = vrot.slane %v8041, 2
  %v8362 = vrot.slane %v8042, 2
  %v8363 = vrot.slane %v8043, 2
  %v8364 = vrot.slane %v8044, 2
  %v8365 = vrot.slane %v8045, 2
  %v8366 = vrot.slane %v8046, 2
  %v8367 = vrot.slane %v8047, 2
  %v8368 = vrot.slane %v8048, 2
  %v8369 = vrot.slane %v8049, 2
  %v8370 = vrot.slane %v8050, 2
  %v8371 = vrot.slane %v8051, 2
  %v8372 = vrot.slane %v8052, 2
  %v8373 = vrot.slane %v8053, 2
  %v8374 = vrot.slane %v8054, 2
  %v8375 = vrot.slane %v8055, 2
  %v8376 = vrot.slane %v8056, 2
  %v8377 = vrot.slane %v8057, 2
  %v8378 = vrot.slane %v8058, 2
  %v8379 = vrot.slane %v8059, 2
  %v8380 = vrot.slane %v8060, 2
  %v8381 = vrot.slane %v8061, 2
  %v8382 = vrot.slane %v8062, 2
  %v8383 = vrot.slane %v8063, 2
  %v8384 = vrot.slane %v8064, 2
  %v8385 = vrot.slane %v8065, 2
  %v8386 = vrot.slane %v8066, 2
  %v8387 = vrot.slane %v8067, 2
  %v8388 = vrot.slane %v8068, 2
  %v8389 = vrot.slane %v8069, 2
  %v8390 = vrot.slane %v8070, 2
  %v8391 = vrot.slane %v8071, 2
  %v8392 = vrot.slane %v8072, 2
  %v8393 = vrot.slane %v8073, 2
  %v8394 = vrot.slane %v8074, 2
  %v8395 = vrot.slane %v8075, 2
  %v8396 = vrot.slane %v8076, 2
  %v8397 = vrot.slane %v8077, 2
  %v8398 = vrot.slane %v8078, 2
  %v8399 = vrot.slane %v8079, 2
  %v8400 = vrot.slane %v8080, 2
  %v8401 = vrot.slane %v8081, 2
  %v8402 = vrot.slane %v8082, 2
  %v8403 = vrot.slane %v8083, 2
  %v8404 = vrot.slane %v8084, 2
  %v8405 = vrot.slane %v8085, 2
  %v8406 = vrot.slane %v8086, 2
  %v8407 = vrot.slane %v8087, 2
  %v8408 = vrot.slane %v8088, 2
  %v8409 = vrot.slane %v8089, 2
  %v8410 = vrot.slane %v8090, 2
  %v8411 = vrot.slane %v8091, 2
  %v8412 = vrot.slane %v8092, 2
  %v8413 = vrot.slane %v8093, 2
  %v8414 = vsel %vm2960, %v8412, %v8413
  %v8415 = vsel %vm2960, %v8411, %v8412
  %v8416 = vsel %vm2960, %v8410, %v8411
  %v8417 = vsel %vm2960, %v8409, %v8410
  %v8418 = vsel %vm2960, %v8408, %v8409
  %v8419 = vsel %vm2960, %v8407, %v8408
  %v8420 = vsel %vm2960, %v8406, %v8407
  %v8421 = vsel %vm2960, %v8405, %v8406
  %v8422 = vsel %vm2960, %v8404, %v8405
  %v8423 = vsel %vm2960, %v8403, %v8404
  %v8424 = vsel %vm2960, %v8402, %v8403
  %v8425 = vsel %vm2960, %v8401, %v8402
  %v8426 = vsel %vm2960, %v8400, %v8401
  %v8427 = vsel %vm2960, %v8399, %v8400
  %v8428 = vsel %vm2960, %v8398, %v8399
  %v8429 = vsel %vm2960, %v8397, %v8398
  %v8430 = vsel %vm2960, %v8396, %v8397
  %v8431 = vsel %vm2960, %v8395, %v8396
  %v8432 = vsel %vm2960, %v8394, %v8395
  %v8433 = vsel %vm2960, %v8393, %v8394
  %v8434 = vsel %vm2960, %v8392, %v8393
  %v8435 = vsel %vm2960, %v8391, %v8392
  %v8436 = vsel %vm2960, %v8390, %v8391
  %v8437 = vsel %vm2960, %v8389, %v8390
  %v8438 = vsel %vm2960, %v8388, %v8389
  %v8439 = vsel %vm2960, %v8387, %v8388
  %v8440 = vsel %vm2960, %v8386, %v8387
  %v8441 = vsel %vm2960, %v8385, %v8386
  %v8442 = vsel %vm2960, %v8384, %v8385
  %v8443 = vsel %vm2960, %v8383, %v8384
  %v8444 = vsel %vm2960, %v8382, %v8383
  %v8445 = vsel %vm2960, %v8381, %v8382
  %v8446 = vsel %vm2960, %v8380, %v8381
  %v8447 = vsel %vm2960, %v8379, %v8380
  %v8448 = vsel %vm2960, %v8378, %v8379
  %v8449 = vsel %vm2960, %v8377, %v8378
  %v8450 = vsel %vm2960, %v8376, %v8377
  %v8451 = vsel %vm2960, %v8375, %v8376
  %v8452 = vsel %vm2960, %v8374, %v8375
  %v8453 = vsel %vm2960, %v8373, %v8374
  %v8454 = vsel %vm2960, %v8372, %v8373
  %v8455 = vsel %vm2960, %v8371, %v8372
  %v8456 = vsel %vm2960, %v8370, %v8371
  %v8457 = vsel %vm2960, %v8369, %v8370
  %v8458 = vsel %vm2960, %v8368, %v8369
  %v8459 = vsel %vm2960, %v8367, %v8368
  %v8460 = vsel %vm2960, %v8366, %v8367
  %v8461 = vsel %vm2960, %v8365, %v8366
  %v8462 = vsel %vm2960, %v8364, %v8365
  %v8463 = vsel %vm2960, %v8363, %v8364
  %v8464 = vsel %vm2960, %v8362, %v8363
  %v8465 = vsel %vm2960, %v8361, %v8362
  %v8466 = vsel %vm2960, %v8360, %v8361
  %v8467 = vsel %vm2960, %v8359, %v8360
  %v8468 = vsel %vm2960, %v8358, %v8359
  %v8469 = vsel %vm2960, %v8357, %v8358
  %v8470 = vsel %vm2960, %v8356, %v8357
  %v8471 = vsel %vm2960, %v8355, %v8356
  %v8472 = vsel %vm2960, %v8354, %v8355
  %v8473 = vsel %vm2960, %v8353, %v8354
  %v8474 = vsel %vm2960, %v8352, %v8353
  %v8475 = vsel %vm2960, %v8351, %v8352
  %v8476 = vsel %vm2960, %v8350, %v8351
  %v8477 = vsel %vm2960, %v8413, %v8350
  %v8478 = vpack.c.bf16 %v8476, %v8476
  %v8479 = vpack.c.bf16 %v8475, %v8475
  %v8480 = vpack.c.bf16 %v8474, %v8474
  %v8481 = vpack.c.bf16 %v8473, %v8473
  %v8482 = vpack.c.bf16 %v8472, %v8472
  %v8483 = vpack.c.bf16 %v8471, %v8471
  %v8484 = vpack.c.bf16 %v8470, %v8470
  %v8485 = vpack.c.bf16 %v8469, %v8469
  %v8486 = vpack.c.bf16 %v8468, %v8468
  %v8487 = vpack.c.bf16 %v8467, %v8467
  %v8488 = vpack.c.bf16 %v8466, %v8466
  %v8489 = vpack.c.bf16 %v8465, %v8465
  %v8490 = vpack.c.bf16 %v8464, %v8464
  %v8491 = vpack.c.bf16 %v8463, %v8463
  %v8492 = vpack.c.bf16 %v8462, %v8462
  %v8493 = vpack.c.bf16 %v8461, %v8461
  %v8494 = vpack.c.bf16 %v8460, %v8460
  %v8495 = vpack.c.bf16 %v8459, %v8459
  %v8496 = vpack.c.bf16 %v8458, %v8458
  %v8497 = vpack.c.bf16 %v8457, %v8457
  %v8498 = vpack.c.bf16 %v8456, %v8456
  %v8499 = vpack.c.bf16 %v8455, %v8455
  %v8500 = vpack.c.bf16 %v8454, %v8454
  %v8501 = vpack.c.bf16 %v8453, %v8453
  %v8502 = vpack.c.bf16 %v8452, %v8452
  %v8503 = vpack.c.bf16 %v8451, %v8451
  %v8504 = vpack.c.bf16 %v8450, %v8450
  %v8505 = vpack.c.bf16 %v8449, %v8449
  %v8506 = vpack.c.bf16 %v8448, %v8448
  %v8507 = vpack.c.bf16 %v8447, %v8447
  %v8508 = vpack.c.bf16 %v8446, %v8446
  %v8509 = vpack.c.bf16 %v8445, %v8445
  %v8510 = vpack.c.bf16 %v8444, %v8444
  %v8511 = vpack.c.bf16 %v8443, %v8443
  %v8512 = vpack.c.bf16 %v8442, %v8442
  %v8513 = vpack.c.bf16 %v8441, %v8441
  %v8514 = vpack.c.bf16 %v8440, %v8440
  %v8515 = vpack.c.bf16 %v8439, %v8439
  %v8516 = vpack.c.bf16 %v8438, %v8438
  %v8517 = vpack.c.bf16 %v8437, %v8437
  %v8518 = vpack.c.bf16 %v8436, %v8436
  %v8519 = vpack.c.bf16 %v8435, %v8435
  %v8520 = vpack.c.bf16 %v8434, %v8434
  %v8521 = vpack.c.bf16 %v8433, %v8433
  %v8522 = vpack.c.bf16 %v8432, %v8432
  %v8523 = vpack.c.bf16 %v8431, %v8431
  %v8524 = vpack.c.bf16 %v8430, %v8430
  %v8525 = vpack.c.bf16 %v8429, %v8429
  %v8526 = vpack.c.bf16 %v8428, %v8428
  %v8527 = vpack.c.bf16 %v8427, %v8427
  %v8528 = vpack.c.bf16 %v8426, %v8426
  %v8529 = vpack.c.bf16 %v8425, %v8425
  %v8530 = vpack.c.bf16 %v8424, %v8424
  %v8531 = vpack.c.bf16 %v8423, %v8423
  %v8532 = vpack.c.bf16 %v8422, %v8422
  %v8533 = vpack.c.bf16 %v8421, %v8421
  %v8534 = vpack.c.bf16 %v8420, %v8420
  %v8535 = vpack.c.bf16 %v8419, %v8419
  %v8536 = vpack.c.bf16 %v8418, %v8418
  %v8537 = vpack.c.bf16 %v8417, %v8417
  %v8538 = vpack.c.bf16 %v8416, %v8416
  %v8539 = vpack.c.bf16 %v8415, %v8415
  %v8540 = vpack.c.bf16 %v8414, %v8414
  %v8541 = vpack.c.bf16 %v8477, %v8477
  %v8606 = vunpack.c.l.b16 %v8094
  %v8607 = vunpack.c.l.b16 %v8095
  %v8608 = vunpack.c.l.b16 %v8096
  %v8609 = vunpack.c.l.b16 %v8097
  %v8610 = vunpack.c.l.b16 %v8098
  %v8611 = vunpack.c.l.b16 %v8099
  %v8612 = vunpack.c.l.b16 %v8100
  %v8613 = vunpack.c.l.b16 %v8101
  %v8614 = vunpack.c.l.b16 %v8102
  %v8615 = vunpack.c.l.b16 %v8103
  %v8616 = vunpack.c.l.b16 %v8104
  %v8617 = vunpack.c.l.b16 %v8105
  %v8618 = vunpack.c.l.b16 %v8106
  %v8619 = vunpack.c.l.b16 %v8107
  %v8620 = vunpack.c.l.b16 %v8108
  %v8621 = vunpack.c.l.b16 %v8109
  %v8622 = vunpack.c.l.b16 %v8110
  %v8623 = vunpack.c.l.b16 %v8111
  %v8624 = vunpack.c.l.b16 %v8112
  %v8625 = vunpack.c.l.b16 %v8113
  %v8626 = vunpack.c.l.b16 %v8114
  %v8627 = vunpack.c.l.b16 %v8115
  %v8628 = vunpack.c.l.b16 %v8116
  %v8629 = vunpack.c.l.b16 %v8117
  %v8630 = vunpack.c.l.b16 %v8118
  %v8631 = vunpack.c.l.b16 %v8119
  %v8632 = vunpack.c.l.b16 %v8120
  %v8633 = vunpack.c.l.b16 %v8121
  %v8634 = vunpack.c.l.b16 %v8122
  %v8635 = vunpack.c.l.b16 %v8123
  %v8636 = vunpack.c.l.b16 %v8124
  %v8637 = vunpack.c.l.b16 %v8125
  %v8638 = vunpack.c.l.b16 %v8126
  %v8639 = vunpack.c.l.b16 %v8127
  %v8640 = vunpack.c.l.b16 %v8128
  %v8641 = vunpack.c.l.b16 %v8129
  %v8642 = vunpack.c.l.b16 %v8130
  %v8643 = vunpack.c.l.b16 %v8131
  %v8644 = vunpack.c.l.b16 %v8132
  %v8645 = vunpack.c.l.b16 %v8133
  %v8646 = vunpack.c.l.b16 %v8134
  %v8647 = vunpack.c.l.b16 %v8135
  %v8648 = vunpack.c.l.b16 %v8136
  %v8649 = vunpack.c.l.b16 %v8137
  %v8650 = vunpack.c.l.b16 %v8138
  %v8651 = vunpack.c.l.b16 %v8139
  %v8652 = vunpack.c.l.b16 %v8140
  %v8653 = vunpack.c.l.b16 %v8141
  %v8654 = vunpack.c.l.b16 %v8142
  %v8655 = vunpack.c.l.b16 %v8143
  %v8656 = vunpack.c.l.b16 %v8144
  %v8657 = vunpack.c.l.b16 %v8145
  %v8658 = vunpack.c.l.b16 %v8146
  %v8659 = vunpack.c.l.b16 %v8147
  %v8660 = vunpack.c.l.b16 %v8148
  %v8661 = vunpack.c.l.b16 %v8149
  %v8662 = vunpack.c.l.b16 %v8150
  %v8663 = vunpack.c.l.b16 %v8151
  %v8664 = vunpack.c.l.b16 %v8152
  %v8665 = vunpack.c.l.b16 %v8153
  %v8666 = vunpack.c.l.b16 %v8154
  %v8667 = vunpack.c.l.b16 %v8155
  %v8668 = vunpack.c.l.b16 %v8156
  %v8669 = vunpack.c.l.b16 %v8157
  %v8670 = vpack.c.b16 %v8607, %v8606
  %v8671 = vpack.c.b16 %v8609, %v8608
  %v8672 = vpack.c.b16 %v8611, %v8610
  %v8673 = vpack.c.b16 %v8613, %v8612
  %v8674 = vpack.c.b16 %v8615, %v8614
  %v8675 = vpack.c.b16 %v8617, %v8616
  %v8676 = vpack.c.b16 %v8619, %v8618
  %v8677 = vpack.c.b16 %v8621, %v8620
  %v8678 = vpack.c.b16 %v8623, %v8622
  %v8679 = vpack.c.b16 %v8625, %v8624
  %v8680 = vpack.c.b16 %v8627, %v8626
  %v8681 = vpack.c.b16 %v8629, %v8628
  %v8682 = vpack.c.b16 %v8631, %v8630
  %v8683 = vpack.c.b16 %v8633, %v8632
  %v8684 = vpack.c.b16 %v8635, %v8634
  %v8685 = vpack.c.b16 %v8637, %v8636
  %v8686 = vpack.c.b16 %v8639, %v8638
  %v8687 = vpack.c.b16 %v8641, %v8640
  %v8688 = vpack.c.b16 %v8643, %v8642
  %v8689 = vpack.c.b16 %v8645, %v8644
  %v8690 = vpack.c.b16 %v8647, %v8646
  %v8691 = vpack.c.b16 %v8649, %v8648
  %v8692 = vpack.c.b16 %v8651, %v8650
  %v8693 = vpack.c.b16 %v8653, %v8652
  %v8694 = vpack.c.b16 %v8655, %v8654
  %v8695 = vpack.c.b16 %v8657, %v8656
  %v8696 = vpack.c.b16 %v8659, %v8658
  %v8697 = vpack.c.b16 %v8661, %v8660
  %v8698 = vpack.c.b16 %v8663, %v8662
  %v8699 = vpack.c.b16 %v8665, %v8664
  %v8700 = vpack.c.b16 %v8667, %v8666
  %v8701 = vpack.c.b16 %v8669, %v8668
  %v8766 = vunpack.c.l.b16 %v8286
  %v8767 = vunpack.c.l.b16 %v8287
  %v8768 = vunpack.c.l.b16 %v8288
  %v8769 = vunpack.c.l.b16 %v8289
  %v8770 = vunpack.c.l.b16 %v8290
  %v8771 = vunpack.c.l.b16 %v8291
  %v8772 = vunpack.c.l.b16 %v8292
  %v8773 = vunpack.c.l.b16 %v8293
  %v8774 = vunpack.c.l.b16 %v8294
  %v8775 = vunpack.c.l.b16 %v8295
  %v8776 = vunpack.c.l.b16 %v8296
  %v8777 = vunpack.c.l.b16 %v8297
  %v8778 = vunpack.c.l.b16 %v8298
  %v8779 = vunpack.c.l.b16 %v8299
  %v8780 = vunpack.c.l.b16 %v8300
  %v8781 = vunpack.c.l.b16 %v8301
  %v8782 = vunpack.c.l.b16 %v8302
  %v8783 = vunpack.c.l.b16 %v8303
  %v8784 = vunpack.c.l.b16 %v8304
  %v8785 = vunpack.c.l.b16 %v8305
  %v8786 = vunpack.c.l.b16 %v8306
  %v8787 = vunpack.c.l.b16 %v8307
  %v8788 = vunpack.c.l.b16 %v8308
  %v8789 = vunpack.c.l.b16 %v8309
  %v8790 = vunpack.c.l.b16 %v8310
  %v8791 = vunpack.c.l.b16 %v8311
  %v8792 = vunpack.c.l.b16 %v8312
  %v8793 = vunpack.c.l.b16 %v8313
  %v8794 = vunpack.c.l.b16 %v8314
  %v8795 = vunpack.c.l.b16 %v8315
  %v8796 = vunpack.c.l.b16 %v8316
  %v8797 = vunpack.c.l.b16 %v8317
  %v8798 = vunpack.c.l.b16 %v8318
  %v8799 = vunpack.c.l.b16 %v8319
  %v8800 = vunpack.c.l.b16 %v8320
  %v8801 = vunpack.c.l.b16 %v8321
  %v8802 = vunpack.c.l.b16 %v8322
  %v8803 = vunpack.c.l.b16 %v8323
  %v8804 = vunpack.c.l.b16 %v8324
  %v8805 = vunpack.c.l.b16 %v8325
  %v8806 = vunpack.c.l.b16 %v8326
  %v8807 = vunpack.c.l.b16 %v8327
  %v8808 = vunpack.c.l.b16 %v8328
  %v8809 = vunpack.c.l.b16 %v8329
  %v8810 = vunpack.c.l.b16 %v8330
  %v8811 = vunpack.c.l.b16 %v8331
  %v8812 = vunpack.c.l.b16 %v8332
  %v8813 = vunpack.c.l.b16 %v8333
  %v8814 = vunpack.c.l.b16 %v8334
  %v8815 = vunpack.c.l.b16 %v8335
  %v8816 = vunpack.c.l.b16 %v8336
  %v8817 = vunpack.c.l.b16 %v8337
  %v8818 = vunpack.c.l.b16 %v8338
  %v8819 = vunpack.c.l.b16 %v8339
  %v8820 = vunpack.c.l.b16 %v8340
  %v8821 = vunpack.c.l.b16 %v8341
  %v8822 = vunpack.c.l.b16 %v8342
  %v8823 = vunpack.c.l.b16 %v8343
  %v8824 = vunpack.c.l.b16 %v8344
  %v8825 = vunpack.c.l.b16 %v8345
  %v8826 = vunpack.c.l.b16 %v8346
  %v8827 = vunpack.c.l.b16 %v8347
  %v8828 = vunpack.c.l.b16 %v8348
  %v8829 = vunpack.c.l.b16 %v8349
  %v8830 = vpack.c.b16 %v8767, %v8766
  %v8831 = vpack.c.b16 %v8769, %v8768
  %v8832 = vpack.c.b16 %v8771, %v8770
  %v8833 = vpack.c.b16 %v8773, %v8772
  %v8834 = vpack.c.b16 %v8775, %v8774
  %v8835 = vpack.c.b16 %v8777, %v8776
  %v8836 = vpack.c.b16 %v8779, %v8778
  %v8837 = vpack.c.b16 %v8781, %v8780
  %v8838 = vpack.c.b16 %v8783, %v8782
  %v8839 = vpack.c.b16 %v8785, %v8784
  %v8840 = vpack.c.b16 %v8787, %v8786
  %v8841 = vpack.c.b16 %v8789, %v8788
  %v8842 = vpack.c.b16 %v8791, %v8790
  %v8843 = vpack.c.b16 %v8793, %v8792
  %v8844 = vpack.c.b16 %v8795, %v8794
  %v8845 = vpack.c.b16 %v8797, %v8796
  %v8846 = vpack.c.b16 %v8799, %v8798
  %v8847 = vpack.c.b16 %v8801, %v8800
  %v8848 = vpack.c.b16 %v8803, %v8802
  %v8849 = vpack.c.b16 %v8805, %v8804
  %v8850 = vpack.c.b16 %v8807, %v8806
  %v8851 = vpack.c.b16 %v8809, %v8808
  %v8852 = vpack.c.b16 %v8811, %v8810
  %v8853 = vpack.c.b16 %v8813, %v8812
  %v8854 = vpack.c.b16 %v8815, %v8814
  %v8855 = vpack.c.b16 %v8817, %v8816
  %v8856 = vpack.c.b16 %v8819, %v8818
  %v8857 = vpack.c.b16 %v8821, %v8820
  %v8858 = vpack.c.b16 %v8823, %v8822
  %v8859 = vpack.c.b16 %v8825, %v8824
  %v8860 = vpack.c.b16 %v8827, %v8826
  %v8861 = vpack.c.b16 %v8829, %v8828
  %8862 = vrot.lane.b32.xlu0 %v8830, 32
  %v8863 = vpop.permute.xlu0 %8862
  %8864 = vrot.lane.b32.xlu0 %v8831, 32
  %v8865 = vpop.permute.xlu0 %8864
  %8866 = vrot.lane.b32.xlu0 %v8832, 32
  %v8867 = vpop.permute.xlu0 %8866
  %8868 = vrot.lane.b32.xlu0 %v8833, 32
  %v8869 = vpop.permute.xlu0 %8868
  %8870 = vrot.lane.b32.xlu0 %v8834, 32
  %v8871 = vpop.permute.xlu0 %8870
  %8872 = vrot.lane.b32.xlu0 %v8835, 32
  %v8873 = vpop.permute.xlu0 %8872
  %8874 = vrot.lane.b32.xlu0 %v8836, 32
  %v8875 = vpop.permute.xlu0 %8874
  %8876 = vrot.lane.b32.xlu0 %v8837, 32
  %v8877 = vpop.permute.xlu0 %8876
  %8878 = vrot.lane.b32.xlu0 %v8838, 32
  %v8879 = vpop.permute.xlu0 %8878
  %8880 = vrot.lane.b32.xlu0 %v8839, 32
  %v8881 = vpop.permute.xlu0 %8880
  %8882 = vrot.lane.b32.xlu0 %v8840, 32
  %v8883 = vpop.permute.xlu0 %8882
  %8884 = vrot.lane.b32.xlu0 %v8841, 32
  %v8885 = vpop.permute.xlu0 %8884
  %8886 = vrot.lane.b32.xlu0 %v8842, 32
  %v8887 = vpop.permute.xlu0 %8886
  %8888 = vrot.lane.b32.xlu0 %v8843, 32
  %v8889 = vpop.permute.xlu0 %8888
  %8890 = vrot.lane.b32.xlu0 %v8844, 32
  %v8891 = vpop.permute.xlu0 %8890
  %8892 = vrot.lane.b32.xlu0 %v8845, 32
  %v8893 = vpop.permute.xlu0 %8892
  %8894 = vrot.lane.b32.xlu0 %v8846, 32
  %v8895 = vpop.permute.xlu0 %8894
  %8896 = vrot.lane.b32.xlu0 %v8847, 32
  %v8897 = vpop.permute.xlu0 %8896
  %8898 = vrot.lane.b32.xlu0 %v8848, 32
  %v8899 = vpop.permute.xlu0 %8898
  %8900 = vrot.lane.b32.xlu0 %v8849, 32
  %v8901 = vpop.permute.xlu0 %8900
  %8902 = vrot.lane.b32.xlu0 %v8850, 32
  %v8903 = vpop.permute.xlu0 %8902
  %8904 = vrot.lane.b32.xlu0 %v8851, 32
  %v8905 = vpop.permute.xlu0 %8904
  %8906 = vrot.lane.b32.xlu0 %v8852, 32
  %v8907 = vpop.permute.xlu0 %8906
  %8908 = vrot.lane.b32.xlu0 %v8853, 32
  %v8909 = vpop.permute.xlu0 %8908
  %8910 = vrot.lane.b32.xlu0 %v8854, 32
  %v8911 = vpop.permute.xlu0 %8910
  %8912 = vrot.lane.b32.xlu0 %v8855, 32
  %v8913 = vpop.permute.xlu0 %8912
  %8914 = vrot.lane.b32.xlu0 %v8856, 32
  %v8915 = vpop.permute.xlu0 %8914
  %8916 = vrot.lane.b32.xlu0 %v8857, 32
  %v8917 = vpop.permute.xlu0 %8916
  %8918 = vrot.lane.b32.xlu0 %v8858, 32
  %v8919 = vpop.permute.xlu0 %8918
  %8920 = vrot.lane.b32.xlu0 %v8859, 32
  %v8921 = vpop.permute.xlu0 %8920
  %8922 = vrot.lane.b32.xlu0 %v8860, 32
  %v8923 = vpop.permute.xlu0 %8922
  %8924 = vrot.lane.b32.xlu0 %v8861, 32
  %v8925 = vpop.permute.xlu0 %8924
  %v8990 = vunpack.c.l.b16 %v8478
  %v8991 = vunpack.c.l.b16 %v8479
  %v8992 = vunpack.c.l.b16 %v8480
  %v8993 = vunpack.c.l.b16 %v8481
  %v8994 = vunpack.c.l.b16 %v8482
  %v8995 = vunpack.c.l.b16 %v8483
  %v8996 = vunpack.c.l.b16 %v8484
  %v8997 = vunpack.c.l.b16 %v8485
  %v8998 = vunpack.c.l.b16 %v8486
  %v8999 = vunpack.c.l.b16 %v8487
  %v9000 = vunpack.c.l.b16 %v8488
  %v9001 = vunpack.c.l.b16 %v8489
  %v9002 = vunpack.c.l.b16 %v8490
  %v9003 = vunpack.c.l.b16 %v8491
  %v9004 = vunpack.c.l.b16 %v8492
  %v9005 = vunpack.c.l.b16 %v8493
  %v9006 = vunpack.c.l.b16 %v8494
  %v9007 = vunpack.c.l.b16 %v8495
  %v9008 = vunpack.c.l.b16 %v8496
  %v9009 = vunpack.c.l.b16 %v8497
  %v9010 = vunpack.c.l.b16 %v8498
  %v9011 = vunpack.c.l.b16 %v8499
  %v9012 = vunpack.c.l.b16 %v8500
  %v9013 = vunpack.c.l.b16 %v8501
  %v9014 = vunpack.c.l.b16 %v8502
  %v9015 = vunpack.c.l.b16 %v8503
  %v9016 = vunpack.c.l.b16 %v8504
  %v9017 = vunpack.c.l.b16 %v8505
  %v9018 = vunpack.c.l.b16 %v8506
  %v9019 = vunpack.c.l.b16 %v8507
  %v9020 = vunpack.c.l.b16 %v8508
  %v9021 = vunpack.c.l.b16 %v8509
  %v9022 = vunpack.c.l.b16 %v8510
  %v9023 = vunpack.c.l.b16 %v8511
  %v9024 = vunpack.c.l.b16 %v8512
  %v9025 = vunpack.c.l.b16 %v8513
  %v9026 = vunpack.c.l.b16 %v8514
  %v9027 = vunpack.c.l.b16 %v8515
  %v9028 = vunpack.c.l.b16 %v8516
  %v9029 = vunpack.c.l.b16 %v8517
  %v9030 = vunpack.c.l.b16 %v8518
  %v9031 = vunpack.c.l.b16 %v8519
  %v9032 = vunpack.c.l.b16 %v8520
  %v9033 = vunpack.c.l.b16 %v8521
  %v9034 = vunpack.c.l.b16 %v8522
  %v9035 = vunpack.c.l.b16 %v8523
  %v9036 = vunpack.c.l.b16 %v8524
  %v9037 = vunpack.c.l.b16 %v8525
  %v9038 = vunpack.c.l.b16 %v8526
  %v9039 = vunpack.c.l.b16 %v8527
  %v9040 = vunpack.c.l.b16 %v8528
  %v9041 = vunpack.c.l.b16 %v8529
  %v9042 = vunpack.c.l.b16 %v8530
  %v9043 = vunpack.c.l.b16 %v8531
  %v9044 = vunpack.c.l.b16 %v8532
  %v9045 = vunpack.c.l.b16 %v8533
  %v9046 = vunpack.c.l.b16 %v8534
  %v9047 = vunpack.c.l.b16 %v8535
  %v9048 = vunpack.c.l.b16 %v8536
  %v9049 = vunpack.c.l.b16 %v8537
  %v9050 = vunpack.c.l.b16 %v8538
  %v9051 = vunpack.c.l.b16 %v8539
  %v9052 = vunpack.c.l.b16 %v8540
  %v9053 = vunpack.c.l.b16 %v8541
  %v9054 = vpack.c.b16 %v8991, %v8990
  %v9055 = vpack.c.b16 %v8993, %v8992
  %v9056 = vpack.c.b16 %v8995, %v8994
  %v9057 = vpack.c.b16 %v8997, %v8996
  %v9058 = vpack.c.b16 %v8999, %v8998
  %v9059 = vpack.c.b16 %v9001, %v9000
  %v9060 = vpack.c.b16 %v9003, %v9002
  %v9061 = vpack.c.b16 %v9005, %v9004
  %v9062 = vpack.c.b16 %v9007, %v9006
  %v9063 = vpack.c.b16 %v9009, %v9008
  %v9064 = vpack.c.b16 %v9011, %v9010
  %v9065 = vpack.c.b16 %v9013, %v9012
  %v9066 = vpack.c.b16 %v9015, %v9014
  %v9067 = vpack.c.b16 %v9017, %v9016
  %v9068 = vpack.c.b16 %v9019, %v9018
  %v9069 = vpack.c.b16 %v9021, %v9020
  %v9070 = vpack.c.b16 %v9023, %v9022
  %v9071 = vpack.c.b16 %v9025, %v9024
  %v9072 = vpack.c.b16 %v9027, %v9026
  %v9073 = vpack.c.b16 %v9029, %v9028
  %v9074 = vpack.c.b16 %v9031, %v9030
  %v9075 = vpack.c.b16 %v9033, %v9032
  %v9076 = vpack.c.b16 %v9035, %v9034
  %v9077 = vpack.c.b16 %v9037, %v9036
  %v9078 = vpack.c.b16 %v9039, %v9038
  %v9079 = vpack.c.b16 %v9041, %v9040
  %v9080 = vpack.c.b16 %v9043, %v9042
  %v9081 = vpack.c.b16 %v9045, %v9044
  %v9082 = vpack.c.b16 %v9047, %v9046
  %v9083 = vpack.c.b16 %v9049, %v9048
  %v9084 = vpack.c.b16 %v9051, %v9050
  %v9085 = vpack.c.b16 %v9053, %v9052
  %9086 = vrot.lane.b32.xlu0 %v9054, 64
  %v9087 = vpop.permute.xlu0 %9086
  %9088 = vrot.lane.b32.xlu0 %v9055, 64
  %v9089 = vpop.permute.xlu0 %9088
  %9090 = vrot.lane.b32.xlu0 %v9056, 64
  %v9091 = vpop.permute.xlu0 %9090
  %9092 = vrot.lane.b32.xlu0 %v9057, 64
  %v9093 = vpop.permute.xlu0 %9092
  %9094 = vrot.lane.b32.xlu0 %v9058, 64
  %v9095 = vpop.permute.xlu0 %9094
  %9096 = vrot.lane.b32.xlu0 %v9059, 64
  %v9097 = vpop.permute.xlu0 %9096
  %9098 = vrot.lane.b32.xlu0 %v9060, 64
  %v9099 = vpop.permute.xlu0 %9098
  %9100 = vrot.lane.b32.xlu0 %v9061, 64
  %v9101 = vpop.permute.xlu0 %9100
  %9102 = vrot.lane.b32.xlu0 %v9062, 64
  %v9103 = vpop.permute.xlu0 %9102
  %9104 = vrot.lane.b32.xlu0 %v9063, 64
  %v9105 = vpop.permute.xlu0 %9104
  %9106 = vrot.lane.b32.xlu0 %v9064, 64
  %v9107 = vpop.permute.xlu0 %9106
  %9108 = vrot.lane.b32.xlu0 %v9065, 64
  %v9109 = vpop.permute.xlu0 %9108
  %9110 = vrot.lane.b32.xlu0 %v9066, 64
  %v9111 = vpop.permute.xlu0 %9110
  %9112 = vrot.lane.b32.xlu0 %v9067, 64
  %v9113 = vpop.permute.xlu0 %9112
  %9114 = vrot.lane.b32.xlu0 %v9068, 64
  %v9115 = vpop.permute.xlu0 %9114
  %9116 = vrot.lane.b32.xlu0 %v9069, 64
  %v9117 = vpop.permute.xlu0 %9116
  %9118 = vrot.lane.b32.xlu0 %v9070, 64
  %v9119 = vpop.permute.xlu0 %9118
  %9120 = vrot.lane.b32.xlu0 %v9071, 64
  %v9121 = vpop.permute.xlu0 %9120
  %9122 = vrot.lane.b32.xlu0 %v9072, 64
  %v9123 = vpop.permute.xlu0 %9122
  %9124 = vrot.lane.b32.xlu0 %v9073, 64
  %v9125 = vpop.permute.xlu0 %9124
  %9126 = vrot.lane.b32.xlu0 %v9074, 64
  %v9127 = vpop.permute.xlu0 %9126
  %9128 = vrot.lane.b32.xlu0 %v9075, 64
  %v9129 = vpop.permute.xlu0 %9128
  %9130 = vrot.lane.b32.xlu0 %v9076, 64
  %v9131 = vpop.permute.xlu0 %9130
  %9132 = vrot.lane.b32.xlu0 %v9077, 64
  %v9133 = vpop.permute.xlu0 %9132
  %9134 = vrot.lane.b32.xlu0 %v9078, 64
  %v9135 = vpop.permute.xlu0 %9134
  %9136 = vrot.lane.b32.xlu0 %v9079, 64
  %v9137 = vpop.permute.xlu0 %9136
  %9138 = vrot.lane.b32.xlu0 %v9080, 64
  %v9139 = vpop.permute.xlu0 %9138
  %9140 = vrot.lane.b32.xlu0 %v9081, 64
  %v9141 = vpop.permute.xlu0 %9140
  %9142 = vrot.lane.b32.xlu0 %v9082, 64
  %v9143 = vpop.permute.xlu0 %9142
  %9144 = vrot.lane.b32.xlu0 %v9083, 64
  %v9145 = vpop.permute.xlu0 %9144
  %9146 = vrot.lane.b32.xlu0 %v9084, 64
  %v9147 = vpop.permute.xlu0 %9146
  %9148 = vrot.lane.b32.xlu0 %v9085, 64
  %v9149 = vpop.permute.xlu0 %9148
  %v9152 = vsel %vm4081, %v8670, %v8863
  %v9155 = vsel %vm4081, %v8671, %v8865
  %v9158 = vsel %vm4081, %v8672, %v8867
  %v9161 = vsel %vm4081, %v8673, %v8869
  %v9164 = vsel %vm4081, %v8674, %v8871
  %v9167 = vsel %vm4081, %v8675, %v8873
  %v9170 = vsel %vm4081, %v8676, %v8875
  %v9173 = vsel %vm4081, %v8677, %v8877
  %v9176 = vsel %vm4081, %v8678, %v8879
  %v9179 = vsel %vm4081, %v8679, %v8881
  %v9182 = vsel %vm4081, %v8680, %v8883
  %v9185 = vsel %vm4081, %v8681, %v8885
  %v9188 = vsel %vm4081, %v8682, %v8887
  %v9191 = vsel %vm4081, %v8683, %v8889
  %v9194 = vsel %vm4081, %v8684, %v8891
  %v9197 = vsel %vm4081, %v8685, %v8893
  %v9200 = vsel %vm4081, %v8686, %v8895
  %v9203 = vsel %vm4081, %v8687, %v8897
  %v9206 = vsel %vm4081, %v8688, %v8899
  %v9209 = vsel %vm4081, %v8689, %v8901
  %v9212 = vsel %vm4081, %v8690, %v8903
  %v9215 = vsel %vm4081, %v8691, %v8905
  %v9218 = vsel %vm4081, %v8692, %v8907
  %v9221 = vsel %vm4081, %v8693, %v8909
  %v9224 = vsel %vm4081, %v8694, %v8911
  %v9227 = vsel %vm4081, %v8695, %v8913
  %v9230 = vsel %vm4081, %v8696, %v8915
  %v9233 = vsel %vm4081, %v8697, %v8917
  %v9236 = vsel %vm4081, %v8698, %v8919
  %v9239 = vsel %vm4081, %v8699, %v8921
  %v9242 = vsel %vm4081, %v8700, %v8923
  %v9245 = vsel %vm4081, %v8701, %v8925
  %v9247 = vsel %vm4178, %v9152, %v9087
  %v9249 = vsel %vm4178, %v9155, %v9089
  %v9251 = vsel %vm4178, %v9158, %v9091
  %v9253 = vsel %vm4178, %v9161, %v9093
  %v9255 = vsel %vm4178, %v9164, %v9095
  %v9257 = vsel %vm4178, %v9167, %v9097
  %v9259 = vsel %vm4178, %v9170, %v9099
  %v9261 = vsel %vm4178, %v9173, %v9101
  %v9263 = vsel %vm4178, %v9176, %v9103
  %v9265 = vsel %vm4178, %v9179, %v9105
  %v9267 = vsel %vm4178, %v9182, %v9107
  %v9269 = vsel %vm4178, %v9185, %v9109
  %v9271 = vsel %vm4178, %v9188, %v9111
  %v9273 = vsel %vm4178, %v9191, %v9113
  %v9275 = vsel %vm4178, %v9194, %v9115
  %v9277 = vsel %vm4178, %v9197, %v9117
  %v9279 = vsel %vm4178, %v9200, %v9119
  %v9281 = vsel %vm4178, %v9203, %v9121
  %v9283 = vsel %vm4178, %v9206, %v9123
  %v9285 = vsel %vm4178, %v9209, %v9125
  %v9287 = vsel %vm4178, %v9212, %v9127
  %v9289 = vsel %vm4178, %v9215, %v9129
  %v9291 = vsel %vm4178, %v9218, %v9131
  %v9293 = vsel %vm4178, %v9221, %v9133
  %v9295 = vsel %vm4178, %v9224, %v9135
  %v9297 = vsel %vm4178, %v9227, %v9137
  %v9299 = vsel %vm4178, %v9230, %v9139
  %v9301 = vsel %vm4178, %v9233, %v9141
  %v9303 = vsel %vm4178, %v9236, %v9143
  %v9305 = vsel %vm4178, %v9239, %v9145
  %v9307 = vsel %vm4178, %v9242, %v9147
  %v9309 = vsel %vm4178, %v9245, %v9149
  %v9310 = vld [vmem:[%s1 + $0xa8] sm:$0xf]
  %v9311 = vld [vmem:[%s1 + $0xac] sm:$0xf]
  %v9312 = vld [vmem:[%s1 + $0xb0] sm:$0xf]
  %v9313 = vld [vmem:[%s1 + $0xb4] sm:$0xf]
  %v9314 = vld [vmem:[%s1 + $0xb8] sm:$0xf]
  %v9315 = vld [vmem:[%s1 + $0xbc] sm:$0xf]
  %v9316 = vld [vmem:[%s1 + $0xc0] sm:$0xf]
  %v9317 = vld [vmem:[%s1 + $0xc4] sm:$0xf]
  %v9318 = vld [vmem:[%s1 + $0xc8] sm:$0xf]
  %v9319 = vld [vmem:[%s1 + $0xcc] sm:$0xf]
  %v9320 = vld [vmem:[%s1 + $0xd0] sm:$0xf]
  %v9321 = vld [vmem:[%s1 + $0xd4] sm:$0xf]
  %v9322 = vld [vmem:[%s2 + $0x3] sm:$0x1]
  %v9323 = vperm.slane %v9322, 0
  %v9336 = vunpack.c.l.b16 %v9310
  %v9337 = vunpack.c.l.b16 %v9311
  %v9338 = vunpack.c.l.b16 %v9312
  %v9339 = vunpack.c.l.b16 %v9313
  %v9340 = vunpack.c.l.b16 %v9314
  %v9341 = vunpack.c.l.b16 %v9315
  %v9342 = vunpack.c.l.b16 %v9316
  %v9343 = vunpack.c.l.b16 %v9317
  %v9344 = vunpack.c.l.b16 %v9318
  %v9345 = vunpack.c.l.b16 %v9319
  %v9346 = vunpack.c.l.b16 %v9320
  %v9347 = vunpack.c.l.b16 %v9321
  %v9348 = vpack.c.b16 %v9337, %v9336
  %v9349 = vpack.c.b16 %v9339, %v9338
  %v9350 = vpack.c.b16 %v9341, %v9340
  %v9351 = vpack.c.b16 %v9343, %v9342
  %v9352 = vpack.c.b16 %v9345, %v9344
  %v9353 = vpack.c.b16 %v9347, %v9346
  %v9360 = vsel %vm4243, %v9247, 0
  %v9362 = vsel %vm4243, %v9249, 0
  %v9364 = vsel %vm4243, %v9251, 0
  %v9366 = vsel %vm4243, %v9253, 0
  %v9368 = vsel %vm4243, %v9255, 0
  %v9370 = vsel %vm4243, %v9257, 0
  %v9372 = vsel %vm4243, %v9259, 0
  %v9374 = vsel %vm4243, %v9261, 0
  %v9376 = vsel %vm4243, %v9263, 0
  %v9378 = vsel %vm4243, %v9265, 0
  %v9380 = vsel %vm4243, %v9267, 0
  %v9382 = vsel %vm4243, %v9269, 0
  %v9384 = vsel %vm4243, %v9271, 0
  %v9386 = vsel %vm4243, %v9273, 0
  %v9388 = vsel %vm4243, %v9275, 0
  %v9390 = vsel %vm4243, %v9277, 0
  %v9392 = vsel %vm4243, %v9279, 0
  %v9394 = vsel %vm4243, %v9281, 0
  %v9396 = vsel %vm4243, %v9283, 0
  %v9398 = vsel %vm4243, %v9285, 0
  %v9400 = vsel %vm4243, %v9287, 0
  %v9402 = vsel %vm4243, %v9289, 0
  %v9404 = vsel %vm4243, %v9291, 0
  %v9406 = vsel %vm4243, %v9293, 0
  %v9408 = vsel %vm4243, %v9295, 0
  %v9410 = vsel %vm4243, %v9297, 0
  %v9412 = vsel %vm4243, %v9299, 0
  %v9414 = vsel %vm4243, %v9301, 0
  %v9416 = vsel %vm4243, %v9303, 0
  %v9418 = vsel %vm4243, %v9305, 0
  %v9420 = vsel %vm4243, %v9307, 0
  %v9422 = vsel %vm4243, %v9309, 0
  %9424 = vmatpush.bf16.msra.mxu0 0
  %9425 = vmatpush.bf16.msra.mxu0 0
  %9426 = vmatpush.bf16.msra.mxu0 %v9353
  %9427 = vmatpush.bf16.msra.mxu0 %v9352
  %9428 = vmatpush.bf16.msra.mxu0 %v9351
  %9429 = vmatpush.bf16.msra.mxu0 %v9350
  %9430 = vmatpush.bf16.msra.mxu0 %v9349
  %9431 = vmatpush.bf16.msra.mxu0 %v9348
  %9432 = vmatmul.bf16.gmra.mxu0 %v9360
  %v9433 = vpop.f32.mrf.mxu0
  %v9434 = vadd.f32 %v9323, %v9433
  %v9435 = vpop.f32.mrf.mxu0
  %v9436 = vadd.f32 %v9323, %v9435
  %9437 = vmatmul.bf16.gmra.mxu0 %v9362
  %v9438 = vpop.f32.mrf.mxu0
  %v9439 = vadd.f32 %v9323, %v9438
  %v9440 = vpop.f32.mrf.mxu0
  %v9441 = vadd.f32 %v9323, %v9440
  %9442 = vmatmul.bf16.gmra.mxu0 %v9364
  %v9443 = vpop.f32.mrf.mxu0
  %v9444 = vadd.f32 %v9323, %v9443
  %v9445 = vpop.f32.mrf.mxu0
  %v9446 = vadd.f32 %v9323, %v9445
  %9447 = vmatmul.bf16.gmra.mxu0 %v9366
  %v9448 = vpop.f32.mrf.mxu0
  %v9449 = vadd.f32 %v9323, %v9448
  %v9450 = vpop.f32.mrf.mxu0
  %v9451 = vadd.f32 %v9323, %v9450
  %9452 = vmatmul.bf16.gmra.mxu0 %v9368
  %v9453 = vpop.f32.mrf.mxu0
  %v9454 = vadd.f32 %v9323, %v9453
  %v9455 = vpop.f32.mrf.mxu0
  %v9456 = vadd.f32 %v9323, %v9455
  %9457 = vmatmul.bf16.gmra.mxu0 %v9370
  %v9458 = vpop.f32.mrf.mxu0
  %v9459 = vadd.f32 %v9323, %v9458
  %v9460 = vpop.f32.mrf.mxu0
  %v9461 = vadd.f32 %v9323, %v9460
  %9462 = vmatmul.bf16.gmra.mxu0 %v9372
  %v9463 = vpop.f32.mrf.mxu0
  %v9464 = vadd.f32 %v9323, %v9463
  %v9465 = vpop.f32.mrf.mxu0
  %v9466 = vadd.f32 %v9323, %v9465
  %9467 = vmatmul.bf16.gmra.mxu0 %v9374
  %v9468 = vpop.f32.mrf.mxu0
  %v9469 = vadd.f32 %v9323, %v9468
  %v9470 = vpop.f32.mrf.mxu0
  %v9471 = vadd.f32 %v9323, %v9470
  %9472 = vmatmul.bf16.gmra.mxu0 %v9376
  %v9473 = vpop.f32.mrf.mxu0
  %v9474 = vadd.f32 %v9323, %v9473
  %v9475 = vpop.f32.mrf.mxu0
  %v9476 = vadd.f32 %v9323, %v9475
  %9477 = vmatmul.bf16.gmra.mxu0 %v9378
  %v9478 = vpop.f32.mrf.mxu0
  %v9479 = vadd.f32 %v9323, %v9478
  %v9480 = vpop.f32.mrf.mxu0
  %v9481 = vadd.f32 %v9323, %v9480
  %9482 = vmatmul.bf16.gmra.mxu0 %v9380
  %v9483 = vpop.f32.mrf.mxu0
  %v9484 = vadd.f32 %v9323, %v9483
  %v9485 = vpop.f32.mrf.mxu0
  %v9486 = vadd.f32 %v9323, %v9485
  %9487 = vmatmul.bf16.gmra.mxu0 %v9382
  %v9488 = vpop.f32.mrf.mxu0
  %v9489 = vadd.f32 %v9323, %v9488
  %v9490 = vpop.f32.mrf.mxu0
  %v9491 = vadd.f32 %v9323, %v9490
  %9492 = vmatmul.bf16.gmra.mxu0 %v9384
  %v9493 = vpop.f32.mrf.mxu0
  %v9494 = vadd.f32 %v9323, %v9493
  %v9495 = vpop.f32.mrf.mxu0
  %v9496 = vadd.f32 %v9323, %v9495
  %9497 = vmatmul.bf16.gmra.mxu0 %v9386
  %v9498 = vpop.f32.mrf.mxu0
  %v9499 = vadd.f32 %v9323, %v9498
  %v9500 = vpop.f32.mrf.mxu0
  %v9501 = vadd.f32 %v9323, %v9500
  %9502 = vmatmul.bf16.gmra.mxu0 %v9388
  %v9503 = vpop.f32.mrf.mxu0
  %v9504 = vadd.f32 %v9323, %v9503
  %v9505 = vpop.f32.mrf.mxu0
  %v9506 = vadd.f32 %v9323, %v9505
  %9507 = vmatmul.bf16.gmra.mxu0 %v9390
  %v9508 = vpop.f32.mrf.mxu0
  %v9509 = vadd.f32 %v9323, %v9508
  %v9510 = vpop.f32.mrf.mxu0
  %v9511 = vadd.f32 %v9323, %v9510
  %9512 = vmatmul.bf16.gmra.mxu0 %v9392
  %v9513 = vpop.f32.mrf.mxu0
  %v9514 = vadd.f32 %v9323, %v9513
  %v9515 = vpop.f32.mrf.mxu0
  %v9516 = vadd.f32 %v9323, %v9515
  %9517 = vmatmul.bf16.gmra.mxu0 %v9394
  %v9518 = vpop.f32.mrf.mxu0
  %v9519 = vadd.f32 %v9323, %v9518
  %v9520 = vpop.f32.mrf.mxu0
  %v9521 = vadd.f32 %v9323, %v9520
  %9522 = vmatmul.bf16.gmra.mxu0 %v9396
  %v9523 = vpop.f32.mrf.mxu0
  %v9524 = vadd.f32 %v9323, %v9523
  %v9525 = vpop.f32.mrf.mxu0
  %v9526 = vadd.f32 %v9323, %v9525
  %9527 = vmatmul.bf16.gmra.mxu0 %v9398
  %v9528 = vpop.f32.mrf.mxu0
  %v9529 = vadd.f32 %v9323, %v9528
  %v9530 = vpop.f32.mrf.mxu0
  %v9531 = vadd.f32 %v9323, %v9530
  %9532 = vmatmul.bf16.gmra.mxu0 %v9400
  %v9533 = vpop.f32.mrf.mxu0
  %v9534 = vadd.f32 %v9323, %v9533
  %v9535 = vpop.f32.mrf.mxu0
  %v9536 = vadd.f32 %v9323, %v9535
  %9537 = vmatmul.bf16.gmra.mxu0 %v9402
  %v9538 = vpop.f32.mrf.mxu0
  %v9539 = vadd.f32 %v9323, %v9538
  %v9540 = vpop.f32.mrf.mxu0
  %v9541 = vadd.f32 %v9323, %v9540
  %9542 = vmatmul.bf16.gmra.mxu0 %v9404
  %v9543 = vpop.f32.mrf.mxu0
  %v9544 = vadd.f32 %v9323, %v9543
  %v9545 = vpop.f32.mrf.mxu0
  %v9546 = vadd.f32 %v9323, %v9545
  %9547 = vmatmul.bf16.gmra.mxu0 %v9406
  %v9548 = vpop.f32.mrf.mxu0
  %v9549 = vadd.f32 %v9323, %v9548
  %v9550 = vpop.f32.mrf.mxu0
  %v9551 = vadd.f32 %v9323, %v9550
  %9552 = vmatmul.bf16.gmra.mxu0 %v9408
  %v9553 = vpop.f32.mrf.mxu0
  %v9554 = vadd.f32 %v9323, %v9553
  %v9555 = vpop.f32.mrf.mxu0
  %v9556 = vadd.f32 %v9323, %v9555
  %9557 = vmatmul.bf16.gmra.mxu0 %v9410
  %v9558 = vpop.f32.mrf.mxu0
  %v9559 = vadd.f32 %v9323, %v9558
  %v9560 = vpop.f32.mrf.mxu0
  %v9561 = vadd.f32 %v9323, %v9560
  %9562 = vmatmul.bf16.gmra.mxu0 %v9412
  %v9563 = vpop.f32.mrf.mxu0
  %v9564 = vadd.f32 %v9323, %v9563
  %v9565 = vpop.f32.mrf.mxu0
  %v9566 = vadd.f32 %v9323, %v9565
  %9567 = vmatmul.bf16.gmra.mxu0 %v9414
  %v9568 = vpop.f32.mrf.mxu0
  %v9569 = vadd.f32 %v9323, %v9568
  %v9570 = vpop.f32.mrf.mxu0
  %v9571 = vadd.f32 %v9323, %v9570
  %9572 = vmatmul.bf16.gmra.mxu0 %v9416
  %v9573 = vpop.f32.mrf.mxu0
  %v9574 = vadd.f32 %v9323, %v9573
  %v9575 = vpop.f32.mrf.mxu0
  %v9576 = vadd.f32 %v9323, %v9575
  %9577 = vmatmul.bf16.gmra.mxu0 %v9418
  %v9578 = vpop.f32.mrf.mxu0
  %v9579 = vadd.f32 %v9323, %v9578
  %v9580 = vpop.f32.mrf.mxu0
  %v9581 = vadd.f32 %v9323, %v9580
  %9582 = vmatmul.bf16.gmra.mxu0 %v9420
  %v9583 = vpop.f32.mrf.mxu0
  %v9584 = vadd.f32 %v9323, %v9583
  %v9585 = vpop.f32.mrf.mxu0
  %v9586 = vadd.f32 %v9323, %v9585
  %9587 = vmatmul.bf16.gmra.mxu0 %v9422
  %v9588 = vpop.f32.mrf.mxu0
  %v9589 = vadd.f32 %v9323, %v9588
  %v9590 = vpop.f32.mrf.mxu0
  %v9591 = vadd.f32 %v9323, %v9590
  %9592 = vdwg.mxu0
  %vm9593 = vcmp.gt.f32.partialorder %v9434, 0.0
  %vm9594 = vcmp.gt.f32.partialorder %v9436, 0.0
  %vm9595 = vcmp.gt.f32.partialorder %v9439, 0.0
  %vm9596 = vcmp.gt.f32.partialorder %v9441, 0.0
  %vm9597 = vcmp.gt.f32.partialorder %v9444, 0.0
  %vm9598 = vcmp.gt.f32.partialorder %v9446, 0.0
  %vm9599 = vcmp.gt.f32.partialorder %v9449, 0.0
  %vm9600 = vcmp.gt.f32.partialorder %v9451, 0.0
  %vm9601 = vcmp.gt.f32.partialorder %v9454, 0.0
  %vm9602 = vcmp.gt.f32.partialorder %v9456, 0.0
  %vm9603 = vcmp.gt.f32.partialorder %v9459, 0.0
  %vm9604 = vcmp.gt.f32.partialorder %v9461, 0.0
  %vm9605 = vcmp.gt.f32.partialorder %v9464, 0.0
  %vm9606 = vcmp.gt.f32.partialorder %v9466, 0.0
  %vm9607 = vcmp.gt.f32.partialorder %v9469, 0.0
  %vm9608 = vcmp.gt.f32.partialorder %v9471, 0.0
  %vm9609 = vcmp.gt.f32.partialorder %v9474, 0.0
  %vm9610 = vcmp.gt.f32.partialorder %v9476, 0.0
  %vm9611 = vcmp.gt.f32.partialorder %v9479, 0.0
  %vm9612 = vcmp.gt.f32.partialorder %v9481, 0.0
  %vm9613 = vcmp.gt.f32.partialorder %v9484, 0.0
  %vm9614 = vcmp.gt.f32.partialorder %v9486, 0.0
  %vm9615 = vcmp.gt.f32.partialorder %v9489, 0.0
  %vm9616 = vcmp.gt.f32.partialorder %v9491, 0.0
  %vm9617 = vcmp.gt.f32.partialorder %v9494, 0.0
  %vm9618 = vcmp.gt.f32.partialorder %v9496, 0.0
  %vm9619 = vcmp.gt.f32.partialorder %v9499, 0.0
  %vm9620 = vcmp.gt.f32.partialorder %v9501, 0.0
  %vm9621 = vcmp.gt.f32.partialorder %v9504, 0.0
  %vm9622 = vcmp.gt.f32.partialorder %v9506, 0.0
  %vm9623 = vcmp.gt.f32.partialorder %v9509, 0.0
  %vm9624 = vcmp.gt.f32.partialorder %v9511, 0.0
  %vm9625 = vcmp.gt.f32.partialorder %v9514, 0.0
  %vm9626 = vcmp.gt.f32.partialorder %v9516, 0.0
  %vm9627 = vcmp.gt.f32.partialorder %v9519, 0.0
  %vm9628 = vcmp.gt.f32.partialorder %v9521, 0.0
  %vm9629 = vcmp.gt.f32.partialorder %v9524, 0.0
  %vm9630 = vcmp.gt.f32.partialorder %v9526, 0.0
  %vm9631 = vcmp.gt.f32.partialorder %v9529, 0.0
  %vm9632 = vcmp.gt.f32.partialorder %v9531, 0.0
  %vm9633 = vcmp.gt.f32.partialorder %v9534, 0.0
  %vm9634 = vcmp.gt.f32.partialorder %v9536, 0.0
  %vm9635 = vcmp.gt.f32.partialorder %v9539, 0.0
  %vm9636 = vcmp.gt.f32.partialorder %v9541, 0.0
  %vm9637 = vcmp.gt.f32.partialorder %v9544, 0.0
  %vm9638 = vcmp.gt.f32.partialorder %v9546, 0.0
  %vm9639 = vcmp.gt.f32.partialorder %v9549, 0.0
  %vm9640 = vcmp.gt.f32.partialorder %v9551, 0.0
  %vm9641 = vcmp.gt.f32.partialorder %v9554, 0.0
  %vm9642 = vcmp.gt.f32.partialorder %v9556, 0.0
  %vm9643 = vcmp.gt.f32.partialorder %v9559, 0.0
  %vm9644 = vcmp.gt.f32.partialorder %v9561, 0.0
  %vm9645 = vcmp.gt.f32.partialorder %v9564, 0.0
  %vm9646 = vcmp.gt.f32.partialorder %v9566, 0.0
  %vm9647 = vcmp.gt.f32.partialorder %v9569, 0.0
  %vm9648 = vcmp.gt.f32.partialorder %v9571, 0.0
  %vm9649 = vcmp.gt.f32.partialorder %v9574, 0.0
  %vm9650 = vcmp.gt.f32.partialorder %v9576, 0.0
  %vm9651 = vcmp.gt.f32.partialorder %v9579, 0.0
  %vm9652 = vcmp.gt.f32.partialorder %v9581, 0.0
  %vm9653 = vcmp.gt.f32.partialorder %v9584, 0.0
  %vm9654 = vcmp.gt.f32.partialorder %v9586, 0.0
  %vm9655 = vcmp.gt.f32.partialorder %v9589, 0.0
  %vm9656 = vcmp.gt.f32.partialorder %v9591, 0.0
  %v9657 = vmul.f32 %v9434, 1.442695
  %v9658 = vpow.pop %v9657
  %v9659 = vmul.f32 %v9436, 1.442695
  %v9660 = vpow.pop %v9659
  %v9661 = vmul.f32 %v9439, 1.442695
  %v9662 = vpow.pop %v9661
  %v9663 = vmul.f32 %v9441, 1.442695
  %v9664 = vpow.pop %v9663
  %v9665 = vmul.f32 %v9444, 1.442695
  %v9666 = vpow.pop %v9665
  %v9667 = vmul.f32 %v9446, 1.442695
  %v9668 = vpow.pop %v9667
  %v9669 = vmul.f32 %v9449, 1.442695
  %v9670 = vpow.pop %v9669
  %v9671 = vmul.f32 %v9451, 1.442695
  %v9672 = vpow.pop %v9671
  %v9673 = vmul.f32 %v9454, 1.442695
  %v9674 = vpow.pop %v9673
  %v9675 = vmul.f32 %v9456, 1.442695
  %v9676 = vpow.pop %v9675
  %v9677 = vmul.f32 %v9459, 1.442695
  %v9678 = vpow.pop %v9677
  %v9679 = vmul.f32 %v9461, 1.442695
  %v9680 = vpow.pop %v9679
  %v9681 = vmul.f32 %v9464, 1.442695
  %v9682 = vpow.pop %v9681
  %v9683 = vmul.f32 %v9466, 1.442695
  %v9684 = vpow.pop %v9683
  %v9685 = vmul.f32 %v9469, 1.442695
  %v9686 = vpow.pop %v9685
  %v9687 = vmul.f32 %v9471, 1.442695
  %v9688 = vpow.pop %v9687
  %v9689 = vmul.f32 %v9474, 1.442695
  %v9690 = vpow.pop %v9689
  %v9691 = vmul.f32 %v9476, 1.442695
  %v9692 = vpow.pop %v9691
  %v9693 = vmul.f32 %v9479, 1.442695
  %v9694 = vpow.pop %v9693
  %v9695 = vmul.f32 %v9481, 1.442695
  %v9696 = vpow.pop %v9695
  %v9697 = vmul.f32 %v9484, 1.442695
  %v9698 = vpow.pop %v9697
  %v9699 = vmul.f32 %v9486, 1.442695
  %v9700 = vpow.pop %v9699
  %v9701 = vmul.f32 %v9489, 1.442695
  %v9702 = vpow.pop %v9701
  %v9703 = vmul.f32 %v9491, 1.442695
  %v9704 = vpow.pop %v9703
  %v9705 = vmul.f32 %v9494, 1.442695
  %v9706 = vpow.pop %v9705
  %v9707 = vmul.f32 %v9496, 1.442695
  %v9708 = vpow.pop %v9707
  %v9709 = vmul.f32 %v9499, 1.442695
  %v9710 = vpow.pop %v9709
  %v9711 = vmul.f32 %v9501, 1.442695
  %v9712 = vpow.pop %v9711
  %v9713 = vmul.f32 %v9504, 1.442695
  %v9714 = vpow.pop %v9713
  %v9715 = vmul.f32 %v9506, 1.442695
  %v9716 = vpow.pop %v9715
  %v9717 = vmul.f32 %v9509, 1.442695
  %v9718 = vpow.pop %v9717
  %v9719 = vmul.f32 %v9511, 1.442695
  %v9720 = vpow.pop %v9719
  %v9721 = vmul.f32 %v9514, 1.442695
  %v9722 = vpow.pop %v9721
  %v9723 = vmul.f32 %v9516, 1.442695
  %v9724 = vpow.pop %v9723
  %v9725 = vmul.f32 %v9519, 1.442695
  %v9726 = vpow.pop %v9725
  %v9727 = vmul.f32 %v9521, 1.442695
  %v9728 = vpow.pop %v9727
  %v9729 = vmul.f32 %v9524, 1.442695
  %v9730 = vpow.pop %v9729
  %v9731 = vmul.f32 %v9526, 1.442695
  %v9732 = vpow.pop %v9731
  %v9733 = vmul.f32 %v9529, 1.442695
  %v9734 = vpow.pop %v9733
  %v9735 = vmul.f32 %v9531, 1.442695
  %v9736 = vpow.pop %v9735
  %v9737 = vmul.f32 %v9534, 1.442695
  %v9738 = vpow.pop %v9737
  %v9739 = vmul.f32 %v9536, 1.442695
  %v9740 = vpow.pop %v9739
  %v9741 = vmul.f32 %v9539, 1.442695
  %v9742 = vpow.pop %v9741
  %v9743 = vmul.f32 %v9541, 1.442695
  %v9744 = vpow.pop %v9743
  %v9745 = vmul.f32 %v9544, 1.442695
  %v9746 = vpow.pop %v9745
  %v9747 = vmul.f32 %v9546, 1.442695
  %v9748 = vpow.pop %v9747
  %v9749 = vmul.f32 %v9549, 1.442695
  %v9750 = vpow.pop %v9749
  %v9751 = vmul.f32 %v9551, 1.442695
  %v9752 = vpow.pop %v9751
  %v9753 = vmul.f32 %v9554, 1.442695
  %v9754 = vpow.pop %v9753
  %v9755 = vmul.f32 %v9556, 1.442695
  %v9756 = vpow.pop %v9755
  %v9757 = vmul.f32 %v9559, 1.442695
  %v9758 = vpow.pop %v9757
  %v9759 = vmul.f32 %v9561, 1.442695
  %v9760 = vpow.pop %v9759
  %v9761 = vmul.f32 %v9564, 1.442695
  %v9762 = vpow.pop %v9761
  %v9763 = vmul.f32 %v9566, 1.442695
  %v9764 = vpow.pop %v9763
  %v9765 = vmul.f32 %v9569, 1.442695
  %v9766 = vpow.pop %v9765
  %v9767 = vmul.f32 %v9571, 1.442695
  %v9768 = vpow.pop %v9767
  %v9769 = vmul.f32 %v9574, 1.442695
  %v9770 = vpow.pop %v9769
  %v9771 = vmul.f32 %v9576, 1.442695
  %v9772 = vpow.pop %v9771
  %v9773 = vmul.f32 %v9579, 1.442695
  %v9774 = vpow.pop %v9773
  %v9775 = vmul.f32 %v9581, 1.442695
  %v9776 = vpow.pop %v9775
  %v9777 = vmul.f32 %v9584, 1.442695
  %v9778 = vpow.pop %v9777
  %v9779 = vmul.f32 %v9586, 1.442695
  %v9780 = vpow.pop %v9779
  %v9781 = vmul.f32 %v9589, 1.442695
  %v9782 = vpow.pop %v9781
  %v9783 = vmul.f32 %v9591, 1.442695
  %v9784 = vpow.pop %v9783
  %v9785 = vsub.f32 %v9658, 1.0
  %v9786 = vsub.f32 %v9660, 1.0
  %v9787 = vsub.f32 %v9662, 1.0
  %v9788 = vsub.f32 %v9664, 1.0
  %v9789 = vsub.f32 %v9666, 1.0
  %v9790 = vsub.f32 %v9668, 1.0
  %v9791 = vsub.f32 %v9670, 1.0
  %v9792 = vsub.f32 %v9672, 1.0
  %v9793 = vsub.f32 %v9674, 1.0
  %v9794 = vsub.f32 %v9676, 1.0
  %v9795 = vsub.f32 %v9678, 1.0
  %v9796 = vsub.f32 %v9680, 1.0
  %v9797 = vsub.f32 %v9682, 1.0
  %v9798 = vsub.f32 %v9684, 1.0
  %v9799 = vsub.f32 %v9686, 1.0
  %v9800 = vsub.f32 %v9688, 1.0
  %v9801 = vsub.f32 %v9690, 1.0
  %v9802 = vsub.f32 %v9692, 1.0
  %v9803 = vsub.f32 %v9694, 1.0
  %v9804 = vsub.f32 %v9696, 1.0
  %v9805 = vsub.f32 %v9698, 1.0
  %v9806 = vsub.f32 %v9700, 1.0
  %v9807 = vsub.f32 %v9702, 1.0
  %v9808 = vsub.f32 %v9704, 1.0
  %v9809 = vsub.f32 %v9706, 1.0
  %v9810 = vsub.f32 %v9708, 1.0
  %v9811 = vsub.f32 %v9710, 1.0
  %v9812 = vsub.f32 %v9712, 1.0
  %v9813 = vsub.f32 %v9714, 1.0
  %v9814 = vsub.f32 %v9716, 1.0
  %v9815 = vsub.f32 %v9718, 1.0
  %v9816 = vsub.f32 %v9720, 1.0
  %v9817 = vsub.f32 %v9722, 1.0
  %v9818 = vsub.f32 %v9724, 1.0
  %v9819 = vsub.f32 %v9726, 1.0
  %v9820 = vsub.f32 %v9728, 1.0
  %v9821 = vsub.f32 %v9730, 1.0
  %v9822 = vsub.f32 %v9732, 1.0
  %v9823 = vsub.f32 %v9734, 1.0
  %v9824 = vsub.f32 %v9736, 1.0
  %v9825 = vsub.f32 %v9738, 1.0
  %v9826 = vsub.f32 %v9740, 1.0
  %v9827 = vsub.f32 %v9742, 1.0
  %v9828 = vsub.f32 %v9744, 1.0
  %v9829 = vsub.f32 %v9746, 1.0
  %v9830 = vsub.f32 %v9748, 1.0
  %v9831 = vsub.f32 %v9750, 1.0
  %v9832 = vsub.f32 %v9752, 1.0
  %v9833 = vsub.f32 %v9754, 1.0
  %v9834 = vsub.f32 %v9756, 1.0
  %v9835 = vsub.f32 %v9758, 1.0
  %v9836 = vsub.f32 %v9760, 1.0
  %v9837 = vsub.f32 %v9762, 1.0
  %v9838 = vsub.f32 %v9764, 1.0
  %v9839 = vsub.f32 %v9766, 1.0
  %v9840 = vsub.f32 %v9768, 1.0
  %v9841 = vsub.f32 %v9770, 1.0
  %v9842 = vsub.f32 %v9772, 1.0
  %v9843 = vsub.f32 %v9774, 1.0
  %v9844 = vsub.f32 %v9776, 1.0
  %v9845 = vsub.f32 %v9778, 1.0
  %v9846 = vsub.f32 %v9780, 1.0
  %v9847 = vsub.f32 %v9782, 1.0
  %v9848 = vsub.f32 %v9784, 1.0
  %v9849 = vsel %vm9593, %v9434, %v9785
  %v9850 = vsel %vm9594, %v9436, %v9786
  %v9851 = vsel %vm9595, %v9439, %v9787
  %v9852 = vsel %vm9596, %v9441, %v9788
  %v9853 = vsel %vm9597, %v9444, %v9789
  %v9854 = vsel %vm9598, %v9446, %v9790
  %v9855 = vsel %vm9599, %v9449, %v9791
  %v9856 = vsel %vm9600, %v9451, %v9792
  %v9857 = vsel %vm9601, %v9454, %v9793
  %v9858 = vsel %vm9602, %v9456, %v9794
  %v9859 = vsel %vm9603, %v9459, %v9795
  %v9860 = vsel %vm9604, %v9461, %v9796
  %v9861 = vsel %vm9605, %v9464, %v9797
  %v9862 = vsel %vm9606, %v9466, %v9798
  %v9863 = vsel %vm9607, %v9469, %v9799
  %v9864 = vsel %vm9608, %v9471, %v9800
  %v9865 = vsel %vm9609, %v9474, %v9801
  %v9866 = vsel %vm9610, %v9476, %v9802
  %v9867 = vsel %vm9611, %v9479, %v9803
  %v9868 = vsel %vm9612, %v9481, %v9804
  %v9869 = vsel %vm9613, %v9484, %v9805
  %v9870 = vsel %vm9614, %v9486, %v9806
  %v9871 = vsel %vm9615, %v9489, %v9807
  %v9872 = vsel %vm9616, %v9491, %v9808
  %v9873 = vsel %vm9617, %v9494, %v9809
  %v9874 = vsel %vm9618, %v9496, %v9810
  %v9875 = vsel %vm9619, %v9499, %v9811
  %v9876 = vsel %vm9620, %v9501, %v9812
  %v9877 = vsel %vm9621, %v9504, %v9813
  %v9878 = vsel %vm9622, %v9506, %v9814
  %v9879 = vsel %vm9623, %v9509, %v9815
  %v9880 = vsel %vm9624, %v9511, %v9816
  %v9881 = vsel %vm9625, %v9514, %v9817
  %v9882 = vsel %vm9626, %v9516, %v9818
  %v9883 = vsel %vm9627, %v9519, %v9819
  %v9884 = vsel %vm9628, %v9521, %v9820
  %v9885 = vsel %vm9629, %v9524, %v9821
  %v9886 = vsel %vm9630, %v9526, %v9822
  %v9887 = vsel %vm9631, %v9529, %v9823
  %v9888 = vsel %vm9632, %v9531, %v9824
  %v9889 = vsel %vm9633, %v9534, %v9825
  %v9890 = vsel %vm9634, %v9536, %v9826
  %v9891 = vsel %vm9635, %v9539, %v9827
  %v9892 = vsel %vm9636, %v9541, %v9828
  %v9893 = vsel %vm9637, %v9544, %v9829
  %v9894 = vsel %vm9638, %v9546, %v9830
  %v9895 = vsel %vm9639, %v9549, %v9831
  %v9896 = vsel %vm9640, %v9551, %v9832
  %v9897 = vsel %vm9641, %v9554, %v9833
  %v9898 = vsel %vm9642, %v9556, %v9834
  %v9899 = vsel %vm9643, %v9559, %v9835
  %v9900 = vsel %vm9644, %v9561, %v9836
  %v9901 = vsel %vm9645, %v9564, %v9837
  %v9902 = vsel %vm9646, %v9566, %v9838
  %v9903 = vsel %vm9647, %v9569, %v9839
  %v9904 = vsel %vm9648, %v9571, %v9840
  %v9905 = vsel %vm9649, %v9574, %v9841
  %v9906 = vsel %vm9650, %v9576, %v9842
  %v9907 = vsel %vm9651, %v9579, %v9843
  %v9908 = vsel %vm9652, %v9581, %v9844
  %v9909 = vsel %vm9653, %v9584, %v9845
  %v9910 = vsel %vm9654, %v9586, %v9846
  %v9911 = vsel %vm9655, %v9589, %v9847
  %v9912 = vsel %vm9656, %v9591, %v9848
  %v9913 = vpack.c.bf16 %v9849, %v9849
  %v9914 = vpack.c.bf16 %v9850, %v9850
  %v9915 = vpack.c.bf16 %v9851, %v9851
  %v9916 = vpack.c.bf16 %v9852, %v9852
  %v9917 = vpack.c.bf16 %v9853, %v9853
  %v9918 = vpack.c.bf16 %v9854, %v9854
  %v9919 = vpack.c.bf16 %v9855, %v9855
  %v9920 = vpack.c.bf16 %v9856, %v9856
  %v9921 = vpack.c.bf16 %v9857, %v9857
  %v9922 = vpack.c.bf16 %v9858, %v9858
  %v9923 = vpack.c.bf16 %v9859, %v9859
  %v9924 = vpack.c.bf16 %v9860, %v9860
  %v9925 = vpack.c.bf16 %v9861, %v9861
  %v9926 = vpack.c.bf16 %v9862, %v9862
  %v9927 = vpack.c.bf16 %v9863, %v9863
  %v9928 = vpack.c.bf16 %v9864, %v9864
  %v9929 = vpack.c.bf16 %v9865, %v9865
  %v9930 = vpack.c.bf16 %v9866, %v9866
  %v9931 = vpack.c.bf16 %v9867, %v9867
  %v9932 = vpack.c.bf16 %v9868, %v9868
  %v9933 = vpack.c.bf16 %v9869, %v9869
  %v9934 = vpack.c.bf16 %v9870, %v9870
  %v9935 = vpack.c.bf16 %v9871, %v9871
  %v9936 = vpack.c.bf16 %v9872, %v9872
  %v9937 = vpack.c.bf16 %v9873, %v9873
  %v9938 = vpack.c.bf16 %v9874, %v9874
  %v9939 = vpack.c.bf16 %v9875, %v9875
  %v9940 = vpack.c.bf16 %v9876, %v9876
  %v9941 = vpack.c.bf16 %v9877, %v9877
  %v9942 = vpack.c.bf16 %v9878, %v9878
  %v9943 = vpack.c.bf16 %v9879, %v9879
  %v9944 = vpack.c.bf16 %v9880, %v9880
  %v9945 = vpack.c.bf16 %v9881, %v9881
  %v9946 = vpack.c.bf16 %v9882, %v9882
  %v9947 = vpack.c.bf16 %v9883, %v9883
  %v9948 = vpack.c.bf16 %v9884, %v9884
  %v9949 = vpack.c.bf16 %v9885, %v9885
  %v9950 = vpack.c.bf16 %v9886, %v9886
  %v9951 = vpack.c.bf16 %v9887, %v9887
  %v9952 = vpack.c.bf16 %v9888, %v9888
  %v9953 = vpack.c.bf16 %v9889, %v9889
  %v9954 = vpack.c.bf16 %v9890, %v9890
  %v9955 = vpack.c.bf16 %v9891, %v9891
  %v9956 = vpack.c.bf16 %v9892, %v9892
  %v9957 = vpack.c.bf16 %v9893, %v9893
  %v9958 = vpack.c.bf16 %v9894, %v9894
  %v9959 = vpack.c.bf16 %v9895, %v9895
  %v9960 = vpack.c.bf16 %v9896, %v9896
  %v9961 = vpack.c.bf16 %v9897, %v9897
  %v9962 = vpack.c.bf16 %v9898, %v9898
  %v9963 = vpack.c.bf16 %v9899, %v9899
  %v9964 = vpack.c.bf16 %v9900, %v9900
  %v9965 = vpack.c.bf16 %v9901, %v9901
  %v9966 = vpack.c.bf16 %v9902, %v9902
  %v9967 = vpack.c.bf16 %v9903, %v9903
  %v9968 = vpack.c.bf16 %v9904, %v9904
  %v9969 = vpack.c.bf16 %v9905, %v9905
  %v9970 = vpack.c.bf16 %v9906, %v9906
  %v9971 = vpack.c.bf16 %v9907, %v9907
  %v9972 = vpack.c.bf16 %v9908, %v9908
  %v9973 = vpack.c.bf16 %v9909, %v9909
  %v9974 = vpack.c.bf16 %v9910, %v9910
  %v9975 = vpack.c.bf16 %v9911, %v9911
  %v9976 = vpack.c.bf16 %v9912, %v9912
  %v9977 = vrot.slane %v9849, 1
  %v9978 = vrot.slane %v9850, 1
  %v9979 = vrot.slane %v9851, 1
  %v9980 = vrot.slane %v9852, 1
  %v9981 = vrot.slane %v9853, 1
  %v9982 = vrot.slane %v9854, 1
  %v9983 = vrot.slane %v9855, 1
  %v9984 = vrot.slane %v9856, 1
  %v9985 = vrot.slane %v9857, 1
  %v9986 = vrot.slane %v9858, 1
  %v9987 = vrot.slane %v9859, 1
  %v9988 = vrot.slane %v9860, 1
  %v9989 = vrot.slane %v9861, 1
  %v9990 = vrot.slane %v9862, 1
  %v9991 = vrot.slane %v9863, 1
  %v9992 = vrot.slane %v9864, 1
  %v9993 = vrot.slane %v9865, 1
  %v9994 = vrot.slane %v9866, 1
  %v9995 = vrot.slane %v9867, 1
  %v9996 = vrot.slane %v9868, 1
  %v9997 = vrot.slane %v9869, 1
  %v9998 = vrot.slane %v9870, 1
  %v9999 = vrot.slane %v9871, 1
  %v10000 = vrot.slane %v9872, 1
  %v10001 = vrot.slane %v9873, 1
  %v10002 = vrot.slane %v9874, 1
  %v10003 = vrot.slane %v9875, 1
  %v10004 = vrot.slane %v9876, 1
  %v10005 = vrot.slane %v9877, 1
  %v10006 = vrot.slane %v9878, 1
  %v10007 = vrot.slane %v9879, 1
  %v10008 = vrot.slane %v9880, 1
  %v10009 = vrot.slane %v9881, 1
  %v10010 = vrot.slane %v9882, 1
  %v10011 = vrot.slane %v9883, 1
  %v10012 = vrot.slane %v9884, 1
  %v10013 = vrot.slane %v9885, 1
  %v10014 = vrot.slane %v9886, 1
  %v10015 = vrot.slane %v9887, 1
  %v10016 = vrot.slane %v9888, 1
  %v10017 = vrot.slane %v9889, 1
  %v10018 = vrot.slane %v9890, 1
  %v10019 = vrot.slane %v9891, 1
  %v10020 = vrot.slane %v9892, 1
  %v10021 = vrot.slane %v9893, 1
  %v10022 = vrot.slane %v9894, 1
  %v10023 = vrot.slane %v9895, 1
  %v10024 = vrot.slane %v9896, 1
  %v10025 = vrot.slane %v9897, 1
  %v10026 = vrot.slane %v9898, 1
  %v10027 = vrot.slane %v9899, 1
  %v10028 = vrot.slane %v9900, 1
  %v10029 = vrot.slane %v9901, 1
  %v10030 = vrot.slane %v9902, 1
  %v10031 = vrot.slane %v9903, 1
  %v10032 = vrot.slane %v9904, 1
  %v10033 = vrot.slane %v9905, 1
  %v10034 = vrot.slane %v9906, 1
  %v10035 = vrot.slane %v9907, 1
  %v10036 = vrot.slane %v9908, 1
  %v10037 = vrot.slane %v9909, 1
  %v10038 = vrot.slane %v9910, 1
  %v10039 = vrot.slane %v9911, 1
  %v10040 = vrot.slane %v9912, 1
  %v10041 = vsel %vm402, %v10039, %v10040
  %v10042 = vsel %vm402, %v10038, %v10039
  %v10043 = vsel %vm402, %v10037, %v10038
  %v10044 = vsel %vm402, %v10036, %v10037
  %v10045 = vsel %vm402, %v10035, %v10036
  %v10046 = vsel %vm402, %v10034, %v10035
  %v10047 = vsel %vm402, %v10033, %v10034
  %v10048 = vsel %vm402, %v10032, %v10033
  %v10049 = vsel %vm402, %v10031, %v10032
  %v10050 = vsel %vm402, %v10030, %v10031
  %v10051 = vsel %vm402, %v10029, %v10030
  %v10052 = vsel %vm402, %v10028, %v10029
  %v10053 = vsel %vm402, %v10027, %v10028
  %v10054 = vsel %vm402, %v10026, %v10027
  %v10055 = vsel %vm402, %v10025, %v10026
  %v10056 = vsel %vm402, %v10024, %v10025
  %v10057 = vsel %vm402, %v10023, %v10024
  %v10058 = vsel %vm402, %v10022, %v10023
  %v10059 = vsel %vm402, %v10021, %v10022
  %v10060 = vsel %vm402, %v10020, %v10021
  %v10061 = vsel %vm402, %v10019, %v10020
  %v10062 = vsel %vm402, %v10018, %v10019
  %v10063 = vsel %vm402, %v10017, %v10018
  %v10064 = vsel %vm402, %v10016, %v10017
  %v10065 = vsel %vm402, %v10015, %v10016
  %v10066 = vsel %vm402, %v10014, %v10015
  %v10067 = vsel %vm402, %v10013, %v10014
  %v10068 = vsel %vm402, %v10012, %v10013
  %v10069 = vsel %vm402, %v10011, %v10012
  %v10070 = vsel %vm402, %v10010, %v10011
  %v10071 = vsel %vm402, %v10009, %v10010
  %v10072 = vsel %vm402, %v10008, %v10009
  %v10073 = vsel %vm402, %v10007, %v10008
  %v10074 = vsel %vm402, %v10006, %v10007
  %v10075 = vsel %vm402, %v10005, %v10006
  %v10076 = vsel %vm402, %v10004, %v10005
  %v10077 = vsel %vm402, %v10003, %v10004
  %v10078 = vsel %vm402, %v10002, %v10003
  %v10079 = vsel %vm402, %v10001, %v10002
  %v10080 = vsel %vm402, %v10000, %v10001
  %v10081 = vsel %vm402, %v9999, %v10000
  %v10082 = vsel %vm402, %v9998, %v9999
  %v10083 = vsel %vm402, %v9997, %v9998
  %v10084 = vsel %vm402, %v9996, %v9997
  %v10085 = vsel %vm402, %v9995, %v9996
  %v10086 = vsel %vm402, %v9994, %v9995
  %v10087 = vsel %vm402, %v9993, %v9994
  %v10088 = vsel %vm402, %v9992, %v9993
  %v10089 = vsel %vm402, %v9991, %v9992
  %v10090 = vsel %vm402, %v9990, %v9991
  %v10091 = vsel %vm402, %v9989, %v9990
  %v10092 = vsel %vm402, %v9988, %v9989
  %v10093 = vsel %vm402, %v9987, %v9988
  %v10094 = vsel %vm402, %v9986, %v9987
  %v10095 = vsel %vm402, %v9985, %v9986
  %v10096 = vsel %vm402, %v9984, %v9985
  %v10097 = vsel %vm402, %v9983, %v9984
  %v10098 = vsel %vm402, %v9982, %v9983
  %v10099 = vsel %vm402, %v9981, %v9982
  %v10100 = vsel %vm402, %v9980, %v9981
  %v10101 = vsel %vm402, %v9979, %v9980
  %v10102 = vsel %vm402, %v9978, %v9979
  %v10103 = vsel %vm402, %v9977, %v9978
  %v10104 = vsel %vm402, %v10040, %v9977
  %v10105 = vpack.c.bf16 %v10103, %v10103
  %v10106 = vpack.c.bf16 %v10102, %v10102
  %v10107 = vpack.c.bf16 %v10101, %v10101
  %v10108 = vpack.c.bf16 %v10100, %v10100
  %v10109 = vpack.c.bf16 %v10099, %v10099
  %v10110 = vpack.c.bf16 %v10098, %v10098
  %v10111 = vpack.c.bf16 %v10097, %v10097
  %v10112 = vpack.c.bf16 %v10096, %v10096
  %v10113 = vpack.c.bf16 %v10095, %v10095
  %v10114 = vpack.c.bf16 %v10094, %v10094
  %v10115 = vpack.c.bf16 %v10093, %v10093
  %v10116 = vpack.c.bf16 %v10092, %v10092
  %v10117 = vpack.c.bf16 %v10091, %v10091
  %v10118 = vpack.c.bf16 %v10090, %v10090
  %v10119 = vpack.c.bf16 %v10089, %v10089
  %v10120 = vpack.c.bf16 %v10088, %v10088
  %v10121 = vpack.c.bf16 %v10087, %v10087
  %v10122 = vpack.c.bf16 %v10086, %v10086
  %v10123 = vpack.c.bf16 %v10085, %v10085
  %v10124 = vpack.c.bf16 %v10084, %v10084
  %v10125 = vpack.c.bf16 %v10083, %v10083
  %v10126 = vpack.c.bf16 %v10082, %v10082
  %v10127 = vpack.c.bf16 %v10081, %v10081
  %v10128 = vpack.c.bf16 %v10080, %v10080
  %v10129 = vpack.c.bf16 %v10079, %v10079
  %v10130 = vpack.c.bf16 %v10078, %v10078
  %v10131 = vpack.c.bf16 %v10077, %v10077
  %v10132 = vpack.c.bf16 %v10076, %v10076
  %v10133 = vpack.c.bf16 %v10075, %v10075
  %v10134 = vpack.c.bf16 %v10074, %v10074
  %v10135 = vpack.c.bf16 %v10073, %v10073
  %v10136 = vpack.c.bf16 %v10072, %v10072
  %v10137 = vpack.c.bf16 %v10071, %v10071
  %v10138 = vpack.c.bf16 %v10070, %v10070
  %v10139 = vpack.c.bf16 %v10069, %v10069
  %v10140 = vpack.c.bf16 %v10068, %v10068
  %v10141 = vpack.c.bf16 %v10067, %v10067
  %v10142 = vpack.c.bf16 %v10066, %v10066
  %v10143 = vpack.c.bf16 %v10065, %v10065
  %v10144 = vpack.c.bf16 %v10064, %v10064
  %v10145 = vpack.c.bf16 %v10063, %v10063
  %v10146 = vpack.c.bf16 %v10062, %v10062
  %v10147 = vpack.c.bf16 %v10061, %v10061
  %v10148 = vpack.c.bf16 %v10060, %v10060
  %v10149 = vpack.c.bf16 %v10059, %v10059
  %v10150 = vpack.c.bf16 %v10058, %v10058
  %v10151 = vpack.c.bf16 %v10057, %v10057
  %v10152 = vpack.c.bf16 %v10056, %v10056
  %v10153 = vpack.c.bf16 %v10055, %v10055
  %v10154 = vpack.c.bf16 %v10054, %v10054
  %v10155 = vpack.c.bf16 %v10053, %v10053
  %v10156 = vpack.c.bf16 %v10052, %v10052
  %v10157 = vpack.c.bf16 %v10051, %v10051
  %v10158 = vpack.c.bf16 %v10050, %v10050
  %v10159 = vpack.c.bf16 %v10049, %v10049
  %v10160 = vpack.c.bf16 %v10048, %v10048
  %v10161 = vpack.c.bf16 %v10047, %v10047
  %v10162 = vpack.c.bf16 %v10046, %v10046
  %v10163 = vpack.c.bf16 %v10045, %v10045
  %v10164 = vpack.c.bf16 %v10044, %v10044
  %v10165 = vpack.c.bf16 %v10043, %v10043
  %v10166 = vpack.c.bf16 %v10042, %v10042
  %v10167 = vpack.c.bf16 %v10041, %v10041
  %v10168 = vpack.c.bf16 %v10104, %v10104
  %v10169 = vrot.slane %v9849, 2
  %v10170 = vrot.slane %v9850, 2
  %v10171 = vrot.slane %v9851, 2
  %v10172 = vrot.slane %v9852, 2
  %v10173 = vrot.slane %v9853, 2
  %v10174 = vrot.slane %v9854, 2
  %v10175 = vrot.slane %v9855, 2
  %v10176 = vrot.slane %v9856, 2
  %v10177 = vrot.slane %v9857, 2
  %v10178 = vrot.slane %v9858, 2
  %v10179 = vrot.slane %v9859, 2
  %v10180 = vrot.slane %v9860, 2
  %v10181 = vrot.slane %v9861, 2
  %v10182 = vrot.slane %v9862, 2
  %v10183 = vrot.slane %v9863, 2
  %v10184 = vrot.slane %v9864, 2
  %v10185 = vrot.slane %v9865, 2
  %v10186 = vrot.slane %v9866, 2
  %v10187 = vrot.slane %v9867, 2
  %v10188 = vrot.slane %v9868, 2
  %v10189 = vrot.slane %v9869, 2
  %v10190 = vrot.slane %v9870, 2
  %v10191 = vrot.slane %v9871, 2
  %v10192 = vrot.slane %v9872, 2
  %v10193 = vrot.slane %v9873, 2
  %v10194 = vrot.slane %v9874, 2
  %v10195 = vrot.slane %v9875, 2
  %v10196 = vrot.slane %v9876, 2
  %v10197 = vrot.slane %v9877, 2
  %v10198 = vrot.slane %v9878, 2
  %v10199 = vrot.slane %v9879, 2
  %v10200 = vrot.slane %v9880, 2
  %v10201 = vrot.slane %v9881, 2
  %v10202 = vrot.slane %v9882, 2
  %v10203 = vrot.slane %v9883, 2
  %v10204 = vrot.slane %v9884, 2
  %v10205 = vrot.slane %v9885, 2
  %v10206 = vrot.slane %v9886, 2
  %v10207 = vrot.slane %v9887, 2
  %v10208 = vrot.slane %v9888, 2
  %v10209 = vrot.slane %v9889, 2
  %v10210 = vrot.slane %v9890, 2
  %v10211 = vrot.slane %v9891, 2
  %v10212 = vrot.slane %v9892, 2
  %v10213 = vrot.slane %v9893, 2
  %v10214 = vrot.slane %v9894, 2
  %v10215 = vrot.slane %v9895, 2
  %v10216 = vrot.slane %v9896, 2
  %v10217 = vrot.slane %v9897, 2
  %v10218 = vrot.slane %v9898, 2
  %v10219 = vrot.slane %v9899, 2
  %v10220 = vrot.slane %v9900, 2
  %v10221 = vrot.slane %v9901, 2
  %v10222 = vrot.slane %v9902, 2
  %v10223 = vrot.slane %v9903, 2
  %v10224 = vrot.slane %v9904, 2
  %v10225 = vrot.slane %v9905, 2
  %v10226 = vrot.slane %v9906, 2
  %v10227 = vrot.slane %v9907, 2
  %v10228 = vrot.slane %v9908, 2
  %v10229 = vrot.slane %v9909, 2
  %v10230 = vrot.slane %v9910, 2
  %v10231 = vrot.slane %v9911, 2
  %v10232 = vrot.slane %v9912, 2
  %v10233 = vsel %vm2960, %v10231, %v10232
  %v10234 = vsel %vm2960, %v10230, %v10231
  %v10235 = vsel %vm2960, %v10229, %v10230
  %v10236 = vsel %vm2960, %v10228, %v10229
  %v10237 = vsel %vm2960, %v10227, %v10228
  %v10238 = vsel %vm2960, %v10226, %v10227
  %v10239 = vsel %vm2960, %v10225, %v10226
  %v10240 = vsel %vm2960, %v10224, %v10225
  %v10241 = vsel %vm2960, %v10223, %v10224
  %v10242 = vsel %vm2960, %v10222, %v10223
  %v10243 = vsel %vm2960, %v10221, %v10222
  %v10244 = vsel %vm2960, %v10220, %v10221
  %v10245 = vsel %vm2960, %v10219, %v10220
  %v10246 = vsel %vm2960, %v10218, %v10219
  %v10247 = vsel %vm2960, %v10217, %v10218
  %v10248 = vsel %vm2960, %v10216, %v10217
  %v10249 = vsel %vm2960, %v10215, %v10216
  %v10250 = vsel %vm2960, %v10214, %v10215
  %v10251 = vsel %vm2960, %v10213, %v10214
  %v10252 = vsel %vm2960, %v10212, %v10213
  %v10253 = vsel %vm2960, %v10211, %v10212
  %v10254 = vsel %vm2960, %v10210, %v10211
  %v10255 = vsel %vm2960, %v10209, %v10210
  %v10256 = vsel %vm2960, %v10208, %v10209
  %v10257 = vsel %vm2960, %v10207, %v10208
  %v10258 = vsel %vm2960, %v10206, %v10207
  %v10259 = vsel %vm2960, %v10205, %v10206
  %v10260 = vsel %vm2960, %v10204, %v10205
  %v10261 = vsel %vm2960, %v10203, %v10204
  %v10262 = vsel %vm2960, %v10202, %v10203
  %v10263 = vsel %vm2960, %v10201, %v10202
  %v10264 = vsel %vm2960, %v10200, %v10201
  %v10265 = vsel %vm2960, %v10199, %v10200
  %v10266 = vsel %vm2960, %v10198, %v10199
  %v10267 = vsel %vm2960, %v10197, %v10198
  %v10268 = vsel %vm2960, %v10196, %v10197
  %v10269 = vsel %vm2960, %v10195, %v10196
  %v10270 = vsel %vm2960, %v10194, %v10195
  %v10271 = vsel %vm2960, %v10193, %v10194
  %v10272 = vsel %vm2960, %v10192, %v10193
  %v10273 = vsel %vm2960, %v10191, %v10192
  %v10274 = vsel %vm2960, %v10190, %v10191
  %v10275 = vsel %vm2960, %v10189, %v10190
  %v10276 = vsel %vm2960, %v10188, %v10189
  %v10277 = vsel %vm2960, %v10187, %v10188
  %v10278 = vsel %vm2960, %v10186, %v10187
  %v10279 = vsel %vm2960, %v10185, %v10186
  %v10280 = vsel %vm2960, %v10184, %v10185
  %v10281 = vsel %vm2960, %v10183, %v10184
  %v10282 = vsel %vm2960, %v10182, %v10183
  %v10283 = vsel %vm2960, %v10181, %v10182
  %v10284 = vsel %vm2960, %v10180, %v10181
  %v10285 = vsel %vm2960, %v10179, %v10180
  %v10286 = vsel %vm2960, %v10178, %v10179
  %v10287 = vsel %vm2960, %v10177, %v10178
  %v10288 = vsel %vm2960, %v10176, %v10177
  %v10289 = vsel %vm2960, %v10175, %v10176
  %v10290 = vsel %vm2960, %v10174, %v10175
  %v10291 = vsel %vm2960, %v10173, %v10174
  %v10292 = vsel %vm2960, %v10172, %v10173
  %v10293 = vsel %vm2960, %v10171, %v10172
  %v10294 = vsel %vm2960, %v10170, %v10171
  %v10295 = vsel %vm2960, %v10169, %v10170
  %v10296 = vsel %vm2960, %v10232, %v10169
  %v10297 = vpack.c.bf16 %v10295, %v10295
  %v10298 = vpack.c.bf16 %v10294, %v10294
  %v10299 = vpack.c.bf16 %v10293, %v10293
  %v10300 = vpack.c.bf16 %v10292, %v10292
  %v10301 = vpack.c.bf16 %v10291, %v10291
  %v10302 = vpack.c.bf16 %v10290, %v10290
  %v10303 = vpack.c.bf16 %v10289, %v10289
  %v10304 = vpack.c.bf16 %v10288, %v10288
  %v10305 = vpack.c.bf16 %v10287, %v10287
  %v10306 = vpack.c.bf16 %v10286, %v10286
  %v10307 = vpack.c.bf16 %v10285, %v10285
  %v10308 = vpack.c.bf16 %v10284, %v10284
  %v10309 = vpack.c.bf16 %v10283, %v10283
  %v10310 = vpack.c.bf16 %v10282, %v10282
  %v10311 = vpack.c.bf16 %v10281, %v10281
  %v10312 = vpack.c.bf16 %v10280, %v10280
  %v10313 = vpack.c.bf16 %v10279, %v10279
  %v10314 = vpack.c.bf16 %v10278, %v10278
  %v10315 = vpack.c.bf16 %v10277, %v10277
  %v10316 = vpack.c.bf16 %v10276, %v10276
  %v10317 = vpack.c.bf16 %v10275, %v10275
  %v10318 = vpack.c.bf16 %v10274, %v10274
  %v10319 = vpack.c.bf16 %v10273, %v10273
  %v10320 = vpack.c.bf16 %v10272, %v10272
  %v10321 = vpack.c.bf16 %v10271, %v10271
  %v10322 = vpack.c.bf16 %v10270, %v10270
  %v10323 = vpack.c.bf16 %v10269, %v10269
  %v10324 = vpack.c.bf16 %v10268, %v10268
  %v10325 = vpack.c.bf16 %v10267, %v10267
  %v10326 = vpack.c.bf16 %v10266, %v10266
  %v10327 = vpack.c.bf16 %v10265, %v10265
  %v10328 = vpack.c.bf16 %v10264, %v10264
  %v10329 = vpack.c.bf16 %v10263, %v10263
  %v10330 = vpack.c.bf16 %v10262, %v10262
  %v10331 = vpack.c.bf16 %v10261, %v10261
  %v10332 = vpack.c.bf16 %v10260, %v10260
  %v10333 = vpack.c.bf16 %v10259, %v10259
  %v10334 = vpack.c.bf16 %v10258, %v10258
  %v10335 = vpack.c.bf16 %v10257, %v10257
  %v10336 = vpack.c.bf16 %v10256, %v10256
  %v10337 = vpack.c.bf16 %v10255, %v10255
  %v10338 = vpack.c.bf16 %v10254, %v10254
  %v10339 = vpack.c.bf16 %v10253, %v10253
  %v10340 = vpack.c.bf16 %v10252, %v10252
  %v10341 = vpack.c.bf16 %v10251, %v10251
  %v10342 = vpack.c.bf16 %v10250, %v10250
  %v10343 = vpack.c.bf16 %v10249, %v10249
  %v10344 = vpack.c.bf16 %v10248, %v10248
  %v10345 = vpack.c.bf16 %v10247, %v10247
  %v10346 = vpack.c.bf16 %v10246, %v10246
  %v10347 = vpack.c.bf16 %v10245, %v10245
  %v10348 = vpack.c.bf16 %v10244, %v10244
  %v10349 = vpack.c.bf16 %v10243, %v10243
  %v10350 = vpack.c.bf16 %v10242, %v10242
  %v10351 = vpack.c.bf16 %v10241, %v10241
  %v10352 = vpack.c.bf16 %v10240, %v10240
  %v10353 = vpack.c.bf16 %v10239, %v10239
  %v10354 = vpack.c.bf16 %v10238, %v10238
  %v10355 = vpack.c.bf16 %v10237, %v10237
  %v10356 = vpack.c.bf16 %v10236, %v10236
  %v10357 = vpack.c.bf16 %v10235, %v10235
  %v10358 = vpack.c.bf16 %v10234, %v10234
  %v10359 = vpack.c.bf16 %v10233, %v10233
  %v10360 = vpack.c.bf16 %v10296, %v10296
  %v10361 = vrot.slane %v9849, 3
  %v10362 = vrot.slane %v9850, 3
  %v10363 = vrot.slane %v9851, 3
  %v10364 = vrot.slane %v9852, 3
  %v10365 = vrot.slane %v9853, 3
  %v10366 = vrot.slane %v9854, 3
  %v10367 = vrot.slane %v9855, 3
  %v10368 = vrot.slane %v9856, 3
  %v10369 = vrot.slane %v9857, 3
  %v10370 = vrot.slane %v9858, 3
  %v10371 = vrot.slane %v9859, 3
  %v10372 = vrot.slane %v9860, 3
  %v10373 = vrot.slane %v9861, 3
  %v10374 = vrot.slane %v9862, 3
  %v10375 = vrot.slane %v9863, 3
  %v10376 = vrot.slane %v9864, 3
  %v10377 = vrot.slane %v9865, 3
  %v10378 = vrot.slane %v9866, 3
  %v10379 = vrot.slane %v9867, 3
  %v10380 = vrot.slane %v9868, 3
  %v10381 = vrot.slane %v9869, 3
  %v10382 = vrot.slane %v9870, 3
  %v10383 = vrot.slane %v9871, 3
  %v10384 = vrot.slane %v9872, 3
  %v10385 = vrot.slane %v9873, 3
  %v10386 = vrot.slane %v9874, 3
  %v10387 = vrot.slane %v9875, 3
  %v10388 = vrot.slane %v9876, 3
  %v10389 = vrot.slane %v9877, 3
  %v10390 = vrot.slane %v9878, 3
  %v10391 = vrot.slane %v9879, 3
  %v10392 = vrot.slane %v9880, 3
  %v10393 = vrot.slane %v9881, 3
  %v10394 = vrot.slane %v9882, 3
  %v10395 = vrot.slane %v9883, 3
  %v10396 = vrot.slane %v9884, 3
  %v10397 = vrot.slane %v9885, 3
  %v10398 = vrot.slane %v9886, 3
  %v10399 = vrot.slane %v9887, 3
  %v10400 = vrot.slane %v9888, 3
  %v10401 = vrot.slane %v9889, 3
  %v10402 = vrot.slane %v9890, 3
  %v10403 = vrot.slane %v9891, 3
  %v10404 = vrot.slane %v9892, 3
  %v10405 = vrot.slane %v9893, 3
  %v10406 = vrot.slane %v9894, 3
  %v10407 = vrot.slane %v9895, 3
  %v10408 = vrot.slane %v9896, 3
  %v10409 = vrot.slane %v9897, 3
  %v10410 = vrot.slane %v9898, 3
  %v10411 = vrot.slane %v9899, 3
  %v10412 = vrot.slane %v9900, 3
  %v10413 = vrot.slane %v9901, 3
  %v10414 = vrot.slane %v9902, 3
  %v10415 = vrot.slane %v9903, 3
  %v10416 = vrot.slane %v9904, 3
  %v10417 = vrot.slane %v9905, 3
  %v10418 = vrot.slane %v9906, 3
  %v10419 = vrot.slane %v9907, 3
  %v10420 = vrot.slane %v9908, 3
  %v10421 = vrot.slane %v9909, 3
  %v10422 = vrot.slane %v9910, 3
  %v10423 = vrot.slane %v9911, 3
  %v10424 = vrot.slane %v9912, 3
  %v10425 = vsel %vm5688, %v10423, %v10424
  %v10426 = vsel %vm5688, %v10422, %v10423
  %v10427 = vsel %vm5688, %v10421, %v10422
  %v10428 = vsel %vm5688, %v10420, %v10421
  %v10429 = vsel %vm5688, %v10419, %v10420
  %v10430 = vsel %vm5688, %v10418, %v10419
  %v10431 = vsel %vm5688, %v10417, %v10418
  %v10432 = vsel %vm5688, %v10416, %v10417
  %v10433 = vsel %vm5688, %v10415, %v10416
  %v10434 = vsel %vm5688, %v10414, %v10415
  %v10435 = vsel %vm5688, %v10413, %v10414
  %v10436 = vsel %vm5688, %v10412, %v10413
  %v10437 = vsel %vm5688, %v10411, %v10412
  %v10438 = vsel %vm5688, %v10410, %v10411
  %v10439 = vsel %vm5688, %v10409, %v10410
  %v10440 = vsel %vm5688, %v10408, %v10409
  %v10441 = vsel %vm5688, %v10407, %v10408
  %v10442 = vsel %vm5688, %v10406, %v10407
  %v10443 = vsel %vm5688, %v10405, %v10406
  %v10444 = vsel %vm5688, %v10404, %v10405
  %v10445 = vsel %vm5688, %v10403, %v10404
  %v10446 = vsel %vm5688, %v10402, %v10403
  %v10447 = vsel %vm5688, %v10401, %v10402
  %v10448 = vsel %vm5688, %v10400, %v10401
  %v10449 = vsel %vm5688, %v10399, %v10400
  %v10450 = vsel %vm5688, %v10398, %v10399
  %v10451 = vsel %vm5688, %v10397, %v10398
  %v10452 = vsel %vm5688, %v10396, %v10397
  %v10453 = vsel %vm5688, %v10395, %v10396
  %v10454 = vsel %vm5688, %v10394, %v10395
  %v10455 = vsel %vm5688, %v10393, %v10394
  %v10456 = vsel %vm5688, %v10392, %v10393
  %v10457 = vsel %vm5688, %v10391, %v10392
  %v10458 = vsel %vm5688, %v10390, %v10391
  %v10459 = vsel %vm5688, %v10389, %v10390
  %v10460 = vsel %vm5688, %v10388, %v10389
  %v10461 = vsel %vm5688, %v10387, %v10388
  %v10462 = vsel %vm5688, %v10386, %v10387
  %v10463 = vsel %vm5688, %v10385, %v10386
  %v10464 = vsel %vm5688, %v10384, %v10385
  %v10465 = vsel %vm5688, %v10383, %v10384
  %v10466 = vsel %vm5688, %v10382, %v10383
  %v10467 = vsel %vm5688, %v10381, %v10382
  %v10468 = vsel %vm5688, %v10380, %v10381
  %v10469 = vsel %vm5688, %v10379, %v10380
  %v10470 = vsel %vm5688, %v10378, %v10379
  %v10471 = vsel %vm5688, %v10377, %v10378
  %v10472 = vsel %vm5688, %v10376, %v10377
  %v10473 = vsel %vm5688, %v10375, %v10376
  %v10474 = vsel %vm5688, %v10374, %v10375
  %v10475 = vsel %vm5688, %v10373, %v10374
  %v10476 = vsel %vm5688, %v10372, %v10373
  %v10477 = vsel %vm5688, %v10371, %v10372
  %v10478 = vsel %vm5688, %v10370, %v10371
  %v10479 = vsel %vm5688, %v10369, %v10370
  %v10480 = vsel %vm5688, %v10368, %v10369
  %v10481 = vsel %vm5688, %v10367, %v10368
  %v10482 = vsel %vm5688, %v10366, %v10367
  %v10483 = vsel %vm5688, %v10365, %v10366
  %v10484 = vsel %vm5688, %v10364, %v10365
  %v10485 = vsel %vm5688, %v10363, %v10364
  %v10486 = vsel %vm5688, %v10362, %v10363
  %v10487 = vsel %vm5688, %v10361, %v10362
  %v10488 = vsel %vm5688, %v10424, %v10361
  %v10489 = vpack.c.bf16 %v10487, %v10487
  %v10490 = vpack.c.bf16 %v10486, %v10486
  %v10491 = vpack.c.bf16 %v10485, %v10485
  %v10492 = vpack.c.bf16 %v10484, %v10484
  %v10493 = vpack.c.bf16 %v10483, %v10483
  %v10494 = vpack.c.bf16 %v10482, %v10482
  %v10495 = vpack.c.bf16 %v10481, %v10481
  %v10496 = vpack.c.bf16 %v10480, %v10480
  %v10497 = vpack.c.bf16 %v10479, %v10479
  %v10498 = vpack.c.bf16 %v10478, %v10478
  %v10499 = vpack.c.bf16 %v10477, %v10477
  %v10500 = vpack.c.bf16 %v10476, %v10476
  %v10501 = vpack.c.bf16 %v10475, %v10475
  %v10502 = vpack.c.bf16 %v10474, %v10474
  %v10503 = vpack.c.bf16 %v10473, %v10473
  %v10504 = vpack.c.bf16 %v10472, %v10472
  %v10505 = vpack.c.bf16 %v10471, %v10471
  %v10506 = vpack.c.bf16 %v10470, %v10470
  %v10507 = vpack.c.bf16 %v10469, %v10469
  %v10508 = vpack.c.bf16 %v10468, %v10468
  %v10509 = vpack.c.bf16 %v10467, %v10467
  %v10510 = vpack.c.bf16 %v10466, %v10466
  %v10511 = vpack.c.bf16 %v10465, %v10465
  %v10512 = vpack.c.bf16 %v10464, %v10464
  %v10513 = vpack.c.bf16 %v10463, %v10463
  %v10514 = vpack.c.bf16 %v10462, %v10462
  %v10515 = vpack.c.bf16 %v10461, %v10461
  %v10516 = vpack.c.bf16 %v10460, %v10460
  %v10517 = vpack.c.bf16 %v10459, %v10459
  %v10518 = vpack.c.bf16 %v10458, %v10458
  %v10519 = vpack.c.bf16 %v10457, %v10457
  %v10520 = vpack.c.bf16 %v10456, %v10456
  %v10521 = vpack.c.bf16 %v10455, %v10455
  %v10522 = vpack.c.bf16 %v10454, %v10454
  %v10523 = vpack.c.bf16 %v10453, %v10453
  %v10524 = vpack.c.bf16 %v10452, %v10452
  %v10525 = vpack.c.bf16 %v10451, %v10451
  %v10526 = vpack.c.bf16 %v10450, %v10450
  %v10527 = vpack.c.bf16 %v10449, %v10449
  %v10528 = vpack.c.bf16 %v10448, %v10448
  %v10529 = vpack.c.bf16 %v10447, %v10447
  %v10530 = vpack.c.bf16 %v10446, %v10446
  %v10531 = vpack.c.bf16 %v10445, %v10445
  %v10532 = vpack.c.bf16 %v10444, %v10444
  %v10533 = vpack.c.bf16 %v10443, %v10443
  %v10534 = vpack.c.bf16 %v10442, %v10442
  %v10535 = vpack.c.bf16 %v10441, %v10441
  %v10536 = vpack.c.bf16 %v10440, %v10440
  %v10537 = vpack.c.bf16 %v10439, %v10439
  %v10538 = vpack.c.bf16 %v10438, %v10438
  %v10539 = vpack.c.bf16 %v10437, %v10437
  %v10540 = vpack.c.bf16 %v10436, %v10436
  %v10541 = vpack.c.bf16 %v10435, %v10435
  %v10542 = vpack.c.bf16 %v10434, %v10434
  %v10543 = vpack.c.bf16 %v10433, %v10433
  %v10544 = vpack.c.bf16 %v10432, %v10432
  %v10545 = vpack.c.bf16 %v10431, %v10431
  %v10546 = vpack.c.bf16 %v10430, %v10430
  %v10547 = vpack.c.bf16 %v10429, %v10429
  %v10548 = vpack.c.bf16 %v10428, %v10428
  %v10549 = vpack.c.bf16 %v10427, %v10427
  %v10550 = vpack.c.bf16 %v10426, %v10426
  %v10551 = vpack.c.bf16 %v10425, %v10425
  %v10552 = vpack.c.bf16 %v10488, %v10488
  %v10553 = vrot.slane %v9849, 4
  %v10554 = vrot.slane %v9850, 4
  %v10555 = vrot.slane %v9851, 4
  %v10556 = vrot.slane %v9852, 4
  %v10557 = vrot.slane %v9853, 4
  %v10558 = vrot.slane %v9854, 4
  %v10559 = vrot.slane %v9855, 4
  %v10560 = vrot.slane %v9856, 4
  %v10561 = vrot.slane %v9857, 4
  %v10562 = vrot.slane %v9858, 4
  %v10563 = vrot.slane %v9859, 4
  %v10564 = vrot.slane %v9860, 4
  %v10565 = vrot.slane %v9861, 4
  %v10566 = vrot.slane %v9862, 4
  %v10567 = vrot.slane %v9863, 4
  %v10568 = vrot.slane %v9864, 4
  %v10569 = vrot.slane %v9865, 4
  %v10570 = vrot.slane %v9866, 4
  %v10571 = vrot.slane %v9867, 4
  %v10572 = vrot.slane %v9868, 4
  %v10573 = vrot.slane %v9869, 4
  %v10574 = vrot.slane %v9870, 4
  %v10575 = vrot.slane %v9871, 4
  %v10576 = vrot.slane %v9872, 4
  %v10577 = vrot.slane %v9873, 4
  %v10578 = vrot.slane %v9874, 4
  %v10579 = vrot.slane %v9875, 4
  %v10580 = vrot.slane %v9876, 4
  %v10581 = vrot.slane %v9877, 4
  %v10582 = vrot.slane %v9878, 4
  %v10583 = vrot.slane %v9879, 4
  %v10584 = vrot.slane %v9880, 4
  %v10585 = vrot.slane %v9881, 4
  %v10586 = vrot.slane %v9882, 4
  %v10587 = vrot.slane %v9883, 4
  %v10588 = vrot.slane %v9884, 4
  %v10589 = vrot.slane %v9885, 4
  %v10590 = vrot.slane %v9886, 4
  %v10591 = vrot.slane %v9887, 4
  %v10592 = vrot.slane %v9888, 4
  %v10593 = vrot.slane %v9889, 4
  %v10594 = vrot.slane %v9890, 4
  %v10595 = vrot.slane %v9891, 4
  %v10596 = vrot.slane %v9892, 4
  %v10597 = vrot.slane %v9893, 4
  %v10598 = vrot.slane %v9894, 4
  %v10599 = vrot.slane %v9895, 4
  %v10600 = vrot.slane %v9896, 4
  %v10601 = vrot.slane %v9897, 4
  %v10602 = vrot.slane %v9898, 4
  %v10603 = vrot.slane %v9899, 4
  %v10604 = vrot.slane %v9900, 4
  %v10605 = vrot.slane %v9901, 4
  %v10606 = vrot.slane %v9902, 4
  %v10607 = vrot.slane %v9903, 4
  %v10608 = vrot.slane %v9904, 4
  %v10609 = vrot.slane %v9905, 4
  %v10610 = vrot.slane %v9906, 4
  %v10611 = vrot.slane %v9907, 4
  %v10612 = vrot.slane %v9908, 4
  %v10613 = vrot.slane %v9909, 4
  %v10614 = vrot.slane %v9910, 4
  %v10615 = vrot.slane %v9911, 4
  %v10616 = vrot.slane %v9912, 4
  %v10617 = vsel %vm5881, %v10615, %v10616
  %v10618 = vsel %vm5881, %v10614, %v10615
  %v10619 = vsel %vm5881, %v10613, %v10614
  %v10620 = vsel %vm5881, %v10612, %v10613
  %v10621 = vsel %vm5881, %v10611, %v10612
  %v10622 = vsel %vm5881, %v10610, %v10611
  %v10623 = vsel %vm5881, %v10609, %v10610
  %v10624 = vsel %vm5881, %v10608, %v10609
  %v10625 = vsel %vm5881, %v10607, %v10608
  %v10626 = vsel %vm5881, %v10606, %v10607
  %v10627 = vsel %vm5881, %v10605, %v10606
  %v10628 = vsel %vm5881, %v10604, %v10605
  %v10629 = vsel %vm5881, %v10603, %v10604
  %v10630 = vsel %vm5881, %v10602, %v10603
  %v10631 = vsel %vm5881, %v10601, %v10602
  %v10632 = vsel %vm5881, %v10600, %v10601
  %v10633 = vsel %vm5881, %v10599, %v10600
  %v10634 = vsel %vm5881, %v10598, %v10599
  %v10635 = vsel %vm5881, %v10597, %v10598
  %v10636 = vsel %vm5881, %v10596, %v10597
  %v10637 = vsel %vm5881, %v10595, %v10596
  %v10638 = vsel %vm5881, %v10594, %v10595
  %v10639 = vsel %vm5881, %v10593, %v10594
  %v10640 = vsel %vm5881, %v10592, %v10593
  %v10641 = vsel %vm5881, %v10591, %v10592
  %v10642 = vsel %vm5881, %v10590, %v10591
  %v10643 = vsel %vm5881, %v10589, %v10590
  %v10644 = vsel %vm5881, %v10588, %v10589
  %v10645 = vsel %vm5881, %v10587, %v10588
  %v10646 = vsel %vm5881, %v10586, %v10587
  %v10647 = vsel %vm5881, %v10585, %v10586
  %v10648 = vsel %vm5881, %v10584, %v10585
  %v10649 = vsel %vm5881, %v10583, %v10584
  %v10650 = vsel %vm5881, %v10582, %v10583
  %v10651 = vsel %vm5881, %v10581, %v10582
  %v10652 = vsel %vm5881, %v10580, %v10581
  %v10653 = vsel %vm5881, %v10579, %v10580
  %v10654 = vsel %vm5881, %v10578, %v10579
  %v10655 = vsel %vm5881, %v10577, %v10578
  %v10656 = vsel %vm5881, %v10576, %v10577
  %v10657 = vsel %vm5881, %v10575, %v10576
  %v10658 = vsel %vm5881, %v10574, %v10575
  %v10659 = vsel %vm5881, %v10573, %v10574
  %v10660 = vsel %vm5881, %v10572, %v10573
  %v10661 = vsel %vm5881, %v10571, %v10572
  %v10662 = vsel %vm5881, %v10570, %v10571
  %v10663 = vsel %vm5881, %v10569, %v10570
  %v10664 = vsel %vm5881, %v10568, %v10569
  %v10665 = vsel %vm5881, %v10567, %v10568
  %v10666 = vsel %vm5881, %v10566, %v10567
  %v10667 = vsel %vm5881, %v10565, %v10566
  %v10668 = vsel %vm5881, %v10564, %v10565
  %v10669 = vsel %vm5881, %v10563, %v10564
  %v10670 = vsel %vm5881, %v10562, %v10563
  %v10671 = vsel %vm5881, %v10561, %v10562
  %v10672 = vsel %vm5881, %v10560, %v10561
  %v10673 = vsel %vm5881, %v10559, %v10560
  %v10674 = vsel %vm5881, %v10558, %v10559
  %v10675 = vsel %vm5881, %v10557, %v10558
  %v10676 = vsel %vm5881, %v10556, %v10557
  %v10677 = vsel %vm5881, %v10555, %v10556
  %v10678 = vsel %vm5881, %v10554, %v10555
  %v10679 = vsel %vm5881, %v10553, %v10554
  %v10680 = vsel %vm5881, %v10616, %v10553
  %v10681 = vpack.c.bf16 %v10679, %v10679
  %v10682 = vpack.c.bf16 %v10678, %v10678
  %v10683 = vpack.c.bf16 %v10677, %v10677
  %v10684 = vpack.c.bf16 %v10676, %v10676
  %v10685 = vpack.c.bf16 %v10675, %v10675
  %v10686 = vpack.c.bf16 %v10674, %v10674
  %v10687 = vpack.c.bf16 %v10673, %v10673
  %v10688 = vpack.c.bf16 %v10672, %v10672
  %v10689 = vpack.c.bf16 %v10671, %v10671
  %v10690 = vpack.c.bf16 %v10670, %v10670
  %v10691 = vpack.c.bf16 %v10669, %v10669
  %v10692 = vpack.c.bf16 %v10668, %v10668
  %v10693 = vpack.c.bf16 %v10667, %v10667
  %v10694 = vpack.c.bf16 %v10666, %v10666
  %v10695 = vpack.c.bf16 %v10665, %v10665
  %v10696 = vpack.c.bf16 %v10664, %v10664
  %v10697 = vpack.c.bf16 %v10663, %v10663
  %v10698 = vpack.c.bf16 %v10662, %v10662
  %v10699 = vpack.c.bf16 %v10661, %v10661
  %v10700 = vpack.c.bf16 %v10660, %v10660
  %v10701 = vpack.c.bf16 %v10659, %v10659
  %v10702 = vpack.c.bf16 %v10658, %v10658
  %v10703 = vpack.c.bf16 %v10657, %v10657
  %v10704 = vpack.c.bf16 %v10656, %v10656
  %v10705 = vpack.c.bf16 %v10655, %v10655
  %v10706 = vpack.c.bf16 %v10654, %v10654
  %v10707 = vpack.c.bf16 %v10653, %v10653
  %v10708 = vpack.c.bf16 %v10652, %v10652
  %v10709 = vpack.c.bf16 %v10651, %v10651
  %v10710 = vpack.c.bf16 %v10650, %v10650
  %v10711 = vpack.c.bf16 %v10649, %v10649
  %v10712 = vpack.c.bf16 %v10648, %v10648
  %v10713 = vpack.c.bf16 %v10647, %v10647
  %v10714 = vpack.c.bf16 %v10646, %v10646
  %v10715 = vpack.c.bf16 %v10645, %v10645
  %v10716 = vpack.c.bf16 %v10644, %v10644
  %v10717 = vpack.c.bf16 %v10643, %v10643
  %v10718 = vpack.c.bf16 %v10642, %v10642
  %v10719 = vpack.c.bf16 %v10641, %v10641
  %v10720 = vpack.c.bf16 %v10640, %v10640
  %v10721 = vpack.c.bf16 %v10639, %v10639
  %v10722 = vpack.c.bf16 %v10638, %v10638
  %v10723 = vpack.c.bf16 %v10637, %v10637
  %v10724 = vpack.c.bf16 %v10636, %v10636
  %v10725 = vpack.c.bf16 %v10635, %v10635
  %v10726 = vpack.c.bf16 %v10634, %v10634
  %v10727 = vpack.c.bf16 %v10633, %v10633
  %v10728 = vpack.c.bf16 %v10632, %v10632
  %v10729 = vpack.c.bf16 %v10631, %v10631
  %v10730 = vpack.c.bf16 %v10630, %v10630
  %v10731 = vpack.c.bf16 %v10629, %v10629
  %v10732 = vpack.c.bf16 %v10628, %v10628
  %v10733 = vpack.c.bf16 %v10627, %v10627
  %v10734 = vpack.c.bf16 %v10626, %v10626
  %v10735 = vpack.c.bf16 %v10625, %v10625
  %v10736 = vpack.c.bf16 %v10624, %v10624
  %v10737 = vpack.c.bf16 %v10623, %v10623
  %v10738 = vpack.c.bf16 %v10622, %v10622
  %v10739 = vpack.c.bf16 %v10621, %v10621
  %v10740 = vpack.c.bf16 %v10620, %v10620
  %v10741 = vpack.c.bf16 %v10619, %v10619
  %v10742 = vpack.c.bf16 %v10618, %v10618
  %v10743 = vpack.c.bf16 %v10617, %v10617
  %v10744 = vpack.c.bf16 %v10680, %v10680
  %v10809 = vunpack.c.l.b16 %v9913
  %v10810 = vunpack.c.l.b16 %v9914
  %v10811 = vunpack.c.l.b16 %v9915
  %v10812 = vunpack.c.l.b16 %v9916
  %v10813 = vunpack.c.l.b16 %v9917
  %v10814 = vunpack.c.l.b16 %v9918
  %v10815 = vunpack.c.l.b16 %v9919
  %v10816 = vunpack.c.l.b16 %v9920
  %v10817 = vunpack.c.l.b16 %v9921
  %v10818 = vunpack.c.l.b16 %v9922
  %v10819 = vunpack.c.l.b16 %v9923
  %v10820 = vunpack.c.l.b16 %v9924
  %v10821 = vunpack.c.l.b16 %v9925
  %v10822 = vunpack.c.l.b16 %v9926
  %v10823 = vunpack.c.l.b16 %v9927
  %v10824 = vunpack.c.l.b16 %v9928
  %v10825 = vunpack.c.l.b16 %v9929
  %v10826 = vunpack.c.l.b16 %v9930
  %v10827 = vunpack.c.l.b16 %v9931
  %v10828 = vunpack.c.l.b16 %v9932
  %v10829 = vunpack.c.l.b16 %v9933
  %v10830 = vunpack.c.l.b16 %v9934
  %v10831 = vunpack.c.l.b16 %v9935
  %v10832 = vunpack.c.l.b16 %v9936
  %v10833 = vunpack.c.l.b16 %v9937
  %v10834 = vunpack.c.l.b16 %v9938
  %v10835 = vunpack.c.l.b16 %v9939
  %v10836 = vunpack.c.l.b16 %v9940
  %v10837 = vunpack.c.l.b16 %v9941
  %v10838 = vunpack.c.l.b16 %v9942
  %v10839 = vunpack.c.l.b16 %v9943
  %v10840 = vunpack.c.l.b16 %v9944
  %v10841 = vunpack.c.l.b16 %v9945
  %v10842 = vunpack.c.l.b16 %v9946
  %v10843 = vunpack.c.l.b16 %v9947
  %v10844 = vunpack.c.l.b16 %v9948
  %v10845 = vunpack.c.l.b16 %v9949
  %v10846 = vunpack.c.l.b16 %v9950
  %v10847 = vunpack.c.l.b16 %v9951
  %v10848 = vunpack.c.l.b16 %v9952
  %v10849 = vunpack.c.l.b16 %v9953
  %v10850 = vunpack.c.l.b16 %v9954
  %v10851 = vunpack.c.l.b16 %v9955
  %v10852 = vunpack.c.l.b16 %v9956
  %v10853 = vunpack.c.l.b16 %v9957
  %v10854 = vunpack.c.l.b16 %v9958
  %v10855 = vunpack.c.l.b16 %v9959
  %v10856 = vunpack.c.l.b16 %v9960
  %v10857 = vunpack.c.l.b16 %v9961
  %v10858 = vunpack.c.l.b16 %v9962
  %v10859 = vunpack.c.l.b16 %v9963
  %v10860 = vunpack.c.l.b16 %v9964
  %v10861 = vunpack.c.l.b16 %v9965
  %v10862 = vunpack.c.l.b16 %v9966
  %v10863 = vunpack.c.l.b16 %v9967
  %v10864 = vunpack.c.l.b16 %v9968
  %v10865 = vunpack.c.l.b16 %v9969
  %v10866 = vunpack.c.l.b16 %v9970
  %v10867 = vunpack.c.l.b16 %v9971
  %v10868 = vunpack.c.l.b16 %v9972
  %v10869 = vunpack.c.l.b16 %v9973
  %v10870 = vunpack.c.l.b16 %v9974
  %v10871 = vunpack.c.l.b16 %v9975
  %v10872 = vunpack.c.l.b16 %v9976
  %v10873 = vpack.c.b16 %v10810, %v10809
  %v10874 = vpack.c.b16 %v10812, %v10811
  %v10875 = vpack.c.b16 %v10814, %v10813
  %v10876 = vpack.c.b16 %v10816, %v10815
  %v10877 = vpack.c.b16 %v10818, %v10817
  %v10878 = vpack.c.b16 %v10820, %v10819
  %v10879 = vpack.c.b16 %v10822, %v10821
  %v10880 = vpack.c.b16 %v10824, %v10823
  %v10881 = vpack.c.b16 %v10826, %v10825
  %v10882 = vpack.c.b16 %v10828, %v10827
  %v10883 = vpack.c.b16 %v10830, %v10829
  %v10884 = vpack.c.b16 %v10832, %v10831
  %v10885 = vpack.c.b16 %v10834, %v10833
  %v10886 = vpack.c.b16 %v10836, %v10835
  %v10887 = vpack.c.b16 %v10838, %v10837
  %v10888 = vpack.c.b16 %v10840, %v10839
  %v10889 = vpack.c.b16 %v10842, %v10841
  %v10890 = vpack.c.b16 %v10844, %v10843
  %v10891 = vpack.c.b16 %v10846, %v10845
  %v10892 = vpack.c.b16 %v10848, %v10847
  %v10893 = vpack.c.b16 %v10850, %v10849
  %v10894 = vpack.c.b16 %v10852, %v10851
  %v10895 = vpack.c.b16 %v10854, %v10853
  %v10896 = vpack.c.b16 %v10856, %v10855
  %v10897 = vpack.c.b16 %v10858, %v10857
  %v10898 = vpack.c.b16 %v10860, %v10859
  %v10899 = vpack.c.b16 %v10862, %v10861
  %v10900 = vpack.c.b16 %v10864, %v10863
  %v10901 = vpack.c.b16 %v10866, %v10865
  %v10902 = vpack.c.b16 %v10868, %v10867
  %v10903 = vpack.c.b16 %v10870, %v10869
  %v10904 = vpack.c.b16 %v10872, %v10871
  %v10969 = vunpack.c.l.b16 %v10105
  %v10970 = vunpack.c.l.b16 %v10106
  %v10971 = vunpack.c.l.b16 %v10107
  %v10972 = vunpack.c.l.b16 %v10108
  %v10973 = vunpack.c.l.b16 %v10109
  %v10974 = vunpack.c.l.b16 %v10110
  %v10975 = vunpack.c.l.b16 %v10111
  %v10976 = vunpack.c.l.b16 %v10112
  %v10977 = vunpack.c.l.b16 %v10113
  %v10978 = vunpack.c.l.b16 %v10114
  %v10979 = vunpack.c.l.b16 %v10115
  %v10980 = vunpack.c.l.b16 %v10116
  %v10981 = vunpack.c.l.b16 %v10117
  %v10982 = vunpack.c.l.b16 %v10118
  %v10983 = vunpack.c.l.b16 %v10119
  %v10984 = vunpack.c.l.b16 %v10120
  %v10985 = vunpack.c.l.b16 %v10121
  %v10986 = vunpack.c.l.b16 %v10122
  %v10987 = vunpack.c.l.b16 %v10123
  %v10988 = vunpack.c.l.b16 %v10124
  %v10989 = vunpack.c.l.b16 %v10125
  %v10990 = vunpack.c.l.b16 %v10126
  %v10991 = vunpack.c.l.b16 %v10127
  %v10992 = vunpack.c.l.b16 %v10128
  %v10993 = vunpack.c.l.b16 %v10129
  %v10994 = vunpack.c.l.b16 %v10130
  %v10995 = vunpack.c.l.b16 %v10131
  %v10996 = vunpack.c.l.b16 %v10132
  %v10997 = vunpack.c.l.b16 %v10133
  %v10998 = vunpack.c.l.b16 %v10134
  %v10999 = vunpack.c.l.b16 %v10135
  %v11000 = vunpack.c.l.b16 %v10136
  %v11001 = vunpack.c.l.b16 %v10137
  %v11002 = vunpack.c.l.b16 %v10138
  %v11003 = vunpack.c.l.b16 %v10139
  %v11004 = vunpack.c.l.b16 %v10140
  %v11005 = vunpack.c.l.b16 %v10141
  %v11006 = vunpack.c.l.b16 %v10142
  %v11007 = vunpack.c.l.b16 %v10143
  %v11008 = vunpack.c.l.b16 %v10144
  %v11009 = vunpack.c.l.b16 %v10145
  %v11010 = vunpack.c.l.b16 %v10146
  %v11011 = vunpack.c.l.b16 %v10147
  %v11012 = vunpack.c.l.b16 %v10148
  %v11013 = vunpack.c.l.b16 %v10149
  %v11014 = vunpack.c.l.b16 %v10150
  %v11015 = vunpack.c.l.b16 %v10151
  %v11016 = vunpack.c.l.b16 %v10152
  %v11017 = vunpack.c.l.b16 %v10153
  %v11018 = vunpack.c.l.b16 %v10154
  %v11019 = vunpack.c.l.b16 %v10155
  %v11020 = vunpack.c.l.b16 %v10156
  %v11021 = vunpack.c.l.b16 %v10157
  %v11022 = vunpack.c.l.b16 %v10158
  %v11023 = vunpack.c.l.b16 %v10159
  %v11024 = vunpack.c.l.b16 %v10160
  %v11025 = vunpack.c.l.b16 %v10161
  %v11026 = vunpack.c.l.b16 %v10162
  %v11027 = vunpack.c.l.b16 %v10163
  %v11028 = vunpack.c.l.b16 %v10164
  %v11029 = vunpack.c.l.b16 %v10165
  %v11030 = vunpack.c.l.b16 %v10166
  %v11031 = vunpack.c.l.b16 %v10167
  %v11032 = vunpack.c.l.b16 %v10168
  %v11033 = vpack.c.b16 %v10970, %v10969
  %v11034 = vpack.c.b16 %v10972, %v10971
  %v11035 = vpack.c.b16 %v10974, %v10973
  %v11036 = vpack.c.b16 %v10976, %v10975
  %v11037 = vpack.c.b16 %v10978, %v10977
  %v11038 = vpack.c.b16 %v10980, %v10979
  %v11039 = vpack.c.b16 %v10982, %v10981
  %v11040 = vpack.c.b16 %v10984, %v10983
  %v11041 = vpack.c.b16 %v10986, %v10985
  %v11042 = vpack.c.b16 %v10988, %v10987
  %v11043 = vpack.c.b16 %v10990, %v10989
  %v11044 = vpack.c.b16 %v10992, %v10991
  %v11045 = vpack.c.b16 %v10994, %v10993
  %v11046 = vpack.c.b16 %v10996, %v10995
  %v11047 = vpack.c.b16 %v10998, %v10997
  %v11048 = vpack.c.b16 %v11000, %v10999
  %v11049 = vpack.c.b16 %v11002, %v11001
  %v11050 = vpack.c.b16 %v11004, %v11003
  %v11051 = vpack.c.b16 %v11006, %v11005
  %v11052 = vpack.c.b16 %v11008, %v11007
  %v11053 = vpack.c.b16 %v11010, %v11009
  %v11054 = vpack.c.b16 %v11012, %v11011
  %v11055 = vpack.c.b16 %v11014, %v11013
  %v11056 = vpack.c.b16 %v11016, %v11015
  %v11057 = vpack.c.b16 %v11018, %v11017
  %v11058 = vpack.c.b16 %v11020, %v11019
  %v11059 = vpack.c.b16 %v11022, %v11021
  %v11060 = vpack.c.b16 %v11024, %v11023
  %v11061 = vpack.c.b16 %v11026, %v11025
  %v11062 = vpack.c.b16 %v11028, %v11027
  %v11063 = vpack.c.b16 %v11030, %v11029
  %v11064 = vpack.c.b16 %v11032, %v11031
  %11065 = vrot.lane.b32.xlu0 %v11033, 64
  %v11066 = vpop.permute.xlu0 %11065
  %11067 = vrot.lane.b32.xlu0 %v11034, 64
  %v11068 = vpop.permute.xlu0 %11067
  %11069 = vrot.lane.b32.xlu0 %v11035, 64
  %v11070 = vpop.permute.xlu0 %11069
  %11071 = vrot.lane.b32.xlu0 %v11036, 64
  %v11072 = vpop.permute.xlu0 %11071
  %11073 = vrot.lane.b32.xlu0 %v11037, 64
  %v11074 = vpop.permute.xlu0 %11073
  %11075 = vrot.lane.b32.xlu0 %v11038, 64
  %v11076 = vpop.permute.xlu0 %11075
  %11077 = vrot.lane.b32.xlu0 %v11039, 64
  %v11078 = vpop.permute.xlu0 %11077
  %11079 = vrot.lane.b32.xlu0 %v11040, 64
  %v11080 = vpop.permute.xlu0 %11079
  %11081 = vrot.lane.b32.xlu0 %v11041, 64
  %v11082 = vpop.permute.xlu0 %11081
  %11083 = vrot.lane.b32.xlu0 %v11042, 64
  %v11084 = vpop.permute.xlu0 %11083
  %11085 = vrot.lane.b32.xlu0 %v11043, 64
  %v11086 = vpop.permute.xlu0 %11085
  %11087 = vrot.lane.b32.xlu0 %v11044, 64
  %v11088 = vpop.permute.xlu0 %11087
  %11089 = vrot.lane.b32.xlu0 %v11045, 64
  %v11090 = vpop.permute.xlu0 %11089
  %11091 = vrot.lane.b32.xlu0 %v11046, 64
  %v11092 = vpop.permute.xlu0 %11091
  %11093 = vrot.lane.b32.xlu0 %v11047, 64
  %v11094 = vpop.permute.xlu0 %11093
  %11095 = vrot.lane.b32.xlu0 %v11048, 64
  %v11096 = vpop.permute.xlu0 %11095
  %11097 = vrot.lane.b32.xlu0 %v11049, 64
  %v11098 = vpop.permute.xlu0 %11097
  %11099 = vrot.lane.b32.xlu0 %v11050, 64
  %v11100 = vpop.permute.xlu0 %11099
  %11101 = vrot.lane.b32.xlu0 %v11051, 64
  %v11102 = vpop.permute.xlu0 %11101
  %11103 = vrot.lane.b32.xlu0 %v11052, 64
  %v11104 = vpop.permute.xlu0 %11103
  %11105 = vrot.lane.b32.xlu0 %v11053, 64
  %v11106 = vpop.permute.xlu0 %11105
  %11107 = vrot.lane.b32.xlu0 %v11054, 64
  %v11108 = vpop.permute.xlu0 %11107
  %11109 = vrot.lane.b32.xlu0 %v11055, 64
  %v11110 = vpop.permute.xlu0 %11109
  %11111 = vrot.lane.b32.xlu0 %v11056, 64
  %v11112 = vpop.permute.xlu0 %11111
  %11113 = vrot.lane.b32.xlu0 %v11057, 64
  %v11114 = vpop.permute.xlu0 %11113
  %11115 = vrot.lane.b32.xlu0 %v11058, 64
  %v11116 = vpop.permute.xlu0 %11115
  %11117 = vrot.lane.b32.xlu0 %v11059, 64
  %v11118 = vpop.permute.xlu0 %11117
  %11119 = vrot.lane.b32.xlu0 %v11060, 64
  %v11120 = vpop.permute.xlu0 %11119
  %11121 = vrot.lane.b32.xlu0 %v11061, 64
  %v11122 = vpop.permute.xlu0 %11121
  %11123 = vrot.lane.b32.xlu0 %v11062, 64
  %v11124 = vpop.permute.xlu0 %11123
  %11125 = vrot.lane.b32.xlu0 %v11063, 64
  %v11126 = vpop.permute.xlu0 %11125
  %11127 = vrot.lane.b32.xlu0 %v11064, 64
  %v11128 = vpop.permute.xlu0 %11127
  %v11193 = vunpack.c.l.b16 %v10297
  %v11194 = vunpack.c.l.b16 %v10298
  %v11195 = vunpack.c.l.b16 %v10299
  %v11196 = vunpack.c.l.b16 %v10300
  %v11197 = vunpack.c.l.b16 %v10301
  %v11198 = vunpack.c.l.b16 %v10302
  %v11199 = vunpack.c.l.b16 %v10303
  %v11200 = vunpack.c.l.b16 %v10304
  %v11201 = vunpack.c.l.b16 %v10305
  %v11202 = vunpack.c.l.b16 %v10306
  %v11203 = vunpack.c.l.b16 %v10307
  %v11204 = vunpack.c.l.b16 %v10308
  %v11205 = vunpack.c.l.b16 %v10309
  %v11206 = vunpack.c.l.b16 %v10310
  %v11207 = vunpack.c.l.b16 %v10311
  %v11208 = vunpack.c.l.b16 %v10312
  %v11209 = vunpack.c.l.b16 %v10313
  %v11210 = vunpack.c.l.b16 %v10314
  %v11211 = vunpack.c.l.b16 %v10315
  %v11212 = vunpack.c.l.b16 %v10316
  %v11213 = vunpack.c.l.b16 %v10317
  %v11214 = vunpack.c.l.b16 %v10318
  %v11215 = vunpack.c.l.b16 %v10319
  %v11216 = vunpack.c.l.b16 %v10320
  %v11217 = vunpack.c.l.b16 %v10321
  %v11218 = vunpack.c.l.b16 %v10322
  %v11219 = vunpack.c.l.b16 %v10323
  %v11220 = vunpack.c.l.b16 %v10324
  %v11221 = vunpack.c.l.b16 %v10325
  %v11222 = vunpack.c.l.b16 %v10326
  %v11223 = vunpack.c.l.b16 %v10327
  %v11224 = vunpack.c.l.b16 %v10328
  %v11225 = vunpack.c.l.b16 %v10329
  %v11226 = vunpack.c.l.b16 %v10330
  %v11227 = vunpack.c.l.b16 %v10331
  %v11228 = vunpack.c.l.b16 %v10332
  %v11229 = vunpack.c.l.b16 %v10333
  %v11230 = vunpack.c.l.b16 %v10334
  %v11231 = vunpack.c.l.b16 %v10335
  %v11232 = vunpack.c.l.b16 %v10336
  %v11233 = vunpack.c.l.b16 %v10337
  %v11234 = vunpack.c.l.b16 %v10338
  %v11235 = vunpack.c.l.b16 %v10339
  %v11236 = vunpack.c.l.b16 %v10340
  %v11237 = vunpack.c.l.b16 %v10341
  %v11238 = vunpack.c.l.b16 %v10342
  %v11239 = vunpack.c.l.b16 %v10343
  %v11240 = vunpack.c.l.b16 %v10344
  %v11241 = vunpack.c.l.b16 %v10345
  %v11242 = vunpack.c.l.b16 %v10346
  %v11243 = vunpack.c.l.b16 %v10347
  %v11244 = vunpack.c.l.b16 %v10348
  %v11245 = vunpack.c.l.b16 %v10349
  %v11246 = vunpack.c.l.b16 %v10350
  %v11247 = vunpack.c.l.b16 %v10351
  %v11248 = vunpack.c.l.b16 %v10352
  %v11249 = vunpack.c.l.b16 %v10353
  %v11250 = vunpack.c.l.b16 %v10354
  %v11251 = vunpack.c.l.b16 %v10355
  %v11252 = vunpack.c.l.b16 %v10356
  %v11253 = vunpack.c.l.b16 %v10357
  %v11254 = vunpack.c.l.b16 %v10358
  %v11255 = vunpack.c.l.b16 %v10359
  %v11256 = vunpack.c.l.b16 %v10360
  %v11257 = vpack.c.b16 %v11194, %v11193
  %v11258 = vpack.c.b16 %v11196, %v11195
  %v11259 = vpack.c.b16 %v11198, %v11197
  %v11260 = vpack.c.b16 %v11200, %v11199
  %v11261 = vpack.c.b16 %v11202, %v11201
  %v11262 = vpack.c.b16 %v11204, %v11203
  %v11263 = vpack.c.b16 %v11206, %v11205
  %v11264 = vpack.c.b16 %v11208, %v11207
  %v11265 = vpack.c.b16 %v11210, %v11209
  %v11266 = vpack.c.b16 %v11212, %v11211
  %v11267 = vpack.c.b16 %v11214, %v11213
  %v11268 = vpack.c.b16 %v11216, %v11215
  %v11269 = vpack.c.b16 %v11218, %v11217
  %v11270 = vpack.c.b16 %v11220, %v11219
  %v11271 = vpack.c.b16 %v11222, %v11221
  %v11272 = vpack.c.b16 %v11224, %v11223
  %v11273 = vpack.c.b16 %v11226, %v11225
  %v11274 = vpack.c.b16 %v11228, %v11227
  %v11275 = vpack.c.b16 %v11230, %v11229
  %v11276 = vpack.c.b16 %v11232, %v11231
  %v11277 = vpack.c.b16 %v11234, %v11233
  %v11278 = vpack.c.b16 %v11236, %v11235
  %v11279 = vpack.c.b16 %v11238, %v11237
  %v11280 = vpack.c.b16 %v11240, %v11239
  %v11281 = vpack.c.b16 %v11242, %v11241
  %v11282 = vpack.c.b16 %v11244, %v11243
  %v11283 = vpack.c.b16 %v11246, %v11245
  %v11284 = vpack.c.b16 %v11248, %v11247
  %v11285 = vpack.c.b16 %v11250, %v11249
  %v11286 = vpack.c.b16 %v11252, %v11251
  %v11287 = vpack.c.b16 %v11254, %v11253
  %v11288 = vpack.c.b16 %v11256, %v11255
  %v11353 = vunpack.c.l.b16 %v10489
  %v11354 = vunpack.c.l.b16 %v10490
  %v11355 = vunpack.c.l.b16 %v10491
  %v11356 = vunpack.c.l.b16 %v10492
  %v11357 = vunpack.c.l.b16 %v10493
  %v11358 = vunpack.c.l.b16 %v10494
  %v11359 = vunpack.c.l.b16 %v10495
  %v11360 = vunpack.c.l.b16 %v10496
  %v11361 = vunpack.c.l.b16 %v10497
  %v11362 = vunpack.c.l.b16 %v10498
  %v11363 = vunpack.c.l.b16 %v10499
  %v11364 = vunpack.c.l.b16 %v10500
  %v11365 = vunpack.c.l.b16 %v10501
  %v11366 = vunpack.c.l.b16 %v10502
  %v11367 = vunpack.c.l.b16 %v10503
  %v11368 = vunpack.c.l.b16 %v10504
  %v11369 = vunpack.c.l.b16 %v10505
  %v11370 = vunpack.c.l.b16 %v10506
  %v11371 = vunpack.c.l.b16 %v10507
  %v11372 = vunpack.c.l.b16 %v10508
  %v11373 = vunpack.c.l.b16 %v10509
  %v11374 = vunpack.c.l.b16 %v10510
  %v11375 = vunpack.c.l.b16 %v10511
  %v11376 = vunpack.c.l.b16 %v10512
  %v11377 = vunpack.c.l.b16 %v10513
  %v11378 = vunpack.c.l.b16 %v10514
  %v11379 = vunpack.c.l.b16 %v10515
  %v11380 = vunpack.c.l.b16 %v10516
  %v11381 = vunpack.c.l.b16 %v10517
  %v11382 = vunpack.c.l.b16 %v10518
  %v11383 = vunpack.c.l.b16 %v10519
  %v11384 = vunpack.c.l.b16 %v10520
  %v11385 = vunpack.c.l.b16 %v10521
  %v11386 = vunpack.c.l.b16 %v10522
  %v11387 = vunpack.c.l.b16 %v10523
  %v11388 = vunpack.c.l.b16 %v10524
  %v11389 = vunpack.c.l.b16 %v10525
  %v11390 = vunpack.c.l.b16 %v10526
  %v11391 = vunpack.c.l.b16 %v10527
  %v11392 = vunpack.c.l.b16 %v10528
  %v11393 = vunpack.c.l.b16 %v10529
  %v11394 = vunpack.c.l.b16 %v10530
  %v11395 = vunpack.c.l.b16 %v10531
  %v11396 = vunpack.c.l.b16 %v10532
  %v11397 = vunpack.c.l.b16 %v10533
  %v11398 = vunpack.c.l.b16 %v10534
  %v11399 = vunpack.c.l.b16 %v10535
  %v11400 = vunpack.c.l.b16 %v10536
  %v11401 = vunpack.c.l.b16 %v10537
  %v11402 = vunpack.c.l.b16 %v10538
  %v11403 = vunpack.c.l.b16 %v10539
  %v11404 = vunpack.c.l.b16 %v10540
  %v11405 = vunpack.c.l.b16 %v10541
  %v11406 = vunpack.c.l.b16 %v10542
  %v11407 = vunpack.c.l.b16 %v10543
  %v11408 = vunpack.c.l.b16 %v10544
  %v11409 = vunpack.c.l.b16 %v10545
  %v11410 = vunpack.c.l.b16 %v10546
  %v11411 = vunpack.c.l.b16 %v10547
  %v11412 = vunpack.c.l.b16 %v10548
  %v11413 = vunpack.c.l.b16 %v10549
  %v11414 = vunpack.c.l.b16 %v10550
  %v11415 = vunpack.c.l.b16 %v10551
  %v11416 = vunpack.c.l.b16 %v10552
  %v11417 = vpack.c.b16 %v11354, %v11353
  %v11418 = vpack.c.b16 %v11356, %v11355
  %v11419 = vpack.c.b16 %v11358, %v11357
  %v11420 = vpack.c.b16 %v11360, %v11359
  %v11421 = vpack.c.b16 %v11362, %v11361
  %v11422 = vpack.c.b16 %v11364, %v11363
  %v11423 = vpack.c.b16 %v11366, %v11365
  %v11424 = vpack.c.b16 %v11368, %v11367
  %v11425 = vpack.c.b16 %v11370, %v11369
  %v11426 = vpack.c.b16 %v11372, %v11371
  %v11427 = vpack.c.b16 %v11374, %v11373
  %v11428 = vpack.c.b16 %v11376, %v11375
  %v11429 = vpack.c.b16 %v11378, %v11377
  %v11430 = vpack.c.b16 %v11380, %v11379
  %v11431 = vpack.c.b16 %v11382, %v11381
  %v11432 = vpack.c.b16 %v11384, %v11383
  %v11433 = vpack.c.b16 %v11386, %v11385
  %v11434 = vpack.c.b16 %v11388, %v11387
  %v11435 = vpack.c.b16 %v11390, %v11389
  %v11436 = vpack.c.b16 %v11392, %v11391
  %v11437 = vpack.c.b16 %v11394, %v11393
  %v11438 = vpack.c.b16 %v11396, %v11395
  %v11439 = vpack.c.b16 %v11398, %v11397
  %v11440 = vpack.c.b16 %v11400, %v11399
  %v11441 = vpack.c.b16 %v11402, %v11401
  %v11442 = vpack.c.b16 %v11404, %v11403
  %v11443 = vpack.c.b16 %v11406, %v11405
  %v11444 = vpack.c.b16 %v11408, %v11407
  %v11445 = vpack.c.b16 %v11410, %v11409
  %v11446 = vpack.c.b16 %v11412, %v11411
  %v11447 = vpack.c.b16 %v11414, %v11413
  %v11448 = vpack.c.b16 %v11416, %v11415
  %11449 = vrot.lane.b32.xlu0 %v11417, 64
  %v11450 = vpop.permute.xlu0 %11449
  %11451 = vrot.lane.b32.xlu0 %v11418, 64
  %v11452 = vpop.permute.xlu0 %11451
  %11453 = vrot.lane.b32.xlu0 %v11419, 64
  %v11454 = vpop.permute.xlu0 %11453
  %11455 = vrot.lane.b32.xlu0 %v11420, 64
  %v11456 = vpop.permute.xlu0 %11455
  %11457 = vrot.lane.b32.xlu0 %v11421, 64
  %v11458 = vpop.permute.xlu0 %11457
  %11459 = vrot.lane.b32.xlu0 %v11422, 64
  %v11460 = vpop.permute.xlu0 %11459
  %11461 = vrot.lane.b32.xlu0 %v11423, 64
  %v11462 = vpop.permute.xlu0 %11461
  %11463 = vrot.lane.b32.xlu0 %v11424, 64
  %v11464 = vpop.permute.xlu0 %11463
  %11465 = vrot.lane.b32.xlu0 %v11425, 64
  %v11466 = vpop.permute.xlu0 %11465
  %11467 = vrot.lane.b32.xlu0 %v11426, 64
  %v11468 = vpop.permute.xlu0 %11467
  %11469 = vrot.lane.b32.xlu0 %v11427, 64
  %v11470 = vpop.permute.xlu0 %11469
  %11471 = vrot.lane.b32.xlu0 %v11428, 64
  %v11472 = vpop.permute.xlu0 %11471
  %11473 = vrot.lane.b32.xlu0 %v11429, 64
  %v11474 = vpop.permute.xlu0 %11473
  %11475 = vrot.lane.b32.xlu0 %v11430, 64
  %v11476 = vpop.permute.xlu0 %11475
  %11477 = vrot.lane.b32.xlu0 %v11431, 64
  %v11478 = vpop.permute.xlu0 %11477
  %11479 = vrot.lane.b32.xlu0 %v11432, 64
  %v11480 = vpop.permute.xlu0 %11479
  %11481 = vrot.lane.b32.xlu0 %v11433, 64
  %v11482 = vpop.permute.xlu0 %11481
  %11483 = vrot.lane.b32.xlu0 %v11434, 64
  %v11484 = vpop.permute.xlu0 %11483
  %11485 = vrot.lane.b32.xlu0 %v11435, 64
  %v11486 = vpop.permute.xlu0 %11485
  %11487 = vrot.lane.b32.xlu0 %v11436, 64
  %v11488 = vpop.permute.xlu0 %11487
  %11489 = vrot.lane.b32.xlu0 %v11437, 64
  %v11490 = vpop.permute.xlu0 %11489
  %11491 = vrot.lane.b32.xlu0 %v11438, 64
  %v11492 = vpop.permute.xlu0 %11491
  %11493 = vrot.lane.b32.xlu0 %v11439, 64
  %v11494 = vpop.permute.xlu0 %11493
  %11495 = vrot.lane.b32.xlu0 %v11440, 64
  %v11496 = vpop.permute.xlu0 %11495
  %11497 = vrot.lane.b32.xlu0 %v11441, 64
  %v11498 = vpop.permute.xlu0 %11497
  %11499 = vrot.lane.b32.xlu0 %v11442, 64
  %v11500 = vpop.permute.xlu0 %11499
  %11501 = vrot.lane.b32.xlu0 %v11443, 64
  %v11502 = vpop.permute.xlu0 %11501
  %11503 = vrot.lane.b32.xlu0 %v11444, 64
  %v11504 = vpop.permute.xlu0 %11503
  %11505 = vrot.lane.b32.xlu0 %v11445, 64
  %v11506 = vpop.permute.xlu0 %11505
  %11507 = vrot.lane.b32.xlu0 %v11446, 64
  %v11508 = vpop.permute.xlu0 %11507
  %11509 = vrot.lane.b32.xlu0 %v11447, 64
  %v11510 = vpop.permute.xlu0 %11509
  %11511 = vrot.lane.b32.xlu0 %v11448, 64
  %v11512 = vpop.permute.xlu0 %11511
  %v11577 = vunpack.c.l.b16 %v10681
  %v11578 = vunpack.c.l.b16 %v10682
  %v11579 = vunpack.c.l.b16 %v10683
  %v11580 = vunpack.c.l.b16 %v10684
  %v11581 = vunpack.c.l.b16 %v10685
  %v11582 = vunpack.c.l.b16 %v10686
  %v11583 = vunpack.c.l.b16 %v10687
  %v11584 = vunpack.c.l.b16 %v10688
  %v11585 = vunpack.c.l.b16 %v10689
  %v11586 = vunpack.c.l.b16 %v10690
  %v11587 = vunpack.c.l.b16 %v10691
  %v11588 = vunpack.c.l.b16 %v10692
  %v11589 = vunpack.c.l.b16 %v10693
  %v11590 = vunpack.c.l.b16 %v10694
  %v11591 = vunpack.c.l.b16 %v10695
  %v11592 = vunpack.c.l.b16 %v10696
  %v11593 = vunpack.c.l.b16 %v10697
  %v11594 = vunpack.c.l.b16 %v10698
  %v11595 = vunpack.c.l.b16 %v10699
  %v11596 = vunpack.c.l.b16 %v10700
  %v11597 = vunpack.c.l.b16 %v10701
  %v11598 = vunpack.c.l.b16 %v10702
  %v11599 = vunpack.c.l.b16 %v10703
  %v11600 = vunpack.c.l.b16 %v10704
  %v11601 = vunpack.c.l.b16 %v10705
  %v11602 = vunpack.c.l.b16 %v10706
  %v11603 = vunpack.c.l.b16 %v10707
  %v11604 = vunpack.c.l.b16 %v10708
  %v11605 = vunpack.c.l.b16 %v10709
  %v11606 = vunpack.c.l.b16 %v10710
  %v11607 = vunpack.c.l.b16 %v10711
  %v11608 = vunpack.c.l.b16 %v10712
  %v11609 = vunpack.c.l.b16 %v10713
  %v11610 = vunpack.c.l.b16 %v10714
  %v11611 = vunpack.c.l.b16 %v10715
  %v11612 = vunpack.c.l.b16 %v10716
  %v11613 = vunpack.c.l.b16 %v10717
  %v11614 = vunpack.c.l.b16 %v10718
  %v11615 = vunpack.c.l.b16 %v10719
  %v11616 = vunpack.c.l.b16 %v10720
  %v11617 = vunpack.c.l.b16 %v10721
  %v11618 = vunpack.c.l.b16 %v10722
  %v11619 = vunpack.c.l.b16 %v10723
  %v11620 = vunpack.c.l.b16 %v10724
  %v11621 = vunpack.c.l.b16 %v10725
  %v11622 = vunpack.c.l.b16 %v10726
  %v11623 = vunpack.c.l.b16 %v10727
  %v11624 = vunpack.c.l.b16 %v10728
  %v11625 = vunpack.c.l.b16 %v10729
  %v11626 = vunpack.c.l.b16 %v10730
  %v11627 = vunpack.c.l.b16 %v10731
  %v11628 = vunpack.c.l.b16 %v10732
  %v11629 = vunpack.c.l.b16 %v10733
  %v11630 = vunpack.c.l.b16 %v10734
  %v11631 = vunpack.c.l.b16 %v10735
  %v11632 = vunpack.c.l.b16 %v10736
  %v11633 = vunpack.c.l.b16 %v10737
  %v11634 = vunpack.c.l.b16 %v10738
  %v11635 = vunpack.c.l.b16 %v10739
  %v11636 = vunpack.c.l.b16 %v10740
  %v11637 = vunpack.c.l.b16 %v10741
  %v11638 = vunpack.c.l.b16 %v10742
  %v11639 = vunpack.c.l.b16 %v10743
  %v11640 = vunpack.c.l.b16 %v10744
  %v11641 = vpack.c.b16 %v11578, %v11577
  %v11642 = vpack.c.b16 %v11580, %v11579
  %v11643 = vpack.c.b16 %v11582, %v11581
  %v11644 = vpack.c.b16 %v11584, %v11583
  %v11645 = vpack.c.b16 %v11586, %v11585
  %v11646 = vpack.c.b16 %v11588, %v11587
  %v11647 = vpack.c.b16 %v11590, %v11589
  %v11648 = vpack.c.b16 %v11592, %v11591
  %v11649 = vpack.c.b16 %v11594, %v11593
  %v11650 = vpack.c.b16 %v11596, %v11595
  %v11651 = vpack.c.b16 %v11598, %v11597
  %v11652 = vpack.c.b16 %v11600, %v11599
  %v11653 = vpack.c.b16 %v11602, %v11601
  %v11654 = vpack.c.b16 %v11604, %v11603
  %v11655 = vpack.c.b16 %v11606, %v11605
  %v11656 = vpack.c.b16 %v11608, %v11607
  %v11657 = vpack.c.b16 %v11610, %v11609
  %v11658 = vpack.c.b16 %v11612, %v11611
  %v11659 = vpack.c.b16 %v11614, %v11613
  %v11660 = vpack.c.b16 %v11616, %v11615
  %v11661 = vpack.c.b16 %v11618, %v11617
  %v11662 = vpack.c.b16 %v11620, %v11619
  %v11663 = vpack.c.b16 %v11622, %v11621
  %v11664 = vpack.c.b16 %v11624, %v11623
  %v11665 = vpack.c.b16 %v11626, %v11625
  %v11666 = vpack.c.b16 %v11628, %v11627
  %v11667 = vpack.c.b16 %v11630, %v11629
  %v11668 = vpack.c.b16 %v11632, %v11631
  %v11669 = vpack.c.b16 %v11634, %v11633
  %v11670 = vpack.c.b16 %v11636, %v11635
  %v11671 = vpack.c.b16 %v11638, %v11637
  %v11672 = vpack.c.b16 %v11640, %v11639
  %v11675 = vsel %vm4178, %v10873, %v11066
  %v11679 = vsel %vm4178, %v10874, %v11068
  %v11683 = vsel %vm4178, %v10875, %v11070
  %v11687 = vsel %vm4178, %v10876, %v11072
  %v11691 = vsel %vm4178, %v10877, %v11074
  %v11695 = vsel %vm4178, %v10878, %v11076
  %v11699 = vsel %vm4178, %v10879, %v11078
  %v11703 = vsel %vm4178, %v10880, %v11080
  %v11707 = vsel %vm4178, %v10881, %v11082
  %v11711 = vsel %vm4178, %v10882, %v11084
  %v11715 = vsel %vm4178, %v10883, %v11086
  %v11719 = vsel %vm4178, %v10884, %v11088
  %v11723 = vsel %vm4178, %v10885, %v11090
  %v11727 = vsel %vm4178, %v10886, %v11092
  %v11731 = vsel %vm4178, %v10887, %v11094
  %v11735 = vsel %vm4178, %v10888, %v11096
  %v11739 = vsel %vm4178, %v10889, %v11098
  %v11743 = vsel %vm4178, %v10890, %v11100
  %v11747 = vsel %vm4178, %v10891, %v11102
  %v11751 = vsel %vm4178, %v10892, %v11104
  %v11755 = vsel %vm4178, %v10893, %v11106
  %v11759 = vsel %vm4178, %v10894, %v11108
  %v11763 = vsel %vm4178, %v10895, %v11110
  %v11767 = vsel %vm4178, %v10896, %v11112
  %v11771 = vsel %vm4178, %v10897, %v11114
  %v11775 = vsel %vm4178, %v10898, %v11116
  %v11779 = vsel %vm4178, %v10899, %v11118
  %v11783 = vsel %vm4178, %v10900, %v11120
  %v11787 = vsel %vm4178, %v10901, %v11122
  %v11791 = vsel %vm4178, %v10902, %v11124
  %v11795 = vsel %vm4178, %v10903, %v11126
  %v11799 = vsel %vm4178, %v10904, %v11128
  %v11803 = vsel %vm4178, %v11257, %v11450
  %v11807 = vsel %vm4178, %v11258, %v11452
  %v11811 = vsel %vm4178, %v11259, %v11454
  %v11815 = vsel %vm4178, %v11260, %v11456
  %v11819 = vsel %vm4178, %v11261, %v11458
  %v11823 = vsel %vm4178, %v11262, %v11460
  %v11827 = vsel %vm4178, %v11263, %v11462
  %v11831 = vsel %vm4178, %v11264, %v11464
  %v11835 = vsel %vm4178, %v11265, %v11466
  %v11839 = vsel %vm4178, %v11266, %v11468
  %v11843 = vsel %vm4178, %v11267, %v11470
  %v11847 = vsel %vm4178, %v11268, %v11472
  %v11851 = vsel %vm4178, %v11269, %v11474
  %v11855 = vsel %vm4178, %v11270, %v11476
  %v11859 = vsel %vm4178, %v11271, %v11478
  %v11863 = vsel %vm4178, %v11272, %v11480
  %v11867 = vsel %vm4178, %v11273, %v11482
  %v11871 = vsel %vm4178, %v11274, %v11484
  %v11875 = vsel %vm4178, %v11275, %v11486
  %v11879 = vsel %vm4178, %v11276, %v11488
  %v11883 = vsel %vm4178, %v11277, %v11490
  %v11887 = vsel %vm4178, %v11278, %v11492
  %v11891 = vsel %vm4178, %v11279, %v11494
  %v11895 = vsel %vm4178, %v11280, %v11496
  %v11899 = vsel %vm4178, %v11281, %v11498
  %v11903 = vsel %vm4178, %v11282, %v11500
  %v11907 = vsel %vm4178, %v11283, %v11502
  %v11911 = vsel %vm4178, %v11284, %v11504
  %v11915 = vsel %vm4178, %v11285, %v11506
  %v11919 = vsel %vm4178, %v11286, %v11508
  %v11923 = vsel %vm4178, %v11287, %v11510
  %v11927 = vsel %vm4178, %v11288, %v11512
  %v11929 = vld [vmem:[%s1 + $0xd8] sm:$0xf]
  %v11930 = vld [vmem:[%s1 + $0xdc] sm:$0xf]
  %v11931 = vld [vmem:[%s1 + $0xe0] sm:$0xf]
  %v11932 = vld [vmem:[%s1 + $0xe4] sm:$0xf]
  %v11933 = vld [vmem:[%s1 + $0xe8] sm:$0xf]
  %v11934 = vld [vmem:[%s1 + $0xec] sm:$0xf]
  %v11935 = vld [vmem:[%s1 + $0xf0] sm:$0xf]
  %v11936 = vld [vmem:[%s1 + $0xf4] sm:$0xf]
  %v11937 = vld [vmem:[%s1 + $0xf8] sm:$0xf]
  %v11938 = vld [vmem:[%s1 + $0xfc] sm:$0xf]
  %v11939 = vld [vmem:[%s1 + $0x100] sm:$0xf]
  %v11940 = vld [vmem:[%s1 + $0x104] sm:$0xf]
  %v11941 = vld [vmem:[%s1 + $0x108] sm:$0xf]
  %v11942 = vld [vmem:[%s1 + $0x10c] sm:$0xf]
  %v11943 = vld [vmem:[%s1 + $0x110] sm:$0xf]
  %v11944 = vld [vmem:[%s1 + $0x114] sm:$0xf]
  %v11945 = vld [vmem:[%s1 + $0x118] sm:$0xf]
  %v11946 = vld [vmem:[%s1 + $0x11c] sm:$0xf]
  %v11947 = vld [vmem:[%s1 + $0x120] sm:$0xf]
  %v11948 = vld [vmem:[%s1 + $0x124] sm:$0xf]
  %v11949 = vld [vmem:[%s1 + $0x128] sm:$0xf]
  %v11950 = vld [vmem:[%s1 + $0x12c] sm:$0xf]
  %v11951 = vld [vmem:[%s1 + $0x130] sm:$0xf]
  %v11952 = vld [vmem:[%s1 + $0x134] sm:$0xf]
  %v11953 = vld [vmem:[%s1 + $0x138] sm:$0xf]
  %v11954 = vld [vmem:[%s1 + $0x13c] sm:$0xf]
  %v11955 = vld [vmem:[%s1 + $0x140] sm:$0xf]
  %v11956 = vld [vmem:[%s1 + $0x144] sm:$0xf]
  %v11957 = vld [vmem:[%s1 + $0x148] sm:$0xf]
  %v11958 = vld [vmem:[%s1 + $0x14c] sm:$0xf]
  %v11959 = vld [vmem:[%s1 + $0x150] sm:$0xf]
  %v11960 = vld [vmem:[%s1 + $0x154] sm:$0xf]
  %v11961 = vld [vmem:[%s1 + $0x158] sm:$0xf]
  %v11962 = vld [vmem:[%s1 + $0x15c] sm:$0xf]
  %v11963 = vld [vmem:[%s1 + $0x160] sm:$0xf]
  %v11964 = vld [vmem:[%s1 + $0x164] sm:$0xf]
  %v11965 = vld [vmem:[%s1 + $0x168] sm:$0xf]
  %v11966 = vld [vmem:[%s1 + $0x16c] sm:$0xf]
  %v11967 = vld [vmem:[%s1 + $0x170] sm:$0xf]
  %v11968 = vld [vmem:[%s1 + $0x174] sm:$0xf]
  %v11969 = vld [vmem:[%s2 + $0x4] sm:$0x1]
  %v11970 = vperm.slane %v11969, 0
  %v12011 = vunpack.c.l.b16 %v11929
  %v12012 = vunpack.c.l.b16 %v11930
  %v12013 = vunpack.c.l.b16 %v11931
  %v12014 = vunpack.c.l.b16 %v11932
  %v12015 = vunpack.c.l.b16 %v11933
  %v12016 = vunpack.c.l.b16 %v11934
  %v12017 = vunpack.c.l.b16 %v11935
  %v12018 = vunpack.c.l.b16 %v11936
  %v12019 = vunpack.c.l.b16 %v11937
  %v12020 = vunpack.c.l.b16 %v11938
  %v12021 = vunpack.c.l.b16 %v11939
  %v12022 = vunpack.c.l.b16 %v11940
  %v12023 = vunpack.c.l.b16 %v11941
  %v12024 = vunpack.c.l.b16 %v11942
  %v12025 = vunpack.c.l.b16 %v11943
  %v12026 = vunpack.c.l.b16 %v11944
  %v12027 = vunpack.c.l.b16 %v11945
  %v12028 = vunpack.c.l.b16 %v11946
  %v12029 = vunpack.c.l.b16 %v11947
  %v12030 = vunpack.c.l.b16 %v11948
  %v12031 = vunpack.c.l.b16 %v11949
  %v12032 = vunpack.c.l.b16 %v11950
  %v12033 = vunpack.c.l.b16 %v11951
  %v12034 = vunpack.c.l.b16 %v11952
  %v12035 = vunpack.c.l.b16 %v11953
  %v12036 = vunpack.c.l.b16 %v11954
  %v12037 = vunpack.c.l.b16 %v11955
  %v12038 = vunpack.c.l.b16 %v11956
  %v12039 = vunpack.c.l.b16 %v11957
  %v12040 = vunpack.c.l.b16 %v11958
  %v12041 = vunpack.c.l.b16 %v11959
  %v12042 = vunpack.c.l.b16 %v11960
  %v12043 = vunpack.c.l.b16 %v11961
  %v12044 = vunpack.c.l.b16 %v11962
  %v12045 = vunpack.c.l.b16 %v11963
  %v12046 = vunpack.c.l.b16 %v11964
  %v12047 = vunpack.c.l.b16 %v11965
  %v12048 = vunpack.c.l.b16 %v11966
  %v12049 = vunpack.c.l.b16 %v11967
  %v12050 = vunpack.c.l.b16 %v11968
  %v12051 = vpack.c.b16 %v12012, %v12011
  %v12052 = vpack.c.b16 %v12014, %v12013
  %v12053 = vpack.c.b16 %v12016, %v12015
  %v12054 = vpack.c.b16 %v12018, %v12017
  %v12055 = vpack.c.b16 %v12020, %v12019
  %v12056 = vpack.c.b16 %v12022, %v12021
  %v12057 = vpack.c.b16 %v12024, %v12023
  %v12058 = vpack.c.b16 %v12026, %v12025
  %v12059 = vpack.c.b16 %v12028, %v12027
  %v12060 = vpack.c.b16 %v12030, %v12029
  %v12061 = vpack.c.b16 %v12032, %v12031
  %v12062 = vpack.c.b16 %v12034, %v12033
  %v12063 = vpack.c.b16 %v12036, %v12035
  %v12064 = vpack.c.b16 %v12038, %v12037
  %v12065 = vpack.c.b16 %v12040, %v12039
  %v12066 = vpack.c.b16 %v12042, %v12041
  %v12067 = vpack.c.b16 %v12044, %v12043
  %v12068 = vpack.c.b16 %v12046, %v12045
  %v12069 = vpack.c.b16 %v12048, %v12047
  %v12070 = vpack.c.b16 %v12050, %v12049
  %v12092 = vsel %vm4178, %v11641, 0
  %v12095 = vsel %vm4178, %v11642, 0
  %v12098 = vsel %vm4178, %v11643, 0
  %v12101 = vsel %vm4178, %v11644, 0
  %v12104 = vsel %vm4178, %v11645, 0
  %v12107 = vsel %vm4178, %v11646, 0
  %v12110 = vsel %vm4178, %v11647, 0
  %v12113 = vsel %vm4178, %v11648, 0
  %v12116 = vsel %vm4178, %v11649, 0
  %v12119 = vsel %vm4178, %v11650, 0
  %v12122 = vsel %vm4178, %v11651, 0
  %v12125 = vsel %vm4178, %v11652, 0
  %v12128 = vsel %vm4178, %v11653, 0
  %v12131 = vsel %vm4178, %v11654, 0
  %v12134 = vsel %vm4178, %v11655, 0
  %v12137 = vsel %vm4178, %v11656, 0
  %v12140 = vsel %vm4178, %v11657, 0
  %v12143 = vsel %vm4178, %v11658, 0
  %v12146 = vsel %vm4178, %v11659, 0
  %v12149 = vsel %vm4178, %v11660, 0
  %v12152 = vsel %vm4178, %v11661, 0
  %v12155 = vsel %vm4178, %v11662, 0
  %v12158 = vsel %vm4178, %v11663, 0
  %v12161 = vsel %vm4178, %v11664, 0
  %v12164 = vsel %vm4178, %v11665, 0
  %v12167 = vsel %vm4178, %v11666, 0
  %v12170 = vsel %vm4178, %v11667, 0
  %v12173 = vsel %vm4178, %v11668, 0
  %v12176 = vsel %vm4178, %v11669, 0
  %v12179 = vsel %vm4178, %v11670, 0
  %v12182 = vsel %vm4178, %v11671, 0
  %v12185 = vsel %vm4178, %v11672, 0
  %12187 = vmatpush.bf16.msra.mxu0 %v12058
  %12188 = vmatpush.bf16.msra.mxu0 %v12057
  %12189 = vmatpush.bf16.msra.mxu0 %v12056
  %12190 = vmatpush.bf16.msra.mxu0 %v12055
  %12191 = vmatpush.bf16.msra.mxu0 %v12054
  %12192 = vmatpush.bf16.msra.mxu0 %v12053
  %12193 = vmatpush.bf16.msra.mxu0 %v12052
  %12194 = vmatpush.bf16.msra.mxu0 %v12051
  %12195 = vmatmul.bf16.gmra.mxu0 %v11675
  %v12196 = vpop.f32.mrf.mxu0
  %v12197 = vadd.f32 %v11970, %v12196
  %v12198 = vpop.f32.mrf.mxu0
  %v12199 = vadd.f32 %v11970, %v12198
  %12200 = vmatmul.bf16.gmra.mxu0 %v11679
  %v12201 = vpop.f32.mrf.mxu0
  %v12202 = vadd.f32 %v11970, %v12201
  %v12203 = vpop.f32.mrf.mxu0
  %v12204 = vadd.f32 %v11970, %v12203
  %12205 = vmatmul.bf16.gmra.mxu0 %v11683
  %v12206 = vpop.f32.mrf.mxu0
  %v12207 = vadd.f32 %v11970, %v12206
  %v12208 = vpop.f32.mrf.mxu0
  %v12209 = vadd.f32 %v11970, %v12208
  %12210 = vmatmul.bf16.gmra.mxu0 %v11687
  %v12211 = vpop.f32.mrf.mxu0
  %v12212 = vadd.f32 %v11970, %v12211
  %v12213 = vpop.f32.mrf.mxu0
  %v12214 = vadd.f32 %v11970, %v12213
  %12215 = vmatmul.bf16.gmra.mxu0 %v11691
  %v12216 = vpop.f32.mrf.mxu0
  %v12217 = vadd.f32 %v11970, %v12216
  %v12218 = vpop.f32.mrf.mxu0
  %v12219 = vadd.f32 %v11970, %v12218
  %12220 = vmatmul.bf16.gmra.mxu0 %v11695
  %v12221 = vpop.f32.mrf.mxu0
  %v12222 = vadd.f32 %v11970, %v12221
  %v12223 = vpop.f32.mrf.mxu0
  %v12224 = vadd.f32 %v11970, %v12223
  %12225 = vmatmul.bf16.gmra.mxu0 %v11699
  %v12226 = vpop.f32.mrf.mxu0
  %v12227 = vadd.f32 %v11970, %v12226
  %v12228 = vpop.f32.mrf.mxu0
  %v12229 = vadd.f32 %v11970, %v12228
  %12230 = vmatmul.bf16.gmra.mxu0 %v11703
  %v12231 = vpop.f32.mrf.mxu0
  %v12232 = vadd.f32 %v11970, %v12231
  %v12233 = vpop.f32.mrf.mxu0
  %v12234 = vadd.f32 %v11970, %v12233
  %12235 = vmatmul.bf16.gmra.mxu0 %v11707
  %v12236 = vpop.f32.mrf.mxu0
  %v12237 = vadd.f32 %v11970, %v12236
  %v12238 = vpop.f32.mrf.mxu0
  %v12239 = vadd.f32 %v11970, %v12238
  %12240 = vmatmul.bf16.gmra.mxu0 %v11711
  %v12241 = vpop.f32.mrf.mxu0
  %v12242 = vadd.f32 %v11970, %v12241
  %v12243 = vpop.f32.mrf.mxu0
  %v12244 = vadd.f32 %v11970, %v12243
  %12245 = vmatmul.bf16.gmra.mxu0 %v11715
  %v12246 = vpop.f32.mrf.mxu0
  %v12247 = vadd.f32 %v11970, %v12246
  %v12248 = vpop.f32.mrf.mxu0
  %v12249 = vadd.f32 %v11970, %v12248
  %12250 = vmatmul.bf16.gmra.mxu0 %v11719
  %v12251 = vpop.f32.mrf.mxu0
  %v12252 = vadd.f32 %v11970, %v12251
  %v12253 = vpop.f32.mrf.mxu0
  %v12254 = vadd.f32 %v11970, %v12253
  %12255 = vmatmul.bf16.gmra.mxu0 %v11723
  %v12256 = vpop.f32.mrf.mxu0
  %v12257 = vadd.f32 %v11970, %v12256
  %v12258 = vpop.f32.mrf.mxu0
  %v12259 = vadd.f32 %v11970, %v12258
  %12260 = vmatmul.bf16.gmra.mxu0 %v11727
  %v12261 = vpop.f32.mrf.mxu0
  %v12262 = vadd.f32 %v11970, %v12261
  %v12263 = vpop.f32.mrf.mxu0
  %v12264 = vadd.f32 %v11970, %v12263
  %12265 = vmatmul.bf16.gmra.mxu0 %v11731
  %v12266 = vpop.f32.mrf.mxu0
  %v12267 = vadd.f32 %v11970, %v12266
  %v12268 = vpop.f32.mrf.mxu0
  %v12269 = vadd.f32 %v11970, %v12268
  %12270 = vmatmul.bf16.gmra.mxu0 %v11735
  %v12271 = vpop.f32.mrf.mxu0
  %v12272 = vadd.f32 %v11970, %v12271
  %v12273 = vpop.f32.mrf.mxu0
  %v12274 = vadd.f32 %v11970, %v12273
  %12275 = vmatmul.bf16.gmra.mxu0 %v11739
  %v12276 = vpop.f32.mrf.mxu0
  %v12277 = vadd.f32 %v11970, %v12276
  %v12278 = vpop.f32.mrf.mxu0
  %v12279 = vadd.f32 %v11970, %v12278
  %12280 = vmatmul.bf16.gmra.mxu0 %v11743
  %v12281 = vpop.f32.mrf.mxu0
  %v12282 = vadd.f32 %v11970, %v12281
  %v12283 = vpop.f32.mrf.mxu0
  %v12284 = vadd.f32 %v11970, %v12283
  %12285 = vmatmul.bf16.gmra.mxu0 %v11747
  %v12286 = vpop.f32.mrf.mxu0
  %v12287 = vadd.f32 %v11970, %v12286
  %v12288 = vpop.f32.mrf.mxu0
  %v12289 = vadd.f32 %v11970, %v12288
  %12290 = vmatmul.bf16.gmra.mxu0 %v11751
  %v12291 = vpop.f32.mrf.mxu0
  %v12292 = vadd.f32 %v11970, %v12291
  %v12293 = vpop.f32.mrf.mxu0
  %v12294 = vadd.f32 %v11970, %v12293
  %12295 = vmatmul.bf16.gmra.mxu0 %v11755
  %v12296 = vpop.f32.mrf.mxu0
  %v12297 = vadd.f32 %v11970, %v12296
  %v12298 = vpop.f32.mrf.mxu0
  %v12299 = vadd.f32 %v11970, %v12298
  %12300 = vmatmul.bf16.gmra.mxu0 %v11759
  %v12301 = vpop.f32.mrf.mxu0
  %v12302 = vadd.f32 %v11970, %v12301
  %v12303 = vpop.f32.mrf.mxu0
  %v12304 = vadd.f32 %v11970, %v12303
  %12305 = vmatmul.bf16.gmra.mxu0 %v11763
  %v12306 = vpop.f32.mrf.mxu0
  %v12307 = vadd.f32 %v11970, %v12306
  %v12308 = vpop.f32.mrf.mxu0
  %v12309 = vadd.f32 %v11970, %v12308
  %12310 = vmatmul.bf16.gmra.mxu0 %v11767
  %v12311 = vpop.f32.mrf.mxu0
  %v12312 = vadd.f32 %v11970, %v12311
  %v12313 = vpop.f32.mrf.mxu0
  %v12314 = vadd.f32 %v11970, %v12313
  %12315 = vmatmul.bf16.gmra.mxu0 %v11771
  %v12316 = vpop.f32.mrf.mxu0
  %v12317 = vadd.f32 %v11970, %v12316
  %v12318 = vpop.f32.mrf.mxu0
  %v12319 = vadd.f32 %v11970, %v12318
  %12320 = vmatmul.bf16.gmra.mxu0 %v11775
  %v12321 = vpop.f32.mrf.mxu0
  %v12322 = vadd.f32 %v11970, %v12321
  %v12323 = vpop.f32.mrf.mxu0
  %v12324 = vadd.f32 %v11970, %v12323
  %12325 = vmatmul.bf16.gmra.mxu0 %v11779
  %v12326 = vpop.f32.mrf.mxu0
  %v12327 = vadd.f32 %v11970, %v12326
  %v12328 = vpop.f32.mrf.mxu0
  %v12329 = vadd.f32 %v11970, %v12328
  %12330 = vmatmul.bf16.gmra.mxu0 %v11783
  %v12331 = vpop.f32.mrf.mxu0
  %v12332 = vadd.f32 %v11970, %v12331
  %v12333 = vpop.f32.mrf.mxu0
  %v12334 = vadd.f32 %v11970, %v12333
  %12335 = vmatmul.bf16.gmra.mxu0 %v11787
  %v12336 = vpop.f32.mrf.mxu0
  %v12337 = vadd.f32 %v11970, %v12336
  %v12338 = vpop.f32.mrf.mxu0
  %v12339 = vadd.f32 %v11970, %v12338
  %12340 = vmatmul.bf16.gmra.mxu0 %v11791
  %v12341 = vpop.f32.mrf.mxu0
  %v12342 = vadd.f32 %v11970, %v12341
  %v12343 = vpop.f32.mrf.mxu0
  %v12344 = vadd.f32 %v11970, %v12343
  %12345 = vmatmul.bf16.gmra.mxu0 %v11795
  %v12346 = vpop.f32.mrf.mxu0
  %v12347 = vadd.f32 %v11970, %v12346
  %v12348 = vpop.f32.mrf.mxu0
  %v12349 = vadd.f32 %v11970, %v12348
  %12350 = vmatmul.bf16.gmra.mxu0 %v11799
  %v12351 = vpop.f32.mrf.mxu0
  %v12352 = vadd.f32 %v11970, %v12351
  %v12353 = vpop.f32.mrf.mxu0
  %v12354 = vadd.f32 %v11970, %v12353
  %12355 = vdwg.mxu0
  %12356 = vmatpush.bf16.msra.mxu0 %v12066
  %12357 = vmatpush.bf16.msra.mxu0 %v12065
  %12358 = vmatpush.bf16.msra.mxu0 %v12064
  %12359 = vmatpush.bf16.msra.mxu0 %v12063
  %12360 = vmatpush.bf16.msra.mxu0 %v12062
  %12361 = vmatpush.bf16.msra.mxu0 %v12061
  %12362 = vmatpush.bf16.msra.mxu0 %v12060
  %12363 = vmatpush.bf16.msra.mxu0 %v12059
  %12364 = vmatmul.bf16.gmra.mxu0 %v11803
  %v12365 = vpop.f32.mrf.mxu0
  %v12366 = vadd.f32 %v12197, %v12365
  %v12367 = vpop.f32.mrf.mxu0
  %v12368 = vadd.f32 %v12199, %v12367
  %12369 = vmatmul.bf16.gmra.mxu0 %v11807
  %v12370 = vpop.f32.mrf.mxu0
  %v12371 = vadd.f32 %v12202, %v12370
  %v12372 = vpop.f32.mrf.mxu0
  %v12373 = vadd.f32 %v12204, %v12372
  %12374 = vmatmul.bf16.gmra.mxu0 %v11811
  %v12375 = vpop.f32.mrf.mxu0
  %v12376 = vadd.f32 %v12207, %v12375
  %v12377 = vpop.f32.mrf.mxu0
  %v12378 = vadd.f32 %v12209, %v12377
  %12379 = vmatmul.bf16.gmra.mxu0 %v11815
  %v12380 = vpop.f32.mrf.mxu0
  %v12381 = vadd.f32 %v12212, %v12380
  %v12382 = vpop.f32.mrf.mxu0
  %v12383 = vadd.f32 %v12214, %v12382
  %12384 = vmatmul.bf16.gmra.mxu0 %v11819
  %v12385 = vpop.f32.mrf.mxu0
  %v12386 = vadd.f32 %v12217, %v12385
  %v12387 = vpop.f32.mrf.mxu0
  %v12388 = vadd.f32 %v12219, %v12387
  %12389 = vmatmul.bf16.gmra.mxu0 %v11823
  %v12390 = vpop.f32.mrf.mxu0
  %v12391 = vadd.f32 %v12222, %v12390
  %v12392 = vpop.f32.mrf.mxu0
  %v12393 = vadd.f32 %v12224, %v12392
  %12394 = vmatmul.bf16.gmra.mxu0 %v11827
  %v12395 = vpop.f32.mrf.mxu0
  %v12396 = vadd.f32 %v12227, %v12395
  %v12397 = vpop.f32.mrf.mxu0
  %v12398 = vadd.f32 %v12229, %v12397
  %12399 = vmatmul.bf16.gmra.mxu0 %v11831
  %v12400 = vpop.f32.mrf.mxu0
  %v12401 = vadd.f32 %v12232, %v12400
  %v12402 = vpop.f32.mrf.mxu0
  %v12403 = vadd.f32 %v12234, %v12402
  %12404 = vmatmul.bf16.gmra.mxu0 %v11835
  %v12405 = vpop.f32.mrf.mxu0
  %v12406 = vadd.f32 %v12237, %v12405
  %v12407 = vpop.f32.mrf.mxu0
  %v12408 = vadd.f32 %v12239, %v12407
  %12409 = vmatmul.bf16.gmra.mxu0 %v11839
  %v12410 = vpop.f32.mrf.mxu0
  %v12411 = vadd.f32 %v12242, %v12410
  %v12412 = vpop.f32.mrf.mxu0
  %v12413 = vadd.f32 %v12244, %v12412
  %12414 = vmatmul.bf16.gmra.mxu0 %v11843
  %v12415 = vpop.f32.mrf.mxu0
  %v12416 = vadd.f32 %v12247, %v12415
  %v12417 = vpop.f32.mrf.mxu0
  %v12418 = vadd.f32 %v12249, %v12417
  %12419 = vmatmul.bf16.gmra.mxu0 %v11847
  %v12420 = vpop.f32.mrf.mxu0
  %v12421 = vadd.f32 %v12252, %v12420
  %v12422 = vpop.f32.mrf.mxu0
  %v12423 = vadd.f32 %v12254, %v12422
  %12424 = vmatmul.bf16.gmra.mxu0 %v11851
  %v12425 = vpop.f32.mrf.mxu0
  %v12426 = vadd.f32 %v12257, %v12425
  %v12427 = vpop.f32.mrf.mxu0
  %v12428 = vadd.f32 %v12259, %v12427
  %12429 = vmatmul.bf16.gmra.mxu0 %v11855
  %v12430 = vpop.f32.mrf.mxu0
  %v12431 = vadd.f32 %v12262, %v12430
  %v12432 = vpop.f32.mrf.mxu0
  %v12433 = vadd.f32 %v12264, %v12432
  %12434 = vmatmul.bf16.gmra.mxu0 %v11859
  %v12435 = vpop.f32.mrf.mxu0
  %v12436 = vadd.f32 %v12267, %v12435
  %v12437 = vpop.f32.mrf.mxu0
  %v12438 = vadd.f32 %v12269, %v12437
  %12439 = vmatmul.bf16.gmra.mxu0 %v11863
  %v12440 = vpop.f32.mrf.mxu0
  %v12441 = vadd.f32 %v12272, %v12440
  %v12442 = vpop.f32.mrf.mxu0
  %v12443 = vadd.f32 %v12274, %v12442
  %12444 = vmatmul.bf16.gmra.mxu0 %v11867
  %v12445 = vpop.f32.mrf.mxu0
  %v12446 = vadd.f32 %v12277, %v12445
  %v12447 = vpop.f32.mrf.mxu0
  %v12448 = vadd.f32 %v12279, %v12447
  %12449 = vmatmul.bf16.gmra.mxu0 %v11871
  %v12450 = vpop.f32.mrf.mxu0
  %v12451 = vadd.f32 %v12282, %v12450
  %v12452 = vpop.f32.mrf.mxu0
  %v12453 = vadd.f32 %v12284, %v12452
  %12454 = vmatmul.bf16.gmra.mxu0 %v11875
  %v12455 = vpop.f32.mrf.mxu0
  %v12456 = vadd.f32 %v12287, %v12455
  %v12457 = vpop.f32.mrf.mxu0
  %v12458 = vadd.f32 %v12289, %v12457
  %12459 = vmatmul.bf16.gmra.mxu0 %v11879
  %v12460 = vpop.f32.mrf.mxu0
  %v12461 = vadd.f32 %v12292, %v12460
  %v12462 = vpop.f32.mrf.mxu0
  %v12463 = vadd.f32 %v12294, %v12462
  %12464 = vmatmul.bf16.gmra.mxu0 %v11883
  %v12465 = vpop.f32.mrf.mxu0
  %v12466 = vadd.f32 %v12297, %v12465
  %v12467 = vpop.f32.mrf.mxu0
  %v12468 = vadd.f32 %v12299, %v12467
  %12469 = vmatmul.bf16.gmra.mxu0 %v11887
  %v12470 = vpop.f32.mrf.mxu0
  %v12471 = vadd.f32 %v12302, %v12470
  %v12472 = vpop.f32.mrf.mxu0
  %v12473 = vadd.f32 %v12304, %v12472
  %12474 = vmatmul.bf16.gmra.mxu0 %v11891
  %v12475 = vpop.f32.mrf.mxu0
  %v12476 = vadd.f32 %v12307, %v12475
  %v12477 = vpop.f32.mrf.mxu0
  %v12478 = vadd.f32 %v12309, %v12477
  %12479 = vmatmul.bf16.gmra.mxu0 %v11895
  %v12480 = vpop.f32.mrf.mxu0
  %v12481 = vadd.f32 %v12312, %v12480
  %v12482 = vpop.f32.mrf.mxu0
  %v12483 = vadd.f32 %v12314, %v12482
  %12484 = vmatmul.bf16.gmra.mxu0 %v11899
  %v12485 = vpop.f32.mrf.mxu0
  %v12486 = vadd.f32 %v12317, %v12485
  %v12487 = vpop.f32.mrf.mxu0
  %v12488 = vadd.f32 %v12319, %v12487
  %12489 = vmatmul.bf16.gmra.mxu0 %v11903
  %v12490 = vpop.f32.mrf.mxu0
  %v12491 = vadd.f32 %v12322, %v12490
  %v12492 = vpop.f32.mrf.mxu0
  %v12493 = vadd.f32 %v12324, %v12492
  %12494 = vmatmul.bf16.gmra.mxu0 %v11907
  %v12495 = vpop.f32.mrf.mxu0
  %v12496 = vadd.f32 %v12327, %v12495
  %v12497 = vpop.f32.mrf.mxu0
  %v12498 = vadd.f32 %v12329, %v12497
  %12499 = vmatmul.bf16.gmra.mxu0 %v11911
  %v12500 = vpop.f32.mrf.mxu0
  %v12501 = vadd.f32 %v12332, %v12500
  %v12502 = vpop.f32.mrf.mxu0
  %v12503 = vadd.f32 %v12334, %v12502
  %12504 = vmatmul.bf16.gmra.mxu0 %v11915
  %v12505 = vpop.f32.mrf.mxu0
  %v12506 = vadd.f32 %v12337, %v12505
  %v12507 = vpop.f32.mrf.mxu0
  %v12508 = vadd.f32 %v12339, %v12507
  %12509 = vmatmul.bf16.gmra.mxu0 %v11919
  %v12510 = vpop.f32.mrf.mxu0
  %v12511 = vadd.f32 %v12342, %v12510
  %v12512 = vpop.f32.mrf.mxu0
  %v12513 = vadd.f32 %v12344, %v12512
  %12514 = vmatmul.bf16.gmra.mxu0 %v11923
  %v12515 = vpop.f32.mrf.mxu0
  %v12516 = vadd.f32 %v12347, %v12515
  %v12517 = vpop.f32.mrf.mxu0
  %v12518 = vadd.f32 %v12349, %v12517
  %12519 = vmatmul.bf16.gmra.mxu0 %v11927
  %v12520 = vpop.f32.mrf.mxu0
  %v12521 = vadd.f32 %v12352, %v12520
  %v12522 = vpop.f32.mrf.mxu0
  %v12523 = vadd.f32 %v12354, %v12522
  %12524 = vdwg.mxu0
  %12525 = vmatpush.bf16.msra.mxu0 0
  %12526 = vmatpush.bf16.msra.mxu0 0
  %12527 = vmatpush.bf16.msra.mxu0 0
  %12528 = vmatpush.bf16.msra.mxu0 0
  %12529 = vmatpush.bf16.msra.mxu0 %v12070
  %12530 = vmatpush.bf16.msra.mxu0 %v12069
  %12531 = vmatpush.bf16.msra.mxu0 %v12068
  %12532 = vmatpush.bf16.msra.mxu0 %v12067
  %12533 = vmatmul.bf16.gmra.mxu0 %v12092
  %v12534 = vpop.f32.mrf.mxu0
  %v12535 = vadd.f32 %v12366, %v12534
  %v12536 = vpop.f32.mrf.mxu0
  %v12537 = vadd.f32 %v12368, %v12536
  %12538 = vmatmul.bf16.gmra.mxu0 %v12095
  %v12539 = vpop.f32.mrf.mxu0
  %v12540 = vadd.f32 %v12371, %v12539
  %v12541 = vpop.f32.mrf.mxu0
  %v12542 = vadd.f32 %v12373, %v12541
  %12543 = vmatmul.bf16.gmra.mxu0 %v12098
  %v12544 = vpop.f32.mrf.mxu0
  %v12545 = vadd.f32 %v12376, %v12544
  %v12546 = vpop.f32.mrf.mxu0
  %v12547 = vadd.f32 %v12378, %v12546
  %12548 = vmatmul.bf16.gmra.mxu0 %v12101
  %v12549 = vpop.f32.mrf.mxu0
  %v12550 = vadd.f32 %v12381, %v12549
  %v12551 = vpop.f32.mrf.mxu0
  %v12552 = vadd.f32 %v12383, %v12551
  %12553 = vmatmul.bf16.gmra.mxu0 %v12104
  %v12554 = vpop.f32.mrf.mxu0
  %v12555 = vadd.f32 %v12386, %v12554
  %v12556 = vpop.f32.mrf.mxu0
  %v12557 = vadd.f32 %v12388, %v12556
  %12558 = vmatmul.bf16.gmra.mxu0 %v12107
  %v12559 = vpop.f32.mrf.mxu0
  %v12560 = vadd.f32 %v12391, %v12559
  %v12561 = vpop.f32.mrf.mxu0
  %v12562 = vadd.f32 %v12393, %v12561
  %12563 = vmatmul.bf16.gmra.mxu0 %v12110
  %v12564 = vpop.f32.mrf.mxu0
  %v12565 = vadd.f32 %v12396, %v12564
  %v12566 = vpop.f32.mrf.mxu0
  %v12567 = vadd.f32 %v12398, %v12566
  %12568 = vmatmul.bf16.gmra.mxu0 %v12113
  %v12569 = vpop.f32.mrf.mxu0
  %v12570 = vadd.f32 %v12401, %v12569
  %v12571 = vpop.f32.mrf.mxu0
  %v12572 = vadd.f32 %v12403, %v12571
  %12573 = vmatmul.bf16.gmra.mxu0 %v12116
  %v12574 = vpop.f32.mrf.mxu0
  %v12575 = vadd.f32 %v12406, %v12574
  %v12576 = vpop.f32.mrf.mxu0
  %v12577 = vadd.f32 %v12408, %v12576
  %12578 = vmatmul.bf16.gmra.mxu0 %v12119
  %v12579 = vpop.f32.mrf.mxu0
  %v12580 = vadd.f32 %v12411, %v12579
  %v12581 = vpop.f32.mrf.mxu0
  %v12582 = vadd.f32 %v12413, %v12581
  %12583 = vmatmul.bf16.gmra.mxu0 %v12122
  %v12584 = vpop.f32.mrf.mxu0
  %v12585 = vadd.f32 %v12416, %v12584
  %v12586 = vpop.f32.mrf.mxu0
  %v12587 = vadd.f32 %v12418, %v12586
  %12588 = vmatmul.bf16.gmra.mxu0 %v12125
  %v12589 = vpop.f32.mrf.mxu0
  %v12590 = vadd.f32 %v12421, %v12589
  %v12591 = vpop.f32.mrf.mxu0
  %v12592 = vadd.f32 %v12423, %v12591
  %12593 = vmatmul.bf16.gmra.mxu0 %v12128
  %v12594 = vpop.f32.mrf.mxu0
  %v12595 = vadd.f32 %v12426, %v12594
  %v12596 = vpop.f32.mrf.mxu0
  %v12597 = vadd.f32 %v12428, %v12596
  %12598 = vmatmul.bf16.gmra.mxu0 %v12131
  %v12599 = vpop.f32.mrf.mxu0
  %v12600 = vadd.f32 %v12431, %v12599
  %v12601 = vpop.f32.mrf.mxu0
  %v12602 = vadd.f32 %v12433, %v12601
  %12603 = vmatmul.bf16.gmra.mxu0 %v12134
  %v12604 = vpop.f32.mrf.mxu0
  %v12605 = vadd.f32 %v12436, %v12604
  %v12606 = vpop.f32.mrf.mxu0
  %v12607 = vadd.f32 %v12438, %v12606
  %12608 = vmatmul.bf16.gmra.mxu0 %v12137
  %v12609 = vpop.f32.mrf.mxu0
  %v12610 = vadd.f32 %v12441, %v12609
  %v12611 = vpop.f32.mrf.mxu0
  %v12612 = vadd.f32 %v12443, %v12611
  %12613 = vmatmul.bf16.gmra.mxu0 %v12140
  %v12614 = vpop.f32.mrf.mxu0
  %v12615 = vadd.f32 %v12446, %v12614
  %v12616 = vpop.f32.mrf.mxu0
  %v12617 = vadd.f32 %v12448, %v12616
  %12618 = vmatmul.bf16.gmra.mxu0 %v12143
  %v12619 = vpop.f32.mrf.mxu0
  %v12620 = vadd.f32 %v12451, %v12619
  %v12621 = vpop.f32.mrf.mxu0
  %v12622 = vadd.f32 %v12453, %v12621
  %12623 = vmatmul.bf16.gmra.mxu0 %v12146
  %v12624 = vpop.f32.mrf.mxu0
  %v12625 = vadd.f32 %v12456, %v12624
  %v12626 = vpop.f32.mrf.mxu0
  %v12627 = vadd.f32 %v12458, %v12626
  %12628 = vmatmul.bf16.gmra.mxu0 %v12149
  %v12629 = vpop.f32.mrf.mxu0
  %v12630 = vadd.f32 %v12461, %v12629
  %v12631 = vpop.f32.mrf.mxu0
  %v12632 = vadd.f32 %v12463, %v12631
  %12633 = vmatmul.bf16.gmra.mxu0 %v12152
  %v12634 = vpop.f32.mrf.mxu0
  %v12635 = vadd.f32 %v12466, %v12634
  %v12636 = vpop.f32.mrf.mxu0
  %v12637 = vadd.f32 %v12468, %v12636
  %12638 = vmatmul.bf16.gmra.mxu0 %v12155
  %v12639 = vpop.f32.mrf.mxu0
  %v12640 = vadd.f32 %v12471, %v12639
  %v12641 = vpop.f32.mrf.mxu0
  %v12642 = vadd.f32 %v12473, %v12641
  %12643 = vmatmul.bf16.gmra.mxu0 %v12158
  %v12644 = vpop.f32.mrf.mxu0
  %v12645 = vadd.f32 %v12476, %v12644
  %v12646 = vpop.f32.mrf.mxu0
  %v12647 = vadd.f32 %v12478, %v12646
  %12648 = vmatmul.bf16.gmra.mxu0 %v12161
  %v12649 = vpop.f32.mrf.mxu0
  %v12650 = vadd.f32 %v12481, %v12649
  %v12651 = vpop.f32.mrf.mxu0
  %v12652 = vadd.f32 %v12483, %v12651
  %12653 = vmatmul.bf16.gmra.mxu0 %v12164
  %v12654 = vpop.f32.mrf.mxu0
  %v12655 = vadd.f32 %v12486, %v12654
  %v12656 = vpop.f32.mrf.mxu0
  %v12657 = vadd.f32 %v12488, %v12656
  %12658 = vmatmul.bf16.gmra.mxu0 %v12167
  %v12659 = vpop.f32.mrf.mxu0
  %v12660 = vadd.f32 %v12491, %v12659
  %v12661 = vpop.f32.mrf.mxu0
  %v12662 = vadd.f32 %v12493, %v12661
  %12663 = vmatmul.bf16.gmra.mxu0 %v12170
  %v12664 = vpop.f32.mrf.mxu0
  %v12665 = vadd.f32 %v12496, %v12664
  %v12666 = vpop.f32.mrf.mxu0
  %v12667 = vadd.f32 %v12498, %v12666
  %12668 = vmatmul.bf16.gmra.mxu0 %v12173
  %v12669 = vpop.f32.mrf.mxu0
  %v12670 = vadd.f32 %v12501, %v12669
  %v12671 = vpop.f32.mrf.mxu0
  %v12672 = vadd.f32 %v12503, %v12671
  %12673 = vmatmul.bf16.gmra.mxu0 %v12176
  %v12674 = vpop.f32.mrf.mxu0
  %v12675 = vadd.f32 %v12506, %v12674
  %v12676 = vpop.f32.mrf.mxu0
  %v12677 = vadd.f32 %v12508, %v12676
  %12678 = vmatmul.bf16.gmra.mxu0 %v12179
  %v12679 = vpop.f32.mrf.mxu0
  %v12680 = vadd.f32 %v12511, %v12679
  %v12681 = vpop.f32.mrf.mxu0
  %v12682 = vadd.f32 %v12513, %v12681
  %12683 = vmatmul.bf16.gmra.mxu0 %v12182
  %v12684 = vpop.f32.mrf.mxu0
  %v12685 = vadd.f32 %v12516, %v12684
  %v12686 = vpop.f32.mrf.mxu0
  %v12687 = vadd.f32 %v12518, %v12686
  %12688 = vmatmul.bf16.gmra.mxu0 %v12185
  %v12689 = vpop.f32.mrf.mxu0
  %v12690 = vadd.f32 %v12521, %v12689
  %v12691 = vpop.f32.mrf.mxu0
  %v12692 = vadd.f32 %v12523, %v12691
  %12693 = vdwg.mxu0
  %vm12694 = vcmp.gt.f32.partialorder %v12535, 0.0
  %vm12695 = vcmp.gt.f32.partialorder %v12537, 0.0
  %vm12696 = vcmp.gt.f32.partialorder %v12540, 0.0
  %vm12697 = vcmp.gt.f32.partialorder %v12542, 0.0
  %vm12698 = vcmp.gt.f32.partialorder %v12545, 0.0
  %vm12699 = vcmp.gt.f32.partialorder %v12547, 0.0
  %vm12700 = vcmp.gt.f32.partialorder %v12550, 0.0
  %vm12701 = vcmp.gt.f32.partialorder %v12552, 0.0
  %vm12702 = vcmp.gt.f32.partialorder %v12555, 0.0
  %vm12703 = vcmp.gt.f32.partialorder %v12557, 0.0
  %vm12704 = vcmp.gt.f32.partialorder %v12560, 0.0
  %vm12705 = vcmp.gt.f32.partialorder %v12562, 0.0
  %vm12706 = vcmp.gt.f32.partialorder %v12565, 0.0
  %vm12707 = vcmp.gt.f32.partialorder %v12567, 0.0
  %vm12708 = vcmp.gt.f32.partialorder %v12570, 0.0
  %vm12709 = vcmp.gt.f32.partialorder %v12572, 0.0
  %vm12710 = vcmp.gt.f32.partialorder %v12575, 0.0
  %vm12711 = vcmp.gt.f32.partialorder %v12577, 0.0
  %vm12712 = vcmp.gt.f32.partialorder %v12580, 0.0
  %vm12713 = vcmp.gt.f32.partialorder %v12582, 0.0
  %vm12714 = vcmp.gt.f32.partialorder %v12585, 0.0
  %vm12715 = vcmp.gt.f32.partialorder %v12587, 0.0
  %vm12716 = vcmp.gt.f32.partialorder %v12590, 0.0
  %vm12717 = vcmp.gt.f32.partialorder %v12592, 0.0
  %vm12718 = vcmp.gt.f32.partialorder %v12595, 0.0
  %vm12719 = vcmp.gt.f32.partialorder %v12597, 0.0
  %vm12720 = vcmp.gt.f32.partialorder %v12600, 0.0
  %vm12721 = vcmp.gt.f32.partialorder %v12602, 0.0
  %vm12722 = vcmp.gt.f32.partialorder %v12605, 0.0
  %vm12723 = vcmp.gt.f32.partialorder %v12607, 0.0
  %vm12724 = vcmp.gt.f32.partialorder %v12610, 0.0
  %vm12725 = vcmp.gt.f32.partialorder %v12612, 0.0
  %vm12726 = vcmp.gt.f32.partialorder %v12615, 0.0
  %vm12727 = vcmp.gt.f32.partialorder %v12617, 0.0
  %vm12728 = vcmp.gt.f32.partialorder %v12620, 0.0
  %vm12729 = vcmp.gt.f32.partialorder %v12622, 0.0
  %vm12730 = vcmp.gt.f32.partialorder %v12625, 0.0
  %vm12731 = vcmp.gt.f32.partialorder %v12627, 0.0
  %vm12732 = vcmp.gt.f32.partialorder %v12630, 0.0
  %vm12733 = vcmp.gt.f32.partialorder %v12632, 0.0
  %vm12734 = vcmp.gt.f32.partialorder %v12635, 0.0
  %vm12735 = vcmp.gt.f32.partialorder %v12637, 0.0
  %vm12736 = vcmp.gt.f32.partialorder %v12640, 0.0
  %vm12737 = vcmp.gt.f32.partialorder %v12642, 0.0
  %vm12738 = vcmp.gt.f32.partialorder %v12645, 0.0
  %vm12739 = vcmp.gt.f32.partialorder %v12647, 0.0
  %vm12740 = vcmp.gt.f32.partialorder %v12650, 0.0
  %vm12741 = vcmp.gt.f32.partialorder %v12652, 0.0
  %vm12742 = vcmp.gt.f32.partialorder %v12655, 0.0
  %vm12743 = vcmp.gt.f32.partialorder %v12657, 0.0
  %vm12744 = vcmp.gt.f32.partialorder %v12660, 0.0
  %vm12745 = vcmp.gt.f32.partialorder %v12662, 0.0
  %vm12746 = vcmp.gt.f32.partialorder %v12665, 0.0
  %vm12747 = vcmp.gt.f32.partialorder %v12667, 0.0
  %vm12748 = vcmp.gt.f32.partialorder %v12670, 0.0
  %vm12749 = vcmp.gt.f32.partialorder %v12672, 0.0
  %vm12750 = vcmp.gt.f32.partialorder %v12675, 0.0
  %vm12751 = vcmp.gt.f32.partialorder %v12677, 0.0
  %vm12752 = vcmp.gt.f32.partialorder %v12680, 0.0
  %vm12753 = vcmp.gt.f32.partialorder %v12682, 0.0
  %vm12754 = vcmp.gt.f32.partialorder %v12685, 0.0
  %vm12755 = vcmp.gt.f32.partialorder %v12687, 0.0
  %vm12756 = vcmp.gt.f32.partialorder %v12690, 0.0
  %vm12757 = vcmp.gt.f32.partialorder %v12692, 0.0
  %v12758 = vmul.f32 %v12535, 1.442695
  %v12759 = vpow.pop %v12758
  %v12760 = vmul.f32 %v12537, 1.442695
  %v12761 = vpow.pop %v12760
  %v12762 = vmul.f32 %v12540, 1.442695
  %v12763 = vpow.pop %v12762
  %v12764 = vmul.f32 %v12542, 1.442695
  %v12765 = vpow.pop %v12764
  %v12766 = vmul.f32 %v12545, 1.442695
  %v12767 = vpow.pop %v12766
  %v12768 = vmul.f32 %v12547, 1.442695
  %v12769 = vpow.pop %v12768
  %v12770 = vmul.f32 %v12550, 1.442695
  %v12771 = vpow.pop %v12770
  %v12772 = vmul.f32 %v12552, 1.442695
  %v12773 = vpow.pop %v12772
  %v12774 = vmul.f32 %v12555, 1.442695
  %v12775 = vpow.pop %v12774
  %v12776 = vmul.f32 %v12557, 1.442695
  %v12777 = vpow.pop %v12776
  %v12778 = vmul.f32 %v12560, 1.442695
  %v12779 = vpow.pop %v12778
  %v12780 = vmul.f32 %v12562, 1.442695
  %v12781 = vpow.pop %v12780
  %v12782 = vmul.f32 %v12565, 1.442695
  %v12783 = vpow.pop %v12782
  %v12784 = vmul.f32 %v12567, 1.442695
  %v12785 = vpow.pop %v12784
  %v12786 = vmul.f32 %v12570, 1.442695
  %v12787 = vpow.pop %v12786
  %v12788 = vmul.f32 %v12572, 1.442695
  %v12789 = vpow.pop %v12788
  %v12790 = vmul.f32 %v12575, 1.442695
  %v12791 = vpow.pop %v12790
  %v12792 = vmul.f32 %v12577, 1.442695
  %v12793 = vpow.pop %v12792
  %v12794 = vmul.f32 %v12580, 1.442695
  %v12795 = vpow.pop %v12794
  %v12796 = vmul.f32 %v12582, 1.442695
  %v12797 = vpow.pop %v12796
  %v12798 = vmul.f32 %v12585, 1.442695
  %v12799 = vpow.pop %v12798
  %v12800 = vmul.f32 %v12587, 1.442695
  %v12801 = vpow.pop %v12800
  %v12802 = vmul.f32 %v12590, 1.442695
  %v12803 = vpow.pop %v12802
  %v12804 = vmul.f32 %v12592, 1.442695
  %v12805 = vpow.pop %v12804
  %v12806 = vmul.f32 %v12595, 1.442695
  %v12807 = vpow.pop %v12806
  %v12808 = vmul.f32 %v12597, 1.442695
  %v12809 = vpow.pop %v12808
  %v12810 = vmul.f32 %v12600, 1.442695
  %v12811 = vpow.pop %v12810
  %v12812 = vmul.f32 %v12602, 1.442695
  %v12813 = vpow.pop %v12812
  %v12814 = vmul.f32 %v12605, 1.442695
  %v12815 = vpow.pop %v12814
  %v12816 = vmul.f32 %v12607, 1.442695
  %v12817 = vpow.pop %v12816
  %v12818 = vmul.f32 %v12610, 1.442695
  %v12819 = vpow.pop %v12818
  %v12820 = vmul.f32 %v12612, 1.442695
  %v12821 = vpow.pop %v12820
  %v12822 = vmul.f32 %v12615, 1.442695
  %v12823 = vpow.pop %v12822
  %v12824 = vmul.f32 %v12617, 1.442695
  %v12825 = vpow.pop %v12824
  %v12826 = vmul.f32 %v12620, 1.442695
  %v12827 = vpow.pop %v12826
  %v12828 = vmul.f32 %v12622, 1.442695
  %v12829 = vpow.pop %v12828
  %v12830 = vmul.f32 %v12625, 1.442695
  %v12831 = vpow.pop %v12830
  %v12832 = vmul.f32 %v12627, 1.442695
  %v12833 = vpow.pop %v12832
  %v12834 = vmul.f32 %v12630, 1.442695
  %v12835 = vpow.pop %v12834
  %v12836 = vmul.f32 %v12632, 1.442695
  %v12837 = vpow.pop %v12836
  %v12838 = vmul.f32 %v12635, 1.442695
  %v12839 = vpow.pop %v12838
  %v12840 = vmul.f32 %v12637, 1.442695
  %v12841 = vpow.pop %v12840
  %v12842 = vmul.f32 %v12640, 1.442695
  %v12843 = vpow.pop %v12842
  %v12844 = vmul.f32 %v12642, 1.442695
  %v12845 = vpow.pop %v12844
  %v12846 = vmul.f32 %v12645, 1.442695
  %v12847 = vpow.pop %v12846
  %v12848 = vmul.f32 %v12647, 1.442695
  %v12849 = vpow.pop %v12848
  %v12850 = vmul.f32 %v12650, 1.442695
  %v12851 = vpow.pop %v12850
  %v12852 = vmul.f32 %v12652, 1.442695
  %v12853 = vpow.pop %v12852
  %v12854 = vmul.f32 %v12655, 1.442695
  %v12855 = vpow.pop %v12854
  %v12856 = vmul.f32 %v12657, 1.442695
  %v12857 = vpow.pop %v12856
  %v12858 = vmul.f32 %v12660, 1.442695
  %v12859 = vpow.pop %v12858
  %v12860 = vmul.f32 %v12662, 1.442695
  %v12861 = vpow.pop %v12860
  %v12862 = vmul.f32 %v12665, 1.442695
  %v12863 = vpow.pop %v12862
  %v12864 = vmul.f32 %v12667, 1.442695
  %v12865 = vpow.pop %v12864
  %v12866 = vmul.f32 %v12670, 1.442695
  %v12867 = vpow.pop %v12866
  %v12868 = vmul.f32 %v12672, 1.442695
  %v12869 = vpow.pop %v12868
  %v12870 = vmul.f32 %v12675, 1.442695
  %v12871 = vpow.pop %v12870
  %v12872 = vmul.f32 %v12677, 1.442695
  %v12873 = vpow.pop %v12872
  %v12874 = vmul.f32 %v12680, 1.442695
  %v12875 = vpow.pop %v12874
  %v12876 = vmul.f32 %v12682, 1.442695
  %v12877 = vpow.pop %v12876
  %v12878 = vmul.f32 %v12685, 1.442695
  %v12879 = vpow.pop %v12878
  %v12880 = vmul.f32 %v12687, 1.442695
  %v12881 = vpow.pop %v12880
  %v12882 = vmul.f32 %v12690, 1.442695
  %v12883 = vpow.pop %v12882
  %v12884 = vmul.f32 %v12692, 1.442695
  %v12885 = vpow.pop %v12884
  %v12886 = vsub.f32 %v12759, 1.0
  %v12887 = vsub.f32 %v12761, 1.0
  %v12888 = vsub.f32 %v12763, 1.0
  %v12889 = vsub.f32 %v12765, 1.0
  %v12890 = vsub.f32 %v12767, 1.0
  %v12891 = vsub.f32 %v12769, 1.0
  %v12892 = vsub.f32 %v12771, 1.0
  %v12893 = vsub.f32 %v12773, 1.0
  %v12894 = vsub.f32 %v12775, 1.0
  %v12895 = vsub.f32 %v12777, 1.0
  %v12896 = vsub.f32 %v12779, 1.0
  %v12897 = vsub.f32 %v12781, 1.0
  %v12898 = vsub.f32 %v12783, 1.0
  %v12899 = vsub.f32 %v12785, 1.0
  %v12900 = vsub.f32 %v12787, 1.0
  %v12901 = vsub.f32 %v12789, 1.0
  %v12902 = vsub.f32 %v12791, 1.0
  %v12903 = vsub.f32 %v12793, 1.0
  %v12904 = vsub.f32 %v12795, 1.0
  %v12905 = vsub.f32 %v12797, 1.0
  %v12906 = vsub.f32 %v12799, 1.0
  %v12907 = vsub.f32 %v12801, 1.0
  %v12908 = vsub.f32 %v12803, 1.0
  %v12909 = vsub.f32 %v12805, 1.0
  %v12910 = vsub.f32 %v12807, 1.0
  %v12911 = vsub.f32 %v12809, 1.0
  %v12912 = vsub.f32 %v12811, 1.0
  %v12913 = vsub.f32 %v12813, 1.0
  %v12914 = vsub.f32 %v12815, 1.0
  %v12915 = vsub.f32 %v12817, 1.0
  %v12916 = vsub.f32 %v12819, 1.0
  %v12917 = vsub.f32 %v12821, 1.0
  %v12918 = vsub.f32 %v12823, 1.0
  %v12919 = vsub.f32 %v12825, 1.0
  %v12920 = vsub.f32 %v12827, 1.0
  %v12921 = vsub.f32 %v12829, 1.0
  %v12922 = vsub.f32 %v12831, 1.0
  %v12923 = vsub.f32 %v12833, 1.0
  %v12924 = vsub.f32 %v12835, 1.0
  %v12925 = vsub.f32 %v12837, 1.0
  %v12926 = vsub.f32 %v12839, 1.0
  %v12927 = vsub.f32 %v12841, 1.0
  %v12928 = vsub.f32 %v12843, 1.0
  %v12929 = vsub.f32 %v12845, 1.0
  %v12930 = vsub.f32 %v12847, 1.0
  %v12931 = vsub.f32 %v12849, 1.0
  %v12932 = vsub.f32 %v12851, 1.0
  %v12933 = vsub.f32 %v12853, 1.0
  %v12934 = vsub.f32 %v12855, 1.0
  %v12935 = vsub.f32 %v12857, 1.0
  %v12936 = vsub.f32 %v12859, 1.0
  %v12937 = vsub.f32 %v12861, 1.0
  %v12938 = vsub.f32 %v12863, 1.0
  %v12939 = vsub.f32 %v12865, 1.0
  %v12940 = vsub.f32 %v12867, 1.0
  %v12941 = vsub.f32 %v12869, 1.0
  %v12942 = vsub.f32 %v12871, 1.0
  %v12943 = vsub.f32 %v12873, 1.0
  %v12944 = vsub.f32 %v12875, 1.0
  %v12945 = vsub.f32 %v12877, 1.0
  %v12946 = vsub.f32 %v12879, 1.0
  %v12947 = vsub.f32 %v12881, 1.0
  %v12948 = vsub.f32 %v12883, 1.0
  %v12949 = vsub.f32 %v12885, 1.0
  %v12950 = vsel %vm12694, %v12535, %v12886
  %v12951 = vsel %vm12695, %v12537, %v12887
  %v12952 = vsel %vm12696, %v12540, %v12888
  %v12953 = vsel %vm12697, %v12542, %v12889
  %v12954 = vsel %vm12698, %v12545, %v12890
  %v12955 = vsel %vm12699, %v12547, %v12891
  %v12956 = vsel %vm12700, %v12550, %v12892
  %v12957 = vsel %vm12701, %v12552, %v12893
  %v12958 = vsel %vm12702, %v12555, %v12894
  %v12959 = vsel %vm12703, %v12557, %v12895
  %v12960 = vsel %vm12704, %v12560, %v12896
  %v12961 = vsel %vm12705, %v12562, %v12897
  %v12962 = vsel %vm12706, %v12565, %v12898
  %v12963 = vsel %vm12707, %v12567, %v12899
  %v12964 = vsel %vm12708, %v12570, %v12900
  %v12965 = vsel %vm12709, %v12572, %v12901
  %v12966 = vsel %vm12710, %v12575, %v12902
  %v12967 = vsel %vm12711, %v12577, %v12903
  %v12968 = vsel %vm12712, %v12580, %v12904
  %v12969 = vsel %vm12713, %v12582, %v12905
  %v12970 = vsel %vm12714, %v12585, %v12906
  %v12971 = vsel %vm12715, %v12587, %v12907
  %v12972 = vsel %vm12716, %v12590, %v12908
  %v12973 = vsel %vm12717, %v12592, %v12909
  %v12974 = vsel %vm12718, %v12595, %v12910
  %v12975 = vsel %vm12719, %v12597, %v12911
  %v12976 = vsel %vm12720, %v12600, %v12912
  %v12977 = vsel %vm12721, %v12602, %v12913
  %v12978 = vsel %vm12722, %v12605, %v12914
  %v12979 = vsel %vm12723, %v12607, %v12915
  %v12980 = vsel %vm12724, %v12610, %v12916
  %v12981 = vsel %vm12725, %v12612, %v12917
  %v12982 = vsel %vm12726, %v12615, %v12918
  %v12983 = vsel %vm12727, %v12617, %v12919
  %v12984 = vsel %vm12728, %v12620, %v12920
  %v12985 = vsel %vm12729, %v12622, %v12921
  %v12986 = vsel %vm12730, %v12625, %v12922
  %v12987 = vsel %vm12731, %v12627, %v12923
  %v12988 = vsel %vm12732, %v12630, %v12924
  %v12989 = vsel %vm12733, %v12632, %v12925
  %v12990 = vsel %vm12734, %v12635, %v12926
  %v12991 = vsel %vm12735, %v12637, %v12927
  %v12992 = vsel %vm12736, %v12640, %v12928
  %v12993 = vsel %vm12737, %v12642, %v12929
  %v12994 = vsel %vm12738, %v12645, %v12930
  %v12995 = vsel %vm12739, %v12647, %v12931
  %v12996 = vsel %vm12740, %v12650, %v12932
  %v12997 = vsel %vm12741, %v12652, %v12933
  %v12998 = vsel %vm12742, %v12655, %v12934
  %v12999 = vsel %vm12743, %v12657, %v12935
  %v13000 = vsel %vm12744, %v12660, %v12936
  %v13001 = vsel %vm12745, %v12662, %v12937
  %v13002 = vsel %vm12746, %v12665, %v12938
  %v13003 = vsel %vm12747, %v12667, %v12939
  %v13004 = vsel %vm12748, %v12670, %v12940
  %v13005 = vsel %vm12749, %v12672, %v12941
  %v13006 = vsel %vm12750, %v12675, %v12942
  %v13007 = vsel %vm12751, %v12677, %v12943
  %v13008 = vsel %vm12752, %v12680, %v12944
  %v13009 = vsel %vm12753, %v12682, %v12945
  %v13010 = vsel %vm12754, %v12685, %v12946
  %v13011 = vsel %vm12755, %v12687, %v12947
  %v13012 = vsel %vm12756, %v12690, %v12948
  %v13013 = vsel %vm12757, %v12692, %v12949
  %v13014 = vpack.c.bf16 %v12950, %v12950
  %v13015 = vpack.c.bf16 %v12951, %v12951
  %v13016 = vpack.c.bf16 %v12952, %v12952
  %v13017 = vpack.c.bf16 %v12953, %v12953
  %v13018 = vpack.c.bf16 %v12954, %v12954
  %v13019 = vpack.c.bf16 %v12955, %v12955
  %v13020 = vpack.c.bf16 %v12956, %v12956
  %v13021 = vpack.c.bf16 %v12957, %v12957
  %v13022 = vpack.c.bf16 %v12958, %v12958
  %v13023 = vpack.c.bf16 %v12959, %v12959
  %v13024 = vpack.c.bf16 %v12960, %v12960
  %v13025 = vpack.c.bf16 %v12961, %v12961
  %v13026 = vpack.c.bf16 %v12962, %v12962
  %v13027 = vpack.c.bf16 %v12963, %v12963
  %v13028 = vpack.c.bf16 %v12964, %v12964
  %v13029 = vpack.c.bf16 %v12965, %v12965
  %v13030 = vpack.c.bf16 %v12966, %v12966
  %v13031 = vpack.c.bf16 %v12967, %v12967
  %v13032 = vpack.c.bf16 %v12968, %v12968
  %v13033 = vpack.c.bf16 %v12969, %v12969
  %v13034 = vpack.c.bf16 %v12970, %v12970
  %v13035 = vpack.c.bf16 %v12971, %v12971
  %v13036 = vpack.c.bf16 %v12972, %v12972
  %v13037 = vpack.c.bf16 %v12973, %v12973
  %v13038 = vpack.c.bf16 %v12974, %v12974
  %v13039 = vpack.c.bf16 %v12975, %v12975
  %v13040 = vpack.c.bf16 %v12976, %v12976
  %v13041 = vpack.c.bf16 %v12977, %v12977
  %v13042 = vpack.c.bf16 %v12978, %v12978
  %v13043 = vpack.c.bf16 %v12979, %v12979
  %v13044 = vpack.c.bf16 %v12980, %v12980
  %v13045 = vpack.c.bf16 %v12981, %v12981
  %v13046 = vpack.c.bf16 %v12982, %v12982
  %v13047 = vpack.c.bf16 %v12983, %v12983
  %v13048 = vpack.c.bf16 %v12984, %v12984
  %v13049 = vpack.c.bf16 %v12985, %v12985
  %v13050 = vpack.c.bf16 %v12986, %v12986
  %v13051 = vpack.c.bf16 %v12987, %v12987
  %v13052 = vpack.c.bf16 %v12988, %v12988
  %v13053 = vpack.c.bf16 %v12989, %v12989
  %v13054 = vpack.c.bf16 %v12990, %v12990
  %v13055 = vpack.c.bf16 %v12991, %v12991
  %v13056 = vpack.c.bf16 %v12992, %v12992
  %v13057 = vpack.c.bf16 %v12993, %v12993
  %v13058 = vpack.c.bf16 %v12994, %v12994
  %v13059 = vpack.c.bf16 %v12995, %v12995
  %v13060 = vpack.c.bf16 %v12996, %v12996
  %v13061 = vpack.c.bf16 %v12997, %v12997
  %v13062 = vpack.c.bf16 %v12998, %v12998
  %v13063 = vpack.c.bf16 %v12999, %v12999
  %v13064 = vpack.c.bf16 %v13000, %v13000
  %v13065 = vpack.c.bf16 %v13001, %v13001
  %v13066 = vpack.c.bf16 %v13002, %v13002
  %v13067 = vpack.c.bf16 %v13003, %v13003
  %v13068 = vpack.c.bf16 %v13004, %v13004
  %v13069 = vpack.c.bf16 %v13005, %v13005
  %v13070 = vpack.c.bf16 %v13006, %v13006
  %v13071 = vpack.c.bf16 %v13007, %v13007
  %v13072 = vpack.c.bf16 %v13008, %v13008
  %v13073 = vpack.c.bf16 %v13009, %v13009
  %v13074 = vpack.c.bf16 %v13010, %v13010
  %v13075 = vpack.c.bf16 %v13011, %v13011
  %v13076 = vpack.c.bf16 %v13012, %v13012
  %v13077 = vpack.c.bf16 %v13013, %v13013
  %v13078 = vrot.slane %v12950, 1
  %v13079 = vrot.slane %v12951, 1
  %v13080 = vrot.slane %v12952, 1
  %v13081 = vrot.slane %v12953, 1
  %v13082 = vrot.slane %v12954, 1
  %v13083 = vrot.slane %v12955, 1
  %v13084 = vrot.slane %v12956, 1
  %v13085 = vrot.slane %v12957, 1
  %v13086 = vrot.slane %v12958, 1
  %v13087 = vrot.slane %v12959, 1
  %v13088 = vrot.slane %v12960, 1
  %v13089 = vrot.slane %v12961, 1
  %v13090 = vrot.slane %v12962, 1
  %v13091 = vrot.slane %v12963, 1
  %v13092 = vrot.slane %v12964, 1
  %v13093 = vrot.slane %v12965, 1
  %v13094 = vrot.slane %v12966, 1
  %v13095 = vrot.slane %v12967, 1
  %v13096 = vrot.slane %v12968, 1
  %v13097 = vrot.slane %v12969, 1
  %v13098 = vrot.slane %v12970, 1
  %v13099 = vrot.slane %v12971, 1
  %v13100 = vrot.slane %v12972, 1
  %v13101 = vrot.slane %v12973, 1
  %v13102 = vrot.slane %v12974, 1
  %v13103 = vrot.slane %v12975, 1
  %v13104 = vrot.slane %v12976, 1
  %v13105 = vrot.slane %v12977, 1
  %v13106 = vrot.slane %v12978, 1
  %v13107 = vrot.slane %v12979, 1
  %v13108 = vrot.slane %v12980, 1
  %v13109 = vrot.slane %v12981, 1
  %v13110 = vrot.slane %v12982, 1
  %v13111 = vrot.slane %v12983, 1
  %v13112 = vrot.slane %v12984, 1
  %v13113 = vrot.slane %v12985, 1
  %v13114 = vrot.slane %v12986, 1
  %v13115 = vrot.slane %v12987, 1
  %v13116 = vrot.slane %v12988, 1
  %v13117 = vrot.slane %v12989, 1
  %v13118 = vrot.slane %v12990, 1
  %v13119 = vrot.slane %v12991, 1
  %v13120 = vrot.slane %v12992, 1
  %v13121 = vrot.slane %v12993, 1
  %v13122 = vrot.slane %v12994, 1
  %v13123 = vrot.slane %v12995, 1
  %v13124 = vrot.slane %v12996, 1
  %v13125 = vrot.slane %v12997, 1
  %v13126 = vrot.slane %v12998, 1
  %v13127 = vrot.slane %v12999, 1
  %v13128 = vrot.slane %v13000, 1
  %v13129 = vrot.slane %v13001, 1
  %v13130 = vrot.slane %v13002, 1
  %v13131 = vrot.slane %v13003, 1
  %v13132 = vrot.slane %v13004, 1
  %v13133 = vrot.slane %v13005, 1
  %v13134 = vrot.slane %v13006, 1
  %v13135 = vrot.slane %v13007, 1
  %v13136 = vrot.slane %v13008, 1
  %v13137 = vrot.slane %v13009, 1
  %v13138 = vrot.slane %v13010, 1
  %v13139 = vrot.slane %v13011, 1
  %v13140 = vrot.slane %v13012, 1
  %v13141 = vrot.slane %v13013, 1
  %v13142 = vsel %vm402, %v13140, %v13141
  %v13143 = vsel %vm402, %v13139, %v13140
  %v13144 = vsel %vm402, %v13138, %v13139
  %v13145 = vsel %vm402, %v13137, %v13138
  %v13146 = vsel %vm402, %v13136, %v13137
  %v13147 = vsel %vm402, %v13135, %v13136
  %v13148 = vsel %vm402, %v13134, %v13135
  %v13149 = vsel %vm402, %v13133, %v13134
  %v13150 = vsel %vm402, %v13132, %v13133
  %v13151 = vsel %vm402, %v13131, %v13132
  %v13152 = vsel %vm402, %v13130, %v13131
  %v13153 = vsel %vm402, %v13129, %v13130
  %v13154 = vsel %vm402, %v13128, %v13129
  %v13155 = vsel %vm402, %v13127, %v13128
  %v13156 = vsel %vm402, %v13126, %v13127
  %v13157 = vsel %vm402, %v13125, %v13126
  %v13158 = vsel %vm402, %v13124, %v13125
  %v13159 = vsel %vm402, %v13123, %v13124
  %v13160 = vsel %vm402, %v13122, %v13123
  %v13161 = vsel %vm402, %v13121, %v13122
  %v13162 = vsel %vm402, %v13120, %v13121
  %v13163 = vsel %vm402, %v13119, %v13120
  %v13164 = vsel %vm402, %v13118, %v13119
  %v13165 = vsel %vm402, %v13117, %v13118
  %v13166 = vsel %vm402, %v13116, %v13117
  %v13167 = vsel %vm402, %v13115, %v13116
  %v13168 = vsel %vm402, %v13114, %v13115
  %v13169 = vsel %vm402, %v13113, %v13114
  %v13170 = vsel %vm402, %v13112, %v13113
  %v13171 = vsel %vm402, %v13111, %v13112
  %v13172 = vsel %vm402, %v13110, %v13111
  %v13173 = vsel %vm402, %v13109, %v13110
  %v13174 = vsel %vm402, %v13108, %v13109
  %v13175 = vsel %vm402, %v13107, %v13108
  %v13176 = vsel %vm402, %v13106, %v13107
  %v13177 = vsel %vm402, %v13105, %v13106
  %v13178 = vsel %vm402, %v13104, %v13105
  %v13179 = vsel %vm402, %v13103, %v13104
  %v13180 = vsel %vm402, %v13102, %v13103
  %v13181 = vsel %vm402, %v13101, %v13102
  %v13182 = vsel %vm402, %v13100, %v13101
  %v13183 = vsel %vm402, %v13099, %v13100
  %v13184 = vsel %vm402, %v13098, %v13099
  %v13185 = vsel %vm402, %v13097, %v13098
  %v13186 = vsel %vm402, %v13096, %v13097
  %v13187 = vsel %vm402, %v13095, %v13096
  %v13188 = vsel %vm402, %v13094, %v13095
  %v13189 = vsel %vm402, %v13093, %v13094
  %v13190 = vsel %vm402, %v13092, %v13093
  %v13191 = vsel %vm402, %v13091, %v13092
  %v13192 = vsel %vm402, %v13090, %v13091
  %v13193 = vsel %vm402, %v13089, %v13090
  %v13194 = vsel %vm402, %v13088, %v13089
  %v13195 = vsel %vm402, %v13087, %v13088
  %v13196 = vsel %vm402, %v13086, %v13087
  %v13197 = vsel %vm402, %v13085, %v13086
  %v13198 = vsel %vm402, %v13084, %v13085
  %v13199 = vsel %vm402, %v13083, %v13084
  %v13200 = vsel %vm402, %v13082, %v13083
  %v13201 = vsel %vm402, %v13081, %v13082
  %v13202 = vsel %vm402, %v13080, %v13081
  %v13203 = vsel %vm402, %v13079, %v13080
  %v13204 = vsel %vm402, %v13078, %v13079
  %v13205 = vsel %vm402, %v13141, %v13078
  %v13206 = vpack.c.bf16 %v13204, %v13204
  %v13207 = vpack.c.bf16 %v13203, %v13203
  %v13208 = vpack.c.bf16 %v13202, %v13202
  %v13209 = vpack.c.bf16 %v13201, %v13201
  %v13210 = vpack.c.bf16 %v13200, %v13200
  %v13211 = vpack.c.bf16 %v13199, %v13199
  %v13212 = vpack.c.bf16 %v13198, %v13198
  %v13213 = vpack.c.bf16 %v13197, %v13197
  %v13214 = vpack.c.bf16 %v13196, %v13196
  %v13215 = vpack.c.bf16 %v13195, %v13195
  %v13216 = vpack.c.bf16 %v13194, %v13194
  %v13217 = vpack.c.bf16 %v13193, %v13193
  %v13218 = vpack.c.bf16 %v13192, %v13192
  %v13219 = vpack.c.bf16 %v13191, %v13191
  %v13220 = vpack.c.bf16 %v13190, %v13190
  %v13221 = vpack.c.bf16 %v13189, %v13189
  %v13222 = vpack.c.bf16 %v13188, %v13188
  %v13223 = vpack.c.bf16 %v13187, %v13187
  %v13224 = vpack.c.bf16 %v13186, %v13186
  %v13225 = vpack.c.bf16 %v13185, %v13185
  %v13226 = vpack.c.bf16 %v13184, %v13184
  %v13227 = vpack.c.bf16 %v13183, %v13183
  %v13228 = vpack.c.bf16 %v13182, %v13182
  %v13229 = vpack.c.bf16 %v13181, %v13181
  %v13230 = vpack.c.bf16 %v13180, %v13180
  %v13231 = vpack.c.bf16 %v13179, %v13179
  %v13232 = vpack.c.bf16 %v13178, %v13178
  %v13233 = vpack.c.bf16 %v13177, %v13177
  %v13234 = vpack.c.bf16 %v13176, %v13176
  %v13235 = vpack.c.bf16 %v13175, %v13175
  %v13236 = vpack.c.bf16 %v13174, %v13174
  %v13237 = vpack.c.bf16 %v13173, %v13173
  %v13238 = vpack.c.bf16 %v13172, %v13172
  %v13239 = vpack.c.bf16 %v13171, %v13171
  %v13240 = vpack.c.bf16 %v13170, %v13170
  %v13241 = vpack.c.bf16 %v13169, %v13169
  %v13242 = vpack.c.bf16 %v13168, %v13168
  %v13243 = vpack.c.bf16 %v13167, %v13167
  %v13244 = vpack.c.bf16 %v13166, %v13166
  %v13245 = vpack.c.bf16 %v13165, %v13165
  %v13246 = vpack.c.bf16 %v13164, %v13164
  %v13247 = vpack.c.bf16 %v13163, %v13163
  %v13248 = vpack.c.bf16 %v13162, %v13162
  %v13249 = vpack.c.bf16 %v13161, %v13161
  %v13250 = vpack.c.bf16 %v13160, %v13160
  %v13251 = vpack.c.bf16 %v13159, %v13159
  %v13252 = vpack.c.bf16 %v13158, %v13158
  %v13253 = vpack.c.bf16 %v13157, %v13157
  %v13254 = vpack.c.bf16 %v13156, %v13156
  %v13255 = vpack.c.bf16 %v13155, %v13155
  %v13256 = vpack.c.bf16 %v13154, %v13154
  %v13257 = vpack.c.bf16 %v13153, %v13153
  %v13258 = vpack.c.bf16 %v13152, %v13152
  %v13259 = vpack.c.bf16 %v13151, %v13151
  %v13260 = vpack.c.bf16 %v13150, %v13150
  %v13261 = vpack.c.bf16 %v13149, %v13149
  %v13262 = vpack.c.bf16 %v13148, %v13148
  %v13263 = vpack.c.bf16 %v13147, %v13147
  %v13264 = vpack.c.bf16 %v13146, %v13146
  %v13265 = vpack.c.bf16 %v13145, %v13145
  %v13266 = vpack.c.bf16 %v13144, %v13144
  %v13267 = vpack.c.bf16 %v13143, %v13143
  %v13268 = vpack.c.bf16 %v13142, %v13142
  %v13269 = vpack.c.bf16 %v13205, %v13205
  %v13334 = vunpack.c.l.b16 %v13014
  %v13335 = vunpack.c.l.b16 %v13015
  %v13336 = vunpack.c.l.b16 %v13016
  %v13337 = vunpack.c.l.b16 %v13017
  %v13338 = vunpack.c.l.b16 %v13018
  %v13339 = vunpack.c.l.b16 %v13019
  %v13340 = vunpack.c.l.b16 %v13020
  %v13341 = vunpack.c.l.b16 %v13021
  %v13342 = vunpack.c.l.b16 %v13022
  %v13343 = vunpack.c.l.b16 %v13023
  %v13344 = vunpack.c.l.b16 %v13024
  %v13345 = vunpack.c.l.b16 %v13025
  %v13346 = vunpack.c.l.b16 %v13026
  %v13347 = vunpack.c.l.b16 %v13027
  %v13348 = vunpack.c.l.b16 %v13028
  %v13349 = vunpack.c.l.b16 %v13029
  %v13350 = vunpack.c.l.b16 %v13030
  %v13351 = vunpack.c.l.b16 %v13031
  %v13352 = vunpack.c.l.b16 %v13032
  %v13353 = vunpack.c.l.b16 %v13033
  %v13354 = vunpack.c.l.b16 %v13034
  %v13355 = vunpack.c.l.b16 %v13035
  %v13356 = vunpack.c.l.b16 %v13036
  %v13357 = vunpack.c.l.b16 %v13037
  %v13358 = vunpack.c.l.b16 %v13038
  %v13359 = vunpack.c.l.b16 %v13039
  %v13360 = vunpack.c.l.b16 %v13040
  %v13361 = vunpack.c.l.b16 %v13041
  %v13362 = vunpack.c.l.b16 %v13042
  %v13363 = vunpack.c.l.b16 %v13043
  %v13364 = vunpack.c.l.b16 %v13044
  %v13365 = vunpack.c.l.b16 %v13045
  %v13366 = vunpack.c.l.b16 %v13046
  %v13367 = vunpack.c.l.b16 %v13047
  %v13368 = vunpack.c.l.b16 %v13048
  %v13369 = vunpack.c.l.b16 %v13049
  %v13370 = vunpack.c.l.b16 %v13050
  %v13371 = vunpack.c.l.b16 %v13051
  %v13372 = vunpack.c.l.b16 %v13052
  %v13373 = vunpack.c.l.b16 %v13053
  %v13374 = vunpack.c.l.b16 %v13054
  %v13375 = vunpack.c.l.b16 %v13055
  %v13376 = vunpack.c.l.b16 %v13056
  %v13377 = vunpack.c.l.b16 %v13057
  %v13378 = vunpack.c.l.b16 %v13058
  %v13379 = vunpack.c.l.b16 %v13059
  %v13380 = vunpack.c.l.b16 %v13060
  %v13381 = vunpack.c.l.b16 %v13061
  %v13382 = vunpack.c.l.b16 %v13062
  %v13383 = vunpack.c.l.b16 %v13063
  %v13384 = vunpack.c.l.b16 %v13064
  %v13385 = vunpack.c.l.b16 %v13065
  %v13386 = vunpack.c.l.b16 %v13066
  %v13387 = vunpack.c.l.b16 %v13067
  %v13388 = vunpack.c.l.b16 %v13068
  %v13389 = vunpack.c.l.b16 %v13069
  %v13390 = vunpack.c.l.b16 %v13070
  %v13391 = vunpack.c.l.b16 %v13071
  %v13392 = vunpack.c.l.b16 %v13072
  %v13393 = vunpack.c.l.b16 %v13073
  %v13394 = vunpack.c.l.b16 %v13074
  %v13395 = vunpack.c.l.b16 %v13075
  %v13396 = vunpack.c.l.b16 %v13076
  %v13397 = vunpack.c.l.b16 %v13077
  %v13398 = vpack.c.b16 %v13335, %v13334
  %v13399 = vpack.c.b16 %v13337, %v13336
  %v13400 = vpack.c.b16 %v13339, %v13338
  %v13401 = vpack.c.b16 %v13341, %v13340
  %v13402 = vpack.c.b16 %v13343, %v13342
  %v13403 = vpack.c.b16 %v13345, %v13344
  %v13404 = vpack.c.b16 %v13347, %v13346
  %v13405 = vpack.c.b16 %v13349, %v13348
  %v13406 = vpack.c.b16 %v13351, %v13350
  %v13407 = vpack.c.b16 %v13353, %v13352
  %v13408 = vpack.c.b16 %v13355, %v13354
  %v13409 = vpack.c.b16 %v13357, %v13356
  %v13410 = vpack.c.b16 %v13359, %v13358
  %v13411 = vpack.c.b16 %v13361, %v13360
  %v13412 = vpack.c.b16 %v13363, %v13362
  %v13413 = vpack.c.b16 %v13365, %v13364
  %v13414 = vpack.c.b16 %v13367, %v13366
  %v13415 = vpack.c.b16 %v13369, %v13368
  %v13416 = vpack.c.b16 %v13371, %v13370
  %v13417 = vpack.c.b16 %v13373, %v13372
  %v13418 = vpack.c.b16 %v13375, %v13374
  %v13419 = vpack.c.b16 %v13377, %v13376
  %v13420 = vpack.c.b16 %v13379, %v13378
  %v13421 = vpack.c.b16 %v13381, %v13380
  %v13422 = vpack.c.b16 %v13383, %v13382
  %v13423 = vpack.c.b16 %v13385, %v13384
  %v13424 = vpack.c.b16 %v13387, %v13386
  %v13425 = vpack.c.b16 %v13389, %v13388
  %v13426 = vpack.c.b16 %v13391, %v13390
  %v13427 = vpack.c.b16 %v13393, %v13392
  %v13428 = vpack.c.b16 %v13395, %v13394
  %v13429 = vpack.c.b16 %v13397, %v13396
  %v13494 = vunpack.c.l.b16 %v13206
  %v13495 = vunpack.c.l.b16 %v13207
  %v13496 = vunpack.c.l.b16 %v13208
  %v13497 = vunpack.c.l.b16 %v13209
  %v13498 = vunpack.c.l.b16 %v13210
  %v13499 = vunpack.c.l.b16 %v13211
  %v13500 = vunpack.c.l.b16 %v13212
  %v13501 = vunpack.c.l.b16 %v13213
  %v13502 = vunpack.c.l.b16 %v13214
  %v13503 = vunpack.c.l.b16 %v13215
  %v13504 = vunpack.c.l.b16 %v13216
  %v13505 = vunpack.c.l.b16 %v13217
  %v13506 = vunpack.c.l.b16 %v13218
  %v13507 = vunpack.c.l.b16 %v13219
  %v13508 = vunpack.c.l.b16 %v13220
  %v13509 = vunpack.c.l.b16 %v13221
  %v13510 = vunpack.c.l.b16 %v13222
  %v13511 = vunpack.c.l.b16 %v13223
  %v13512 = vunpack.c.l.b16 %v13224
  %v13513 = vunpack.c.l.b16 %v13225
  %v13514 = vunpack.c.l.b16 %v13226
  %v13515 = vunpack.c.l.b16 %v13227
  %v13516 = vunpack.c.l.b16 %v13228
  %v13517 = vunpack.c.l.b16 %v13229
  %v13518 = vunpack.c.l.b16 %v13230
  %v13519 = vunpack.c.l.b16 %v13231
  %v13520 = vunpack.c.l.b16 %v13232
  %v13521 = vunpack.c.l.b16 %v13233
  %v13522 = vunpack.c.l.b16 %v13234
  %v13523 = vunpack.c.l.b16 %v13235
  %v13524 = vunpack.c.l.b16 %v13236
  %v13525 = vunpack.c.l.b16 %v13237
  %v13526 = vunpack.c.l.b16 %v13238
  %v13527 = vunpack.c.l.b16 %v13239
  %v13528 = vunpack.c.l.b16 %v13240
  %v13529 = vunpack.c.l.b16 %v13241
  %v13530 = vunpack.c.l.b16 %v13242
  %v13531 = vunpack.c.l.b16 %v13243
  %v13532 = vunpack.c.l.b16 %v13244
  %v13533 = vunpack.c.l.b16 %v13245
  %v13534 = vunpack.c.l.b16 %v13246
  %v13535 = vunpack.c.l.b16 %v13247
  %v13536 = vunpack.c.l.b16 %v13248
  %v13537 = vunpack.c.l.b16 %v13249
  %v13538 = vunpack.c.l.b16 %v13250
  %v13539 = vunpack.c.l.b16 %v13251
  %v13540 = vunpack.c.l.b16 %v13252
  %v13541 = vunpack.c.l.b16 %v13253
  %v13542 = vunpack.c.l.b16 %v13254
  %v13543 = vunpack.c.l.b16 %v13255
  %v13544 = vunpack.c.l.b16 %v13256
  %v13545 = vunpack.c.l.b16 %v13257
  %v13546 = vunpack.c.l.b16 %v13258
  %v13547 = vunpack.c.l.b16 %v13259
  %v13548 = vunpack.c.l.b16 %v13260
  %v13549 = vunpack.c.l.b16 %v13261
  %v13550 = vunpack.c.l.b16 %v13262
  %v13551 = vunpack.c.l.b16 %v13263
  %v13552 = vunpack.c.l.b16 %v13264
  %v13553 = vunpack.c.l.b16 %v13265
  %v13554 = vunpack.c.l.b16 %v13266
  %v13555 = vunpack.c.l.b16 %v13267
  %v13556 = vunpack.c.l.b16 %v13268
  %v13557 = vunpack.c.l.b16 %v13269
  %v13558 = vpack.c.b16 %v13495, %v13494
  %v13559 = vpack.c.b16 %v13497, %v13496
  %v13560 = vpack.c.b16 %v13499, %v13498
  %v13561 = vpack.c.b16 %v13501, %v13500
  %v13562 = vpack.c.b16 %v13503, %v13502
  %v13563 = vpack.c.b16 %v13505, %v13504
  %v13564 = vpack.c.b16 %v13507, %v13506
  %v13565 = vpack.c.b16 %v13509, %v13508
  %v13566 = vpack.c.b16 %v13511, %v13510
  %v13567 = vpack.c.b16 %v13513, %v13512
  %v13568 = vpack.c.b16 %v13515, %v13514
  %v13569 = vpack.c.b16 %v13517, %v13516
  %v13570 = vpack.c.b16 %v13519, %v13518
  %v13571 = vpack.c.b16 %v13521, %v13520
  %v13572 = vpack.c.b16 %v13523, %v13522
  %v13573 = vpack.c.b16 %v13525, %v13524
  %v13574 = vpack.c.b16 %v13527, %v13526
  %v13575 = vpack.c.b16 %v13529, %v13528
  %v13576 = vpack.c.b16 %v13531, %v13530
  %v13577 = vpack.c.b16 %v13533, %v13532
  %v13578 = vpack.c.b16 %v13535, %v13534
  %v13579 = vpack.c.b16 %v13537, %v13536
  %v13580 = vpack.c.b16 %v13539, %v13538
  %v13581 = vpack.c.b16 %v13541, %v13540
  %v13582 = vpack.c.b16 %v13543, %v13542
  %v13583 = vpack.c.b16 %v13545, %v13544
  %v13584 = vpack.c.b16 %v13547, %v13546
  %v13585 = vpack.c.b16 %v13549, %v13548
  %v13586 = vpack.c.b16 %v13551, %v13550
  %v13587 = vpack.c.b16 %v13553, %v13552
  %v13588 = vpack.c.b16 %v13555, %v13554
  %v13589 = vpack.c.b16 %v13557, %v13556
  %13590 = vrot.lane.b32.xlu0 %v13558, 64
  %v13591 = vpop.permute.xlu0 %13590
  %13592 = vrot.lane.b32.xlu0 %v13559, 64
  %v13593 = vpop.permute.xlu0 %13592
  %13594 = vrot.lane.b32.xlu0 %v13560, 64
  %v13595 = vpop.permute.xlu0 %13594
  %13596 = vrot.lane.b32.xlu0 %v13561, 64
  %v13597 = vpop.permute.xlu0 %13596
  %13598 = vrot.lane.b32.xlu0 %v13562, 64
  %v13599 = vpop.permute.xlu0 %13598
  %13600 = vrot.lane.b32.xlu0 %v13563, 64
  %v13601 = vpop.permute.xlu0 %13600
  %13602 = vrot.lane.b32.xlu0 %v13564, 64
  %v13603 = vpop.permute.xlu0 %13602
  %13604 = vrot.lane.b32.xlu0 %v13565, 64
  %v13605 = vpop.permute.xlu0 %13604
  %13606 = vrot.lane.b32.xlu0 %v13566, 64
  %v13607 = vpop.permute.xlu0 %13606
  %13608 = vrot.lane.b32.xlu0 %v13567, 64
  %v13609 = vpop.permute.xlu0 %13608
  %13610 = vrot.lane.b32.xlu0 %v13568, 64
  %v13611 = vpop.permute.xlu0 %13610
  %13612 = vrot.lane.b32.xlu0 %v13569, 64
  %v13613 = vpop.permute.xlu0 %13612
  %13614 = vrot.lane.b32.xlu0 %v13570, 64
  %v13615 = vpop.permute.xlu0 %13614
  %13616 = vrot.lane.b32.xlu0 %v13571, 64
  %v13617 = vpop.permute.xlu0 %13616
  %13618 = vrot.lane.b32.xlu0 %v13572, 64
  %v13619 = vpop.permute.xlu0 %13618
  %13620 = vrot.lane.b32.xlu0 %v13573, 64
  %v13621 = vpop.permute.xlu0 %13620
  %13622 = vrot.lane.b32.xlu0 %v13574, 64
  %v13623 = vpop.permute.xlu0 %13622
  %13624 = vrot.lane.b32.xlu0 %v13575, 64
  %v13625 = vpop.permute.xlu0 %13624
  %13626 = vrot.lane.b32.xlu0 %v13576, 64
  %v13627 = vpop.permute.xlu0 %13626
  %13628 = vrot.lane.b32.xlu0 %v13577, 64
  %v13629 = vpop.permute.xlu0 %13628
  %13630 = vrot.lane.b32.xlu0 %v13578, 64
  %v13631 = vpop.permute.xlu0 %13630
  %13632 = vrot.lane.b32.xlu0 %v13579, 64
  %v13633 = vpop.permute.xlu0 %13632
  %13634 = vrot.lane.b32.xlu0 %v13580, 64
  %v13635 = vpop.permute.xlu0 %13634
  %13636 = vrot.lane.b32.xlu0 %v13581, 64
  %v13637 = vpop.permute.xlu0 %13636
  %13638 = vrot.lane.b32.xlu0 %v13582, 64
  %v13639 = vpop.permute.xlu0 %13638
  %13640 = vrot.lane.b32.xlu0 %v13583, 64
  %v13641 = vpop.permute.xlu0 %13640
  %13642 = vrot.lane.b32.xlu0 %v13584, 64
  %v13643 = vpop.permute.xlu0 %13642
  %13644 = vrot.lane.b32.xlu0 %v13585, 64
  %v13645 = vpop.permute.xlu0 %13644
  %13646 = vrot.lane.b32.xlu0 %v13586, 64
  %v13647 = vpop.permute.xlu0 %13646
  %13648 = vrot.lane.b32.xlu0 %v13587, 64
  %v13649 = vpop.permute.xlu0 %13648
  %13650 = vrot.lane.b32.xlu0 %v13588, 64
  %v13651 = vpop.permute.xlu0 %13650
  %13652 = vrot.lane.b32.xlu0 %v13589, 64
  %v13653 = vpop.permute.xlu0 %13652
  %v13656 = vsel %vm4178, %v13398, %v13591
  %v13660 = vsel %vm4178, %v13399, %v13593
  %v13664 = vsel %vm4178, %v13400, %v13595
  %v13668 = vsel %vm4178, %v13401, %v13597
  %v13672 = vsel %vm4178, %v13402, %v13599
  %v13676 = vsel %vm4178, %v13403, %v13601
  %v13680 = vsel %vm4178, %v13404, %v13603
  %v13684 = vsel %vm4178, %v13405, %v13605
  %v13688 = vsel %vm4178, %v13406, %v13607
  %v13692 = vsel %vm4178, %v13407, %v13609
  %v13696 = vsel %vm4178, %v13408, %v13611
  %v13700 = vsel %vm4178, %v13409, %v13613
  %v13704 = vsel %vm4178, %v13410, %v13615
  %v13708 = vsel %vm4178, %v13411, %v13617
  %v13712 = vsel %vm4178, %v13412, %v13619
  %v13716 = vsel %vm4178, %v13413, %v13621
  %v13720 = vsel %vm4178, %v13414, %v13623
  %v13724 = vsel %vm4178, %v13415, %v13625
  %v13728 = vsel %vm4178, %v13416, %v13627
  %v13732 = vsel %vm4178, %v13417, %v13629
  %v13736 = vsel %vm4178, %v13418, %v13631
  %v13740 = vsel %vm4178, %v13419, %v13633
  %v13744 = vsel %vm4178, %v13420, %v13635
  %v13748 = vsel %vm4178, %v13421, %v13637
  %v13752 = vsel %vm4178, %v13422, %v13639
  %v13756 = vsel %vm4178, %v13423, %v13641
  %v13760 = vsel %vm4178, %v13424, %v13643
  %v13764 = vsel %vm4178, %v13425, %v13645
  %v13768 = vsel %vm4178, %v13426, %v13647
  %v13772 = vsel %vm4178, %v13427, %v13649
  %v13776 = vsel %vm4178, %v13428, %v13651
  %v13780 = vsel %vm4178, %v13429, %v13653
  %v13782 = vld [vmem:[%s1 + $0x178] sm:$0xf]
  %v13783 = vld [vmem:[%s1 + $0x17c] sm:$0xf]
  %v13784 = vld [vmem:[%s1 + $0x180] sm:$0xf]
  %v13785 = vld [vmem:[%s1 + $0x184] sm:$0xf]
  %v13786 = vld [vmem:[%s1 + $0x188] sm:$0xf]
  %v13787 = vld [vmem:[%s1 + $0x18c] sm:$0xf]
  %v13788 = vld [vmem:[%s1 + $0x190] sm:$0xf]
  %v13789 = vld [vmem:[%s1 + $0x194] sm:$0xf]
  %v13790 = vld [vmem:[%s1 + $0x198] sm:$0xf]
  %v13791 = vld [vmem:[%s1 + $0x19c] sm:$0xf]
  %v13792 = vld [vmem:[%s1 + $0x1a0] sm:$0xf]
  %v13793 = vld [vmem:[%s1 + $0x1a4] sm:$0xf]
  %v13794 = vld [vmem:[%s1 + $0x1a8] sm:$0xf]
  %v13795 = vld [vmem:[%s1 + $0x1ac] sm:$0xf]
  %v13796 = vld [vmem:[%s1 + $0x1b0] sm:$0xf]
  %v13797 = vld [vmem:[%s1 + $0x1b4] sm:$0xf]
  %v13798 = vld [vmem:[%s2 + $0x5] sm:$0x1]
  %v13799 = vperm.slane %v13798, 0
  %v13816 = vunpack.c.l.b16 %v13782
  %v13817 = vunpack.c.l.b16 %v13783
  %v13818 = vunpack.c.l.b16 %v13784
  %v13819 = vunpack.c.l.b16 %v13785
  %v13820 = vunpack.c.l.b16 %v13786
  %v13821 = vunpack.c.l.b16 %v13787
  %v13822 = vunpack.c.l.b16 %v13788
  %v13823 = vunpack.c.l.b16 %v13789
  %v13824 = vunpack.c.l.b16 %v13790
  %v13825 = vunpack.c.l.b16 %v13791
  %v13826 = vunpack.c.l.b16 %v13792
  %v13827 = vunpack.c.l.b16 %v13793
  %v13828 = vunpack.c.l.b16 %v13794
  %v13829 = vunpack.c.l.b16 %v13795
  %v13830 = vunpack.c.l.b16 %v13796
  %v13831 = vunpack.c.l.b16 %v13797
  %v13832 = vpack.c.b16 %v13817, %v13816
  %v13833 = vpack.c.b16 %v13819, %v13818
  %v13834 = vpack.c.b16 %v13821, %v13820
  %v13835 = vpack.c.b16 %v13823, %v13822
  %v13836 = vpack.c.b16 %v13825, %v13824
  %v13837 = vpack.c.b16 %v13827, %v13826
  %v13838 = vpack.c.b16 %v13829, %v13828
  %v13839 = vpack.c.b16 %v13831, %v13830
  %13848 = vmatpush.bf16.msra.mxu0 %v13839
  %13849 = vmatpush.bf16.msra.mxu0 %v13838
  %13850 = vmatpush.bf16.msra.mxu0 %v13837
  %13851 = vmatpush.bf16.msra.mxu0 %v13836
  %13852 = vmatpush.bf16.msra.mxu0 %v13835
  %13853 = vmatpush.bf16.msra.mxu0 %v13834
  %13854 = vmatpush.bf16.msra.mxu0 %v13833
  %13855 = vmatpush.bf16.msra.mxu0 %v13832
  %13856 = vmatmul.bf16.gmra.mxu0 %v13656
  %v13857 = vpop.f32.mrf.mxu0
  %v13858 = vadd.f32 %v13799, %v13857
  %v13859 = vpop.f32.mrf.mxu0
  %v13860 = vadd.f32 %v13799, %v13859
  %13861 = vmatmul.bf16.gmra.mxu0 %v13660
  %v13862 = vpop.f32.mrf.mxu0
  %v13863 = vadd.f32 %v13799, %v13862
  %v13864 = vpop.f32.mrf.mxu0
  %v13865 = vadd.f32 %v13799, %v13864
  %13866 = vmatmul.bf16.gmra.mxu0 %v13664
  %v13867 = vpop.f32.mrf.mxu0
  %v13868 = vadd.f32 %v13799, %v13867
  %v13869 = vpop.f32.mrf.mxu0
  %v13870 = vadd.f32 %v13799, %v13869
  %13871 = vmatmul.bf16.gmra.mxu0 %v13668
  %v13872 = vpop.f32.mrf.mxu0
  %v13873 = vadd.f32 %v13799, %v13872
  %v13874 = vpop.f32.mrf.mxu0
  %v13875 = vadd.f32 %v13799, %v13874
  %13876 = vmatmul.bf16.gmra.mxu0 %v13672
  %v13877 = vpop.f32.mrf.mxu0
  %v13878 = vadd.f32 %v13799, %v13877
  %v13879 = vpop.f32.mrf.mxu0
  %v13880 = vadd.f32 %v13799, %v13879
  %13881 = vmatmul.bf16.gmra.mxu0 %v13676
  %v13882 = vpop.f32.mrf.mxu0
  %v13883 = vadd.f32 %v13799, %v13882
  %v13884 = vpop.f32.mrf.mxu0
  %v13885 = vadd.f32 %v13799, %v13884
  %13886 = vmatmul.bf16.gmra.mxu0 %v13680
  %v13887 = vpop.f32.mrf.mxu0
  %v13888 = vadd.f32 %v13799, %v13887
  %v13889 = vpop.f32.mrf.mxu0
  %v13890 = vadd.f32 %v13799, %v13889
  %13891 = vmatmul.bf16.gmra.mxu0 %v13684
  %v13892 = vpop.f32.mrf.mxu0
  %v13893 = vadd.f32 %v13799, %v13892
  %v13894 = vpop.f32.mrf.mxu0
  %v13895 = vadd.f32 %v13799, %v13894
  %13896 = vmatmul.bf16.gmra.mxu0 %v13688
  %v13897 = vpop.f32.mrf.mxu0
  %v13898 = vadd.f32 %v13799, %v13897
  %v13899 = vpop.f32.mrf.mxu0
  %v13900 = vadd.f32 %v13799, %v13899
  %13901 = vmatmul.bf16.gmra.mxu0 %v13692
  %v13902 = vpop.f32.mrf.mxu0
  %v13903 = vadd.f32 %v13799, %v13902
  %v13904 = vpop.f32.mrf.mxu0
  %v13905 = vadd.f32 %v13799, %v13904
  %13906 = vmatmul.bf16.gmra.mxu0 %v13696
  %v13907 = vpop.f32.mrf.mxu0
  %v13908 = vadd.f32 %v13799, %v13907
  %v13909 = vpop.f32.mrf.mxu0
  %v13910 = vadd.f32 %v13799, %v13909
  %13911 = vmatmul.bf16.gmra.mxu0 %v13700
  %v13912 = vpop.f32.mrf.mxu0
  %v13913 = vadd.f32 %v13799, %v13912
  %v13914 = vpop.f32.mrf.mxu0
  %v13915 = vadd.f32 %v13799, %v13914
  %13916 = vmatmul.bf16.gmra.mxu0 %v13704
  %v13917 = vpop.f32.mrf.mxu0
  %v13918 = vadd.f32 %v13799, %v13917
  %v13919 = vpop.f32.mrf.mxu0
  %v13920 = vadd.f32 %v13799, %v13919
  %13921 = vmatmul.bf16.gmra.mxu0 %v13708
  %v13922 = vpop.f32.mrf.mxu0
  %v13923 = vadd.f32 %v13799, %v13922
  %v13924 = vpop.f32.mrf.mxu0
  %v13925 = vadd.f32 %v13799, %v13924
  %13926 = vmatmul.bf16.gmra.mxu0 %v13712
  %v13927 = vpop.f32.mrf.mxu0
  %v13928 = vadd.f32 %v13799, %v13927
  %v13929 = vpop.f32.mrf.mxu0
  %v13930 = vadd.f32 %v13799, %v13929
  %13931 = vmatmul.bf16.gmra.mxu0 %v13716
  %v13932 = vpop.f32.mrf.mxu0
  %v13933 = vadd.f32 %v13799, %v13932
  %v13934 = vpop.f32.mrf.mxu0
  %v13935 = vadd.f32 %v13799, %v13934
  %13936 = vmatmul.bf16.gmra.mxu0 %v13720
  %v13937 = vpop.f32.mrf.mxu0
  %v13938 = vadd.f32 %v13799, %v13937
  %v13939 = vpop.f32.mrf.mxu0
  %v13940 = vadd.f32 %v13799, %v13939
  %13941 = vmatmul.bf16.gmra.mxu0 %v13724
  %v13942 = vpop.f32.mrf.mxu0
  %v13943 = vadd.f32 %v13799, %v13942
  %v13944 = vpop.f32.mrf.mxu0
  %v13945 = vadd.f32 %v13799, %v13944
  %13946 = vmatmul.bf16.gmra.mxu0 %v13728
  %v13947 = vpop.f32.mrf.mxu0
  %v13948 = vadd.f32 %v13799, %v13947
  %v13949 = vpop.f32.mrf.mxu0
  %v13950 = vadd.f32 %v13799, %v13949
  %13951 = vmatmul.bf16.gmra.mxu0 %v13732
  %v13952 = vpop.f32.mrf.mxu0
  %v13953 = vadd.f32 %v13799, %v13952
  %v13954 = vpop.f32.mrf.mxu0
  %v13955 = vadd.f32 %v13799, %v13954
  %13956 = vmatmul.bf16.gmra.mxu0 %v13736
  %v13957 = vpop.f32.mrf.mxu0
  %v13958 = vadd.f32 %v13799, %v13957
  %v13959 = vpop.f32.mrf.mxu0
  %v13960 = vadd.f32 %v13799, %v13959
  %13961 = vmatmul.bf16.gmra.mxu0 %v13740
  %v13962 = vpop.f32.mrf.mxu0
  %v13963 = vadd.f32 %v13799, %v13962
  %v13964 = vpop.f32.mrf.mxu0
  %v13965 = vadd.f32 %v13799, %v13964
  %13966 = vmatmul.bf16.gmra.mxu0 %v13744
  %v13967 = vpop.f32.mrf.mxu0
  %v13968 = vadd.f32 %v13799, %v13967
  %v13969 = vpop.f32.mrf.mxu0
  %v13970 = vadd.f32 %v13799, %v13969
  %13971 = vmatmul.bf16.gmra.mxu0 %v13748
  %v13972 = vpop.f32.mrf.mxu0
  %v13973 = vadd.f32 %v13799, %v13972
  %v13974 = vpop.f32.mrf.mxu0
  %v13975 = vadd.f32 %v13799, %v13974
  %13976 = vmatmul.bf16.gmra.mxu0 %v13752
  %v13977 = vpop.f32.mrf.mxu0
  %v13978 = vadd.f32 %v13799, %v13977
  %v13979 = vpop.f32.mrf.mxu0
  %v13980 = vadd.f32 %v13799, %v13979
  %13981 = vmatmul.bf16.gmra.mxu0 %v13756
  %v13982 = vpop.f32.mrf.mxu0
  %v13983 = vadd.f32 %v13799, %v13982
  %v13984 = vpop.f32.mrf.mxu0
  %v13985 = vadd.f32 %v13799, %v13984
  %13986 = vmatmul.bf16.gmra.mxu0 %v13760
  %v13987 = vpop.f32.mrf.mxu0
  %v13988 = vadd.f32 %v13799, %v13987
  %v13989 = vpop.f32.mrf.mxu0
  %v13990 = vadd.f32 %v13799, %v13989
  %13991 = vmatmul.bf16.gmra.mxu0 %v13764
  %v13992 = vpop.f32.mrf.mxu0
  %v13993 = vadd.f32 %v13799, %v13992
  %v13994 = vpop.f32.mrf.mxu0
  %v13995 = vadd.f32 %v13799, %v13994
  %13996 = vmatmul.bf16.gmra.mxu0 %v13768
  %v13997 = vpop.f32.mrf.mxu0
  %v13998 = vadd.f32 %v13799, %v13997
  %v13999 = vpop.f32.mrf.mxu0
  %v14000 = vadd.f32 %v13799, %v13999
  %14001 = vmatmul.bf16.gmra.mxu0 %v13772
  %v14002 = vpop.f32.mrf.mxu0
  %v14003 = vadd.f32 %v13799, %v14002
  %v14004 = vpop.f32.mrf.mxu0
  %v14005 = vadd.f32 %v13799, %v14004
  %14006 = vmatmul.bf16.gmra.mxu0 %v13776
  %v14007 = vpop.f32.mrf.mxu0
  %v14008 = vadd.f32 %v13799, %v14007
  %v14009 = vpop.f32.mrf.mxu0
  %v14010 = vadd.f32 %v13799, %v14009
  %14011 = vmatmul.bf16.gmra.mxu0 %v13780
  %v14012 = vpop.f32.mrf.mxu0
  %v14013 = vadd.f32 %v13799, %v14012
  %v14014 = vpop.f32.mrf.mxu0
  %v14015 = vadd.f32 %v13799, %v14014
  %14016 = vdwg.mxu0
  %v14017 = vmax.f32 %v13858, 0.0
  %v14018 = vmax.f32 %v13860, 0.0
  %v14019 = vmax.f32 %v13863, 0.0
  %v14020 = vmax.f32 %v13865, 0.0
  %v14021 = vmax.f32 %v13868, 0.0
  %v14022 = vmax.f32 %v13870, 0.0
  %v14023 = vmax.f32 %v13873, 0.0
  %v14024 = vmax.f32 %v13875, 0.0
  %v14025 = vmax.f32 %v13878, 0.0
  %v14026 = vmax.f32 %v13880, 0.0
  %v14027 = vmax.f32 %v13883, 0.0
  %v14028 = vmax.f32 %v13885, 0.0
  %v14029 = vmax.f32 %v13888, 0.0
  %v14030 = vmax.f32 %v13890, 0.0
  %v14031 = vmax.f32 %v13893, 0.0
  %v14032 = vmax.f32 %v13895, 0.0
  %v14033 = vmax.f32 %v13898, 0.0
  %v14034 = vmax.f32 %v13900, 0.0
  %v14035 = vmax.f32 %v13903, 0.0
  %v14036 = vmax.f32 %v13905, 0.0
  %v14037 = vmax.f32 %v13908, 0.0
  %v14038 = vmax.f32 %v13910, 0.0
  %v14039 = vmax.f32 %v13913, 0.0
  %v14040 = vmax.f32 %v13915, 0.0
  %v14041 = vmax.f32 %v13918, 0.0
  %v14042 = vmax.f32 %v13920, 0.0
  %v14043 = vmax.f32 %v13923, 0.0
  %v14044 = vmax.f32 %v13925, 0.0
  %v14045 = vmax.f32 %v13928, 0.0
  %v14046 = vmax.f32 %v13930, 0.0
  %v14047 = vmax.f32 %v13933, 0.0
  %v14048 = vmax.f32 %v13935, 0.0
  %v14049 = vmax.f32 %v13938, 0.0
  %v14050 = vmax.f32 %v13940, 0.0
  %v14051 = vmax.f32 %v13943, 0.0
  %v14052 = vmax.f32 %v13945, 0.0
  %v14053 = vmax.f32 %v13948, 0.0
  %v14054 = vmax.f32 %v13950, 0.0
  %v14055 = vmax.f32 %v13953, 0.0
  %v14056 = vmax.f32 %v13955, 0.0
  %v14057 = vmax.f32 %v13958, 0.0
  %v14058 = vmax.f32 %v13960, 0.0
  %v14059 = vmax.f32 %v13963, 0.0
  %v14060 = vmax.f32 %v13965, 0.0
  %v14061 = vmax.f32 %v13968, 0.0
  %v14062 = vmax.f32 %v13970, 0.0
  %v14063 = vmax.f32 %v13973, 0.0
  %v14064 = vmax.f32 %v13975, 0.0
  %v14065 = vmax.f32 %v13978, 0.0
  %v14066 = vmax.f32 %v13980, 0.0
  %v14067 = vmax.f32 %v13983, 0.0
  %v14068 = vmax.f32 %v13985, 0.0
  %v14069 = vmax.f32 %v13988, 0.0
  %v14070 = vmax.f32 %v13990, 0.0
  %v14071 = vmax.f32 %v13993, 0.0
  %v14072 = vmax.f32 %v13995, 0.0
  %v14073 = vmax.f32 %v13998, 0.0
  %v14074 = vmax.f32 %v14000, 0.0
  %v14075 = vmax.f32 %v14003, 0.0
  %v14076 = vmax.f32 %v14005, 0.0
  %v14077 = vmax.f32 %v14008, 0.0
  %v14078 = vmax.f32 %v14010, 0.0
  %v14079 = vmax.f32 %v14013, 0.0
  %v14080 = vmax.f32 %v14015, 0.0
  %vm14081 = vcmask 130048
  %14082 = vst.msk [vmem:[%s3] sm:$0xff] %vm14081, %v14017
  %14083 = vst.msk [vmem:[%s3 + $0x8] sm:$0xff] %vm14081, %v14018
  %14084 = vst.msk [vmem:[%s3 + $0x10] sm:$0xff] %vm14081, %v14019
  %14085 = vst.msk [vmem:[%s3 + $0x18] sm:$0xff] %vm14081, %v14020
  %14086 = vst.msk [vmem:[%s3 + $0x20] sm:$0xff] %vm14081, %v14021
  %14087 = vst.msk [vmem:[%s3 + $0x28] sm:$0xff] %vm14081, %v14022
  %14088 = vst.msk [vmem:[%s3 + $0x30] sm:$0xff] %vm14081, %v14023
  %14089 = vst.msk [vmem:[%s3 + $0x38] sm:$0xff] %vm14081, %v14024
  %14090 = vst.msk [vmem:[%s3 + $0x40] sm:$0xff] %vm14081, %v14025
  %14091 = vst.msk [vmem:[%s3 + $0x48] sm:$0xff] %vm14081, %v14026
  %14092 = vst.msk [vmem:[%s3 + $0x50] sm:$0xff] %vm14081, %v14027
  %14093 = vst.msk [vmem:[%s3 + $0x58] sm:$0xff] %vm14081, %v14028
  %14094 = vst.msk [vmem:[%s3 + $0x60] sm:$0xff] %vm14081, %v14029
  %14095 = vst.msk [vmem:[%s3 + $0x68] sm:$0xff] %vm14081, %v14030
  %14096 = vst.msk [vmem:[%s3 + $0x70] sm:$0xff] %vm14081, %v14031
  %14097 = vst.msk [vmem:[%s3 + $0x78] sm:$0xff] %vm14081, %v14032
  %14098 = vst.msk [vmem:[%s3 + $0x80] sm:$0xff] %vm14081, %v14033
  %14099 = vst.msk [vmem:[%s3 + $0x88] sm:$0xff] %vm14081, %v14034
  %14100 = vst.msk [vmem:[%s3 + $0x90] sm:$0xff] %vm14081, %v14035
  %14101 = vst.msk [vmem:[%s3 + $0x98] sm:$0xff] %vm14081, %v14036
  %14102 = vst.msk [vmem:[%s3 + $0xa0] sm:$0xff] %vm14081, %v14037
  %14103 = vst.msk [vmem:[%s3 + $0xa8] sm:$0xff] %vm14081, %v14038
  %14104 = vst.msk [vmem:[%s3 + $0xb0] sm:$0xff] %vm14081, %v14039
  %14105 = vst.msk [vmem:[%s3 + $0xb8] sm:$0xff] %vm14081, %v14040
  %14106 = vst.msk [vmem:[%s3 + $0xc0] sm:$0xff] %vm14081, %v14041
  %14107 = vst.msk [vmem:[%s3 + $0xc8] sm:$0xff] %vm14081, %v14042
  %14108 = vst.msk [vmem:[%s3 + $0xd0] sm:$0xff] %vm14081, %v14043
  %14109 = vst.msk [vmem:[%s3 + $0xd8] sm:$0xff] %vm14081, %v14044
  %14110 = vst.msk [vmem:[%s3 + $0xe0] sm:$0xff] %vm14081, %v14045
  %14111 = vst.msk [vmem:[%s3 + $0xe8] sm:$0xff] %vm14081, %v14046
  %14112 = vst.msk [vmem:[%s3 + $0xf0] sm:$0xff] %vm14081, %v14047
  %14113 = vst.msk [vmem:[%s3 + $0xf8] sm:$0xff] %vm14081, %v14048
  %14114 = vst.msk [vmem:[%s3 + $0x100] sm:$0xff] %vm14081, %v14049
  %14115 = vst.msk [vmem:[%s3 + $0x108] sm:$0xff] %vm14081, %v14050
  %14116 = vst.msk [vmem:[%s3 + $0x110] sm:$0xff] %vm14081, %v14051
  %14117 = vst.msk [vmem:[%s3 + $0x118] sm:$0xff] %vm14081, %v14052
  %14118 = vst.msk [vmem:[%s3 + $0x120] sm:$0xff] %vm14081, %v14053
  %14119 = vst.msk [vmem:[%s3 + $0x128] sm:$0xff] %vm14081, %v14054
  %14120 = vst.msk [vmem:[%s3 + $0x130] sm:$0xff] %vm14081, %v14055
  %14121 = vst.msk [vmem:[%s3 + $0x138] sm:$0xff] %vm14081, %v14056
  %14122 = vst.msk [vmem:[%s3 + $0x140] sm:$0xff] %vm14081, %v14057
  %14123 = vst.msk [vmem:[%s3 + $0x148] sm:$0xff] %vm14081, %v14058
  %14124 = vst.msk [vmem:[%s3 + $0x150] sm:$0xff] %vm14081, %v14059
  %14125 = vst.msk [vmem:[%s3 + $0x158] sm:$0xff] %vm14081, %v14060
  %14126 = vst.msk [vmem:[%s3 + $0x160] sm:$0xff] %vm14081, %v14061
  %14127 = vst.msk [vmem:[%s3 + $0x168] sm:$0xff] %vm14081, %v14062
  %14128 = vst.msk [vmem:[%s3 + $0x170] sm:$0xff] %vm14081, %v14063
  %14129 = vst.msk [vmem:[%s3 + $0x178] sm:$0xff] %vm14081, %v14064
  %14130 = vst.msk [vmem:[%s3 + $0x180] sm:$0xff] %vm14081, %v14065
  %14131 = vst.msk [vmem:[%s3 + $0x188] sm:$0xff] %vm14081, %v14066
  %14132 = vst.msk [vmem:[%s3 + $0x190] sm:$0xff] %vm14081, %v14067
  %14133 = vst.msk [vmem:[%s3 + $0x198] sm:$0xff] %vm14081, %v14068
  %14134 = vst.msk [vmem:[%s3 + $0x1a0] sm:$0xff] %vm14081, %v14069
  %14135 = vst.msk [vmem:[%s3 + $0x1a8] sm:$0xff] %vm14081, %v14070
  %14136 = vst.msk [vmem:[%s3 + $0x1b0] sm:$0xff] %vm14081, %v14071
  %14137 = vst.msk [vmem:[%s3 + $0x1b8] sm:$0xff] %vm14081, %v14072
  %14138 = vst.msk [vmem:[%s3 + $0x1c0] sm:$0xff] %vm14081, %v14073
  %14139 = vst.msk [vmem:[%s3 + $0x1c8] sm:$0xff] %vm14081, %v14074
  %14140 = vst.msk [vmem:[%s3 + $0x1d0] sm:$0xff] %vm14081, %v14075
  %14141 = vst.msk [vmem:[%s3 + $0x1d8] sm:$0xff] %vm14081, %v14076
  %14142 = vst.msk [vmem:[%s3 + $0x1e0] sm:$0xff] %vm14081, %v14077
  %14143 = vst.msk [vmem:[%s3 + $0x1e8] sm:$0xff] %vm14081, %v14078
  %14144 = vst.msk [vmem:[%s3 + $0x1f0] sm:$0xff] %vm14081, %v14079
  %14145 = vst.msk [vmem:[%s3 + $0x1f8] sm:$0xff] %vm14081, %v14080
  // Predicated region
  $region14: #{tpu_custom_call.1} parent=0 // pred_check
    _
  $region15: #{tpu_custom_call.1} parent=0 // pred_check_branch
    %14147 = sbr.rel (0) target = $region17
  $region16: #{tpu_custom_call.1} parent=0 // pred_region
    _
  $region17: #{tpu_custom_call.1} parent=0 // pred_fallthru
    _
  // Predicated region
  $region18: #{tpu_custom_call.1} parent=0 // pred_check
    _
  $region19: #{tpu_custom_call.1} parent=0 // pred_check_branch
    %14149 = sbr.rel (0) target = $region21
  $region20: #{tpu_custom_call.1} parent=0 // pred_region
    _
  $region21: #{tpu_custom_call.1} parent=0 // pred_fallthru
    _

</llo_original>
